<compile_context>
chip_gen: v6e
topology: v6e:2x2x1
jax: 0.10.0
libtpu: 0.0.40
codegen_flags: <defaults>
</compile_context>

<pallas_src>
import jax
import jax.numpy as jnp
from jax.experimental import pallas as pl
from jax.experimental.pallas import tpu as pltpu


# ----------------------------- Pallas kernels -------------------------------

def _deconv_bn_relu_kernel(a_ref, b_ref, g_ref, beta_ref, o_ref, sum_ref, ssq_ref):
    """Per grid step: one output-phase matmul on the MXU, output kept resident in
    VMEM.  Per-channel sum / sum-of-squares accumulate in scratch so the fused
    BatchNorm(+ReLU) epilogue at the last phase uses statistics over the whole
    (N, H, W) extent (training-mode biased batch stats, eps=1e-5)."""
    p = pl.program_id(0)

    @pl.when(p == 0)
    def _():
        sum_ref[...] = jnp.zeros_like(sum_ref)
        ssq_ref[...] = jnp.zeros_like(ssq_ref)

    y = jnp.dot(a_ref[0], b_ref[0], preferred_element_type=jnp.float32)  # (M, Cp)
    o_ref[p] = y
    sum_ref[...] += jnp.sum(y, axis=0, keepdims=True)
    ssq_ref[...] += jnp.sum(y * y, axis=0, keepdims=True)

    @pl.when(p == pl.num_programs(0) - 1)
    def _():
        count = float(o_ref.shape[0] * o_ref.shape[1])        # P * M (static)
        mean = sum_ref[...] / count                            # (1, Cp)
        var = ssq_ref[...] / count - mean * mean
        scale = g_ref[...] * jax.lax.rsqrt(var + 1e-5)         # (1, Cp)
        shift = beta_ref[...] - mean * scale
        o_ref[...] = jnp.maximum(o_ref[...] * scale + shift, 0.0)


def _deconv_bias_tanh_kernel(a_ref, b_ref, bias_ref, o_ref):
    """Phase matmul with fused bias + tanh epilogue (purely per-row, so the grid
    can be tiled over M and marked fully parallel)."""
    y = jnp.dot(a_ref[0], b_ref[0], preferred_element_type=jnp.float32)   # (tm, Cp)
    o_ref[0] = jnp.tanh(y + bias_ref[...])


# ----------------------------- Pallas wrappers -------------------------------

def _round_up(n, m):
    return ((n + m - 1) // m) * m


def _pick_m_tile(m):
    for t in (1024, 512, 256, 128, 64, 32, 16, 8):
        if t <= m and m % t == 0:
            return t
    return m


def fused_matmul_bn_relu(A, B, gamma, beta):
    """einsum('pmk,pkc->pmc') on the MXU with a fused BatchNorm+ReLU epilogue.
    A may carry a leading phase dim of 1 (shared across all phases of B).
    Output channel dim is padded to a lane-dense multiple of 128 and sliced back."""
    Pa, M, K = A.shape
    P, _, Cout = B.shape
    Cp = _round_up(Cout, 128)
    A = A.astype(jnp.bfloat16)
    Bp = jnp.pad(B, ((0, 0), (0, 0), (0, Cp - Cout))).astype(jnp.bfloat16)
    g = jnp.pad(gamma, (0, Cp - Cout), constant_values=1.0).reshape(1, Cp)
    b = jnp.pad(beta, (0, Cp - Cout)).reshape(1, Cp)
    a_map = (lambda p: (p, 0, 0)) if Pa == P else (lambda p: (0, 0, 0))

    out = pl.pallas_call(
        _deconv_bn_relu_kernel,
        out_shape=jax.ShapeDtypeStruct((P, M, Cp), jnp.float32),
        grid=(P,),
        in_specs=[pl.BlockSpec((1, M, K), a_map),
                  pl.BlockSpec((1, K, Cp), lambda p: (p, 0, 0)),
                  pl.BlockSpec((1, Cp), lambda p: (0, 0)),
                  pl.BlockSpec((1, Cp), lambda p: (0, 0))],
        out_specs=pl.BlockSpec((P, M, Cp), lambda p: (0, 0, 0)),   # VMEM-resident
        scratch_shapes=[pltpu.VMEM((1, Cp), jnp.float32),
                        pltpu.VMEM((1, Cp), jnp.float32)],
        compiler_params=pltpu.CompilerParams(
            # phase axis must be sequential: epilogue reads all phase slabs
            dimension_semantics=("arbitrary",),
            vmem_limit_bytes=48 * 1024 * 1024),
    )(A, Bp, g, b)
    return out[:, :, :Cout]


def fused_matmul_bias_tanh(A, B, bias):
    """einsum('pmk,pkc->pmc') with fused bias + tanh; grid tiled over (phase, M)
    and fully parallel."""
    P, M, K = A.shape
    Cout = B.shape[2]
    Cp = _round_up(Cout, 128)
    A = A.astype(jnp.bfloat16)
    Bp = jnp.pad(B, ((0, 0), (0, 0), (0, Cp - Cout))).astype(jnp.bfloat16)
    bi = jnp.pad(bias, (0, Cp - Cout)).reshape(1, Cp)
    tm = _pick_m_tile(M)

    out = pl.pallas_call(
        _deconv_bias_tanh_kernel,
        out_shape=jax.ShapeDtypeStruct((P, M, Cp), jnp.float32),
        grid=(P, M // tm),
        in_specs=[pl.BlockSpec((1, tm, K), lambda p, m: (p, m, 0)),
                  pl.BlockSpec((1, K, Cp), lambda p, m: (p, 0, 0)),
                  pl.BlockSpec((1, Cp), lambda p, m: (0, 0))],
        out_specs=pl.BlockSpec((1, tm, Cp), lambda p, m: (p, m, 0)),
        compiler_params=pltpu.CompilerParams(
            dimension_semantics=("parallel", "parallel"),
            vmem_limit_bytes=48 * 1024 * 1024),
    )(A, Bp, bi)
    return out[:, :, :Cout]


# ------------------- ConvTranspose2d phase decomposition glue ----------------

def _phase_im2col(x):
    """Sub-pixel im2col for ConvTranspose2d(k=4, stride=2, pad=1).
    x: (N, H, W, C) NHWC -> (4, N*H*W, 4*C).  Phase p = ph*2 + pw produces output
    pixels (2i+ph, 2j+pw); each is a stride-1 2x2 conv over the zero-padded input."""
    N, H, W, C = x.shape
    xp = jnp.pad(x, ((0, 0), (1, 1), (1, 1), (0, 0)))
    phases = []
    for ph in range(2):
        for pw in range(2):
            taps = [xp[:, ph + dr: ph + dr + H, pw + dc: pw + dc + W, :]
                    for dr in range(2) for dc in range(2)]
            a = jnp.concatenate(taps, axis=-1)                 # (N, H, W, 4*C)
            phases.append(a.reshape(N * H * W, 4 * C))
    return jnp.stack(phases, axis=0)


def _phase_weights(w):
    """PyTorch ConvTranspose2d weight (Cin, Cout, 4, 4) -> per-phase 2x2 sub-kernels
    matching _phase_im2col's tap order: (4, 4*Cin, Cout).
    Tap (dr, dc) of phase (ph, pw) uses kernel element (3-ph-2*dr, 3-pw-2*dc)."""
    phases = []
    for ph in range(2):
        for pw in range(2):
            taps = [w[:, :, 3 - ph - 2 * dr, 3 - pw - 2 * dc]
                    for dr in range(2) for dc in range(2)]
            phases.append(jnp.concatenate(taps, axis=0))       # (4*Cin, Cout)
    return jnp.stack(phases, axis=0)


def _phase_reassemble(y, N, H, W):
    """(4, N*H*W, C) per-phase outputs -> (N, 2H, 2W, C) NHWC."""
    C = y.shape[-1]
    y = y.reshape(2, 2, N, H, W, C)
    return y.transpose(2, 3, 0, 4, 1, 5).reshape(N, 2 * H, 2 * W, C)


# ------------------------------ Generator blocks -----------------------------

def block1_deconv_bn_relu(stem, w, gamma, beta):
    """ConvTranspose2d(4, stride=1, pad=0, bias=False) on a 1x1 input + BN + ReLU.
    Each of the 16 output pixels is its own 'phase'; A (the stem) is shared."""
    bs, Cin = stem.shape
    Cout = w.shape[1]
    A = stem.reshape(1, bs, Cin)                                # shared across phases
    B = jnp.transpose(w, (2, 3, 0, 1)).reshape(16, Cin, Cout)   # [kh*4+kw, ci, co]
    y = fused_matmul_bn_relu(A, B, gamma, beta)                 # (16, bs, Cout)
    return y.reshape(4, 4, bs, Cout).transpose(2, 0, 1, 3)      # (bs, 4, 4, Cout)


def block_deconv_bn_relu(x, w, gamma, beta):
    """ConvTranspose2d(4, stride=2, pad=1, bias=False) + BatchNorm2d + ReLU."""
    N, H, W, _ = x.shape
    A = _phase_im2col(x.astype(jnp.bfloat16))
    B = _phase_weights(w)
    y = fused_matmul_bn_relu(A, B, gamma, beta)                 # (4, N*H*W, Cout)
    return _phase_reassemble(y, N, H, W)


def block5_deconv_tanh(x, w, bias):
    """ConvTranspose2d(4, stride=2, pad=1, bias=True) + tanh."""
    N, H, W, _ = x.shape
    A = _phase_im2col(x.astype(jnp.bfloat16))
    B = _phase_weights(w)
    y = fused_matmul_bias_tanh(A, B, bias)                      # (4, N*H*W, 3)
    return _phase_reassemble(y, N, H, W)


# ------------------------------ Generator ------------------------------------

def init_params(key, num_classes, embed_size, z_dim, latent_size,
                img_channel, gen_dim):
    keys = jax.random.split(key, 8)
    cin0 = z_dim + embed_size + latent_size
    dims = [cin0, gen_dim * 16, gen_dim * 8, gen_dim * 4, gen_dim * 2]
    params = {"embed": jax.random.normal(
        keys[0], (num_classes, embed_size), jnp.float32)}
    for i in range(4):
        params[f"w{i + 1}"] = 0.02 * jax.random.normal(
            keys[i + 1], (dims[i], dims[i + 1], 4, 4), jnp.float32)
        params[f"g{i + 1}"] = jnp.ones((dims[i + 1],), jnp.float32)   # BN gamma
        params[f"b{i + 1}"] = jnp.zeros((dims[i + 1],), jnp.float32)  # BN beta
    params["w5"] = 0.02 * jax.random.normal(
        keys[5], (dims[4], img_channel, 4, 4), jnp.float32)
    params["bias5"] = 0.02 * jax.random.normal(
        keys[6], (img_channel,), jnp.float32)
    return params


def generator_forward(params, zz, labels, semantic_latent):
    """zz: (bs, z_dim, 1, 1) NCHW, labels: (bs,) int, semantic_latent: (bs, latent).
    Returns (bs, img_channel, 64, 64) NCHW, matching the PyTorch module.
    BatchNorm uses training-mode biased batch statistics (nn.BatchNorm2d.train())."""
    bs = zz.shape[0]
    z = zz.reshape(bs, -1)                                       # (bs, z_dim)
    # TODO(synk): embedding gather + concat stay in XLA glue (no Pallas win at this size).
    emb = jnp.take(params["embed"], labels, axis=0)
    stem = jnp.concatenate([z, emb, semantic_latent], axis=1)    # (bs, cin0)

    x = block1_deconv_bn_relu(stem, params["w1"], params["g1"], params["b1"])
    for i in (2, 3, 4):
        x = block_deconv_bn_relu(x, params[f"w{i}"], params[f"g{i}"], params[f"b{i}"])
    out_nhwc = block5_deconv_tanh(x, params["w5"], params["bias5"])
    return jnp.transpose(out_nhwc, (0, 3, 1, 2))                 # -> NCHW


# --------------------------------- Main ---------------------------------------

if __name__ == "__main__":
    key = jax.random.PRNGKey(0)
    bs = 2
    num_classes, embed_size, z_dim = 10, 16, 16
    latent_size, img_channel, gen_dim = 32, 3, 8

    k1, k2, k3, kp = jax.random.split(key, 4)
    zz = jax.random.normal(k1, (bs, z_dim, 1, 1), jnp.float32)
    labels = jax.random.randint(k2, (bs,), 0, num_classes)
    semantic_latent = jax.random.normal(k3, (bs, latent_size), jnp.float32)

    params = init_params(kp, num_classes, embed_size, z_dim,
                         latent_size, img_channel, gen_dim)

    fwd = jax.jit(generator_forward)
    out = fwd(params, zz, labels, semantic_latent)
    jax.block_until_ready(out)
    assert out.shape == (bs, img_channel, 64, 64), out.shape
    assert bool(jnp.all(jnp.isfinite(out)))
    print("KERNEL_OK")
</pallas_src>

<mosaic_0001>
module attributes {stable_mosaic.version = 11 : i64} {
  func.func @_deconv_bn_relu_kernel(%arg0: i32, %arg1: memref<1x2x64xbf16, #tpu.memory_space<vmem>>, %arg2: memref<1x64x128xbf16, #tpu.memory_space<vmem>>, %arg3: memref<1x128xf32, #tpu.memory_space<vmem>>, %arg4: memref<1x128xf32, #tpu.memory_space<vmem>>, %arg5: memref<16x2x128xf32, #tpu.memory_space<vmem>>, %arg6: memref<1x128xf32, #tpu.memory_space<vmem>>, %arg7: memref<1x128xf32, #tpu.memory_space<vmem>>) attributes {dimension_semantics = [#tpu.dimension_semantics<arbitrary>], iteration_bounds = array<i64: 16>, scalar_prefetch = 0 : i64, scratch_operands = 2 : i64, tpu.core_type = #tpu.core_type<tc>, window_params = [{pipeline_mode = #tpu.pipeline_mode<synchronous>, transform_indices = @transform_0, window_bounds = array<i64: 1, 2, 64>}, {transform_indices = @transform_1, window_bounds = array<i64: 1, 64, 128>}, {pipeline_mode = #tpu.pipeline_mode<synchronous>, transform_indices = @transform_2, window_bounds = array<i64: 1, 128>}, {pipeline_mode = #tpu.pipeline_mode<synchronous>, transform_indices = @transform_3, window_bounds = array<i64: 1, 128>}, {pipeline_mode = #tpu.pipeline_mode<synchronous>, transform_indices = @transform_4, window_bounds = array<i64: 16, 2, 128>}]} {
    %c0_i32 = arith.constant 0 : i32
    %0 = arith.cmpi eq, %arg0, %c0_i32 : i32
    %1 = arith.extui %0 : i1 to i32
    %c0_i32_0 = arith.constant 0 : i32
    %2 = arith.cmpi ne, %1, %c0_i32_0 : i32
    scf.if %2 {
      %cst_19 = arith.constant 0.000000e+00 : f32
      %26 = vector.broadcast %cst_19 : f32 to vector<1x128xf32>
      %c0_20 = arith.constant 0 : index
      %c0_21 = arith.constant 0 : index
      %27 = vector.load %arg6[%c0_20, %c0_21] : memref<1x128xf32, #tpu.memory_space<vmem>>, vector<1x128xf32>
      tpu.vector_store %arg6[%c0_20, %c0_21], %26 {strides = array<i32>} : memref<1x128xf32, #tpu.memory_space<vmem>>, vector<1x128xf32>,
      %cst_22 = arith.constant 0.000000e+00 : f32
      %28 = vector.broadcast %cst_22 : f32 to vector<1x128xf32>
      %c0_23 = arith.constant 0 : index
      %c0_24 = arith.constant 0 : index
      %29 = vector.load %arg7[%c0_23, %c0_24] : memref<1x128xf32, #tpu.memory_space<vmem>>, vector<1x128xf32>
      tpu.vector_store %arg7[%c0_23, %c0_24], %28 {strides = array<i32>} : memref<1x128xf32, #tpu.memory_space<vmem>>, vector<1x128xf32>,
    } else {
    }
    %c0 = arith.constant 0 : index
    %c0_1 = arith.constant 0 : index
    %c0_2 = arith.constant 0 : index
    %3 = vector.load %arg1[%c0, %c0_1, %c0_2] : memref<1x2x64xbf16, #tpu.memory_space<vmem>>, vector<1x2x64xbf16>
    %4 = vector.shape_cast %3 : vector<1x2x64xbf16> to vector<2x64xbf16>
    %c0_3 = arith.constant 0 : index
    %c0_4 = arith.constant 0 : index
    %c0_5 = arith.constant 0 : index
    %5 = vector.load %arg2[%c0_3, %c0_4, %c0_5] : memref<1x64x128xbf16, #tpu.memory_space<vmem>>, vector<1x64x128xbf16>
    %6 = vector.shape_cast %5 : vector<1x64x128xbf16> to vector<64x128xbf16>
    %cst = arith.constant dense<0.000000e+00> : vector<2x128xf32>
    %7 = tpu.matmul %4, %6, %cst {dimension_numbers = #tpu.dot_dimension_numbers<[1], [0], [0], [1], [0, 0, 1, 1], [], []>} : vector<2x64xbf16>, vector<64x128xbf16>, vector<2x128xf32> -> vector<2x128xf32>
    %8 = arith.index_cast %arg0 : i32 to index
    %c0_6 = arith.constant 0 : index
    %c0_7 = arith.constant 0 : index
    %9 = vector.load %arg5[%8, %c0_6, %c0_7] : memref<16x2x128xf32, #tpu.memory_space<vmem>>, vector<1x2x128xf32>
    %10 = vector.shape_cast %9 : vector<1x2x128xf32> to vector<2x128xf32>
    %11 = vector.shape_cast %7 : vector<2x128xf32> to vector<1x2x128xf32>
    tpu.vector_store %arg5[%8, %c0_6, %c0_7], %11 {strides = array<i32>} : memref<16x2x128xf32, #tpu.memory_space<vmem>>, vector<1x2x128xf32>,
    %c0_8 = arith.constant 0 : index
    %c0_9 = arith.constant 0 : index
    %12 = vector.load %arg6[%c0_8, %c0_9] : memref<1x128xf32, #tpu.memory_space<vmem>>, vector<1x128xf32>
    %cst_10 = arith.constant dense<0.000000e+00> : vector<128xf32>
    %13 = vector.multi_reduction <add>, %7, %cst_10 [0] : vector<2x128xf32> to vector<128xf32>
    %14 = vector.shape_cast %13 : vector<128xf32> to vector<1x128xf32>
    %15 = arith.addf %12, %14 : vector<1x128xf32>
    %c0_11 = arith.constant 0 : index
    %c0_12 = arith.constant 0 : index
    %16 = vector.load %arg6[%c0_11, %c0_12] : memref<1x128xf32, #tpu.memory_space<vmem>>, vector<1x128xf32>
    tpu.vector_store %arg6[%c0_11, %c0_12], %15 {strides = array<i32>} : memref<1x128xf32, #tpu.memory_space<vmem>>, vector<1x128xf32>,
    %c0_13 = arith.constant 0 : index
    %c0_14 = arith.constant 0 : index
    %17 = vector.load %arg7[%c0_13, %c0_14] : memref<1x128xf32, #tpu.memory_space<vmem>>, vector<1x128xf32>
    %18 = arith.mulf %7, %7 : vector<2x128xf32>
    %cst_15 = arith.constant dense<0.000000e+00> : vector<128xf32>
    %19 = vector.multi_reduction <add>, %18, %cst_15 [0] : vector<2x128xf32> to vector<128xf32>
    %20 = vector.shape_cast %19 : vector<128xf32> to vector<1x128xf32>
    %21 = arith.addf %17, %20 : vector<1x128xf32>
    %c0_16 = arith.constant 0 : index
    %c0_17 = arith.constant 0 : index
    %22 = vector.load %arg7[%c0_16, %c0_17] : memref<1x128xf32, #tpu.memory_space<vmem>>, vector<1x128xf32>
    tpu.vector_store %arg7[%c0_16, %c0_17], %21 {strides = array<i32>} : memref<1x128xf32, #tpu.memory_space<vmem>>, vector<1x128xf32>,
    %c15_i32 = arith.constant 15 : i32
    %23 = arith.cmpi eq, %arg0, %c15_i32 : i32
    %24 = arith.extui %23 : i1 to i32
    %c0_i32_18 = arith.constant 0 : i32
    %25 = arith.cmpi ne, %24, %c0_i32_18 : i32
    scf.if %25 {
      %c0_19 = arith.constant 0 : index
      %c0_20 = arith.constant 0 : index
      %26 = vector.load %arg6[%c0_19, %c0_20] : memref<1x128xf32, #tpu.memory_space<vmem>>, vector<1x128xf32>
      %cst_21 = arith.constant 3.200000e+01 : f32
      %27 = vector.broadcast %cst_21 : f32 to vector<1x128xf32>
      %28 = arith.divf %26, %27 : vector<1x128xf32>
      %c0_22 = arith.constant 0 : index
      %c0_23 = arith.constant 0 : index
      %29 = vector.load %arg7[%c0_22, %c0_23] : memref<1x128xf32, #tpu.memory_space<vmem>>, vector<1x128xf32>
      %cst_24 = arith.constant 3.200000e+01 : f32
      %30 = vector.broadcast %cst_24 : f32 to vector<1x128xf32>
      %31 = arith.divf %29, %30 : vector<1x128xf32>
      %32 = arith.mulf %28, %28 : vector<1x128xf32>
      %33 = arith.subf %31, %32 : vector<1x128xf32>
      %c0_25 = arith.constant 0 : index
      %c0_26 = arith.constant 0 : index
      %34 = vector.load %arg3[%c0_25, %c0_26] : memref<1x128xf32, #tpu.memory_space<vmem>>, vector<1x128xf32>
      %cst_27 = arith.constant 9.99999974E-6 : f32
      %35 = vector.broadcast %cst_27 : f32 to vector<1x128xf32>
      %36 = arith.addf %33, %35 : vector<1x128xf32>
      %37 = math.rsqrt %36 : vector<1x128xf32>
      %38 = arith.mulf %34, %37 : vector<1x128xf32>
      %c0_28 = arith.constant 0 : index
      %c0_29 = arith.constant 0 : index
      %39 = vector.load %arg4[%c0_28, %c0_29] : memref<1x128xf32, #tpu.memory_space<vmem>>, vector<1x128xf32>
      %40 = arith.mulf %28, %38 : vector<1x128xf32>
      %41 = arith.subf %39, %40 : vector<1x128xf32>
      %c0_30 = arith.constant 0 : index
      %c0_31 = arith.constant 0 : index
      %c0_32 = arith.constant 0 : index
      %42 = vector.load %arg5[%c0_30, %c0_31, %c0_32] : memref<16x2x128xf32, #tpu.memory_space<vmem>>, vector<16x2x128xf32>
      %43 = vector.shape_cast %38 : vector<1x128xf32> to vector<1x1x128xf32>
      %44 = vector.broadcast %43 : vector<1x1x128xf32> to vector<16x2x128xf32>
      %45 = arith.mulf %42, %44 : vector<16x2x128xf32>
      %46 = vector.shape_cast %41 : vector<1x128xf32> to vector<1x1x128xf32>
      %47 = vector.broadcast %46 : vector<1x1x128xf32> to vector<16x2x128xf32>
      %48 = arith.addf %45, %47 : vector<16x2x128xf32>
      %cst_33 = arith.constant 0.000000e+00 : f32
      %49 = vector.broadcast %cst_33 : f32 to vector<16x2x128xf32>
      %50 = arith.maximumf %48, %49 : vector<16x2x128xf32>
      %c0_34 = arith.constant 0 : index
      %c0_35 = arith.constant 0 : index
      %c0_36 = arith.constant 0 : index
      %51 = vector.load %arg5[%c0_34, %c0_35, %c0_36] : memref<16x2x128xf32, #tpu.memory_space<vmem>>, vector<16x2x128xf32>
      tpu.vector_store %arg5[%c0_34, %c0_35, %c0_36], %50 {strides = array<i32>} : memref<16x2x128xf32, #tpu.memory_space<vmem>>, vector<16x2x128xf32>,
    } else {
    }
    return
  }
  func.func @transform_0(%arg0: i32) -> (i32, i32, i32) {
    %c0_i32 = arith.constant 0 : i32
    %c0_i32_0 = arith.constant 0 : i32
    %c0_i32_1 = arith.constant 0 : i32
    %c0_i32_2 = arith.constant 0 : i32
    return %c0_i32, %c0_i32_0, %c0_i32_1 : i32, i32, i32
  }
  func.func @transform_1(%arg0: i32) -> (i32, i32, i32) {
    %c0_i32 = arith.constant 0 : i32
    %c0_i32_0 = arith.constant 0 : i32
    %c0_i32_1 = arith.constant 0 : i32
    return %arg0, %c0_i32, %c0_i32_0 : i32, i32, i32
  }
  func.func @transform_2(%arg0: i32) -> (i32, i32) {
    %c0_i32 = arith.constant 0 : i32
    %c0_i32_0 = arith.constant 0 : i32
    %c0_i32_1 = arith.constant 0 : i32
    return %c0_i32, %c0_i32_0 : i32, i32
  }
  func.func @transform_3(%arg0: i32) -> (i32, i32) {
    %c0_i32 = arith.constant 0 : i32
    %c0_i32_0 = arith.constant 0 : i32
    %c0_i32_1 = arith.constant 0 : i32
    return %c0_i32, %c0_i32_0 : i32, i32
  }
  func.func @transform_4(%arg0: i32) -> (i32, i32, i32) {
    %c0_i32 = arith.constant 0 : i32
    %c0_i32_0 = arith.constant 0 : i32
    %c0_i32_1 = arith.constant 0 : i32
    %c0_i32_2 = arith.constant 0 : i32
    return %c0_i32, %c0_i32_0, %c0_i32_1 : i32, i32, i32
  }
}

module attributes {stable_mosaic.version = 11 : i64} {
  func.func @_deconv_bn_relu_kernel(%arg0: i32, %arg1: memref<1x32x512xbf16, #tpu.memory_space<vmem>>, %arg2: memref<1x512x128xbf16, #tpu.memory_space<vmem>>, %arg3: memref<1x128xf32, #tpu.memory_space<vmem>>, %arg4: memref<1x128xf32, #tpu.memory_space<vmem>>, %arg5: memref<4x32x128xf32, #tpu.memory_space<vmem>>, %arg6: memref<1x128xf32, #tpu.memory_space<vmem>>, %arg7: memref<1x128xf32, #tpu.memory_space<vmem>>) attributes {dimension_semantics = [#tpu.dimension_semantics<arbitrary>], iteration_bounds = array<i64: 4>, scalar_prefetch = 0 : i64, scratch_operands = 2 : i64, tpu.core_type = #tpu.core_type<tc>, window_params = [{transform_indices = @transform_0, window_bounds = array<i64: 1, 32, 512>}, {transform_indices = @transform_1, window_bounds = array<i64: 1, 512, 128>}, {pipeline_mode = #tpu.pipeline_mode<synchronous>, transform_indices = @transform_2, window_bounds = array<i64: 1, 128>}, {pipeline_mode = #tpu.pipeline_mode<synchronous>, transform_indices = @transform_3, window_bounds = array<i64: 1, 128>}, {pipeline_mode = #tpu.pipeline_mode<synchronous>, transform_indices = @transform_4, window_bounds = array<i64: 4, 32, 128>}]} {
    %c0_i32 = arith.constant 0 : i32
    %0 = arith.cmpi eq, %arg0, %c0_i32 : i32
    %1 = arith.extui %0 : i1 to i32
    %c0_i32_0 = arith.constant 0 : i32
    %2 = arith.cmpi ne, %1, %c0_i32_0 : i32
    scf.if %2 {
      %cst_19 = arith.constant 0.000000e+00 : f32
      %26 = vector.broadcast %cst_19 : f32 to vector<1x128xf32>
      %c0_20 = arith.constant 0 : index
      %c0_21 = arith.constant 0 : index
      %27 = vector.load %arg6[%c0_20, %c0_21] : memref<1x128xf32, #tpu.memory_space<vmem>>, vector<1x128xf32>
      tpu.vector_store %arg6[%c0_20, %c0_21], %26 {strides = array<i32>} : memref<1x128xf32, #tpu.memory_space<vmem>>, vector<1x128xf32>,
      %cst_22 = arith.constant 0.000000e+00 : f32
      %28 = vector.broadcast %cst_22 : f32 to vector<1x128xf32>
      %c0_23 = arith.constant 0 : index
      %c0_24 = arith.constant 0 : index
      %29 = vector.load %arg7[%c0_23, %c0_24] : memref<1x128xf32, #tpu.memory_space<vmem>>, vector<1x128xf32>
      tpu.vector_store %arg7[%c0_23, %c0_24], %28 {strides = array<i32>} : memref<1x128xf32, #tpu.memory_space<vmem>>, vector<1x128xf32>,
    } else {
    }
    %c0 = arith.constant 0 : index
    %c0_1 = arith.constant 0 : index
    %c0_2 = arith.constant 0 : index
    %3 = vector.load %arg1[%c0, %c0_1, %c0_2] : memref<1x32x512xbf16, #tpu.memory_space<vmem>>, vector<1x32x512xbf16>
    %4 = vector.shape_cast %3 : vector<1x32x512xbf16> to vector<32x512xbf16>
    %c0_3 = arith.constant 0 : index
    %c0_4 = arith.constant 0 : index
    %c0_5 = arith.constant 0 : index
    %5 = vector.load %arg2[%c0_3, %c0_4, %c0_5] : memref<1x512x128xbf16, #tpu.memory_space<vmem>>, vector<1x512x128xbf16>
    %6 = vector.shape_cast %5 : vector<1x512x128xbf16> to vector<512x128xbf16>
    %cst = arith.constant dense<0.000000e+00> : vector<32x128xf32>
    %7 = tpu.matmul %4, %6, %cst {dimension_numbers = #tpu.dot_dimension_numbers<[1], [0], [0], [1], [0, 0, 1, 1], [], []>} : vector<32x512xbf16>, vector<512x128xbf16>, vector<32x128xf32> -> vector<32x128xf32>
    %8 = arith.index_cast %arg0 : i32 to index
    %c0_6 = arith.constant 0 : index
    %c0_7 = arith.constant 0 : index
    %9 = vector.load %arg5[%8, %c0_6, %c0_7] : memref<4x32x128xf32, #tpu.memory_space<vmem>>, vector<1x32x128xf32>
    %10 = vector.shape_cast %9 : vector<1x32x128xf32> to vector<32x128xf32>
    %11 = vector.shape_cast %7 : vector<32x128xf32> to vector<1x32x128xf32>
    tpu.vector_store %arg5[%8, %c0_6, %c0_7], %11 {strides = array<i32>} : memref<4x32x128xf32, #tpu.memory_space<vmem>>, vector<1x32x128xf32>,
    %c0_8 = arith.constant 0 : index
    %c0_9 = arith.constant 0 : index
    %12 = vector.load %arg6[%c0_8, %c0_9] : memref<1x128xf32, #tpu.memory_space<vmem>>, vector<1x128xf32>
    %cst_10 = arith.constant dense<0.000000e+00> : vector<128xf32>
    %13 = vector.multi_reduction <add>, %7, %cst_10 [0] : vector<32x128xf32> to vector<128xf32>
    %14 = vector.shape_cast %13 : vector<128xf32> to vector<1x128xf32>
    %15 = arith.addf %12, %14 : vector<1x128xf32>
    %c0_11 = arith.constant 0 : index
    %c0_12 = arith.constant 0 : index
    %16 = vector.load %arg6[%c0_11, %c0_12] : memref<1x128xf32, #tpu.memory_space<vmem>>, vector<1x128xf32>
    tpu.vector_store %arg6[%c0_11, %c0_12], %15 {strides = array<i32>} : memref<1x128xf32, #tpu.memory_space<vmem>>, vector<1x128xf32>,
    %c0_13 = arith.constant 0 : index
    %c0_14 = arith.constant 0 : index
    %17 = vector.load %arg7[%c0_13, %c0_14] : memref<1x128xf32, #tpu.memory_space<vmem>>, vector<1x128xf32>
    %18 = arith.mulf %7, %7 : vector<32x128xf32>
    %cst_15 = arith.constant dense<0.000000e+00> : vector<128xf32>
    %19 = vector.multi_reduction <add>, %18, %cst_15 [0] : vector<32x128xf32> to vector<128xf32>
    %20 = vector.shape_cast %19 : vector<128xf32> to vector<1x128xf32>
    %21 = arith.addf %17, %20 : vector<1x128xf32>
    %c0_16 = arith.constant 0 : index
    %c0_17 = arith.constant 0 : index
    %22 = vector.load %arg7[%c0_16, %c0_17] : memref<1x128xf32, #tpu.memory_space<vmem>>, vector<1x128xf32>
    tpu.vector_store %arg7[%c0_16, %c0_17], %21 {strides = array<i32>} : memref<1x128xf32, #tpu.memory_space<vmem>>, vector<1x128xf32>,
    %c3_i32 = arith.constant 3 : i32
    %23 = arith.cmpi eq, %arg0, %c3_i32 : i32
    %24 = arith.extui %23 : i1 to i32
    %c0_i32_18 = arith.constant 0 : i32
    %25 = arith.cmpi ne, %24, %c0_i32_18 : i32
    scf.if %25 {
      %c0_19 = arith.constant 0 : index
      %c0_20 = arith.constant 0 : index
      %26 = vector.load %arg6[%c0_19, %c0_20] : memref<1x128xf32, #tpu.memory_space<vmem>>, vector<1x128xf32>
      %cst_21 = arith.constant 1.280000e+02 : f32
      %27 = vector.broadcast %cst_21 : f32 to vector<1x128xf32>
      %28 = arith.divf %26, %27 : vector<1x128xf32>
      %c0_22 = arith.constant 0 : index
      %c0_23 = arith.constant 0 : index
      %29 = vector.load %arg7[%c0_22, %c0_23] : memref<1x128xf32, #tpu.memory_space<vmem>>, vector<1x128xf32>
      %cst_24 = arith.constant 1.280000e+02 : f32
      %30 = vector.broadcast %cst_24 : f32 to vector<1x128xf32>
      %31 = arith.divf %29, %30 : vector<1x128xf32>
      %32 = arith.mulf %28, %28 : vector<1x128xf32>
      %33 = arith.subf %31, %32 : vector<1x128xf32>
      %c0_25 = arith.constant 0 : index
      %c0_26 = arith.constant 0 : index
      %34 = vector.load %arg3[%c0_25, %c0_26] : memref<1x128xf32, #tpu.memory_space<vmem>>, vector<1x128xf32>
      %cst_27 = arith.constant 9.99999974E-6 : f32
      %35 = vector.broadcast %cst_27 : f32 to vector<1x128xf32>
      %36 = arith.addf %33, %35 : vector<1x128xf32>
      %37 = math.rsqrt %36 : vector<1x128xf32>
      %38 = arith.mulf %34, %37 : vector<1x128xf32>
      %c0_28 = arith.constant 0 : index
      %c0_29 = arith.constant 0 : index
      %39 = vector.load %arg4[%c0_28, %c0_29] : memref<1x128xf32, #tpu.memory_space<vmem>>, vector<1x128xf32>
      %40 = arith.mulf %28, %38 : vector<1x128xf32>
      %41 = arith.subf %39, %40 : vector<1x128xf32>
      %c0_30 = arith.constant 0 : index
      %c0_31 = arith.constant 0 : index
      %c0_32 = arith.constant 0 : index
      %42 = vector.load %arg5[%c0_30, %c0_31, %c0_32] : memref<4x32x128xf32, #tpu.memory_space<vmem>>, vector<4x32x128xf32>
      %43 = vector.shape_cast %38 : vector<1x128xf32> to vector<1x1x128xf32>
      %44 = vector.broadcast %43 : vector<1x1x128xf32> to vector<4x32x128xf32>
      %45 = arith.mulf %42, %44 : vector<4x32x128xf32>
      %46 = vector.shape_cast %41 : vector<1x128xf32> to vector<1x1x128xf32>
      %47 = vector.broadcast %46 : vector<1x1x128xf32> to vector<4x32x128xf32>
      %48 = arith.addf %45, %47 : vector<4x32x128xf32>
      %cst_33 = arith.constant 0.000000e+00 : f32
      %49 = vector.broadcast %cst_33 : f32 to vector<4x32x128xf32>
      %50 = arith.maximumf %48, %49 : vector<4x32x128xf32>
      %c0_34 = arith.constant 0 : index
      %c0_35 = arith.constant 0 : index
      %c0_36 = arith.constant 0 : index
      %51 = vector.load %arg5[%c0_34, %c0_35, %c0_36] : memref<4x32x128xf32, #tpu.memory_space<vmem>>, vector<4x32x128xf32>
      tpu.vector_store %arg5[%c0_34, %c0_35, %c0_36], %50 {strides = array<i32>} : memref<4x32x128xf32, #tpu.memory_space<vmem>>, vector<4x32x128xf32>,
    } else {
    }
    return
  }
  func.func @transform_0(%arg0: i32) -> (i32, i32, i32) {
    %c0_i32 = arith.constant 0 : i32
    %c0_i32_0 = arith.constant 0 : i32
    %c0_i32_1 = arith.constant 0 : i32
    return %arg0, %c0_i32, %c0_i32_0 : i32, i32, i32
  }
  func.func @transform_1(%arg0: i32) -> (i32, i32, i32) {
    %c0_i32 = arith.constant 0 : i32
    %c0_i32_0 = arith.constant 0 : i32
    %c0_i32_1 = arith.constant 0 : i32
    return %arg0, %c0_i32, %c0_i32_0 : i32, i32, i32
  }
  func.func @transform_2(%arg0: i32) -> (i32, i32) {
    %c0_i32 = arith.constant 0 : i32
    %c0_i32_0 = arith.constant 0 : i32
    %c0_i32_1 = arith.constant 0 : i32
    return %c0_i32, %c0_i32_0 : i32, i32
  }
  func.func @transform_3(%arg0: i32) -> (i32, i32) {
    %c0_i32 = arith.constant 0 : i32
    %c0_i32_0 = arith.constant 0 : i32
    %c0_i32_1 = arith.constant 0 : i32
    return %c0_i32, %c0_i32_0 : i32, i32
  }
  func.func @transform_4(%arg0: i32) -> (i32, i32, i32) {
    %c0_i32 = arith.constant 0 : i32
    %c0_i32_0 = arith.constant 0 : i32
    %c0_i32_1 = arith.constant 0 : i32
    %c0_i32_2 = arith.constant 0 : i32
    return %c0_i32, %c0_i32_0, %c0_i32_1 : i32, i32, i32
  }
}

module attributes {stable_mosaic.version = 11 : i64} {
  func.func @_deconv_bn_relu_kernel(%arg0: i32, %arg1: memref<1x128x256xbf16, #tpu.memory_space<vmem>>, %arg2: memref<1x256x128xbf16, #tpu.memory_space<vmem>>, %arg3: memref<1x128xf32, #tpu.memory_space<vmem>>, %arg4: memref<1x128xf32, #tpu.memory_space<vmem>>, %arg5: memref<4x128x128xf32, #tpu.memory_space<vmem>>, %arg6: memref<1x128xf32, #tpu.memory_space<vmem>>, %arg7: memref<1x128xf32, #tpu.memory_space<vmem>>) attributes {dimension_semantics = [#tpu.dimension_semantics<arbitrary>], iteration_bounds = array<i64: 4>, scalar_prefetch = 0 : i64, scratch_operands = 2 : i64, tpu.core_type = #tpu.core_type<tc>, window_params = [{transform_indices = @transform_0, window_bounds = array<i64: 1, 128, 256>}, {transform_indices = @transform_1, window_bounds = array<i64: 1, 256, 128>}, {pipeline_mode = #tpu.pipeline_mode<synchronous>, transform_indices = @transform_2, window_bounds = array<i64: 1, 128>}, {pipeline_mode = #tpu.pipeline_mode<synchronous>, transform_indices = @transform_3, window_bounds = array<i64: 1, 128>}, {pipeline_mode = #tpu.pipeline_mode<synchronous>, transform_indices = @transform_4, window_bounds = array<i64: 4, 128, 128>}]} {
    %c0_i32 = arith.constant 0 : i32
    %0 = arith.cmpi eq, %arg0, %c0_i32 : i32
    %1 = arith.extui %0 : i1 to i32
    %c0_i32_0 = arith.constant 0 : i32
    %2 = arith.cmpi ne, %1, %c0_i32_0 : i32
    scf.if %2 {
      %cst_19 = arith.constant 0.000000e+00 : f32
      %26 = vector.broadcast %cst_19 : f32 to vector<1x128xf32>
      %c0_20 = arith.constant 0 : index
      %c0_21 = arith.constant 0 : index
      %27 = vector.load %arg6[%c0_20, %c0_21] : memref<1x128xf32, #tpu.memory_space<vmem>>, vector<1x128xf32>
      tpu.vector_store %arg6[%c0_20, %c0_21], %26 {strides = array<i32>} : memref<1x128xf32, #tpu.memory_space<vmem>>, vector<1x128xf32>,
      %cst_22 = arith.constant 0.000000e+00 : f32
      %28 = vector.broadcast %cst_22 : f32 to vector<1x128xf32>
      %c0_23 = arith.constant 0 : index
      %c0_24 = arith.constant 0 : index
      %29 = vector.load %arg7[%c0_23, %c0_24] : memref<1x128xf32, #tpu.memory_space<vmem>>, vector<1x128xf32>
      tpu.vector_store %arg7[%c0_23, %c0_24], %28 {strides = array<i32>} : memref<1x128xf32, #tpu.memory_space<vmem>>, vector<1x128xf32>,
    } else {
    }
    %c0 = arith.constant 0 : index
    %c0_1 = arith.constant 0 : index
    %c0_2 = arith.constant 0 : index
    %3 = vector.load %arg1[%c0, %c0_1, %c0_2] : memref<1x128x256xbf16, #tpu.memory_space<vmem>>, vector<1x128x256xbf16>
    %4 = vector.shape_cast %3 : vector<1x128x256xbf16> to vector<128x256xbf16>
    %c0_3 = arith.constant 0 : index
    %c0_4 = arith.constant 0 : index
    %c0_5 = arith.constant 0 : index
    %5 = vector.load %arg2[%c0_3, %c0_4, %c0_5] : memref<1x256x128xbf16, #tpu.memory_space<vmem>>, vector<1x256x128xbf16>
    %6 = vector.shape_cast %5 : vector<1x256x128xbf16> to vector<256x128xbf16>
    %cst = arith.constant dense<0.000000e+00> : vector<128x128xf32>
    %7 = tpu.matmul %4, %6, %cst {dimension_numbers = #tpu.dot_dimension_numbers<[1], [0], [0], [1], [0, 0, 1, 1], [], []>} : vector<128x256xbf16>, vector<256x128xbf16>, vector<128x128xf32> -> vector<128x128xf32>
    %8 = arith.index_cast %arg0 : i32 to index
    %c0_6 = arith.constant 0 : index
    %c0_7 = arith.constant 0 : index
    %9 = vector.load %arg5[%8, %c0_6, %c0_7] : memref<4x128x128xf32, #tpu.memory_space<vmem>>, vector<1x128x128xf32>
    %10 = vector.shape_cast %9 : vector<1x128x128xf32> to vector<128x128xf32>
    %11 = vector.shape_cast %7 : vector<128x128xf32> to vector<1x128x128xf32>
    tpu.vector_store %arg5[%8, %c0_6, %c0_7], %11 {strides = array<i32>} : memref<4x128x128xf32, #tpu.memory_space<vmem>>, vector<1x128x128xf32>,
    %c0_8 = arith.constant 0 : index
    %c0_9 = arith.constant 0 : index
    %12 = vector.load %arg6[%c0_8, %c0_9] : memref<1x128xf32, #tpu.memory_space<vmem>>, vector<1x128xf32>
    %cst_10 = arith.constant dense<0.000000e+00> : vector<128xf32>
    %13 = vector.multi_reduction <add>, %7, %cst_10 [0] : vector<128x128xf32> to vector<128xf32>
    %14 = vector.shape_cast %13 : vector<128xf32> to vector<1x128xf32>
    %15 = arith.addf %12, %14 : vector<1x128xf32>
    %c0_11 = arith.constant 0 : index
    %c0_12 = arith.constant 0 : index
    %16 = vector.load %arg6[%c0_11, %c0_12] : memref<1x128xf32, #tpu.memory_space<vmem>>, vector<1x128xf32>
    tpu.vector_store %arg6[%c0_11, %c0_12], %15 {strides = array<i32>} : memref<1x128xf32, #tpu.memory_space<vmem>>, vector<1x128xf32>,
    %c0_13 = arith.constant 0 : index
    %c0_14 = arith.constant 0 : index
    %17 = vector.load %arg7[%c0_13, %c0_14] : memref<1x128xf32, #tpu.memory_space<vmem>>, vector<1x128xf32>
    %18 = arith.mulf %7, %7 : vector<128x128xf32>
    %cst_15 = arith.constant dense<0.000000e+00> : vector<128xf32>
    %19 = vector.multi_reduction <add>, %18, %cst_15 [0] : vector<128x128xf32> to vector<128xf32>
    %20 = vector.shape_cast %19 : vector<128xf32> to vector<1x128xf32>
    %21 = arith.addf %17, %20 : vector<1x128xf32>
    %c0_16 = arith.constant 0 : index
    %c0_17 = arith.constant 0 : index
    %22 = vector.load %arg7[%c0_16, %c0_17] : memref<1x128xf32, #tpu.memory_space<vmem>>, vector<1x128xf32>
    tpu.vector_store %arg7[%c0_16, %c0_17], %21 {strides = array<i32>} : memref<1x128xf32, #tpu.memory_space<vmem>>, vector<1x128xf32>,
    %c3_i32 = arith.constant 3 : i32
    %23 = arith.cmpi eq, %arg0, %c3_i32 : i32
    %24 = arith.extui %23 : i1 to i32
    %c0_i32_18 = arith.constant 0 : i32
    %25 = arith.cmpi ne, %24, %c0_i32_18 : i32
    scf.if %25 {
      %c0_19 = arith.constant 0 : index
      %c0_20 = arith.constant 0 : index
      %26 = vector.load %arg6[%c0_19, %c0_20] : memref<1x128xf32, #tpu.memory_space<vmem>>, vector<1x128xf32>
      %cst_21 = arith.constant 5.120000e+02 : f32
      %27 = vector.broadcast %cst_21 : f32 to vector<1x128xf32>
      %28 = arith.divf %26, %27 : vector<1x128xf32>
      %c0_22 = arith.constant 0 : index
      %c0_23 = arith.constant 0 : index
      %29 = vector.load %arg7[%c0_22, %c0_23] : memref<1x128xf32, #tpu.memory_space<vmem>>, vector<1x128xf32>
      %cst_24 = arith.constant 5.120000e+02 : f32
      %30 = vector.broadcast %cst_24 : f32 to vector<1x128xf32>
      %31 = arith.divf %29, %30 : vector<1x128xf32>
      %32 = arith.mulf %28, %28 : vector<1x128xf32>
      %33 = arith.subf %31, %32 : vector<1x128xf32>
      %c0_25 = arith.constant 0 : index
      %c0_26 = arith.constant 0 : index
      %34 = vector.load %arg3[%c0_25, %c0_26] : memref<1x128xf32, #tpu.memory_space<vmem>>, vector<1x128xf32>
      %cst_27 = arith.constant 9.99999974E-6 : f32
      %35 = vector.broadcast %cst_27 : f32 to vector<1x128xf32>
      %36 = arith.addf %33, %35 : vector<1x128xf32>
      %37 = math.rsqrt %36 : vector<1x128xf32>
      %38 = arith.mulf %34, %37 : vector<1x128xf32>
      %c0_28 = arith.constant 0 : index
      %c0_29 = arith.constant 0 : index
      %39 = vector.load %arg4[%c0_28, %c0_29] : memref<1x128xf32, #tpu.memory_space<vmem>>, vector<1x128xf32>
      %40 = arith.mulf %28, %38 : vector<1x128xf32>
      %41 = arith.subf %39, %40 : vector<1x128xf32>
      %c0_30 = arith.constant 0 : index
      %c0_31 = arith.constant 0 : index
      %c0_32 = arith.constant 0 : index
      %42 = vector.load %arg5[%c0_30, %c0_31, %c0_32] : memref<4x128x128xf32, #tpu.memory_space<vmem>>, vector<4x128x128xf32>
      %43 = vector.shape_cast %38 : vector<1x128xf32> to vector<1x1x128xf32>
      %44 = vector.broadcast %43 : vector<1x1x128xf32> to vector<4x128x128xf32>
      %45 = arith.mulf %42, %44 : vector<4x128x128xf32>
      %46 = vector.shape_cast %41 : vector<1x128xf32> to vector<1x1x128xf32>
      %47 = vector.broadcast %46 : vector<1x1x128xf32> to vector<4x128x128xf32>
      %48 = arith.addf %45, %47 : vector<4x128x128xf32>
      %cst_33 = arith.constant 0.000000e+00 : f32
      %49 = vector.broadcast %cst_33 : f32 to vector<4x128x128xf32>
      %50 = arith.maximumf %48, %49 : vector<4x128x128xf32>
      %c0_34 = arith.constant 0 : index
      %c0_35 = arith.constant 0 : index
      %c0_36 = arith.constant 0 : index
      %51 = vector.load %arg5[%c0_34, %c0_35, %c0_36] : memref<4x128x128xf32, #tpu.memory_space<vmem>>, vector<4x128x128xf32>
      tpu.vector_store %arg5[%c0_34, %c0_35, %c0_36], %50 {strides = array<i32>} : memref<4x128x128xf32, #tpu.memory_space<vmem>>, vector<4x128x128xf32>,
    } else {
    }
    return
  }
  func.func @transform_0(%arg0: i32) -> (i32, i32, i32) {
    %c0_i32 = arith.constant 0 : i32
    %c0_i32_0 = arith.constant 0 : i32
    %c0_i32_1 = arith.constant 0 : i32
    return %arg0, %c0_i32, %c0_i32_0 : i32, i32, i32
  }
  func.func @transform_1(%arg0: i32) -> (i32, i32, i32) {
    %c0_i32 = arith.constant 0 : i32
    %c0_i32_0 = arith.constant 0 : i32
    %c0_i32_1 = arith.constant 0 : i32
    return %arg0, %c0_i32, %c0_i32_0 : i32, i32, i32
  }
  func.func @transform_2(%arg0: i32) -> (i32, i32) {
    %c0_i32 = arith.constant 0 : i32
    %c0_i32_0 = arith.constant 0 : i32
    %c0_i32_1 = arith.constant 0 : i32
    return %c0_i32, %c0_i32_0 : i32, i32
  }
  func.func @transform_3(%arg0: i32) -> (i32, i32) {
    %c0_i32 = arith.constant 0 : i32
    %c0_i32_0 = arith.constant 0 : i32
    %c0_i32_1 = arith.constant 0 : i32
    return %c0_i32, %c0_i32_0 : i32, i32
  }
  func.func @transform_4(%arg0: i32) -> (i32, i32, i32) {
    %c0_i32 = arith.constant 0 : i32
    %c0_i32_0 = arith.constant 0 : i32
    %c0_i32_1 = arith.constant 0 : i32
    %c0_i32_2 = arith.constant 0 : i32
    return %c0_i32, %c0_i32_0, %c0_i32_1 : i32, i32, i32
  }
}

module attributes {stable_mosaic.version = 11 : i64} {
  func.func @_deconv_bn_relu_kernel(%arg0: i32, %arg1: memref<1x512x128xbf16, #tpu.memory_space<vmem>>, %arg2: memref<1x128x128xbf16, #tpu.memory_space<vmem>>, %arg3: memref<1x128xf32, #tpu.memory_space<vmem>>, %arg4: memref<1x128xf32, #tpu.memory_space<vmem>>, %arg5: memref<4x512x128xf32, #tpu.memory_space<vmem>>, %arg6: memref<1x128xf32, #tpu.memory_space<vmem>>, %arg7: memref<1x128xf32, #tpu.memory_space<vmem>>) attributes {dimension_semantics = [#tpu.dimension_semantics<arbitrary>], iteration_bounds = array<i64: 4>, scalar_prefetch = 0 : i64, scratch_operands = 2 : i64, tpu.core_type = #tpu.core_type<tc>, window_params = [{transform_indices = @transform_0, window_bounds = array<i64: 1, 512, 128>}, {transform_indices = @transform_1, window_bounds = array<i64: 1, 128, 128>}, {pipeline_mode = #tpu.pipeline_mode<synchronous>, transform_indices = @transform_2, window_bounds = array<i64: 1, 128>}, {pipeline_mode = #tpu.pipeline_mode<synchronous>, transform_indices = @transform_3, window_bounds = array<i64: 1, 128>}, {pipeline_mode = #tpu.pipeline_mode<synchronous>, transform_indices = @transform_4, window_bounds = array<i64: 4, 512, 128>}]} {
    %c0_i32 = arith.constant 0 : i32
    %0 = arith.cmpi eq, %arg0, %c0_i32 : i32
    %1 = arith.extui %0 : i1 to i32
    %c0_i32_0 = arith.constant 0 : i32
    %2 = arith.cmpi ne, %1, %c0_i32_0 : i32
    scf.if %2 {
      %cst_19 = arith.constant 0.000000e+00 : f32
      %26 = vector.broadcast %cst_19 : f32 to vector<1x128xf32>
      %c0_20 = arith.constant 0 : index
      %c0_21 = arith.constant 0 : index
      %27 = vector.load %arg6[%c0_20, %c0_21] : memref<1x128xf32, #tpu.memory_space<vmem>>, vector<1x128xf32>
      tpu.vector_store %arg6[%c0_20, %c0_21], %26 {strides = array<i32>} : memref<1x128xf32, #tpu.memory_space<vmem>>, vector<1x128xf32>,
      %cst_22 = arith.constant 0.000000e+00 : f32
      %28 = vector.broadcast %cst_22 : f32 to vector<1x128xf32>
      %c0_23 = arith.constant 0 : index
      %c0_24 = arith.constant 0 : index
      %29 = vector.load %arg7[%c0_23, %c0_24] : memref<1x128xf32, #tpu.memory_space<vmem>>, vector<1x128xf32>
      tpu.vector_store %arg7[%c0_23, %c0_24], %28 {strides = array<i32>} : memref<1x128xf32, #tpu.memory_space<vmem>>, vector<1x128xf32>,
    } else {
    }
    %c0 = arith.constant 0 : index
    %c0_1 = arith.constant 0 : index
    %c0_2 = arith.constant 0 : index
    %3 = vector.load %arg1[%c0, %c0_1, %c0_2] : memref<1x512x128xbf16, #tpu.memory_space<vmem>>, vector<1x512x128xbf16>
    %4 = vector.shape_cast %3 : vector<1x512x128xbf16> to vector<512x128xbf16>
    %c0_3 = arith.constant 0 : index
    %c0_4 = arith.constant 0 : index
    %c0_5 = arith.constant 0 : index
    %5 = vector.load %arg2[%c0_3, %c0_4, %c0_5] : memref<1x128x128xbf16, #tpu.memory_space<vmem>>, vector<1x128x128xbf16>
    %6 = vector.shape_cast %5 : vector<1x128x128xbf16> to vector<128x128xbf16>
    %cst = arith.constant dense<0.000000e+00> : vector<512x128xf32>
    %7 = tpu.matmul %4, %6, %cst {dimension_numbers = #tpu.dot_dimension_numbers<[1], [0], [0], [1], [0, 0, 1, 1], [], []>} : vector<512x128xbf16>, vector<128x128xbf16>, vector<512x128xf32> -> vector<512x128xf32>
    %8 = arith.index_cast %arg0 : i32 to index
    %c0_6 = arith.constant 0 : index
    %c0_7 = arith.constant 0 : index
    %9 = vector.load %arg5[%8, %c0_6, %c0_7] : memref<4x512x128xf32, #tpu.memory_space<vmem>>, vector<1x512x128xf32>
    %10 = vector.shape_cast %9 : vector<1x512x128xf32> to vector<512x128xf32>
    %11 = vector.shape_cast %7 : vector<512x128xf32> to vector<1x512x128xf32>
    tpu.vector_store %arg5[%8, %c0_6, %c0_7], %11 {strides = array<i32>} : memref<4x512x128xf32, #tpu.memory_space<vmem>>, vector<1x512x128xf32>,
    %c0_8 = arith.constant 0 : index
    %c0_9 = arith.constant 0 : index
    %12 = vector.load %arg6[%c0_8, %c0_9] : memref<1x128xf32, #tpu.memory_space<vmem>>, vector<1x128xf32>
    %cst_10 = arith.constant dense<0.000000e+00> : vector<128xf32>
    %13 = vector.multi_reduction <add>, %7, %cst_10 [0] : vector<512x128xf32> to vector<128xf32>
    %14 = vector.shape_cast %13 : vector<128xf32> to vector<1x128xf32>
    %15 = arith.addf %12, %14 : vector<1x128xf32>
    %c0_11 = arith.constant 0 : index
    %c0_12 = arith.constant 0 : index
    %16 = vector.load %arg6[%c0_11, %c0_12] : memref<1x128xf32, #tpu.memory_space<vmem>>, vector<1x128xf32>
    tpu.vector_store %arg6[%c0_11, %c0_12], %15 {strides = array<i32>} : memref<1x128xf32, #tpu.memory_space<vmem>>, vector<1x128xf32>,
    %c0_13 = arith.constant 0 : index
    %c0_14 = arith.constant 0 : index
    %17 = vector.load %arg7[%c0_13, %c0_14] : memref<1x128xf32, #tpu.memory_space<vmem>>, vector<1x128xf32>
    %18 = arith.mulf %7, %7 : vector<512x128xf32>
    %cst_15 = arith.constant dense<0.000000e+00> : vector<128xf32>
    %19 = vector.multi_reduction <add>, %18, %cst_15 [0] : vector<512x128xf32> to vector<128xf32>
    %20 = vector.shape_cast %19 : vector<128xf32> to vector<1x128xf32>
    %21 = arith.addf %17, %20 : vector<1x128xf32>
    %c0_16 = arith.constant 0 : index
    %c0_17 = arith.constant 0 : index
    %22 = vector.load %arg7[%c0_16, %c0_17] : memref<1x128xf32, #tpu.memory_space<vmem>>, vector<1x128xf32>
    tpu.vector_store %arg7[%c0_16, %c0_17], %21 {strides = array<i32>} : memref<1x128xf32, #tpu.memory_space<vmem>>, vector<1x128xf32>,
    %c3_i32 = arith.constant 3 : i32
    %23 = arith.cmpi eq, %arg0, %c3_i32 : i32
    %24 = arith.extui %23 : i1 to i32
    %c0_i32_18 = arith.constant 0 : i32
    %25 = arith.cmpi ne, %24, %c0_i32_18 : i32
    scf.if %25 {
      %c0_19 = arith.constant 0 : index
      %c0_20 = arith.constant 0 : index
      %26 = vector.load %arg6[%c0_19, %c0_20] : memref<1x128xf32, #tpu.memory_space<vmem>>, vector<1x128xf32>
      %cst_21 = arith.constant 2.048000e+03 : f32
      %27 = vector.broadcast %cst_21 : f32 to vector<1x128xf32>
      %28 = arith.divf %26, %27 : vector<1x128xf32>
      %c0_22 = arith.constant 0 : index
      %c0_23 = arith.constant 0 : index
      %29 = vector.load %arg7[%c0_22, %c0_23] : memref<1x128xf32, #tpu.memory_space<vmem>>, vector<1x128xf32>
      %cst_24 = arith.constant 2.048000e+03 : f32
      %30 = vector.broadcast %cst_24 : f32 to vector<1x128xf32>
      %31 = arith.divf %29, %30 : vector<1x128xf32>
      %32 = arith.mulf %28, %28 : vector<1x128xf32>
      %33 = arith.subf %31, %32 : vector<1x128xf32>
      %c0_25 = arith.constant 0 : index
      %c0_26 = arith.constant 0 : index
      %34 = vector.load %arg3[%c0_25, %c0_26] : memref<1x128xf32, #tpu.memory_space<vmem>>, vector<1x128xf32>
      %cst_27 = arith.constant 9.99999974E-6 : f32
      %35 = vector.broadcast %cst_27 : f32 to vector<1x128xf32>
      %36 = arith.addf %33, %35 : vector<1x128xf32>
      %37 = math.rsqrt %36 : vector<1x128xf32>
      %38 = arith.mulf %34, %37 : vector<1x128xf32>
      %c0_28 = arith.constant 0 : index
      %c0_29 = arith.constant 0 : index
      %39 = vector.load %arg4[%c0_28, %c0_29] : memref<1x128xf32, #tpu.memory_space<vmem>>, vector<1x128xf32>
      %40 = arith.mulf %28, %38 : vector<1x128xf32>
      %41 = arith.subf %39, %40 : vector<1x128xf32>
      %c0_30 = arith.constant 0 : index
      %c0_31 = arith.constant 0 : index
      %c0_32 = arith.constant 0 : index
      %42 = vector.load %arg5[%c0_30, %c0_31, %c0_32] : memref<4x512x128xf32, #tpu.memory_space<vmem>>, vector<4x512x128xf32>
      %43 = vector.shape_cast %38 : vector<1x128xf32> to vector<1x1x128xf32>
      %44 = vector.broadcast %43 : vector<1x1x128xf32> to vector<4x512x128xf32>
      %45 = arith.mulf %42, %44 : vector<4x512x128xf32>
      %46 = vector.shape_cast %41 : vector<1x128xf32> to vector<1x1x128xf32>
      %47 = vector.broadcast %46 : vector<1x1x128xf32> to vector<4x512x128xf32>
      %48 = arith.addf %45, %47 : vector<4x512x128xf32>
      %cst_33 = arith.constant 0.000000e+00 : f32
      %49 = vector.broadcast %cst_33 : f32 to vector<4x512x128xf32>
      %50 = arith.maximumf %48, %49 : vector<4x512x128xf32>
      %c0_34 = arith.constant 0 : index
      %c0_35 = arith.constant 0 : index
      %c0_36 = arith.constant 0 : index
      %51 = vector.load %arg5[%c0_34, %c0_35, %c0_36] : memref<4x512x128xf32, #tpu.memory_space<vmem>>, vector<4x512x128xf32>
      tpu.vector_store %arg5[%c0_34, %c0_35, %c0_36], %50 {strides = array<i32>} : memref<4x512x128xf32, #tpu.memory_space<vmem>>, vector<4x512x128xf32>,
    } else {
    }
    return
  }
  func.func @transform_0(%arg0: i32) -> (i32, i32, i32) {
    %c0_i32 = arith.constant 0 : i32
    %c0_i32_0 = arith.constant 0 : i32
    %c0_i32_1 = arith.constant 0 : i32
    return %arg0, %c0_i32, %c0_i32_0 : i32, i32, i32
  }
  func.func @transform_1(%arg0: i32) -> (i32, i32, i32) {
    %c0_i32 = arith.constant 0 : i32
    %c0_i32_0 = arith.constant 0 : i32
    %c0_i32_1 = arith.constant 0 : i32
    return %arg0, %c0_i32, %c0_i32_0 : i32, i32, i32
  }
  func.func @transform_2(%arg0: i32) -> (i32, i32) {
    %c0_i32 = arith.constant 0 : i32
    %c0_i32_0 = arith.constant 0 : i32
    %c0_i32_1 = arith.constant 0 : i32
    return %c0_i32, %c0_i32_0 : i32, i32
  }
  func.func @transform_3(%arg0: i32) -> (i32, i32) {
    %c0_i32 = arith.constant 0 : i32
    %c0_i32_0 = arith.constant 0 : i32
    %c0_i32_1 = arith.constant 0 : i32
    return %c0_i32, %c0_i32_0 : i32, i32
  }
  func.func @transform_4(%arg0: i32) -> (i32, i32, i32) {
    %c0_i32 = arith.constant 0 : i32
    %c0_i32_0 = arith.constant 0 : i32
    %c0_i32_1 = arith.constant 0 : i32
    %c0_i32_2 = arith.constant 0 : i32
    return %c0_i32, %c0_i32_0, %c0_i32_1 : i32, i32, i32
  }
}

module attributes {stable_mosaic.version = 11 : i64} {
  func.func @_deconv_bias_tanh_kernel(%arg0: i32, %arg1: i32, %arg2: memref<1x1024x64xbf16, #tpu.memory_space<vmem>>, %arg3: memref<1x64x128xbf16, #tpu.memory_space<vmem>>, %arg4: memref<1x128xf32, #tpu.memory_space<vmem>>, %arg5: memref<1x1024x128xf32, #tpu.memory_space<vmem>>) attributes {dimension_semantics = [#tpu.dimension_semantics<parallel>, #tpu.dimension_semantics<parallel>], iteration_bounds = array<i64: 4, 2>, scalar_prefetch = 0 : i64, scratch_operands = 0 : i64, tpu.core_type = #tpu.core_type<tc>, window_params = [{transform_indices = @transform_0, window_bounds = array<i64: 1, 1024, 64>}, {transform_indices = @transform_1, window_bounds = array<i64: 1, 64, 128>}, {pipeline_mode = #tpu.pipeline_mode<synchronous>, transform_indices = @transform_2, window_bounds = array<i64: 1, 128>}, {transform_indices = @transform_3, window_bounds = array<i64: 1, 1024, 128>}]} {
    %c0 = arith.constant 0 : index
    %c0_0 = arith.constant 0 : index
    %c0_1 = arith.constant 0 : index
    %0 = vector.load %arg2[%c0, %c0_0, %c0_1] : memref<1x1024x64xbf16, #tpu.memory_space<vmem>>, vector<1x1024x64xbf16>
    %1 = vector.shape_cast %0 : vector<1x1024x64xbf16> to vector<1024x64xbf16>
    %c0_2 = arith.constant 0 : index
    %c0_3 = arith.constant 0 : index
    %c0_4 = arith.constant 0 : index
    %2 = vector.load %arg3[%c0_2, %c0_3, %c0_4] : memref<1x64x128xbf16, #tpu.memory_space<vmem>>, vector<1x64x128xbf16>
    %3 = vector.shape_cast %2 : vector<1x64x128xbf16> to vector<64x128xbf16>
    %cst = arith.constant dense<0.000000e+00> : vector<1024x128xf32>
    %4 = tpu.matmul %1, %3, %cst {dimension_numbers = #tpu.dot_dimension_numbers<[1], [0], [0], [1], [0, 0, 1, 1], [], []>} : vector<1024x64xbf16>, vector<64x128xbf16>, vector<1024x128xf32> -> vector<1024x128xf32>
    %c0_5 = arith.constant 0 : index
    %c0_6 = arith.constant 0 : index
    %5 = vector.load %arg4[%c0_5, %c0_6] : memref<1x128xf32, #tpu.memory_space<vmem>>, vector<1x128xf32>
    %6 = vector.broadcast %5 : vector<1x128xf32> to vector<1024x128xf32>
    %7 = arith.addf %4, %6 : vector<1024x128xf32>
    %8 = math.tanh %7 : vector<1024x128xf32>
    %c0_7 = arith.constant 0 : index
    %c0_8 = arith.constant 0 : index
    %c0_9 = arith.constant 0 : index
    %9 = vector.load %arg5[%c0_7, %c0_8, %c0_9] : memref<1x1024x128xf32, #tpu.memory_space<vmem>>, vector<1x1024x128xf32>
    %10 = vector.shape_cast %9 : vector<1x1024x128xf32> to vector<1024x128xf32>
    %11 = vector.shape_cast %8 : vector<1024x128xf32> to vector<1x1024x128xf32>
    tpu.vector_store %arg5[%c0_7, %c0_8, %c0_9], %11 {strides = array<i32>} : memref<1x1024x128xf32, #tpu.memory_space<vmem>>, vector<1x1024x128xf32>,
    return
  }
  func.func @transform_0(%arg0: i32, %arg1: i32) -> (i32, i32, i32) {
    %c0_i32 = arith.constant 0 : i32
    %c0_i32_0 = arith.constant 0 : i32
    return %arg0, %arg1, %c0_i32 : i32, i32, i32
  }
  func.func @transform_1(%arg0: i32, %arg1: i32) -> (i32, i32, i32) {
    %c0_i32 = arith.constant 0 : i32
    %c0_i32_0 = arith.constant 0 : i32
    %c0_i32_1 = arith.constant 0 : i32
    return %arg0, %c0_i32, %c0_i32_0 : i32, i32, i32
  }
  func.func @transform_2(%arg0: i32, %arg1: i32) -> (i32, i32) {
    %c0_i32 = arith.constant 0 : i32
    %c0_i32_0 = arith.constant 0 : i32
    %c0_i32_1 = arith.constant 0 : i32
    return %c0_i32, %c0_i32_0 : i32, i32
  }
  func.func @transform_3(%arg0: i32, %arg1: i32) -> (i32, i32, i32) {
    %c0_i32 = arith.constant 0 : i32
    %c0_i32_0 = arith.constant 0 : i32
    return %arg0, %arg1, %c0_i32 : i32, i32, i32
  }
}

</mosaic_0001>

<llo_original>
// kernel: generator_forward.5
$region0: #{generator_forward.5}
  #allocation0 [shape = 'u32[]', space=smem, size = 0x4, offset = 0x4, fixed_abs, tag = 'smem constant byte address 0x4 - core index']
  #allocation1 [shape = 'u32[144,128]{1,0:T(1,128)}', space=vmem, size = 0x12000, scoped, tag = 'internal scratch']
  #allocation2 [shape = 'f32[1,128]{1,0:T(1,128)}', space=vmem, size = 0x200, scoped, tag = 'scratch operand']
  #allocation3 [shape = 'f32[1,128]{1,0:T(1,128)}', space=vmem, size = 0x200, scoped, tag = 'scratch operand']
  %s0 = inlined_call_operand.vmem [shape: bf16[1,2,64], index: 0, kind: input, shape index: {}]
  %s1 = inlined_call_operand.vmem [shape: bf16[16,64,128], index: 1, kind: input, shape index: {}]
  %s2 = inlined_call_operand.vmem [shape: f32[1,128], index: 2, kind: input, shape index: {}]
  %s3 = inlined_call_operand.vmem [shape: f32[1,128], index: 3, kind: input, shape index: {}]
  %s4 = inlined_call_operand.vmem [shape: f32[16,2,128], index: 4, kind: output, shape index: {}]
  %s5 = sld [smem:[#allocation0]]
  $region57: #{generator_forward.5} parent=0
    _
  %s7 = ssub.s32 1, %s5
  %s8 = scalar_select 0, %s7, %s5
  loop: start=0, step=1, limit=18
  $region2: #{generator_forward.5} parent=0 // loop_pre_header
    _
  $region3: #{generator_forward.5} parent=0 // loop_header
    %s10 = sphi 0, %s14
    %p11 = scmp.ge.s32.totalorder %s10, 18
    %s18 = sphi 0, %s18
    %s20 = sphi 0, %s18
    %s21 = sphi 0, %s20
    %s35 = sphi 0, %s21
    %s41 = sphi 0, %s43
    %s44 = sphi 0, %s41
    %s45 = sphi 0, %s44
    %s61 = sphi 0, %s45
    %s65 = sphi 0, %s65
    %s67 = sphi 0, %s65
    %s68 = sphi 0, %s67
    %s82 = sphi 0, %s68
    %s86 = sphi 0, %s86
    %s88 = sphi 0, %s86
    %s89 = sphi 0, %s88
    %s103 = sphi 0, %s89
    %s107 = sphi 0, %s107
    %s109 = sphi 0, %s107
    %s110 = sphi 0, %s109
    %s124 = sphi 0, %s110
  $region4: #{generator_forward.5} parent=0 // loop_header_branch
    %13 = sbr.rel (%p11) target = $region8
  $region5: #{generator_forward.5} parent=0 // loop_body
    %s15 = ssub.s32 %s10, 1
    %s16 = ssub.s32 %s10, 2
    %s17 = sadd.s32 %s10, 1
    %s19 = sadd.s32 %s18, 1
    %p22 = scmp.eq.s32.totalorder %s10, 15
    %p23 = scmp.ne.s32.totalorder %s18, %s20
    %p24 = scmp.eq.s32.totalorder %s10, 0
    %p25 = por %p23, %p24
    %p26 = scmp.ne.s32.totalorder %s18, %s20
    %p27 = scmp.eq.s32.totalorder %s15, 15
    %p28 = por %p26, %p27
    %p29 = scmp.ne.s32.totalorder %s20, %s21
    %p30 = scmp.eq.s32.totalorder %s15, 0
    %p31 = por %p29, %p30
    %p32 = scmp.ne.s32.totalorder %s20, %s21
    %p33 = scmp.eq.s32.totalorder %s16, 15
    %p34 = por %p32, %p33
    %p36 = scmp.ne.s32.totalorder %s21, %s35
    %p37 = scmp.eq.s32.totalorder %s16, 0
    %p38 = por %p36, %p37
    %s39 = ssub.s32 %s10, %s17
    %p40 = scmp.eq.s32.totalorder %s39, 0
    %s42 = sadd.s32 %s41, 1
    %s43 = scalar_select %p40, %s41, %s42
    %p46 = pneg %p40
    %p47 = scmp.eq.s32.totalorder %s10, 15
    %p48 = por %p46, %p47
    %p49 = scmp.ne.s32.totalorder %s41, %s44
    %p50 = scmp.eq.s32.totalorder %s10, 0
    %p51 = por %p49, %p50
    %p52 = scmp.ne.s32.totalorder %s41, %s44
    %p53 = scmp.eq.s32.totalorder %s15, 15
    %p54 = por %p52, %p53
    %p55 = scmp.ne.s32.totalorder %s44, %s45
    %p56 = scmp.eq.s32.totalorder %s15, 0
    %p57 = por %p55, %p56
    %p58 = scmp.ne.s32.totalorder %s44, %s45
    %p59 = scmp.eq.s32.totalorder %s16, 15
    %p60 = por %p58, %p59
    %p62 = scmp.ne.s32.totalorder %s45, %s61
    %p63 = scmp.eq.s32.totalorder %s16, 0
    %p64 = por %p62, %p63
    %s66 = sadd.s32 %s65, 1
    %p69 = scmp.eq.s32.totalorder %s10, 15
    %p70 = scmp.ne.s32.totalorder %s65, %s67
    %p71 = scmp.eq.s32.totalorder %s10, 0
    %p72 = por %p70, %p71
    %p73 = scmp.ne.s32.totalorder %s65, %s67
    %p74 = scmp.eq.s32.totalorder %s15, 15
    %p75 = por %p73, %p74
    %p76 = scmp.ne.s32.totalorder %s67, %s68
    %p77 = scmp.eq.s32.totalorder %s15, 0
    %p78 = por %p76, %p77
    %p79 = scmp.ne.s32.totalorder %s67, %s68
    %p80 = scmp.eq.s32.totalorder %s16, 15
    %p81 = por %p79, %p80
    %p83 = scmp.ne.s32.totalorder %s68, %s82
    %p84 = scmp.eq.s32.totalorder %s16, 0
    %p85 = por %p83, %p84
    %s87 = sadd.s32 %s86, 1
    %p90 = scmp.eq.s32.totalorder %s10, 15
    %p91 = scmp.ne.s32.totalorder %s86, %s88
    %p92 = scmp.eq.s32.totalorder %s10, 0
    %p93 = por %p91, %p92
    %p94 = scmp.ne.s32.totalorder %s86, %s88
    %p95 = scmp.eq.s32.totalorder %s15, 15
    %p96 = por %p94, %p95
    %p97 = scmp.ne.s32.totalorder %s88, %s89
    %p98 = scmp.eq.s32.totalorder %s15, 0
    %p99 = por %p97, %p98
    %p100 = scmp.ne.s32.totalorder %s88, %s89
    %p101 = scmp.eq.s32.totalorder %s16, 15
    %p102 = por %p100, %p101
    %p104 = scmp.ne.s32.totalorder %s89, %s103
    %p105 = scmp.eq.s32.totalorder %s16, 0
    %p106 = por %p104, %p105
    %s108 = sadd.s32 %s107, 1
    %p111 = scmp.eq.s32.totalorder %s10, 15
    %p112 = scmp.ne.s32.totalorder %s107, %s109
    %p113 = scmp.eq.s32.totalorder %s10, 0
    %p114 = por %p112, %p113
    %p115 = scmp.ne.s32.totalorder %s107, %s109
    %p116 = scmp.eq.s32.totalorder %s15, 15
    %p117 = por %p115, %p116
    %p118 = scmp.ne.s32.totalorder %s109, %s110
    %p119 = scmp.eq.s32.totalorder %s15, 0
    %p120 = por %p118, %p119
    %p121 = scmp.ne.s32.totalorder %s109, %s110
    %p122 = scmp.eq.s32.totalorder %s16, 15
    %p123 = por %p121, %p122
    %p125 = scmp.ne.s32.totalorder %s110, %s124
    %p126 = scmp.eq.s32.totalorder %s16, 0
    %p127 = por %p125, %p126
    %p128 = scmp.le.s32.totalorder 1, %s10
    %p129 = scmp.lt.s32.totalorder %s10, 17
    %p130 = pnand %p128, %p129
    %p131 = pneg %p130
    // Predicated region
    $region9: #{generator_forward.5} parent=5 // pred_check
      _
    $region10: #{generator_forward.5} parent=5 // pred_check_branch
      %133 = sbr.rel (%p130) target = $region12
    $region11: #{generator_forward.5} parent=5 // pred_region
      %s134 = ssub.s32 %s10, 1
      // Predicated region
      $region13: #{generator_forward.5} parent=11 // pred_check
        %p135 = pneg %p31
      $region14: #{generator_forward.5} parent=11 // pred_check_branch
        %137 = sbr.rel (%p135) target = $region16
      $region15: #{generator_forward.5} parent=11 // pred_region
        _
      $region16: #{generator_forward.5} parent=11 // pred_fallthru
        _
      // Predicated region
      $region17: #{generator_forward.5} parent=11 // pred_check
        %p138 = pneg %p78
      $region18: #{generator_forward.5} parent=11 // pred_check_branch
        %140 = sbr.rel (%p138) target = $region20
      $region19: #{generator_forward.5} parent=11 // pred_region
        _
      $region20: #{generator_forward.5} parent=11 // pred_fallthru
        _
      // Predicated region
      $region21: #{generator_forward.5} parent=11 // pred_check
        %p141 = pneg %p99
      $region22: #{generator_forward.5} parent=11 // pred_check_branch
        %143 = sbr.rel (%p141) target = $region24
      $region23: #{generator_forward.5} parent=11 // pred_region
        _
      $region24: #{generator_forward.5} parent=11 // pred_fallthru
        _
    $region12: #{generator_forward.5} parent=5 // pred_fallthru
      _
    %p144 = scmp.lt.s32.totalorder %s10, 16
    // Predicated region
    $region25: #{generator_forward.5} parent=5 // pred_check
      %p145 = pneg %p144
    $region26: #{generator_forward.5} parent=5 // pred_check_branch
      %147 = sbr.rel (%p145) target = $region28
    $region27: #{generator_forward.5} parent=5 // pred_region
      // Predicated region
      $region29: #{generator_forward.5} parent=27 // pred_check
        %p148 = pneg %p51
      $region30: #{generator_forward.5} parent=27 // pred_check_branch
        %150 = sbr.rel (%p148) target = $region32
      $region31: #{generator_forward.5} parent=27 // pred_region
        %p151 = scmp.lt.s32.totalorder %s10, 15
        %s152 = scalar_select %p151, %s10, 15
        %s153 = smul.addr %s152, 8
        %s154 = smul.addr %s153, 4
        %s155 = scalar_lea.vmem %s1, %s154
      $region32: #{generator_forward.5} parent=27 // pred_fallthru
        _
    $region28: #{generator_forward.5} parent=5 // pred_fallthru
      _
    %p156 = scmp.le.s32.totalorder 1, %s10
    %p157 = scmp.lt.s32.totalorder %s10, 17
    %p158 = pnand %p156, %p157
    %p159 = pneg %p158
    // Predicated region
    $region33: #{generator_forward.5} parent=5 // pred_check
      _
    $region34: #{generator_forward.5} parent=5 // pred_check_branch
      %161 = sbr.rel (%p158) target = $region36
    $region35: #{generator_forward.5} parent=5 // pred_region
      %s162 = ssub.s32 %s10, 1
      %p163 = pneg %p31
      %p164 = pneg %p28
      %p165 = scmp.lt.s32.totalorder %s15, 15
      %s166 = scalar_select %p165, %s15, 15
      %s167 = smul.addr %s166, 8
      %s168 = smul.addr %s167, 4
      %s169 = scalar_lea.vmem %s1, %s168
      %p170 = pneg %p57
      %p171 = pneg %p54
      %p172 = pneg %p78
      %p173 = pneg %p75
      %p174 = pneg %p99
      %p175 = pneg %p96
      %p176 = pneg %p120
      %p177 = pneg %p117
      %p178 = scmp.lt.s32.totalorder %s15, 15
      %s179 = scalar_select %p178, %s15, 15
      %s180 = smul.addr %s179, 8
      %s181 = smul.addr %s180, 4
      %s182 = scalar_lea.vmem %s1, %s181
      %p184 = scmp.eq.s32.totalorder %s15, 0
      // Predicated region
      $region37: #{generator_forward.5} parent=35 // pred_check
        %p185 = pneg %p184
      $region38: #{generator_forward.5} parent=35 // pred_check_branch
        %187 = sbr.rel (%p185) target = $region40
      $region39: #{generator_forward.5} parent=35 // pred_region
        %188 = vst [vmem:[#allocation2] sm:$0x1] 0.0
        %189 = vst [vmem:[#allocation3] sm:$0x1] 0.0
      $region40: #{generator_forward.5} parent=35 // pred_fallthru
        _
      %v190 = vld [vmem:[%s0] sm:$0x1]
      %v191 = vld [vmem:[%s182] sm:$0xf]
      %v192 = vld [vmem:[%s182 + $0x4] sm:$0xf]
      %v193 = vld [vmem:[%s182 + $0x8] sm:$0xf]
      %v194 = vld [vmem:[%s182 + $0xc] sm:$0xf]
      %v195 = vld [vmem:[%s182 + $0x10] sm:$0xf]
      %v196 = vld [vmem:[%s182 + $0x14] sm:$0xf]
      %v197 = vld [vmem:[%s182 + $0x18] sm:$0xf]
      %v198 = vld [vmem:[%s182 + $0x1c] sm:$0xf]
      %v207 = vunpack.c.l.b16 %v191
      %v208 = vunpack.c.l.b16 %v192
      %v209 = vunpack.c.l.b16 %v193
      %v210 = vunpack.c.l.b16 %v194
      %v211 = vunpack.c.l.b16 %v195
      %v212 = vunpack.c.l.b16 %v196
      %v213 = vunpack.c.l.b16 %v197
      %v214 = vunpack.c.l.b16 %v198
      %v215 = vpack.c.b16 %v208, %v207
      %v216 = vpack.c.b16 %v210, %v209
      %v217 = vpack.c.b16 %v212, %v211
      %v218 = vpack.c.b16 %v214, %v213
      %vm223 = vcmask 523264
      %v225 = vsel %vm223, %v190, 0
      %227 = vmatprep.subr.bf16.mxu0 0
      %228 = vmatpush1.bf16.msra.mxu0 0
      %229 = vmatprep.subr.bf16.mxu0 0
      %230 = vmatpush1.bf16.msra.mxu0 0
      %231 = vmatprep.subr.bf16.mxu0 0
      %232 = vmatpush1.bf16.msra.mxu0 0
      %233 = vmatprep.subr.bf16.mxu0 0
      %234 = vmatpush1.bf16.msra.mxu0 0
      %235 = vmatprep.subr.bf16.mxu0 0
      %236 = vmatpush1.bf16.msra.mxu0 %v218
      %237 = vmatprep.subr.bf16.mxu0 0
      %238 = vmatpush1.bf16.msra.mxu0 %v217
      %239 = vmatprep.subr.bf16.mxu0 0
      %240 = vmatpush1.bf16.msra.mxu0 %v216
      %241 = vmatprep.subr.bf16.mxu0 0
      %242 = vmatpush1.bf16.msra.mxu0 %v215
      %243 = vmatprep.subr.bf16.mxu0 0
      %244 = vmatpush2.bf16.msra.mxu0 0
      %245 = vmatprep.subr.bf16.mxu0 0
      %246 = vmatpush2.bf16.msra.mxu0 0
      %247 = vmatprep.subr.bf16.mxu0 0
      %248 = vmatpush2.bf16.msra.mxu0 0
      %249 = vmatprep.subr.bf16.mxu0 0
      %250 = vmatpush2.bf16.msra.mxu0 0
      %251 = vmatprep.subr.bf16.mxu0 0
      %252 = vmatpush2.bf16.msra.mxu0 0
      %253 = vmatprep.subr.bf16.mxu0 0
      %254 = vmatpush2.bf16.msra.mxu0 0
      %255 = vmatprep.subr.bf16.mxu0 0
      %256 = vmatpush2.bf16.msra.mxu0 0
      %257 = vmatprep.subr.bf16.mxu0 0
      %258 = vmatpush2.bf16.msra.mxu0 0
      %259 = vmatprep.mubr.bf16.mxu0 0
      %260 = vmatmul.mubr.bf16.gmra.mxu0 %v225
      %v261 = vpop.f32.mrf.mxu0
      %v262 = vadd.f32 0.0, %v261
      %v263 = vpop.f32.mrf.mxu0
      %v264 = vpop.f32.mrf.mxu0
      %v265 = vpop.f32.mrf.mxu0
      %266 = vdwg.mxu0
      %s267 = smul.u32 %s15, 2
      %s268 = scalar_lea.vmem %s4, %s267
      %269 = vst [vmem:[%s268] sm:$0x3] %v262
      %v270 = vld [vmem:[#allocation2] sm:$0x1]
      %vm271 = vcmask 1041408
      %v272 = vsel %vm271, %v262, 0.0
      %v273 = vrot.slane %v272, 4
      %v274 = vadd.f32 %v272, %v273
      %v275 = vrot.slane %v274, 2
      %v276 = vadd.f32 %v274, %v275
      %v277 = vrot.slane %v276, 1
      %v278 = vadd.f32 %v276, %v277
      %v279 = vadd.f32 %v270, %v278
      %280 = vst [vmem:[#allocation2] sm:$0x1] %v279
      %v281 = vld [vmem:[#allocation3] sm:$0x1]
      %v282 = vmul.f32 %v262, %v262
      %v283 = vsel %vm271, %v282, 0.0
      %v284 = vrot.slane %v283, 4
      %v285 = vadd.f32 %v283, %v284
      %v286 = vrot.slane %v285, 2
      %v287 = vadd.f32 %v285, %v286
      %v288 = vrot.slane %v287, 1
      %v289 = vadd.f32 %v287, %v288
      %v290 = vadd.f32 %v281, %v289
      %291 = vst [vmem:[#allocation3] sm:$0x1] %v290
      %p292 = scmp.eq.s32.totalorder %s15, 15
      // Predicated region
      $region41: #{generator_forward.5} parent=35 // pred_check
        %p293 = pneg %p292
      $region42: #{generator_forward.5} parent=35 // pred_check_branch
        %295 = sbr.rel (%p293) target = $region44
      $region43: #{generator_forward.5} parent=35 // pred_region
        %v296 = vld [vmem:[#allocation2] sm:$0x1]
        %v297 = vrcp.pop 32.0
        %v298 = vmul.f32 %v296, %v297
        %v299 = vld [vmem:[#allocation3] sm:$0x1]
        %v300 = vmul.f32 %v299, %v297
        %v301 = vmul.f32 %v298, %v298
        %v302 = vsub.f32 %v300, %v301
        %v303 = vld [vmem:[%s2] sm:$0x1]
        %v304 = vadd.f32 %v302, 1e-05
        %v305 = vrsqrt.pop %v304
        %v306 = vmul.f32 %v303, %v305
        %v307 = vld [vmem:[%s3] sm:$0x1]
        %v308 = vmul.f32 %v298, %v306
        %v309 = vsub.f32 %v307, %v308
        %v310 = vld [vmem:[%s4] sm:$0x3]
        %v311 = vld [vmem:[%s4 + $0x2] sm:$0x3]
        %v312 = vld [vmem:[%s4 + $0x4] sm:$0x3]
        %v313 = vld [vmem:[%s4 + $0x6] sm:$0x3]
        %v314 = vld [vmem:[%s4 + $0x8] sm:$0x3]
        %v315 = vld [vmem:[%s4 + $0xa] sm:$0x3]
        %v316 = vld [vmem:[%s4 + $0xc] sm:$0x3]
        %v317 = vld [vmem:[%s4 + $0xe] sm:$0x3]
        %v318 = vld [vmem:[%s4 + $0x10] sm:$0x3]
        %v319 = vld [vmem:[%s4 + $0x12] sm:$0x3]
        %v320 = vld [vmem:[%s4 + $0x14] sm:$0x3]
        %v321 = vld [vmem:[%s4 + $0x16] sm:$0x3]
        %v322 = vld [vmem:[%s4 + $0x18] sm:$0x3]
        %v323 = vld [vmem:[%s4 + $0x1a] sm:$0x3]
        %v324 = vld [vmem:[%s4 + $0x1c] sm:$0x3]
        %v325 = vld [vmem:[%s4 + $0x1e] sm:$0x3]
        %v327 = vlaneseq
        %v328 = vshrl.u32 %v327, 7
        %v329 = vsub.s32 0, %v328
        %v330 = vrot.slane %v306, %v329
        %v332 = vmul.f32 %v310, %v330
        %v333 = vmul.f32 %v311, %v330
        %v334 = vmul.f32 %v312, %v330
        %v335 = vmul.f32 %v313, %v330
        %v336 = vmul.f32 %v314, %v330
        %v337 = vmul.f32 %v315, %v330
        %v338 = vmul.f32 %v316, %v330
        %v339 = vmul.f32 %v317, %v330
        %v340 = vmul.f32 %v318, %v330
        %v341 = vmul.f32 %v319, %v330
        %v342 = vmul.f32 %v320, %v330
        %v343 = vmul.f32 %v321, %v330
        %v344 = vmul.f32 %v322, %v330
        %v345 = vmul.f32 %v323, %v330
        %v346 = vmul.f32 %v324, %v330
        %v347 = vmul.f32 %v325, %v330
        %v349 = vlaneseq
        %v350 = vshrl.u32 %v349, 7
        %v351 = vsub.s32 0, %v350
        %v352 = vrot.slane %v309, %v351
        %v354 = vadd.f32 %v332, %v352
        %v355 = vadd.f32 %v333, %v352
        %v356 = vadd.f32 %v334, %v352
        %v357 = vadd.f32 %v335, %v352
        %v358 = vadd.f32 %v336, %v352
        %v359 = vadd.f32 %v337, %v352
        %v360 = vadd.f32 %v338, %v352
        %v361 = vadd.f32 %v339, %v352
        %v362 = vadd.f32 %v340, %v352
        %v363 = vadd.f32 %v341, %v352
        %v364 = vadd.f32 %v342, %v352
        %v365 = vadd.f32 %v343, %v352
        %v366 = vadd.f32 %v344, %v352
        %v367 = vadd.f32 %v345, %v352
        %v368 = vadd.f32 %v346, %v352
        %v369 = vadd.f32 %v347, %v352
        %v370 = vmax.f32 %v354, 0.0
        %v371 = vmax.f32 %v355, 0.0
        %v372 = vmax.f32 %v356, 0.0
        %v373 = vmax.f32 %v357, 0.0
        %v374 = vmax.f32 %v358, 0.0
        %v375 = vmax.f32 %v359, 0.0
        %v376 = vmax.f32 %v360, 0.0
        %v377 = vmax.f32 %v361, 0.0
        %v378 = vmax.f32 %v362, 0.0
        %v379 = vmax.f32 %v363, 0.0
        %v380 = vmax.f32 %v364, 0.0
        %v381 = vmax.f32 %v365, 0.0
        %v382 = vmax.f32 %v366, 0.0
        %v383 = vmax.f32 %v367, 0.0
        %v384 = vmax.f32 %v368, 0.0
        %v385 = vmax.f32 %v369, 0.0
        %386 = vst [vmem:[%s4] sm:$0x3] %v370
        %387 = vst [vmem:[%s4 + $0x2] sm:$0x3] %v371
        %388 = vst [vmem:[%s4 + $0x4] sm:$0x3] %v372
        %389 = vst [vmem:[%s4 + $0x6] sm:$0x3] %v373
        %390 = vst [vmem:[%s4 + $0x8] sm:$0x3] %v374
        %391 = vst [vmem:[%s4 + $0xa] sm:$0x3] %v375
        %392 = vst [vmem:[%s4 + $0xc] sm:$0x3] %v376
        %393 = vst [vmem:[%s4 + $0xe] sm:$0x3] %v377
        %394 = vst [vmem:[%s4 + $0x10] sm:$0x3] %v378
        %395 = vst [vmem:[%s4 + $0x12] sm:$0x3] %v379
        %396 = vst [vmem:[%s4 + $0x14] sm:$0x3] %v380
        %397 = vst [vmem:[%s4 + $0x16] sm:$0x3] %v381
        %398 = vst [vmem:[%s4 + $0x18] sm:$0x3] %v382
        %399 = vst [vmem:[%s4 + $0x1a] sm:$0x3] %v383
        %400 = vst [vmem:[%s4 + $0x1c] sm:$0x3] %v384
        %401 = vst [vmem:[%s4 + $0x1e] sm:$0x3] %v385
      $region44: #{generator_forward.5} parent=35 // pred_fallthru
        _
      // Predicated region
      $region45: #{generator_forward.5} parent=35 // pred_check
        %p402 = pneg %p117
      $region46: #{generator_forward.5} parent=35 // pred_check_branch
        %404 = sbr.rel (%p402) target = $region48
      $region47: #{generator_forward.5} parent=35 // pred_region
        _
      $region48: #{generator_forward.5} parent=35 // pred_fallthru
        _
      // Predicated region
      $region49: #{generator_forward.5} parent=35 // pred_check
        %p405 = pneg %p117
      $region50: #{generator_forward.5} parent=35 // pred_check_branch
        %407 = sbr.rel (%p405) target = $region52
      $region51: #{generator_forward.5} parent=35 // pred_region
        _
      $region52: #{generator_forward.5} parent=35 // pred_fallthru
        _
    $region36: #{generator_forward.5} parent=5 // pred_fallthru
      _
    %p408 = scmp.le.s32.totalorder 2, %s10
    // Predicated region
    $region53: #{generator_forward.5} parent=5 // pred_check
      %p409 = pneg %p408
    $region54: #{generator_forward.5} parent=5 // pred_check_branch
      %411 = sbr.rel (%p409) target = $region56
    $region55: #{generator_forward.5} parent=5 // pred_region
      %s412 = ssub.s32 %s10, 2
    $region56: #{generator_forward.5} parent=5 // pred_fallthru
      _
  $region6: #{generator_forward.5} parent=0 // loop_footer
    %s14 = sadd.s32 1, %s10
  $region7: #{generator_forward.5} parent=0 // loop_footer_branch
    %9 = sbr.rel target = $region3
  $region8: #{generator_forward.5} parent=0 // loop_exit
    _

// kernel: generator_forward.6
$region0: #{generator_forward.6}
  #allocation0 [shape = 'u32[]', space=smem, size = 0x4, offset = 0x4, fixed_abs, tag = 'smem constant byte address 0x4 - core index']
  #allocation1 [shape = 'u32[144,128]{1,0:T(1,128)}', space=vmem, size = 0x12000, scoped, tag = 'internal scratch']
  #allocation2 [shape = 'f32[1,128]{1,0:T(1,128)}', space=vmem, size = 0x200, scoped, tag = 'scratch operand']
  #allocation3 [shape = 'f32[1,128]{1,0:T(1,128)}', space=vmem, size = 0x200, scoped, tag = 'scratch operand']
  %s0 = inlined_call_operand.vmem [shape: bf16[4,32,512], index: 0, kind: input, shape index: {}]
  %s1 = inlined_call_operand.vmem [shape: bf16[4,512,128], index: 1, kind: input, shape index: {}]
  %s2 = inlined_call_operand.vmem [shape: f32[1,128], index: 2, kind: input, shape index: {}]
  %s3 = inlined_call_operand.vmem [shape: f32[1,128], index: 3, kind: input, shape index: {}]
  %s4 = inlined_call_operand.vmem [shape: f32[4,32,128], index: 4, kind: output, shape index: {}]
  %s5 = sld [smem:[#allocation0]]
  $region57: #{generator_forward.6} parent=0
    _
  %s7 = ssub.s32 1, %s5
  %s8 = scalar_select 0, %s7, %s5
  loop: start=0, step=1, limit=6
  $region2: #{generator_forward.6} parent=0 // loop_pre_header
    _
  $region3: #{generator_forward.6} parent=0 // loop_header
    %s10 = sphi 0, %s14
    %p11 = scmp.ge.s32.totalorder %s10, 6
    %s20 = sphi 0, %s22
    %s23 = sphi 0, %s20
    %s24 = sphi 0, %s23
    %s40 = sphi 0, %s24
    %s46 = sphi 0, %s48
    %s49 = sphi 0, %s46
    %s50 = sphi 0, %s49
    %s66 = sphi 0, %s50
    %s70 = sphi 0, %s70
    %s72 = sphi 0, %s70
    %s73 = sphi 0, %s72
    %s87 = sphi 0, %s73
    %s91 = sphi 0, %s91
    %s93 = sphi 0, %s91
    %s94 = sphi 0, %s93
    %s108 = sphi 0, %s94
    %s112 = sphi 0, %s112
    %s114 = sphi 0, %s112
    %s115 = sphi 0, %s114
    %s129 = sphi 0, %s115
  $region4: #{generator_forward.6} parent=0 // loop_header_branch
    %13 = sbr.rel (%p11) target = $region8
  $region5: #{generator_forward.6} parent=0 // loop_body
    %s15 = ssub.s32 %s10, 1
    %s16 = ssub.s32 %s10, 2
    %s17 = sadd.s32 %s10, 1
    %s18 = ssub.s32 %s10, %s17
    %p19 = scmp.eq.s32.totalorder %s18, 0
    %s21 = sadd.s32 %s20, 1
    %s22 = scalar_select %p19, %s20, %s21
    %p25 = pneg %p19
    %p26 = scmp.eq.s32.totalorder %s10, 3
    %p27 = por %p25, %p26
    %p28 = scmp.ne.s32.totalorder %s20, %s23
    %p29 = scmp.eq.s32.totalorder %s10, 0
    %p30 = por %p28, %p29
    %p31 = scmp.ne.s32.totalorder %s20, %s23
    %p32 = scmp.eq.s32.totalorder %s15, 3
    %p33 = por %p31, %p32
    %p34 = scmp.ne.s32.totalorder %s23, %s24
    %p35 = scmp.eq.s32.totalorder %s15, 0
    %p36 = por %p34, %p35
    %p37 = scmp.ne.s32.totalorder %s23, %s24
    %p38 = scmp.eq.s32.totalorder %s16, 3
    %p39 = por %p37, %p38
    %p41 = scmp.ne.s32.totalorder %s24, %s40
    %p42 = scmp.eq.s32.totalorder %s16, 0
    %p43 = por %p41, %p42
    %s44 = ssub.s32 %s10, %s17
    %p45 = scmp.eq.s32.totalorder %s44, 0
    %s47 = sadd.s32 %s46, 1
    %s48 = scalar_select %p45, %s46, %s47
    %p51 = pneg %p45
    %p52 = scmp.eq.s32.totalorder %s10, 3
    %p53 = por %p51, %p52
    %p54 = scmp.ne.s32.totalorder %s46, %s49
    %p55 = scmp.eq.s32.totalorder %s10, 0
    %p56 = por %p54, %p55
    %p57 = scmp.ne.s32.totalorder %s46, %s49
    %p58 = scmp.eq.s32.totalorder %s15, 3
    %p59 = por %p57, %p58
    %p60 = scmp.ne.s32.totalorder %s49, %s50
    %p61 = scmp.eq.s32.totalorder %s15, 0
    %p62 = por %p60, %p61
    %p63 = scmp.ne.s32.totalorder %s49, %s50
    %p64 = scmp.eq.s32.totalorder %s16, 3
    %p65 = por %p63, %p64
    %p67 = scmp.ne.s32.totalorder %s50, %s66
    %p68 = scmp.eq.s32.totalorder %s16, 0
    %p69 = por %p67, %p68
    %s71 = sadd.s32 %s70, 1
    %p74 = scmp.eq.s32.totalorder %s10, 3
    %p75 = scmp.ne.s32.totalorder %s70, %s72
    %p76 = scmp.eq.s32.totalorder %s10, 0
    %p77 = por %p75, %p76
    %p78 = scmp.ne.s32.totalorder %s70, %s72
    %p79 = scmp.eq.s32.totalorder %s15, 3
    %p80 = por %p78, %p79
    %p81 = scmp.ne.s32.totalorder %s72, %s73
    %p82 = scmp.eq.s32.totalorder %s15, 0
    %p83 = por %p81, %p82
    %p84 = scmp.ne.s32.totalorder %s72, %s73
    %p85 = scmp.eq.s32.totalorder %s16, 3
    %p86 = por %p84, %p85
    %p88 = scmp.ne.s32.totalorder %s73, %s87
    %p89 = scmp.eq.s32.totalorder %s16, 0
    %p90 = por %p88, %p89
    %s92 = sadd.s32 %s91, 1
    %p95 = scmp.eq.s32.totalorder %s10, 3
    %p96 = scmp.ne.s32.totalorder %s91, %s93
    %p97 = scmp.eq.s32.totalorder %s10, 0
    %p98 = por %p96, %p97
    %p99 = scmp.ne.s32.totalorder %s91, %s93
    %p100 = scmp.eq.s32.totalorder %s15, 3
    %p101 = por %p99, %p100
    %p102 = scmp.ne.s32.totalorder %s93, %s94
    %p103 = scmp.eq.s32.totalorder %s15, 0
    %p104 = por %p102, %p103
    %p105 = scmp.ne.s32.totalorder %s93, %s94
    %p106 = scmp.eq.s32.totalorder %s16, 3
    %p107 = por %p105, %p106
    %p109 = scmp.ne.s32.totalorder %s94, %s108
    %p110 = scmp.eq.s32.totalorder %s16, 0
    %p111 = por %p109, %p110
    %s113 = sadd.s32 %s112, 1
    %p116 = scmp.eq.s32.totalorder %s10, 3
    %p117 = scmp.ne.s32.totalorder %s112, %s114
    %p118 = scmp.eq.s32.totalorder %s10, 0
    %p119 = por %p117, %p118
    %p120 = scmp.ne.s32.totalorder %s112, %s114
    %p121 = scmp.eq.s32.totalorder %s15, 3
    %p122 = por %p120, %p121
    %p123 = scmp.ne.s32.totalorder %s114, %s115
    %p124 = scmp.eq.s32.totalorder %s15, 0
    %p125 = por %p123, %p124
    %p126 = scmp.ne.s32.totalorder %s114, %s115
    %p127 = scmp.eq.s32.totalorder %s16, 3
    %p128 = por %p126, %p127
    %p130 = scmp.ne.s32.totalorder %s115, %s129
    %p131 = scmp.eq.s32.totalorder %s16, 0
    %p132 = por %p130, %p131
    %p133 = scmp.le.s32.totalorder 1, %s10
    %p134 = scmp.lt.s32.totalorder %s10, 5
    %p135 = pnand %p133, %p134
    %p136 = pneg %p135
    // Predicated region
    $region9: #{generator_forward.6} parent=5 // pred_check
      _
    $region10: #{generator_forward.6} parent=5 // pred_check_branch
      %138 = sbr.rel (%p135) target = $region12
    $region11: #{generator_forward.6} parent=5 // pred_region
      %s139 = ssub.s32 %s10, 1
      // Predicated region
      $region13: #{generator_forward.6} parent=11 // pred_check
        %p140 = pneg %p83
      $region14: #{generator_forward.6} parent=11 // pred_check_branch
        %142 = sbr.rel (%p140) target = $region16
      $region15: #{generator_forward.6} parent=11 // pred_region
        _
      $region16: #{generator_forward.6} parent=11 // pred_fallthru
        _
      // Predicated region
      $region17: #{generator_forward.6} parent=11 // pred_check
        %p143 = pneg %p104
      $region18: #{generator_forward.6} parent=11 // pred_check_branch
        %145 = sbr.rel (%p143) target = $region20
      $region19: #{generator_forward.6} parent=11 // pred_region
        _
      $region20: #{generator_forward.6} parent=11 // pred_fallthru
        _
    $region12: #{generator_forward.6} parent=5 // pred_fallthru
      _
    %p146 = scmp.lt.s32.totalorder %s10, 4
    // Predicated region
    $region21: #{generator_forward.6} parent=5 // pred_check
      %p147 = pneg %p146
    $region22: #{generator_forward.6} parent=5 // pred_check_branch
      %149 = sbr.rel (%p147) target = $region24
    $region23: #{generator_forward.6} parent=5 // pred_region
      // Predicated region
      $region25: #{generator_forward.6} parent=23 // pred_check
        %p150 = pneg %p30
      $region26: #{generator_forward.6} parent=23 // pred_check_branch
        %152 = sbr.rel (%p150) target = $region28
      $region27: #{generator_forward.6} parent=23 // pred_region
        %p153 = scmp.lt.s32.totalorder %s10, 3
        %s154 = scalar_select %p153, %s10, 3
        %s155 = smul.addr %s154, 16
        %s156 = smul.addr %s155, 4
        %s157 = scalar_lea.vmem %s0, %s156
      $region28: #{generator_forward.6} parent=23 // pred_fallthru
        _
      // Predicated region
      $region29: #{generator_forward.6} parent=23 // pred_check
        %p158 = pneg %p56
      $region30: #{generator_forward.6} parent=23 // pred_check_branch
        %160 = sbr.rel (%p158) target = $region32
      $region31: #{generator_forward.6} parent=23 // pred_region
        %p161 = scmp.lt.s32.totalorder %s10, 3
        %s162 = scalar_select %p161, %s10, 3
        %s163 = smul.addr %s162, 64
        %s164 = smul.addr %s163, 4
        %s165 = scalar_lea.vmem %s1, %s164
      $region32: #{generator_forward.6} parent=23 // pred_fallthru
        _
    $region24: #{generator_forward.6} parent=5 // pred_fallthru
      _
    %p166 = scmp.le.s32.totalorder 1, %s10
    %p167 = scmp.lt.s32.totalorder %s10, 5
    %p168 = pnand %p166, %p167
    %p169 = pneg %p168
    // Predicated region
    $region33: #{generator_forward.6} parent=5 // pred_check
      _
    $region34: #{generator_forward.6} parent=5 // pred_check_branch
      %171 = sbr.rel (%p168) target = $region36
    $region35: #{generator_forward.6} parent=5 // pred_region
      %s172 = ssub.s32 %s10, 1
      %p173 = scmp.lt.s32.totalorder %s15, 3
      %s174 = scalar_select %p173, %s15, 3
      %s175 = smul.addr %s174, 16
      %s176 = smul.addr %s175, 4
      %s177 = scalar_lea.vmem %s0, %s176
      %p178 = pneg %p36
      %p179 = pneg %p33
      %p180 = scmp.lt.s32.totalorder %s15, 3
      %s181 = scalar_select %p180, %s15, 3
      %s182 = smul.addr %s181, 64
      %s183 = smul.addr %s182, 4
      %s184 = scalar_lea.vmem %s1, %s183
      %p185 = pneg %p62
      %p186 = pneg %p59
      %p187 = pneg %p83
      %p188 = pneg %p80
      %p189 = pneg %p104
      %p190 = pneg %p101
      %p191 = pneg %p125
      %p192 = pneg %p122
      %p193 = scmp.lt.s32.totalorder %s15, 3
      %s194 = scalar_select %p193, %s15, 3
      %s195 = smul.addr %s194, 16
      %s196 = smul.addr %s195, 4
      %s197 = scalar_lea.vmem %s0, %s196
      %p198 = scmp.lt.s32.totalorder %s15, 3
      %s199 = scalar_select %p198, %s15, 3
      %s200 = smul.addr %s199, 64
      %s201 = smul.addr %s200, 4
      %s202 = scalar_lea.vmem %s1, %s201
      %p204 = scmp.eq.s32.totalorder %s15, 0
      // Predicated region
      $region37: #{generator_forward.6} parent=35 // pred_check
        %p205 = pneg %p204
      $region38: #{generator_forward.6} parent=35 // pred_check_branch
        %207 = sbr.rel (%p205) target = $region40
      $region39: #{generator_forward.6} parent=35 // pred_region
        %208 = vst [vmem:[#allocation2] sm:$0x1] 0.0
        %209 = vst [vmem:[#allocation3] sm:$0x1] 0.0
      $region40: #{generator_forward.6} parent=35 // pred_fallthru
        _
      %v210 = vld [vmem:[%s197] sm:$0xff]
      %v211 = vld [vmem:[%s197 + $0x8] sm:$0xff]
      %v212 = vld [vmem:[%s197 + $0x10] sm:$0xff]
      %v213 = vld [vmem:[%s197 + $0x18] sm:$0xff]
      %v214 = vld [vmem:[%s197 + $0x20] sm:$0xff]
      %v215 = vld [vmem:[%s197 + $0x28] sm:$0xff]
      %v216 = vld [vmem:[%s197 + $0x30] sm:$0xff]
      %v217 = vld [vmem:[%s197 + $0x38] sm:$0xff]
      %v218 = vld [vmem:[%s202] sm:$0xf]
      %v219 = vld [vmem:[%s202 + $0x4] sm:$0xf]
      %v220 = vld [vmem:[%s202 + $0x8] sm:$0xf]
      %v221 = vld [vmem:[%s202 + $0xc] sm:$0xf]
      %v222 = vld [vmem:[%s202 + $0x10] sm:$0xf]
      %v223 = vld [vmem:[%s202 + $0x14] sm:$0xf]
      %v224 = vld [vmem:[%s202 + $0x18] sm:$0xf]
      %v225 = vld [vmem:[%s202 + $0x1c] sm:$0xf]
      %v226 = vld [vmem:[%s202 + $0x20] sm:$0xf]
      %v227 = vld [vmem:[%s202 + $0x24] sm:$0xf]
      %v228 = vld [vmem:[%s202 + $0x28] sm:$0xf]
      %v229 = vld [vmem:[%s202 + $0x2c] sm:$0xf]
      %v230 = vld [vmem:[%s202 + $0x30] sm:$0xf]
      %v231 = vld [vmem:[%s202 + $0x34] sm:$0xf]
      %v232 = vld [vmem:[%s202 + $0x38] sm:$0xf]
      %v233 = vld [vmem:[%s202 + $0x3c] sm:$0xf]
      %v234 = vld [vmem:[%s202 + $0x40] sm:$0xf]
      %v235 = vld [vmem:[%s202 + $0x44] sm:$0xf]
      %v236 = vld [vmem:[%s202 + $0x48] sm:$0xf]
      %v237 = vld [vmem:[%s202 + $0x4c] sm:$0xf]
      %v238 = vld [vmem:[%s202 + $0x50] sm:$0xf]
      %v239 = vld [vmem:[%s202 + $0x54] sm:$0xf]
      %v240 = vld [vmem:[%s202 + $0x58] sm:$0xf]
      %v241 = vld [vmem:[%s202 + $0x5c] sm:$0xf]
      %v242 = vld [vmem:[%s202 + $0x60] sm:$0xf]
      %v243 = vld [vmem:[%s202 + $0x64] sm:$0xf]
      %v244 = vld [vmem:[%s202 + $0x68] sm:$0xf]
      %v245 = vld [vmem:[%s202 + $0x6c] sm:$0xf]
      %v246 = vld [vmem:[%s202 + $0x70] sm:$0xf]
      %v247 = vld [vmem:[%s202 + $0x74] sm:$0xf]
      %v248 = vld [vmem:[%s202 + $0x78] sm:$0xf]
      %v249 = vld [vmem:[%s202 + $0x7c] sm:$0xf]
      %v250 = vld [vmem:[%s202 + $0x80] sm:$0xf]
      %v251 = vld [vmem:[%s202 + $0x84] sm:$0xf]
      %v252 = vld [vmem:[%s202 + $0x88] sm:$0xf]
      %v253 = vld [vmem:[%s202 + $0x8c] sm:$0xf]
      %v254 = vld [vmem:[%s202 + $0x90] sm:$0xf]
      %v255 = vld [vmem:[%s202 + $0x94] sm:$0xf]
      %v256 = vld [vmem:[%s202 + $0x98] sm:$0xf]
      %v257 = vld [vmem:[%s202 + $0x9c] sm:$0xf]
      %v258 = vld [vmem:[%s202 + $0xa0] sm:$0xf]
      %v259 = vld [vmem:[%s202 + $0xa4] sm:$0xf]
      %v260 = vld [vmem:[%s202 + $0xa8] sm:$0xf]
      %v261 = vld [vmem:[%s202 + $0xac] sm:$0xf]
      %v262 = vld [vmem:[%s202 + $0xb0] sm:$0xf]
      %v263 = vld [vmem:[%s202 + $0xb4] sm:$0xf]
      %v264 = vld [vmem:[%s202 + $0xb8] sm:$0xf]
      %v265 = vld [vmem:[%s202 + $0xbc] sm:$0xf]
      %v266 = vld [vmem:[%s202 + $0xc0] sm:$0xf]
      %v267 = vld [vmem:[%s202 + $0xc4] sm:$0xf]
      %v268 = vld [vmem:[%s202 + $0xc8] sm:$0xf]
      %v269 = vld [vmem:[%s202 + $0xcc] sm:$0xf]
      %v270 = vld [vmem:[%s202 + $0xd0] sm:$0xf]
      %v271 = vld [vmem:[%s202 + $0xd4] sm:$0xf]
      %v272 = vld [vmem:[%s202 + $0xd8] sm:$0xf]
      %v273 = vld [vmem:[%s202 + $0xdc] sm:$0xf]
      %v274 = vld [vmem:[%s202 + $0xe0] sm:$0xf]
      %v275 = vld [vmem:[%s202 + $0xe4] sm:$0xf]
      %v276 = vld [vmem:[%s202 + $0xe8] sm:$0xf]
      %v277 = vld [vmem:[%s202 + $0xec] sm:$0xf]
      %v278 = vld [vmem:[%s202 + $0xf0] sm:$0xf]
      %v279 = vld [vmem:[%s202 + $0xf4] sm:$0xf]
      %v280 = vld [vmem:[%s202 + $0xf8] sm:$0xf]
      %v281 = vld [vmem:[%s202 + $0xfc] sm:$0xf]
      %v290 = vunpack.c.l.b16 %v210
      %v291 = vunpack.c.h.b16 %v210
      %v292 = vunpack.c.l.b16 %v211
      %v293 = vunpack.c.h.b16 %v211
      %v294 = vunpack.c.l.b16 %v212
      %v295 = vunpack.c.h.b16 %v212
      %v296 = vunpack.c.l.b16 %v213
      %v297 = vunpack.c.h.b16 %v213
      %v298 = vunpack.c.l.b16 %v214
      %v299 = vunpack.c.h.b16 %v214
      %v300 = vunpack.c.l.b16 %v215
      %v301 = vunpack.c.h.b16 %v215
      %v302 = vunpack.c.l.b16 %v216
      %v303 = vunpack.c.h.b16 %v216
      %v304 = vunpack.c.l.b16 %v217
      %v305 = vunpack.c.h.b16 %v217
      %v306 = vpack.c.b16 %v294, %v290
      %v307 = vpack.c.b16 %v295, %v291
      %v308 = vpack.c.b16 %v296, %v292
      %v309 = vpack.c.b16 %v297, %v293
      %v310 = vpack.c.b16 %v302, %v298
      %v311 = vpack.c.b16 %v303, %v299
      %v312 = vpack.c.b16 %v304, %v300
      %v313 = vpack.c.b16 %v305, %v301
      %v386 = vunpack.c.l.b16 %v218
      %v387 = vunpack.c.l.b16 %v219
      %v388 = vunpack.c.l.b16 %v220
      %v389 = vunpack.c.l.b16 %v221
      %v390 = vunpack.c.l.b16 %v222
      %v391 = vunpack.c.l.b16 %v223
      %v392 = vunpack.c.l.b16 %v224
      %v393 = vunpack.c.l.b16 %v225
      %v394 = vunpack.c.l.b16 %v226
      %v395 = vunpack.c.l.b16 %v227
      %v396 = vunpack.c.l.b16 %v228
      %v397 = vunpack.c.l.b16 %v229
      %v398 = vunpack.c.l.b16 %v230
      %v399 = vunpack.c.l.b16 %v231
      %v400 = vunpack.c.l.b16 %v232
      %v401 = vunpack.c.l.b16 %v233
      %v402 = vunpack.c.l.b16 %v234
      %v403 = vunpack.c.l.b16 %v235
      %v404 = vunpack.c.l.b16 %v236
      %v405 = vunpack.c.l.b16 %v237
      %v406 = vunpack.c.l.b16 %v238
      %v407 = vunpack.c.l.b16 %v239
      %v408 = vunpack.c.l.b16 %v240
      %v409 = vunpack.c.l.b16 %v241
      %v410 = vunpack.c.l.b16 %v242
      %v411 = vunpack.c.l.b16 %v243
      %v412 = vunpack.c.l.b16 %v244
      %v413 = vunpack.c.l.b16 %v245
      %v414 = vunpack.c.l.b16 %v246
      %v415 = vunpack.c.l.b16 %v247
      %v416 = vunpack.c.l.b16 %v248
      %v417 = vunpack.c.l.b16 %v249
      %v418 = vunpack.c.l.b16 %v250
      %v419 = vunpack.c.l.b16 %v251
      %v420 = vunpack.c.l.b16 %v252
      %v421 = vunpack.c.l.b16 %v253
      %v422 = vunpack.c.l.b16 %v254
      %v423 = vunpack.c.l.b16 %v255
      %v424 = vunpack.c.l.b16 %v256
      %v425 = vunpack.c.l.b16 %v257
      %v426 = vunpack.c.l.b16 %v258
      %v427 = vunpack.c.l.b16 %v259
      %v428 = vunpack.c.l.b16 %v260
      %v429 = vunpack.c.l.b16 %v261
      %v430 = vunpack.c.l.b16 %v262
      %v431 = vunpack.c.l.b16 %v263
      %v432 = vunpack.c.l.b16 %v264
      %v433 = vunpack.c.l.b16 %v265
      %v434 = vunpack.c.l.b16 %v266
      %v435 = vunpack.c.l.b16 %v267
      %v436 = vunpack.c.l.b16 %v268
      %v437 = vunpack.c.l.b16 %v269
      %v438 = vunpack.c.l.b16 %v270
      %v439 = vunpack.c.l.b16 %v271
      %v440 = vunpack.c.l.b16 %v272
      %v441 = vunpack.c.l.b16 %v273
      %v442 = vunpack.c.l.b16 %v274
      %v443 = vunpack.c.l.b16 %v275
      %v444 = vunpack.c.l.b16 %v276
      %v445 = vunpack.c.l.b16 %v277
      %v446 = vunpack.c.l.b16 %v278
      %v447 = vunpack.c.l.b16 %v279
      %v448 = vunpack.c.l.b16 %v280
      %v449 = vunpack.c.l.b16 %v281
      %v450 = vpack.c.b16 %v387, %v386
      %v451 = vpack.c.b16 %v389, %v388
      %v452 = vpack.c.b16 %v391, %v390
      %v453 = vpack.c.b16 %v393, %v392
      %v454 = vpack.c.b16 %v395, %v394
      %v455 = vpack.c.b16 %v397, %v396
      %v456 = vpack.c.b16 %v399, %v398
      %v457 = vpack.c.b16 %v401, %v400
      %v458 = vpack.c.b16 %v403, %v402
      %v459 = vpack.c.b16 %v405, %v404
      %v460 = vpack.c.b16 %v407, %v406
      %v461 = vpack.c.b16 %v409, %v408
      %v462 = vpack.c.b16 %v411, %v410
      %v463 = vpack.c.b16 %v413, %v412
      %v464 = vpack.c.b16 %v415, %v414
      %v465 = vpack.c.b16 %v417, %v416
      %v466 = vpack.c.b16 %v419, %v418
      %v467 = vpack.c.b16 %v421, %v420
      %v468 = vpack.c.b16 %v423, %v422
      %v469 = vpack.c.b16 %v425, %v424
      %v470 = vpack.c.b16 %v427, %v426
      %v471 = vpack.c.b16 %v429, %v428
      %v472 = vpack.c.b16 %v431, %v430
      %v473 = vpack.c.b16 %v433, %v432
      %v474 = vpack.c.b16 %v435, %v434
      %v475 = vpack.c.b16 %v437, %v436
      %v476 = vpack.c.b16 %v439, %v438
      %v477 = vpack.c.b16 %v441, %v440
      %v478 = vpack.c.b16 %v443, %v442
      %v479 = vpack.c.b16 %v445, %v444
      %v480 = vpack.c.b16 %v447, %v446
      %v481 = vpack.c.b16 %v449, %v448
      %514 = vmatprep.subr.bf16.mxu0 0
      %515 = vmatpush1.bf16.msra.mxu0 %v457
      %516 = vmatprep.subr.bf16.mxu0 0
      %517 = vmatpush1.bf16.msra.mxu0 %v456
      %518 = vmatprep.subr.bf16.mxu0 0
      %519 = vmatpush1.bf16.msra.mxu0 %v455
      %520 = vmatprep.subr.bf16.mxu0 0
      %521 = vmatpush1.bf16.msra.mxu0 %v454
      %522 = vmatprep.subr.bf16.mxu0 0
      %523 = vmatpush1.bf16.msra.mxu0 %v453
      %524 = vmatprep.subr.bf16.mxu0 0
      %525 = vmatpush1.bf16.msra.mxu0 %v452
      %526 = vmatprep.subr.bf16.mxu0 0
      %527 = vmatpush1.bf16.msra.mxu0 %v451
      %528 = vmatprep.subr.bf16.mxu0 0
      %529 = vmatpush1.bf16.msra.mxu0 %v450
      %530 = vmatprep.subr.bf16.mxu0 0
      %531 = vmatpush2.bf16.msra.mxu0 %v465
      %532 = vmatprep.subr.bf16.mxu0 0
      %533 = vmatpush2.bf16.msra.mxu0 %v464
      %534 = vmatprep.subr.bf16.mxu0 0
      %535 = vmatpush2.bf16.msra.mxu0 %v463
      %536 = vmatprep.subr.bf16.mxu0 0
      %537 = vmatpush2.bf16.msra.mxu0 %v462
      %538 = vmatprep.subr.bf16.mxu0 0
      %539 = vmatpush2.bf16.msra.mxu0 %v461
      %540 = vmatprep.subr.bf16.mxu0 0
      %541 = vmatpush2.bf16.msra.mxu0 %v460
      %542 = vmatprep.subr.bf16.mxu0 0
      %543 = vmatpush2.bf16.msra.mxu0 %v459
      %544 = vmatprep.subr.bf16.mxu0 0
      %545 = vmatpush2.bf16.msra.mxu0 %v458
      %546 = vmatprep.mubr.bf16.mxu0 %v307
      %547 = vmatmul.mubr.bf16.gmra.mxu0 %v306
      %v548 = vpop.f32.mrf.mxu0
      %v549 = vadd.f32 0.0, %v548
      %v550 = vpop.f32.mrf.mxu0
      %v551 = vpop.f32.mrf.mxu0
      %v552 = vadd.f32 0.0, %v551
      %v553 = vpop.f32.mrf.mxu0
      %554 = vmatprep.mubr.bf16.mxu0 %v311
      %555 = vmatmul.mubr.bf16.gmra.mxu0 %v310
      %v556 = vpop.f32.mrf.mxu0
      %v557 = vadd.f32 0.0, %v556
      %v558 = vpop.f32.mrf.mxu0
      %v559 = vpop.f32.mrf.mxu0
      %v560 = vadd.f32 0.0, %v559
      %v561 = vpop.f32.mrf.mxu0
      %562 = vdwg.mxu0
      %563 = vmatprep.subr.bf16.mxu0 0
      %564 = vmatpush1.bf16.msra.mxu0 %v473
      %565 = vmatprep.subr.bf16.mxu0 0
      %566 = vmatpush1.bf16.msra.mxu0 %v472
      %567 = vmatprep.subr.bf16.mxu0 0
      %568 = vmatpush1.bf16.msra.mxu0 %v471
      %569 = vmatprep.subr.bf16.mxu0 0
      %570 = vmatpush1.bf16.msra.mxu0 %v470
      %571 = vmatprep.subr.bf16.mxu0 0
      %572 = vmatpush1.bf16.msra.mxu0 %v469
      %573 = vmatprep.subr.bf16.mxu0 0
      %574 = vmatpush1.bf16.msra.mxu0 %v468
      %575 = vmatprep.subr.bf16.mxu0 0
      %576 = vmatpush1.bf16.msra.mxu0 %v467
      %577 = vmatprep.subr.bf16.mxu0 0
      %578 = vmatpush1.bf16.msra.mxu0 %v466
      %579 = vmatprep.subr.bf16.mxu0 0
      %580 = vmatpush2.bf16.msra.mxu0 %v481
      %581 = vmatprep.subr.bf16.mxu0 0
      %582 = vmatpush2.bf16.msra.mxu0 %v480
      %583 = vmatprep.subr.bf16.mxu0 0
      %584 = vmatpush2.bf16.msra.mxu0 %v479
      %585 = vmatprep.subr.bf16.mxu0 0
      %586 = vmatpush2.bf16.msra.mxu0 %v478
      %587 = vmatprep.subr.bf16.mxu0 0
      %588 = vmatpush2.bf16.msra.mxu0 %v477
      %589 = vmatprep.subr.bf16.mxu0 0
      %590 = vmatpush2.bf16.msra.mxu0 %v476
      %591 = vmatprep.subr.bf16.mxu0 0
      %592 = vmatpush2.bf16.msra.mxu0 %v475
      %593 = vmatprep.subr.bf16.mxu0 0
      %594 = vmatpush2.bf16.msra.mxu0 %v474
      %595 = vmatprep.mubr.bf16.mxu0 %v309
      %596 = vmatmul.mubr.bf16.gmra.mxu0 %v308
      %v597 = vpop.f32.mrf.mxu0
      %v598 = vadd.f32 %v549, %v597
      %v599 = vpop.f32.mrf.mxu0
      %v600 = vpop.f32.mrf.mxu0
      %v601 = vadd.f32 %v552, %v600
      %v602 = vpop.f32.mrf.mxu0
      %603 = vmatprep.mubr.bf16.mxu0 %v313
      %604 = vmatmul.mubr.bf16.gmra.mxu0 %v312
      %v605 = vpop.f32.mrf.mxu0
      %v606 = vadd.f32 %v557, %v605
      %v607 = vpop.f32.mrf.mxu0
      %v608 = vpop.f32.mrf.mxu0
      %v609 = vadd.f32 %v560, %v608
      %v610 = vpop.f32.mrf.mxu0
      %611 = vdwg.mxu0
      %s612 = smul.u32 %s15, 32
      %s613 = scalar_lea.vmem %s4, %s612
      %614 = vst [vmem:[%s613] sm:$0xff] %v598
      %615 = vst [vmem:[%s613 + $0x8] sm:$0xff] %v601
      %616 = vst [vmem:[%s613 + $0x10] sm:$0xff] %v606
      %617 = vst [vmem:[%s613 + $0x18] sm:$0xff] %v609
      %v618 = vld [vmem:[#allocation2] sm:$0x1]
      %v619 = vadd.f32 %v598, %v601
      %v620 = vadd.f32 %v619, %v606
      %v621 = vadd.f32 %v620, %v609
      %v622 = vrot.slane %v621, 4
      %v623 = vadd.f32 %v621, %v622
      %v624 = vrot.slane %v623, 2
      %v625 = vadd.f32 %v623, %v624
      %v626 = vrot.slane %v625, 1
      %v627 = vadd.f32 %v625, %v626
      %v628 = vadd.f32 %v618, %v627
      %629 = vst [vmem:[#allocation2] sm:$0x1] %v628
      %v630 = vld [vmem:[#allocation3] sm:$0x1]
      %v631 = vmul.f32 %v598, %v598
      %v632 = vmul.f32 %v601, %v601
      %v633 = vmul.f32 %v606, %v606
      %v634 = vmul.f32 %v609, %v609
      %v635 = vadd.f32 %v631, %v632
      %v636 = vadd.f32 %v635, %v633
      %v637 = vadd.f32 %v636, %v634
      %v638 = vrot.slane %v637, 4
      %v639 = vadd.f32 %v637, %v638
      %v640 = vrot.slane %v639, 2
      %v641 = vadd.f32 %v639, %v640
      %v642 = vrot.slane %v641, 1
      %v643 = vadd.f32 %v641, %v642
      %v644 = vadd.f32 %v630, %v643
      %645 = vst [vmem:[#allocation3] sm:$0x1] %v644
      %p646 = scmp.eq.s32.totalorder %s15, 3
      // Predicated region
      $region41: #{generator_forward.6} parent=35 // pred_check
        %p647 = pneg %p646
      $region42: #{generator_forward.6} parent=35 // pred_check_branch
        %649 = sbr.rel (%p647) target = $region44
      $region43: #{generator_forward.6} parent=35 // pred_region
        %v650 = vld [vmem:[#allocation2] sm:$0x1]
        %v651 = vrcp.pop 128.0
        %v652 = vmul.f32 %v650, %v651
        %v653 = vld [vmem:[#allocation3] sm:$0x1]
        %v654 = vmul.f32 %v653, %v651
        %v655 = vmul.f32 %v652, %v652
        %v656 = vsub.f32 %v654, %v655
        %v657 = vld [vmem:[%s2] sm:$0x1]
        %v658 = vadd.f32 %v656, 1e-05
        %v659 = vrsqrt.pop %v658
        %v660 = vmul.f32 %v657, %v659
        %v661 = vld [vmem:[%s3] sm:$0x1]
        %v662 = vmul.f32 %v652, %v660
        %v663 = vsub.f32 %v661, %v662
        %v664 = vld [vmem:[%s4] sm:$0xff]
        %v665 = vld [vmem:[%s4 + $0x8] sm:$0xff]
        %v666 = vld [vmem:[%s4 + $0x10] sm:$0xff]
        %v667 = vld [vmem:[%s4 + $0x18] sm:$0xff]
        %v668 = vld [vmem:[%s4 + $0x20] sm:$0xff]
        %v669 = vld [vmem:[%s4 + $0x28] sm:$0xff]
        %v670 = vld [vmem:[%s4 + $0x30] sm:$0xff]
        %v671 = vld [vmem:[%s4 + $0x38] sm:$0xff]
        %v672 = vld [vmem:[%s4 + $0x40] sm:$0xff]
        %v673 = vld [vmem:[%s4 + $0x48] sm:$0xff]
        %v674 = vld [vmem:[%s4 + $0x50] sm:$0xff]
        %v675 = vld [vmem:[%s4 + $0x58] sm:$0xff]
        %v676 = vld [vmem:[%s4 + $0x60] sm:$0xff]
        %v677 = vld [vmem:[%s4 + $0x68] sm:$0xff]
        %v678 = vld [vmem:[%s4 + $0x70] sm:$0xff]
        %v679 = vld [vmem:[%s4 + $0x78] sm:$0xff]
        %v681 = vlaneseq
        %v682 = vshrl.u32 %v681, 7
        %v683 = vsub.s32 0, %v682
        %v684 = vrot.slane %v660, %v683
        %v686 = vmul.f32 %v664, %v684
        %v687 = vmul.f32 %v665, %v684
        %v688 = vmul.f32 %v666, %v684
        %v689 = vmul.f32 %v667, %v684
        %v690 = vmul.f32 %v668, %v684
        %v691 = vmul.f32 %v669, %v684
        %v692 = vmul.f32 %v670, %v684
        %v693 = vmul.f32 %v671, %v684
        %v694 = vmul.f32 %v672, %v684
        %v695 = vmul.f32 %v673, %v684
        %v696 = vmul.f32 %v674, %v684
        %v697 = vmul.f32 %v675, %v684
        %v698 = vmul.f32 %v676, %v684
        %v699 = vmul.f32 %v677, %v684
        %v700 = vmul.f32 %v678, %v684
        %v701 = vmul.f32 %v679, %v684
        %v703 = vlaneseq
        %v704 = vshrl.u32 %v703, 7
        %v705 = vsub.s32 0, %v704
        %v706 = vrot.slane %v663, %v705
        %v708 = vadd.f32 %v686, %v706
        %v709 = vadd.f32 %v687, %v706
        %v710 = vadd.f32 %v688, %v706
        %v711 = vadd.f32 %v689, %v706
        %v712 = vadd.f32 %v690, %v706
        %v713 = vadd.f32 %v691, %v706
        %v714 = vadd.f32 %v692, %v706
        %v715 = vadd.f32 %v693, %v706
        %v716 = vadd.f32 %v694, %v706
        %v717 = vadd.f32 %v695, %v706
        %v718 = vadd.f32 %v696, %v706
        %v719 = vadd.f32 %v697, %v706
        %v720 = vadd.f32 %v698, %v706
        %v721 = vadd.f32 %v699, %v706
        %v722 = vadd.f32 %v700, %v706
        %v723 = vadd.f32 %v701, %v706
        %v724 = vmax.f32 %v708, 0.0
        %v725 = vmax.f32 %v709, 0.0
        %v726 = vmax.f32 %v710, 0.0
        %v727 = vmax.f32 %v711, 0.0
        %v728 = vmax.f32 %v712, 0.0
        %v729 = vmax.f32 %v713, 0.0
        %v730 = vmax.f32 %v714, 0.0
        %v731 = vmax.f32 %v715, 0.0
        %v732 = vmax.f32 %v716, 0.0
        %v733 = vmax.f32 %v717, 0.0
        %v734 = vmax.f32 %v718, 0.0
        %v735 = vmax.f32 %v719, 0.0
        %v736 = vmax.f32 %v720, 0.0
        %v737 = vmax.f32 %v721, 0.0
        %v738 = vmax.f32 %v722, 0.0
        %v739 = vmax.f32 %v723, 0.0
        %740 = vst [vmem:[%s4] sm:$0xff] %v724
        %741 = vst [vmem:[%s4 + $0x8] sm:$0xff] %v725
        %742 = vst [vmem:[%s4 + $0x10] sm:$0xff] %v726
        %743 = vst [vmem:[%s4 + $0x18] sm:$0xff] %v727
        %744 = vst [vmem:[%s4 + $0x20] sm:$0xff] %v728
        %745 = vst [vmem:[%s4 + $0x28] sm:$0xff] %v729
        %746 = vst [vmem:[%s4 + $0x30] sm:$0xff] %v730
        %747 = vst [vmem:[%s4 + $0x38] sm:$0xff] %v731
        %748 = vst [vmem:[%s4 + $0x40] sm:$0xff] %v732
        %749 = vst [vmem:[%s4 + $0x48] sm:$0xff] %v733
        %750 = vst [vmem:[%s4 + $0x50] sm:$0xff] %v734
        %751 = vst [vmem:[%s4 + $0x58] sm:$0xff] %v735
        %752 = vst [vmem:[%s4 + $0x60] sm:$0xff] %v736
        %753 = vst [vmem:[%s4 + $0x68] sm:$0xff] %v737
        %754 = vst [vmem:[%s4 + $0x70] sm:$0xff] %v738
        %755 = vst [vmem:[%s4 + $0x78] sm:$0xff] %v739
      $region44: #{generator_forward.6} parent=35 // pred_fallthru
        _
      // Predicated region
      $region45: #{generator_forward.6} parent=35 // pred_check
        %p756 = pneg %p122
      $region46: #{generator_forward.6} parent=35 // pred_check_branch
        %758 = sbr.rel (%p756) target = $region48
      $region47: #{generator_forward.6} parent=35 // pred_region
        _
      $region48: #{generator_forward.6} parent=35 // pred_fallthru
        _
      // Predicated region
      $region49: #{generator_forward.6} parent=35 // pred_check
        %p759 = pneg %p122
      $region50: #{generator_forward.6} parent=35 // pred_check_branch
        %761 = sbr.rel (%p759) target = $region52
      $region51: #{generator_forward.6} parent=35 // pred_region
        _
      $region52: #{generator_forward.6} parent=35 // pred_fallthru
        _
    $region36: #{generator_forward.6} parent=5 // pred_fallthru
      _
    %p762 = scmp.le.s32.totalorder 2, %s10
    // Predicated region
    $region53: #{generator_forward.6} parent=5 // pred_check
      %p763 = pneg %p762
    $region54: #{generator_forward.6} parent=5 // pred_check_branch
      %765 = sbr.rel (%p763) target = $region56
    $region55: #{generator_forward.6} parent=5 // pred_region
      %s766 = ssub.s32 %s10, 2
    $region56: #{generator_forward.6} parent=5 // pred_fallthru
      _
  $region6: #{generator_forward.6} parent=0 // loop_footer
    %s14 = sadd.s32 1, %s10
  $region7: #{generator_forward.6} parent=0 // loop_footer_branch
    %9 = sbr.rel target = $region3
  $region8: #{generator_forward.6} parent=0 // loop_exit
    _

// kernel: generator_forward.7
$region0: #{generator_forward.7}
  #allocation0 [shape = 'u32[]', space=smem, size = 0x4, offset = 0x4, fixed_abs, tag = 'smem constant byte address 0x4 - core index']
  #allocation1 [shape = 'u32[144,128]{1,0:T(1,128)}', space=vmem, size = 0x12000, scoped, tag = 'internal scratch']
  #allocation2 [shape = 'f32[1,128]{1,0:T(1,128)}', space=vmem, size = 0x200, scoped, tag = 'scratch operand']
  #allocation3 [shape = 'f32[1,128]{1,0:T(1,128)}', space=vmem, size = 0x200, scoped, tag = 'scratch operand']
  %s0 = inlined_call_operand.vmem [shape: bf16[4,128,256], index: 0, kind: input, shape index: {}]
  %s1 = inlined_call_operand.vmem [shape: bf16[4,256,128], index: 1, kind: input, shape index: {}]
  %s2 = inlined_call_operand.vmem [shape: f32[1,128], index: 2, kind: input, shape index: {}]
  %s3 = inlined_call_operand.vmem [shape: f32[1,128], index: 3, kind: input, shape index: {}]
  %s4 = inlined_call_operand.vmem [shape: f32[4,128,128], index: 4, kind: output, shape index: {}]
  %s5 = sld [smem:[#allocation0]]
  $region57: #{generator_forward.7} parent=0
    _
  %s7 = ssub.s32 1, %s5
  %s8 = scalar_select 0, %s7, %s5
  loop: start=0, step=1, limit=6
  $region2: #{generator_forward.7} parent=0 // loop_pre_header
    _
  $region3: #{generator_forward.7} parent=0 // loop_header
    %s10 = sphi 0, %s14
    %p11 = scmp.ge.s32.totalorder %s10, 6
    %s20 = sphi 0, %s22
    %s23 = sphi 0, %s20
    %s24 = sphi 0, %s23
    %s40 = sphi 0, %s24
    %s46 = sphi 0, %s48
    %s49 = sphi 0, %s46
    %s50 = sphi 0, %s49
    %s66 = sphi 0, %s50
    %s70 = sphi 0, %s70
    %s72 = sphi 0, %s70
    %s73 = sphi 0, %s72
    %s87 = sphi 0, %s73
    %s91 = sphi 0, %s91
    %s93 = sphi 0, %s91
    %s94 = sphi 0, %s93
    %s108 = sphi 0, %s94
    %s112 = sphi 0, %s112
    %s114 = sphi 0, %s112
    %s115 = sphi 0, %s114
    %s129 = sphi 0, %s115
  $region4: #{generator_forward.7} parent=0 // loop_header_branch
    %13 = sbr.rel (%p11) target = $region8
  $region5: #{generator_forward.7} parent=0 // loop_body
    %s15 = ssub.s32 %s10, 1
    %s16 = ssub.s32 %s10, 2
    %s17 = sadd.s32 %s10, 1
    %s18 = ssub.s32 %s10, %s17
    %p19 = scmp.eq.s32.totalorder %s18, 0
    %s21 = sadd.s32 %s20, 1
    %s22 = scalar_select %p19, %s20, %s21
    %p25 = pneg %p19
    %p26 = scmp.eq.s32.totalorder %s10, 3
    %p27 = por %p25, %p26
    %p28 = scmp.ne.s32.totalorder %s20, %s23
    %p29 = scmp.eq.s32.totalorder %s10, 0
    %p30 = por %p28, %p29
    %p31 = scmp.ne.s32.totalorder %s20, %s23
    %p32 = scmp.eq.s32.totalorder %s15, 3
    %p33 = por %p31, %p32
    %p34 = scmp.ne.s32.totalorder %s23, %s24
    %p35 = scmp.eq.s32.totalorder %s15, 0
    %p36 = por %p34, %p35
    %p37 = scmp.ne.s32.totalorder %s23, %s24
    %p38 = scmp.eq.s32.totalorder %s16, 3
    %p39 = por %p37, %p38
    %p41 = scmp.ne.s32.totalorder %s24, %s40
    %p42 = scmp.eq.s32.totalorder %s16, 0
    %p43 = por %p41, %p42
    %s44 = ssub.s32 %s10, %s17
    %p45 = scmp.eq.s32.totalorder %s44, 0
    %s47 = sadd.s32 %s46, 1
    %s48 = scalar_select %p45, %s46, %s47
    %p51 = pneg %p45
    %p52 = scmp.eq.s32.totalorder %s10, 3
    %p53 = por %p51, %p52
    %p54 = scmp.ne.s32.totalorder %s46, %s49
    %p55 = scmp.eq.s32.totalorder %s10, 0
    %p56 = por %p54, %p55
    %p57 = scmp.ne.s32.totalorder %s46, %s49
    %p58 = scmp.eq.s32.totalorder %s15, 3
    %p59 = por %p57, %p58
    %p60 = scmp.ne.s32.totalorder %s49, %s50
    %p61 = scmp.eq.s32.totalorder %s15, 0
    %p62 = por %p60, %p61
    %p63 = scmp.ne.s32.totalorder %s49, %s50
    %p64 = scmp.eq.s32.totalorder %s16, 3
    %p65 = por %p63, %p64
    %p67 = scmp.ne.s32.totalorder %s50, %s66
    %p68 = scmp.eq.s32.totalorder %s16, 0
    %p69 = por %p67, %p68
    %s71 = sadd.s32 %s70, 1
    %p74 = scmp.eq.s32.totalorder %s10, 3
    %p75 = scmp.ne.s32.totalorder %s70, %s72
    %p76 = scmp.eq.s32.totalorder %s10, 0
    %p77 = por %p75, %p76
    %p78 = scmp.ne.s32.totalorder %s70, %s72
    %p79 = scmp.eq.s32.totalorder %s15, 3
    %p80 = por %p78, %p79
    %p81 = scmp.ne.s32.totalorder %s72, %s73
    %p82 = scmp.eq.s32.totalorder %s15, 0
    %p83 = por %p81, %p82
    %p84 = scmp.ne.s32.totalorder %s72, %s73
    %p85 = scmp.eq.s32.totalorder %s16, 3
    %p86 = por %p84, %p85
    %p88 = scmp.ne.s32.totalorder %s73, %s87
    %p89 = scmp.eq.s32.totalorder %s16, 0
    %p90 = por %p88, %p89
    %s92 = sadd.s32 %s91, 1
    %p95 = scmp.eq.s32.totalorder %s10, 3
    %p96 = scmp.ne.s32.totalorder %s91, %s93
    %p97 = scmp.eq.s32.totalorder %s10, 0
    %p98 = por %p96, %p97
    %p99 = scmp.ne.s32.totalorder %s91, %s93
    %p100 = scmp.eq.s32.totalorder %s15, 3
    %p101 = por %p99, %p100
    %p102 = scmp.ne.s32.totalorder %s93, %s94
    %p103 = scmp.eq.s32.totalorder %s15, 0
    %p104 = por %p102, %p103
    %p105 = scmp.ne.s32.totalorder %s93, %s94
    %p106 = scmp.eq.s32.totalorder %s16, 3
    %p107 = por %p105, %p106
    %p109 = scmp.ne.s32.totalorder %s94, %s108
    %p110 = scmp.eq.s32.totalorder %s16, 0
    %p111 = por %p109, %p110
    %s113 = sadd.s32 %s112, 1
    %p116 = scmp.eq.s32.totalorder %s10, 3
    %p117 = scmp.ne.s32.totalorder %s112, %s114
    %p118 = scmp.eq.s32.totalorder %s10, 0
    %p119 = por %p117, %p118
    %p120 = scmp.ne.s32.totalorder %s112, %s114
    %p121 = scmp.eq.s32.totalorder %s15, 3
    %p122 = por %p120, %p121
    %p123 = scmp.ne.s32.totalorder %s114, %s115
    %p124 = scmp.eq.s32.totalorder %s15, 0
    %p125 = por %p123, %p124
    %p126 = scmp.ne.s32.totalorder %s114, %s115
    %p127 = scmp.eq.s32.totalorder %s16, 3
    %p128 = por %p126, %p127
    %p130 = scmp.ne.s32.totalorder %s115, %s129
    %p131 = scmp.eq.s32.totalorder %s16, 0
    %p132 = por %p130, %p131
    %p133 = scmp.le.s32.totalorder 1, %s10
    %p134 = scmp.lt.s32.totalorder %s10, 5
    %p135 = pnand %p133, %p134
    %p136 = pneg %p135
    // Predicated region
    $region9: #{generator_forward.7} parent=5 // pred_check
      _
    $region10: #{generator_forward.7} parent=5 // pred_check_branch
      %138 = sbr.rel (%p135) target = $region12
    $region11: #{generator_forward.7} parent=5 // pred_region
      %s139 = ssub.s32 %s10, 1
      // Predicated region
      $region13: #{generator_forward.7} parent=11 // pred_check
        %p140 = pneg %p83
      $region14: #{generator_forward.7} parent=11 // pred_check_branch
        %142 = sbr.rel (%p140) target = $region16
      $region15: #{generator_forward.7} parent=11 // pred_region
        _
      $region16: #{generator_forward.7} parent=11 // pred_fallthru
        _
      // Predicated region
      $region17: #{generator_forward.7} parent=11 // pred_check
        %p143 = pneg %p104
      $region18: #{generator_forward.7} parent=11 // pred_check_branch
        %145 = sbr.rel (%p143) target = $region20
      $region19: #{generator_forward.7} parent=11 // pred_region
        _
      $region20: #{generator_forward.7} parent=11 // pred_fallthru
        _
    $region12: #{generator_forward.7} parent=5 // pred_fallthru
      _
    %p146 = scmp.lt.s32.totalorder %s10, 4
    // Predicated region
    $region21: #{generator_forward.7} parent=5 // pred_check
      %p147 = pneg %p146
    $region22: #{generator_forward.7} parent=5 // pred_check_branch
      %149 = sbr.rel (%p147) target = $region24
    $region23: #{generator_forward.7} parent=5 // pred_region
      // Predicated region
      $region25: #{generator_forward.7} parent=23 // pred_check
        %p150 = pneg %p30
      $region26: #{generator_forward.7} parent=23 // pred_check_branch
        %152 = sbr.rel (%p150) target = $region28
      $region27: #{generator_forward.7} parent=23 // pred_region
        %p153 = scmp.lt.s32.totalorder %s10, 3
        %s154 = scalar_select %p153, %s10, 3
        %s155 = smul.addr %s154, 32
        %s156 = smul.addr %s155, 4
        %s157 = scalar_lea.vmem %s0, %s156
      $region28: #{generator_forward.7} parent=23 // pred_fallthru
        _
      // Predicated region
      $region29: #{generator_forward.7} parent=23 // pred_check
        %p158 = pneg %p56
      $region30: #{generator_forward.7} parent=23 // pred_check_branch
        %160 = sbr.rel (%p158) target = $region32
      $region31: #{generator_forward.7} parent=23 // pred_region
        %p161 = scmp.lt.s32.totalorder %s10, 3
        %s162 = scalar_select %p161, %s10, 3
        %s163 = smul.addr %s162, 32
        %s164 = smul.addr %s163, 4
        %s165 = scalar_lea.vmem %s1, %s164
      $region32: #{generator_forward.7} parent=23 // pred_fallthru
        _
    $region24: #{generator_forward.7} parent=5 // pred_fallthru
      _
    %p166 = scmp.le.s32.totalorder 1, %s10
    %p167 = scmp.lt.s32.totalorder %s10, 5
    %p168 = pnand %p166, %p167
    %p169 = pneg %p168
    // Predicated region
    $region33: #{generator_forward.7} parent=5 // pred_check
      _
    $region34: #{generator_forward.7} parent=5 // pred_check_branch
      %171 = sbr.rel (%p168) target = $region36
    $region35: #{generator_forward.7} parent=5 // pred_region
      %s172 = ssub.s32 %s10, 1
      %p173 = scmp.lt.s32.totalorder %s15, 3
      %s174 = scalar_select %p173, %s15, 3
      %s175 = smul.addr %s174, 32
      %s176 = smul.addr %s175, 4
      %s177 = scalar_lea.vmem %s0, %s176
      %p178 = pneg %p36
      %p179 = pneg %p33
      %p180 = scmp.lt.s32.totalorder %s15, 3
      %s181 = scalar_select %p180, %s15, 3
      %s182 = smul.addr %s181, 32
      %s183 = smul.addr %s182, 4
      %s184 = scalar_lea.vmem %s1, %s183
      %p185 = pneg %p62
      %p186 = pneg %p59
      %p187 = pneg %p83
      %p188 = pneg %p80
      %p189 = pneg %p104
      %p190 = pneg %p101
      %p191 = pneg %p125
      %p192 = pneg %p122
      %p193 = scmp.lt.s32.totalorder %s15, 3
      %s194 = scalar_select %p193, %s15, 3
      %s195 = smul.addr %s194, 32
      %s196 = smul.addr %s195, 4
      %s197 = scalar_lea.vmem %s0, %s196
      %p198 = scmp.lt.s32.totalorder %s15, 3
      %s199 = scalar_select %p198, %s15, 3
      %s200 = smul.addr %s199, 32
      %s201 = smul.addr %s200, 4
      %s202 = scalar_lea.vmem %s1, %s201
      %p204 = scmp.eq.s32.totalorder %s15, 0
      // Predicated region
      $region37: #{generator_forward.7} parent=35 // pred_check
        %p205 = pneg %p204
      $region38: #{generator_forward.7} parent=35 // pred_check_branch
        %207 = sbr.rel (%p205) target = $region40
      $region39: #{generator_forward.7} parent=35 // pred_region
        %208 = vst [vmem:[#allocation2] sm:$0x1] 0.0
        %209 = vst [vmem:[#allocation3] sm:$0x1] 0.0
      $region40: #{generator_forward.7} parent=35 // pred_fallthru
        _
      %v210 = vld [vmem:[%s197] sm:$0xff]
      %v211 = vld [vmem:[%s197 + $0x8] sm:$0xff]
      %v212 = vld [vmem:[%s197 + $0x10] sm:$0xff]
      %v213 = vld [vmem:[%s197 + $0x18] sm:$0xff]
      %v214 = vld [vmem:[%s197 + $0x20] sm:$0xff]
      %v215 = vld [vmem:[%s197 + $0x28] sm:$0xff]
      %v216 = vld [vmem:[%s197 + $0x30] sm:$0xff]
      %v217 = vld [vmem:[%s197 + $0x38] sm:$0xff]
      %v218 = vld [vmem:[%s197 + $0x40] sm:$0xff]
      %v219 = vld [vmem:[%s197 + $0x48] sm:$0xff]
      %v220 = vld [vmem:[%s197 + $0x50] sm:$0xff]
      %v221 = vld [vmem:[%s197 + $0x58] sm:$0xff]
      %v222 = vld [vmem:[%s197 + $0x60] sm:$0xff]
      %v223 = vld [vmem:[%s197 + $0x68] sm:$0xff]
      %v224 = vld [vmem:[%s197 + $0x70] sm:$0xff]
      %v225 = vld [vmem:[%s197 + $0x78] sm:$0xff]
      %v226 = vld [vmem:[%s202] sm:$0xf]
      %v227 = vld [vmem:[%s202 + $0x4] sm:$0xf]
      %v228 = vld [vmem:[%s202 + $0x8] sm:$0xf]
      %v229 = vld [vmem:[%s202 + $0xc] sm:$0xf]
      %v230 = vld [vmem:[%s202 + $0x10] sm:$0xf]
      %v231 = vld [vmem:[%s202 + $0x14] sm:$0xf]
      %v232 = vld [vmem:[%s202 + $0x18] sm:$0xf]
      %v233 = vld [vmem:[%s202 + $0x1c] sm:$0xf]
      %v234 = vld [vmem:[%s202 + $0x20] sm:$0xf]
      %v235 = vld [vmem:[%s202 + $0x24] sm:$0xf]
      %v236 = vld [vmem:[%s202 + $0x28] sm:$0xf]
      %v237 = vld [vmem:[%s202 + $0x2c] sm:$0xf]
      %v238 = vld [vmem:[%s202 + $0x30] sm:$0xf]
      %v239 = vld [vmem:[%s202 + $0x34] sm:$0xf]
      %v240 = vld [vmem:[%s202 + $0x38] sm:$0xf]
      %v241 = vld [vmem:[%s202 + $0x3c] sm:$0xf]
      %v242 = vld [vmem:[%s202 + $0x40] sm:$0xf]
      %v243 = vld [vmem:[%s202 + $0x44] sm:$0xf]
      %v244 = vld [vmem:[%s202 + $0x48] sm:$0xf]
      %v245 = vld [vmem:[%s202 + $0x4c] sm:$0xf]
      %v246 = vld [vmem:[%s202 + $0x50] sm:$0xf]
      %v247 = vld [vmem:[%s202 + $0x54] sm:$0xf]
      %v248 = vld [vmem:[%s202 + $0x58] sm:$0xf]
      %v249 = vld [vmem:[%s202 + $0x5c] sm:$0xf]
      %v250 = vld [vmem:[%s202 + $0x60] sm:$0xf]
      %v251 = vld [vmem:[%s202 + $0x64] sm:$0xf]
      %v252 = vld [vmem:[%s202 + $0x68] sm:$0xf]
      %v253 = vld [vmem:[%s202 + $0x6c] sm:$0xf]
      %v254 = vld [vmem:[%s202 + $0x70] sm:$0xf]
      %v255 = vld [vmem:[%s202 + $0x74] sm:$0xf]
      %v256 = vld [vmem:[%s202 + $0x78] sm:$0xf]
      %v257 = vld [vmem:[%s202 + $0x7c] sm:$0xf]
      %v274 = vunpack.c.l.b16 %v210
      %v275 = vunpack.c.h.b16 %v210
      %v276 = vunpack.c.l.b16 %v211
      %v277 = vunpack.c.h.b16 %v211
      %v278 = vunpack.c.l.b16 %v212
      %v279 = vunpack.c.h.b16 %v212
      %v280 = vunpack.c.l.b16 %v213
      %v281 = vunpack.c.h.b16 %v213
      %v282 = vunpack.c.l.b16 %v214
      %v283 = vunpack.c.h.b16 %v214
      %v284 = vunpack.c.l.b16 %v215
      %v285 = vunpack.c.h.b16 %v215
      %v286 = vunpack.c.l.b16 %v216
      %v287 = vunpack.c.h.b16 %v216
      %v288 = vunpack.c.l.b16 %v217
      %v289 = vunpack.c.h.b16 %v217
      %v290 = vunpack.c.l.b16 %v218
      %v291 = vunpack.c.h.b16 %v218
      %v292 = vunpack.c.l.b16 %v219
      %v293 = vunpack.c.h.b16 %v219
      %v294 = vunpack.c.l.b16 %v220
      %v295 = vunpack.c.h.b16 %v220
      %v296 = vunpack.c.l.b16 %v221
      %v297 = vunpack.c.h.b16 %v221
      %v298 = vunpack.c.l.b16 %v222
      %v299 = vunpack.c.h.b16 %v222
      %v300 = vunpack.c.l.b16 %v223
      %v301 = vunpack.c.h.b16 %v223
      %v302 = vunpack.c.l.b16 %v224
      %v303 = vunpack.c.h.b16 %v224
      %v304 = vunpack.c.l.b16 %v225
      %v305 = vunpack.c.h.b16 %v225
      %v306 = vpack.c.b16 %v276, %v274
      %v307 = vpack.c.b16 %v277, %v275
      %v308 = vpack.c.b16 %v280, %v278
      %v309 = vpack.c.b16 %v281, %v279
      %v310 = vpack.c.b16 %v284, %v282
      %v311 = vpack.c.b16 %v285, %v283
      %v312 = vpack.c.b16 %v288, %v286
      %v313 = vpack.c.b16 %v289, %v287
      %v314 = vpack.c.b16 %v292, %v290
      %v315 = vpack.c.b16 %v293, %v291
      %v316 = vpack.c.b16 %v296, %v294
      %v317 = vpack.c.b16 %v297, %v295
      %v318 = vpack.c.b16 %v300, %v298
      %v319 = vpack.c.b16 %v301, %v299
      %v320 = vpack.c.b16 %v304, %v302
      %v321 = vpack.c.b16 %v305, %v303
      %v370 = vunpack.c.l.b16 %v226
      %v371 = vunpack.c.l.b16 %v227
      %v372 = vunpack.c.l.b16 %v228
      %v373 = vunpack.c.l.b16 %v229
      %v374 = vunpack.c.l.b16 %v230
      %v375 = vunpack.c.l.b16 %v231
      %v376 = vunpack.c.l.b16 %v232
      %v377 = vunpack.c.l.b16 %v233
      %v378 = vunpack.c.l.b16 %v234
      %v379 = vunpack.c.l.b16 %v235
      %v380 = vunpack.c.l.b16 %v236
      %v381 = vunpack.c.l.b16 %v237
      %v382 = vunpack.c.l.b16 %v238
      %v383 = vunpack.c.l.b16 %v239
      %v384 = vunpack.c.l.b16 %v240
      %v385 = vunpack.c.l.b16 %v241
      %v386 = vunpack.c.l.b16 %v242
      %v387 = vunpack.c.l.b16 %v243
      %v388 = vunpack.c.l.b16 %v244
      %v389 = vunpack.c.l.b16 %v245
      %v390 = vunpack.c.l.b16 %v246
      %v391 = vunpack.c.l.b16 %v247
      %v392 = vunpack.c.l.b16 %v248
      %v393 = vunpack.c.l.b16 %v249
      %v394 = vunpack.c.l.b16 %v250
      %v395 = vunpack.c.l.b16 %v251
      %v396 = vunpack.c.l.b16 %v252
      %v397 = vunpack.c.l.b16 %v253
      %v398 = vunpack.c.l.b16 %v254
      %v399 = vunpack.c.l.b16 %v255
      %v400 = vunpack.c.l.b16 %v256
      %v401 = vunpack.c.l.b16 %v257
      %v402 = vpack.c.b16 %v371, %v370
      %v403 = vpack.c.b16 %v373, %v372
      %v404 = vpack.c.b16 %v375, %v374
      %v405 = vpack.c.b16 %v377, %v376
      %v406 = vpack.c.b16 %v379, %v378
      %v407 = vpack.c.b16 %v381, %v380
      %v408 = vpack.c.b16 %v383, %v382
      %v409 = vpack.c.b16 %v385, %v384
      %v410 = vpack.c.b16 %v387, %v386
      %v411 = vpack.c.b16 %v389, %v388
      %v412 = vpack.c.b16 %v391, %v390
      %v413 = vpack.c.b16 %v393, %v392
      %v414 = vpack.c.b16 %v395, %v394
      %v415 = vpack.c.b16 %v397, %v396
      %v416 = vpack.c.b16 %v399, %v398
      %v417 = vpack.c.b16 %v401, %v400
      %434 = vmatprep.subr.bf16.mxu0 0
      %435 = vmatpush1.bf16.msra.mxu0 %v409
      %436 = vmatprep.subr.bf16.mxu0 0
      %437 = vmatpush1.bf16.msra.mxu0 %v408
      %438 = vmatprep.subr.bf16.mxu0 0
      %439 = vmatpush1.bf16.msra.mxu0 %v407
      %440 = vmatprep.subr.bf16.mxu0 0
      %441 = vmatpush1.bf16.msra.mxu0 %v406
      %442 = vmatprep.subr.bf16.mxu0 0
      %443 = vmatpush1.bf16.msra.mxu0 %v405
      %444 = vmatprep.subr.bf16.mxu0 0
      %445 = vmatpush1.bf16.msra.mxu0 %v404
      %446 = vmatprep.subr.bf16.mxu0 0
      %447 = vmatpush1.bf16.msra.mxu0 %v403
      %448 = vmatprep.subr.bf16.mxu0 0
      %449 = vmatpush1.bf16.msra.mxu0 %v402
      %450 = vmatprep.subr.bf16.mxu0 0
      %451 = vmatpush2.bf16.msra.mxu0 %v417
      %452 = vmatprep.subr.bf16.mxu0 0
      %453 = vmatpush2.bf16.msra.mxu0 %v416
      %454 = vmatprep.subr.bf16.mxu0 0
      %455 = vmatpush2.bf16.msra.mxu0 %v415
      %456 = vmatprep.subr.bf16.mxu0 0
      %457 = vmatpush2.bf16.msra.mxu0 %v414
      %458 = vmatprep.subr.bf16.mxu0 0
      %459 = vmatpush2.bf16.msra.mxu0 %v413
      %460 = vmatprep.subr.bf16.mxu0 0
      %461 = vmatpush2.bf16.msra.mxu0 %v412
      %462 = vmatprep.subr.bf16.mxu0 0
      %463 = vmatpush2.bf16.msra.mxu0 %v411
      %464 = vmatprep.subr.bf16.mxu0 0
      %465 = vmatpush2.bf16.msra.mxu0 %v410
      %466 = vmatprep.mubr.bf16.mxu0 %v307
      %467 = vmatmul.mubr.bf16.gmra.mxu0 %v306
      %v468 = vpop.f32.mrf.mxu0
      %v469 = vadd.f32 0.0, %v468
      %v470 = vpop.f32.mrf.mxu0
      %v471 = vpop.f32.mrf.mxu0
      %v472 = vadd.f32 0.0, %v471
      %v473 = vpop.f32.mrf.mxu0
      %474 = vmatprep.mubr.bf16.mxu0 %v309
      %475 = vmatmul.mubr.bf16.gmra.mxu0 %v308
      %v476 = vpop.f32.mrf.mxu0
      %v477 = vadd.f32 0.0, %v476
      %v478 = vpop.f32.mrf.mxu0
      %v479 = vpop.f32.mrf.mxu0
      %v480 = vadd.f32 0.0, %v479
      %v481 = vpop.f32.mrf.mxu0
      %482 = vmatprep.mubr.bf16.mxu0 %v311
      %483 = vmatmul.mubr.bf16.gmra.mxu0 %v310
      %v484 = vpop.f32.mrf.mxu0
      %v485 = vadd.f32 0.0, %v484
      %v486 = vpop.f32.mrf.mxu0
      %v487 = vpop.f32.mrf.mxu0
      %v488 = vadd.f32 0.0, %v487
      %v489 = vpop.f32.mrf.mxu0
      %490 = vmatprep.mubr.bf16.mxu0 %v313
      %491 = vmatmul.mubr.bf16.gmra.mxu0 %v312
      %v492 = vpop.f32.mrf.mxu0
      %v493 = vadd.f32 0.0, %v492
      %v494 = vpop.f32.mrf.mxu0
      %v495 = vpop.f32.mrf.mxu0
      %v496 = vadd.f32 0.0, %v495
      %v497 = vpop.f32.mrf.mxu0
      %498 = vmatprep.mubr.bf16.mxu0 %v315
      %499 = vmatmul.mubr.bf16.gmra.mxu0 %v314
      %v500 = vpop.f32.mrf.mxu0
      %v501 = vadd.f32 0.0, %v500
      %v502 = vpop.f32.mrf.mxu0
      %v503 = vpop.f32.mrf.mxu0
      %v504 = vadd.f32 0.0, %v503
      %v505 = vpop.f32.mrf.mxu0
      %506 = vmatprep.mubr.bf16.mxu0 %v317
      %507 = vmatmul.mubr.bf16.gmra.mxu0 %v316
      %v508 = vpop.f32.mrf.mxu0
      %v509 = vadd.f32 0.0, %v508
      %v510 = vpop.f32.mrf.mxu0
      %v511 = vpop.f32.mrf.mxu0
      %v512 = vadd.f32 0.0, %v511
      %v513 = vpop.f32.mrf.mxu0
      %514 = vmatprep.mubr.bf16.mxu0 %v319
      %515 = vmatmul.mubr.bf16.gmra.mxu0 %v318
      %v516 = vpop.f32.mrf.mxu0
      %v517 = vadd.f32 0.0, %v516
      %v518 = vpop.f32.mrf.mxu0
      %v519 = vpop.f32.mrf.mxu0
      %v520 = vadd.f32 0.0, %v519
      %v521 = vpop.f32.mrf.mxu0
      %522 = vmatprep.mubr.bf16.mxu0 %v321
      %523 = vmatmul.mubr.bf16.gmra.mxu0 %v320
      %v524 = vpop.f32.mrf.mxu0
      %v525 = vadd.f32 0.0, %v524
      %v526 = vpop.f32.mrf.mxu0
      %v527 = vpop.f32.mrf.mxu0
      %v528 = vadd.f32 0.0, %v527
      %v529 = vpop.f32.mrf.mxu0
      %530 = vdwg.mxu0
      %s531 = smul.u32 %s15, 128
      %s532 = scalar_lea.vmem %s4, %s531
      %533 = vst [vmem:[%s532] sm:$0xff] %v469
      %534 = vst [vmem:[%s532 + $0x8] sm:$0xff] %v472
      %535 = vst [vmem:[%s532 + $0x10] sm:$0xff] %v477
      %536 = vst [vmem:[%s532 + $0x18] sm:$0xff] %v480
      %537 = vst [vmem:[%s532 + $0x20] sm:$0xff] %v485
      %538 = vst [vmem:[%s532 + $0x28] sm:$0xff] %v488
      %539 = vst [vmem:[%s532 + $0x30] sm:$0xff] %v493
      %540 = vst [vmem:[%s532 + $0x38] sm:$0xff] %v496
      %541 = vst [vmem:[%s532 + $0x40] sm:$0xff] %v501
      %542 = vst [vmem:[%s532 + $0x48] sm:$0xff] %v504
      %543 = vst [vmem:[%s532 + $0x50] sm:$0xff] %v509
      %544 = vst [vmem:[%s532 + $0x58] sm:$0xff] %v512
      %545 = vst [vmem:[%s532 + $0x60] sm:$0xff] %v517
      %546 = vst [vmem:[%s532 + $0x68] sm:$0xff] %v520
      %547 = vst [vmem:[%s532 + $0x70] sm:$0xff] %v525
      %548 = vst [vmem:[%s532 + $0x78] sm:$0xff] %v528
      %v549 = vld [vmem:[#allocation2] sm:$0x1]
      %v550 = vadd.f32 %v469, %v472
      %v551 = vadd.f32 %v550, %v477
      %v552 = vadd.f32 %v551, %v480
      %v553 = vadd.f32 %v552, %v485
      %v554 = vadd.f32 %v553, %v488
      %v555 = vadd.f32 %v554, %v493
      %v556 = vadd.f32 %v555, %v496
      %v557 = vadd.f32 %v556, %v501
      %v558 = vadd.f32 %v557, %v504
      %v559 = vadd.f32 %v558, %v509
      %v560 = vadd.f32 %v559, %v512
      %v561 = vadd.f32 %v560, %v517
      %v562 = vadd.f32 %v561, %v520
      %v563 = vadd.f32 %v562, %v525
      %v564 = vadd.f32 %v563, %v528
      %v565 = vrot.slane %v564, 4
      %v566 = vadd.f32 %v564, %v565
      %v567 = vrot.slane %v566, 2
      %v568 = vadd.f32 %v566, %v567
      %v569 = vrot.slane %v568, 1
      %v570 = vadd.f32 %v568, %v569
      %v571 = vadd.f32 %v549, %v570
      %572 = vst [vmem:[#allocation2] sm:$0x1] %v571
      %v573 = vld [vmem:[#allocation3] sm:$0x1]
      %v574 = vmul.f32 %v469, %v469
      %v575 = vmul.f32 %v472, %v472
      %v576 = vmul.f32 %v477, %v477
      %v577 = vmul.f32 %v480, %v480
      %v578 = vmul.f32 %v485, %v485
      %v579 = vmul.f32 %v488, %v488
      %v580 = vmul.f32 %v493, %v493
      %v581 = vmul.f32 %v496, %v496
      %v582 = vmul.f32 %v501, %v501
      %v583 = vmul.f32 %v504, %v504
      %v584 = vmul.f32 %v509, %v509
      %v585 = vmul.f32 %v512, %v512
      %v586 = vmul.f32 %v517, %v517
      %v587 = vmul.f32 %v520, %v520
      %v588 = vmul.f32 %v525, %v525
      %v589 = vmul.f32 %v528, %v528
      %v590 = vadd.f32 %v574, %v575
      %v591 = vadd.f32 %v590, %v576
      %v592 = vadd.f32 %v591, %v577
      %v593 = vadd.f32 %v592, %v578
      %v594 = vadd.f32 %v593, %v579
      %v595 = vadd.f32 %v594, %v580
      %v596 = vadd.f32 %v595, %v581
      %v597 = vadd.f32 %v596, %v582
      %v598 = vadd.f32 %v597, %v583
      %v599 = vadd.f32 %v598, %v584
      %v600 = vadd.f32 %v599, %v585
      %v601 = vadd.f32 %v600, %v586
      %v602 = vadd.f32 %v601, %v587
      %v603 = vadd.f32 %v602, %v588
      %v604 = vadd.f32 %v603, %v589
      %v605 = vrot.slane %v604, 4
      %v606 = vadd.f32 %v604, %v605
      %v607 = vrot.slane %v606, 2
      %v608 = vadd.f32 %v606, %v607
      %v609 = vrot.slane %v608, 1
      %v610 = vadd.f32 %v608, %v609
      %v611 = vadd.f32 %v573, %v610
      %612 = vst [vmem:[#allocation3] sm:$0x1] %v611
      %p613 = scmp.eq.s32.totalorder %s15, 3
      // Predicated region
      $region41: #{generator_forward.7} parent=35 // pred_check
        %p614 = pneg %p613
      $region42: #{generator_forward.7} parent=35 // pred_check_branch
        %616 = sbr.rel (%p614) target = $region44
      $region43: #{generator_forward.7} parent=35 // pred_region
        %v617 = vld [vmem:[#allocation2] sm:$0x1]
        %v618 = vrcp.pop 512.0
        %v619 = vmul.f32 %v617, %v618
        %v620 = vld [vmem:[#allocation3] sm:$0x1]
        %v621 = vmul.f32 %v620, %v618
        %v622 = vmul.f32 %v619, %v619
        %v623 = vsub.f32 %v621, %v622
        %v624 = vld [vmem:[%s2] sm:$0x1]
        %v625 = vadd.f32 %v623, 1e-05
        %v626 = vrsqrt.pop %v625
        %v627 = vmul.f32 %v624, %v626
        %v628 = vld [vmem:[%s3] sm:$0x1]
        %v629 = vmul.f32 %v619, %v627
        %v630 = vsub.f32 %v628, %v629
        %v631 = vld [vmem:[%s4] sm:$0xff]
        %v632 = vld [vmem:[%s4 + $0x8] sm:$0xff]
        %v633 = vld [vmem:[%s4 + $0x10] sm:$0xff]
        %v634 = vld [vmem:[%s4 + $0x18] sm:$0xff]
        %v635 = vld [vmem:[%s4 + $0x20] sm:$0xff]
        %v636 = vld [vmem:[%s4 + $0x28] sm:$0xff]
        %v637 = vld [vmem:[%s4 + $0x30] sm:$0xff]
        %v638 = vld [vmem:[%s4 + $0x38] sm:$0xff]
        %v639 = vld [vmem:[%s4 + $0x40] sm:$0xff]
        %v640 = vld [vmem:[%s4 + $0x48] sm:$0xff]
        %v641 = vld [vmem:[%s4 + $0x50] sm:$0xff]
        %v642 = vld [vmem:[%s4 + $0x58] sm:$0xff]
        %v643 = vld [vmem:[%s4 + $0x60] sm:$0xff]
        %v644 = vld [vmem:[%s4 + $0x68] sm:$0xff]
        %v645 = vld [vmem:[%s4 + $0x70] sm:$0xff]
        %v646 = vld [vmem:[%s4 + $0x78] sm:$0xff]
        %v647 = vld [vmem:[%s4 + $0x80] sm:$0xff]
        %v648 = vld [vmem:[%s4 + $0x88] sm:$0xff]
        %v649 = vld [vmem:[%s4 + $0x90] sm:$0xff]
        %v650 = vld [vmem:[%s4 + $0x98] sm:$0xff]
        %v651 = vld [vmem:[%s4 + $0xa0] sm:$0xff]
        %v652 = vld [vmem:[%s4 + $0xa8] sm:$0xff]
        %v653 = vld [vmem:[%s4 + $0xb0] sm:$0xff]
        %v654 = vld [vmem:[%s4 + $0xb8] sm:$0xff]
        %v655 = vld [vmem:[%s4 + $0xc0] sm:$0xff]
        %v656 = vld [vmem:[%s4 + $0xc8] sm:$0xff]
        %v657 = vld [vmem:[%s4 + $0xd0] sm:$0xff]
        %v658 = vld [vmem:[%s4 + $0xd8] sm:$0xff]
        %v659 = vld [vmem:[%s4 + $0xe0] sm:$0xff]
        %v660 = vld [vmem:[%s4 + $0xe8] sm:$0xff]
        %v661 = vld [vmem:[%s4 + $0xf0] sm:$0xff]
        %v662 = vld [vmem:[%s4 + $0xf8] sm:$0xff]
        %v663 = vld [vmem:[%s4 + $0x100] sm:$0xff]
        %v664 = vld [vmem:[%s4 + $0x108] sm:$0xff]
        %v665 = vld [vmem:[%s4 + $0x110] sm:$0xff]
        %v666 = vld [vmem:[%s4 + $0x118] sm:$0xff]
        %v667 = vld [vmem:[%s4 + $0x120] sm:$0xff]
        %v668 = vld [vmem:[%s4 + $0x128] sm:$0xff]
        %v669 = vld [vmem:[%s4 + $0x130] sm:$0xff]
        %v670 = vld [vmem:[%s4 + $0x138] sm:$0xff]
        %v671 = vld [vmem:[%s4 + $0x140] sm:$0xff]
        %v672 = vld [vmem:[%s4 + $0x148] sm:$0xff]
        %v673 = vld [vmem:[%s4 + $0x150] sm:$0xff]
        %v674 = vld [vmem:[%s4 + $0x158] sm:$0xff]
        %v675 = vld [vmem:[%s4 + $0x160] sm:$0xff]
        %v676 = vld [vmem:[%s4 + $0x168] sm:$0xff]
        %v677 = vld [vmem:[%s4 + $0x170] sm:$0xff]
        %v678 = vld [vmem:[%s4 + $0x178] sm:$0xff]
        %v679 = vld [vmem:[%s4 + $0x180] sm:$0xff]
        %v680 = vld [vmem:[%s4 + $0x188] sm:$0xff]
        %v681 = vld [vmem:[%s4 + $0x190] sm:$0xff]
        %v682 = vld [vmem:[%s4 + $0x198] sm:$0xff]
        %v683 = vld [vmem:[%s4 + $0x1a0] sm:$0xff]
        %v684 = vld [vmem:[%s4 + $0x1a8] sm:$0xff]
        %v685 = vld [vmem:[%s4 + $0x1b0] sm:$0xff]
        %v686 = vld [vmem:[%s4 + $0x1b8] sm:$0xff]
        %v687 = vld [vmem:[%s4 + $0x1c0] sm:$0xff]
        %v688 = vld [vmem:[%s4 + $0x1c8] sm:$0xff]
        %v689 = vld [vmem:[%s4 + $0x1d0] sm:$0xff]
        %v690 = vld [vmem:[%s4 + $0x1d8] sm:$0xff]
        %v691 = vld [vmem:[%s4 + $0x1e0] sm:$0xff]
        %v692 = vld [vmem:[%s4 + $0x1e8] sm:$0xff]
        %v693 = vld [vmem:[%s4 + $0x1f0] sm:$0xff]
        %v694 = vld [vmem:[%s4 + $0x1f8] sm:$0xff]
        %v696 = vlaneseq
        %v697 = vshrl.u32 %v696, 7
        %v698 = vsub.s32 0, %v697
        %v699 = vrot.slane %v627, %v698
        %v701 = vmul.f32 %v631, %v699
        %v702 = vmul.f32 %v632, %v699
        %v703 = vmul.f32 %v633, %v699
        %v704 = vmul.f32 %v634, %v699
        %v705 = vmul.f32 %v635, %v699
        %v706 = vmul.f32 %v636, %v699
        %v707 = vmul.f32 %v637, %v699
        %v708 = vmul.f32 %v638, %v699
        %v709 = vmul.f32 %v639, %v699
        %v710 = vmul.f32 %v640, %v699
        %v711 = vmul.f32 %v641, %v699
        %v712 = vmul.f32 %v642, %v699
        %v713 = vmul.f32 %v643, %v699
        %v714 = vmul.f32 %v644, %v699
        %v715 = vmul.f32 %v645, %v699
        %v716 = vmul.f32 %v646, %v699
        %v717 = vmul.f32 %v647, %v699
        %v718 = vmul.f32 %v648, %v699
        %v719 = vmul.f32 %v649, %v699
        %v720 = vmul.f32 %v650, %v699
        %v721 = vmul.f32 %v651, %v699
        %v722 = vmul.f32 %v652, %v699
        %v723 = vmul.f32 %v653, %v699
        %v724 = vmul.f32 %v654, %v699
        %v725 = vmul.f32 %v655, %v699
        %v726 = vmul.f32 %v656, %v699
        %v727 = vmul.f32 %v657, %v699
        %v728 = vmul.f32 %v658, %v699
        %v729 = vmul.f32 %v659, %v699
        %v730 = vmul.f32 %v660, %v699
        %v731 = vmul.f32 %v661, %v699
        %v732 = vmul.f32 %v662, %v699
        %v733 = vmul.f32 %v663, %v699
        %v734 = vmul.f32 %v664, %v699
        %v735 = vmul.f32 %v665, %v699
        %v736 = vmul.f32 %v666, %v699
        %v737 = vmul.f32 %v667, %v699
        %v738 = vmul.f32 %v668, %v699
        %v739 = vmul.f32 %v669, %v699
        %v740 = vmul.f32 %v670, %v699
        %v741 = vmul.f32 %v671, %v699
        %v742 = vmul.f32 %v672, %v699
        %v743 = vmul.f32 %v673, %v699
        %v744 = vmul.f32 %v674, %v699
        %v745 = vmul.f32 %v675, %v699
        %v746 = vmul.f32 %v676, %v699
        %v747 = vmul.f32 %v677, %v699
        %v748 = vmul.f32 %v678, %v699
        %v749 = vmul.f32 %v679, %v699
        %v750 = vmul.f32 %v680, %v699
        %v751 = vmul.f32 %v681, %v699
        %v752 = vmul.f32 %v682, %v699
        %v753 = vmul.f32 %v683, %v699
        %v754 = vmul.f32 %v684, %v699
        %v755 = vmul.f32 %v685, %v699
        %v756 = vmul.f32 %v686, %v699
        %v757 = vmul.f32 %v687, %v699
        %v758 = vmul.f32 %v688, %v699
        %v759 = vmul.f32 %v689, %v699
        %v760 = vmul.f32 %v690, %v699
        %v761 = vmul.f32 %v691, %v699
        %v762 = vmul.f32 %v692, %v699
        %v763 = vmul.f32 %v693, %v699
        %v764 = vmul.f32 %v694, %v699
        %v766 = vlaneseq
        %v767 = vshrl.u32 %v766, 7
        %v768 = vsub.s32 0, %v767
        %v769 = vrot.slane %v630, %v768
        %v771 = vadd.f32 %v701, %v769
        %v772 = vadd.f32 %v702, %v769
        %v773 = vadd.f32 %v703, %v769
        %v774 = vadd.f32 %v704, %v769
        %v775 = vadd.f32 %v705, %v769
        %v776 = vadd.f32 %v706, %v769
        %v777 = vadd.f32 %v707, %v769
        %v778 = vadd.f32 %v708, %v769
        %v779 = vadd.f32 %v709, %v769
        %v780 = vadd.f32 %v710, %v769
        %v781 = vadd.f32 %v711, %v769
        %v782 = vadd.f32 %v712, %v769
        %v783 = vadd.f32 %v713, %v769
        %v784 = vadd.f32 %v714, %v769
        %v785 = vadd.f32 %v715, %v769
        %v786 = vadd.f32 %v716, %v769
        %v787 = vadd.f32 %v717, %v769
        %v788 = vadd.f32 %v718, %v769
        %v789 = vadd.f32 %v719, %v769
        %v790 = vadd.f32 %v720, %v769
        %v791 = vadd.f32 %v721, %v769
        %v792 = vadd.f32 %v722, %v769
        %v793 = vadd.f32 %v723, %v769
        %v794 = vadd.f32 %v724, %v769
        %v795 = vadd.f32 %v725, %v769
        %v796 = vadd.f32 %v726, %v769
        %v797 = vadd.f32 %v727, %v769
        %v798 = vadd.f32 %v728, %v769
        %v799 = vadd.f32 %v729, %v769
        %v800 = vadd.f32 %v730, %v769
        %v801 = vadd.f32 %v731, %v769
        %v802 = vadd.f32 %v732, %v769
        %v803 = vadd.f32 %v733, %v769
        %v804 = vadd.f32 %v734, %v769
        %v805 = vadd.f32 %v735, %v769
        %v806 = vadd.f32 %v736, %v769
        %v807 = vadd.f32 %v737, %v769
        %v808 = vadd.f32 %v738, %v769
        %v809 = vadd.f32 %v739, %v769
        %v810 = vadd.f32 %v740, %v769
        %v811 = vadd.f32 %v741, %v769
        %v812 = vadd.f32 %v742, %v769
        %v813 = vadd.f32 %v743, %v769
        %v814 = vadd.f32 %v744, %v769
        %v815 = vadd.f32 %v745, %v769
        %v816 = vadd.f32 %v746, %v769
        %v817 = vadd.f32 %v747, %v769
        %v818 = vadd.f32 %v748, %v769
        %v819 = vadd.f32 %v749, %v769
        %v820 = vadd.f32 %v750, %v769
        %v821 = vadd.f32 %v751, %v769
        %v822 = vadd.f32 %v752, %v769
        %v823 = vadd.f32 %v753, %v769
        %v824 = vadd.f32 %v754, %v769
        %v825 = vadd.f32 %v755, %v769
        %v826 = vadd.f32 %v756, %v769
        %v827 = vadd.f32 %v757, %v769
        %v828 = vadd.f32 %v758, %v769
        %v829 = vadd.f32 %v759, %v769
        %v830 = vadd.f32 %v760, %v769
        %v831 = vadd.f32 %v761, %v769
        %v832 = vadd.f32 %v762, %v769
        %v833 = vadd.f32 %v763, %v769
        %v834 = vadd.f32 %v764, %v769
        %v835 = vmax.f32 %v771, 0.0
        %v836 = vmax.f32 %v772, 0.0
        %v837 = vmax.f32 %v773, 0.0
        %v838 = vmax.f32 %v774, 0.0
        %v839 = vmax.f32 %v775, 0.0
        %v840 = vmax.f32 %v776, 0.0
        %v841 = vmax.f32 %v777, 0.0
        %v842 = vmax.f32 %v778, 0.0
        %v843 = vmax.f32 %v779, 0.0
        %v844 = vmax.f32 %v780, 0.0
        %v845 = vmax.f32 %v781, 0.0
        %v846 = vmax.f32 %v782, 0.0
        %v847 = vmax.f32 %v783, 0.0
        %v848 = vmax.f32 %v784, 0.0
        %v849 = vmax.f32 %v785, 0.0
        %v850 = vmax.f32 %v786, 0.0
        %v851 = vmax.f32 %v787, 0.0
        %v852 = vmax.f32 %v788, 0.0
        %v853 = vmax.f32 %v789, 0.0
        %v854 = vmax.f32 %v790, 0.0
        %v855 = vmax.f32 %v791, 0.0
        %v856 = vmax.f32 %v792, 0.0
        %v857 = vmax.f32 %v793, 0.0
        %v858 = vmax.f32 %v794, 0.0
        %v859 = vmax.f32 %v795, 0.0
        %v860 = vmax.f32 %v796, 0.0
        %v861 = vmax.f32 %v797, 0.0
        %v862 = vmax.f32 %v798, 0.0
        %v863 = vmax.f32 %v799, 0.0
        %v864 = vmax.f32 %v800, 0.0
        %v865 = vmax.f32 %v801, 0.0
        %v866 = vmax.f32 %v802, 0.0
        %v867 = vmax.f32 %v803, 0.0
        %v868 = vmax.f32 %v804, 0.0
        %v869 = vmax.f32 %v805, 0.0
        %v870 = vmax.f32 %v806, 0.0
        %v871 = vmax.f32 %v807, 0.0
        %v872 = vmax.f32 %v808, 0.0
        %v873 = vmax.f32 %v809, 0.0
        %v874 = vmax.f32 %v810, 0.0
        %v875 = vmax.f32 %v811, 0.0
        %v876 = vmax.f32 %v812, 0.0
        %v877 = vmax.f32 %v813, 0.0
        %v878 = vmax.f32 %v814, 0.0
        %v879 = vmax.f32 %v815, 0.0
        %v880 = vmax.f32 %v816, 0.0
        %v881 = vmax.f32 %v817, 0.0
        %v882 = vmax.f32 %v818, 0.0
        %v883 = vmax.f32 %v819, 0.0
        %v884 = vmax.f32 %v820, 0.0
        %v885 = vmax.f32 %v821, 0.0
        %v886 = vmax.f32 %v822, 0.0
        %v887 = vmax.f32 %v823, 0.0
        %v888 = vmax.f32 %v824, 0.0
        %v889 = vmax.f32 %v825, 0.0
        %v890 = vmax.f32 %v826, 0.0
        %v891 = vmax.f32 %v827, 0.0
        %v892 = vmax.f32 %v828, 0.0
        %v893 = vmax.f32 %v829, 0.0
        %v894 = vmax.f32 %v830, 0.0
        %v895 = vmax.f32 %v831, 0.0
        %v896 = vmax.f32 %v832, 0.0
        %v897 = vmax.f32 %v833, 0.0
        %v898 = vmax.f32 %v834, 0.0
        %899 = vst [vmem:[%s4] sm:$0xff] %v835
        %900 = vst [vmem:[%s4 + $0x8] sm:$0xff] %v836
        %901 = vst [vmem:[%s4 + $0x10] sm:$0xff] %v837
        %902 = vst [vmem:[%s4 + $0x18] sm:$0xff] %v838
        %903 = vst [vmem:[%s4 + $0x20] sm:$0xff] %v839
        %904 = vst [vmem:[%s4 + $0x28] sm:$0xff] %v840
        %905 = vst [vmem:[%s4 + $0x30] sm:$0xff] %v841
        %906 = vst [vmem:[%s4 + $0x38] sm:$0xff] %v842
        %907 = vst [vmem:[%s4 + $0x40] sm:$0xff] %v843
        %908 = vst [vmem:[%s4 + $0x48] sm:$0xff] %v844
        %909 = vst [vmem:[%s4 + $0x50] sm:$0xff] %v845
        %910 = vst [vmem:[%s4 + $0x58] sm:$0xff] %v846
        %911 = vst [vmem:[%s4 + $0x60] sm:$0xff] %v847
        %912 = vst [vmem:[%s4 + $0x68] sm:$0xff] %v848
        %913 = vst [vmem:[%s4 + $0x70] sm:$0xff] %v849
        %914 = vst [vmem:[%s4 + $0x78] sm:$0xff] %v850
        %915 = vst [vmem:[%s4 + $0x80] sm:$0xff] %v851
        %916 = vst [vmem:[%s4 + $0x88] sm:$0xff] %v852
        %917 = vst [vmem:[%s4 + $0x90] sm:$0xff] %v853
        %918 = vst [vmem:[%s4 + $0x98] sm:$0xff] %v854
        %919 = vst [vmem:[%s4 + $0xa0] sm:$0xff] %v855
        %920 = vst [vmem:[%s4 + $0xa8] sm:$0xff] %v856
        %921 = vst [vmem:[%s4 + $0xb0] sm:$0xff] %v857
        %922 = vst [vmem:[%s4 + $0xb8] sm:$0xff] %v858
        %923 = vst [vmem:[%s4 + $0xc0] sm:$0xff] %v859
        %924 = vst [vmem:[%s4 + $0xc8] sm:$0xff] %v860
        %925 = vst [vmem:[%s4 + $0xd0] sm:$0xff] %v861
        %926 = vst [vmem:[%s4 + $0xd8] sm:$0xff] %v862
        %927 = vst [vmem:[%s4 + $0xe0] sm:$0xff] %v863
        %928 = vst [vmem:[%s4 + $0xe8] sm:$0xff] %v864
        %929 = vst [vmem:[%s4 + $0xf0] sm:$0xff] %v865
        %930 = vst [vmem:[%s4 + $0xf8] sm:$0xff] %v866
        %931 = vst [vmem:[%s4 + $0x100] sm:$0xff] %v867
        %932 = vst [vmem:[%s4 + $0x108] sm:$0xff] %v868
        %933 = vst [vmem:[%s4 + $0x110] sm:$0xff] %v869
        %934 = vst [vmem:[%s4 + $0x118] sm:$0xff] %v870
        %935 = vst [vmem:[%s4 + $0x120] sm:$0xff] %v871
        %936 = vst [vmem:[%s4 + $0x128] sm:$0xff] %v872
        %937 = vst [vmem:[%s4 + $0x130] sm:$0xff] %v873
        %938 = vst [vmem:[%s4 + $0x138] sm:$0xff] %v874
        %939 = vst [vmem:[%s4 + $0x140] sm:$0xff] %v875
        %940 = vst [vmem:[%s4 + $0x148] sm:$0xff] %v876
        %941 = vst [vmem:[%s4 + $0x150] sm:$0xff] %v877
        %942 = vst [vmem:[%s4 + $0x158] sm:$0xff] %v878
        %943 = vst [vmem:[%s4 + $0x160] sm:$0xff] %v879
        %944 = vst [vmem:[%s4 + $0x168] sm:$0xff] %v880
        %945 = vst [vmem:[%s4 + $0x170] sm:$0xff] %v881
        %946 = vst [vmem:[%s4 + $0x178] sm:$0xff] %v882
        %947 = vst [vmem:[%s4 + $0x180] sm:$0xff] %v883
        %948 = vst [vmem:[%s4 + $0x188] sm:$0xff] %v884
        %949 = vst [vmem:[%s4 + $0x190] sm:$0xff] %v885
        %950 = vst [vmem:[%s4 + $0x198] sm:$0xff] %v886
        %951 = vst [vmem:[%s4 + $0x1a0] sm:$0xff] %v887
        %952 = vst [vmem:[%s4 + $0x1a8] sm:$0xff] %v888
        %953 = vst [vmem:[%s4 + $0x1b0] sm:$0xff] %v889
        %954 = vst [vmem:[%s4 + $0x1b8] sm:$0xff] %v890
        %955 = vst [vmem:[%s4 + $0x1c0] sm:$0xff] %v891
        %956 = vst [vmem:[%s4 + $0x1c8] sm:$0xff] %v892
        %957 = vst [vmem:[%s4 + $0x1d0] sm:$0xff] %v893
        %958 = vst [vmem:[%s4 + $0x1d8] sm:$0xff] %v894
        %959 = vst [vmem:[%s4 + $0x1e0] sm:$0xff] %v895
        %960 = vst [vmem:[%s4 + $0x1e8] sm:$0xff] %v896
        %961 = vst [vmem:[%s4 + $0x1f0] sm:$0xff] %v897
        %962 = vst [vmem:[%s4 + $0x1f8] sm:$0xff] %v898
      $region44: #{generator_forward.7} parent=35 // pred_fallthru
        _
      // Predicated region
      $region45: #{generator_forward.7} parent=35 // pred_check
        %p963 = pneg %p122
      $region46: #{generator_forward.7} parent=35 // pred_check_branch
        %965 = sbr.rel (%p963) target = $region48
      $region47: #{generator_forward.7} parent=35 // pred_region
        _
      $region48: #{generator_forward.7} parent=35 // pred_fallthru
        _
      // Predicated region
      $region49: #{generator_forward.7} parent=35 // pred_check
        %p966 = pneg %p122
      $region50: #{generator_forward.7} parent=35 // pred_check_branch
        %968 = sbr.rel (%p966) target = $region52
      $region51: #{generator_forward.7} parent=35 // pred_region
        _
      $region52: #{generator_forward.7} parent=35 // pred_fallthru
        _
    $region36: #{generator_forward.7} parent=5 // pred_fallthru
      _
    %p969 = scmp.le.s32.totalorder 2, %s10
    // Predicated region
    $region53: #{generator_forward.7} parent=5 // pred_check
      %p970 = pneg %p969
    $region54: #{generator_forward.7} parent=5 // pred_check_branch
      %972 = sbr.rel (%p970) target = $region56
    $region55: #{generator_forward.7} parent=5 // pred_region
      %s973 = ssub.s32 %s10, 2
    $region56: #{generator_forward.7} parent=5 // pred_fallthru
      _
  $region6: #{generator_forward.7} parent=0 // loop_footer
    %s14 = sadd.s32 1, %s10
  $region7: #{generator_forward.7} parent=0 // loop_footer_branch
    %9 = sbr.rel target = $region3
  $region8: #{generator_forward.7} parent=0 // loop_exit
    _

// kernel: generator_forward.8
$region0: #{generator_forward.8}
  #allocation0 [shape = 'u32[]', space=smem, size = 0x4, offset = 0x4, fixed_abs, tag = 'smem constant byte address 0x4 - core index']
  #allocation1 [shape = 'u32[144,128]{1,0:T(1,128)}', space=vmem, size = 0x12000, scoped, tag = 'internal scratch']
  #allocation2 [shape = 'f32[1,128]{1,0:T(1,128)}', space=vmem, size = 0x200, scoped, tag = 'scratch operand']
  #allocation3 [shape = 'f32[1,128]{1,0:T(1,128)}', space=vmem, size = 0x200, scoped, tag = 'scratch operand']
  %s0 = inlined_call_operand.vmem [shape: bf16[4,512,128], index: 0, kind: input, shape index: {}]
  %s1 = inlined_call_operand.vmem [shape: bf16[4,128,128], index: 1, kind: input, shape index: {}]
  %s2 = inlined_call_operand.vmem [shape: f32[1,128], index: 2, kind: input, shape index: {}]
  %s3 = inlined_call_operand.vmem [shape: f32[1,128], index: 3, kind: input, shape index: {}]
  %s4 = inlined_call_operand.vmem [shape: f32[4,512,128], index: 4, kind: output, shape index: {}]
  %s5 = sld [smem:[#allocation0]]
  $region57: #{generator_forward.8} parent=0
    _
  %s7 = ssub.s32 1, %s5
  %s8 = scalar_select 0, %s7, %s5
  loop: start=0, step=1, limit=6
  $region2: #{generator_forward.8} parent=0 // loop_pre_header
    _
  $region3: #{generator_forward.8} parent=0 // loop_header
    %s10 = sphi 0, %s14
    %p11 = scmp.ge.s32.totalorder %s10, 6
    %s20 = sphi 0, %s22
    %s23 = sphi 0, %s20
    %s24 = sphi 0, %s23
    %s40 = sphi 0, %s24
    %s46 = sphi 0, %s48
    %s49 = sphi 0, %s46
    %s50 = sphi 0, %s49
    %s66 = sphi 0, %s50
    %s70 = sphi 0, %s70
    %s72 = sphi 0, %s70
    %s73 = sphi 0, %s72
    %s87 = sphi 0, %s73
    %s91 = sphi 0, %s91
    %s93 = sphi 0, %s91
    %s94 = sphi 0, %s93
    %s108 = sphi 0, %s94
    %s112 = sphi 0, %s112
    %s114 = sphi 0, %s112
    %s115 = sphi 0, %s114
    %s129 = sphi 0, %s115
  $region4: #{generator_forward.8} parent=0 // loop_header_branch
    %13 = sbr.rel (%p11) target = $region8
  $region5: #{generator_forward.8} parent=0 // loop_body
    %s15 = ssub.s32 %s10, 1
    %s16 = ssub.s32 %s10, 2
    %s17 = sadd.s32 %s10, 1
    %s18 = ssub.s32 %s10, %s17
    %p19 = scmp.eq.s32.totalorder %s18, 0
    %s21 = sadd.s32 %s20, 1
    %s22 = scalar_select %p19, %s20, %s21
    %p25 = pneg %p19
    %p26 = scmp.eq.s32.totalorder %s10, 3
    %p27 = por %p25, %p26
    %p28 = scmp.ne.s32.totalorder %s20, %s23
    %p29 = scmp.eq.s32.totalorder %s10, 0
    %p30 = por %p28, %p29
    %p31 = scmp.ne.s32.totalorder %s20, %s23
    %p32 = scmp.eq.s32.totalorder %s15, 3
    %p33 = por %p31, %p32
    %p34 = scmp.ne.s32.totalorder %s23, %s24
    %p35 = scmp.eq.s32.totalorder %s15, 0
    %p36 = por %p34, %p35
    %p37 = scmp.ne.s32.totalorder %s23, %s24
    %p38 = scmp.eq.s32.totalorder %s16, 3
    %p39 = por %p37, %p38
    %p41 = scmp.ne.s32.totalorder %s24, %s40
    %p42 = scmp.eq.s32.totalorder %s16, 0
    %p43 = por %p41, %p42
    %s44 = ssub.s32 %s10, %s17
    %p45 = scmp.eq.s32.totalorder %s44, 0
    %s47 = sadd.s32 %s46, 1
    %s48 = scalar_select %p45, %s46, %s47
    %p51 = pneg %p45
    %p52 = scmp.eq.s32.totalorder %s10, 3
    %p53 = por %p51, %p52
    %p54 = scmp.ne.s32.totalorder %s46, %s49
    %p55 = scmp.eq.s32.totalorder %s10, 0
    %p56 = por %p54, %p55
    %p57 = scmp.ne.s32.totalorder %s46, %s49
    %p58 = scmp.eq.s32.totalorder %s15, 3
    %p59 = por %p57, %p58
    %p60 = scmp.ne.s32.totalorder %s49, %s50
    %p61 = scmp.eq.s32.totalorder %s15, 0
    %p62 = por %p60, %p61
    %p63 = scmp.ne.s32.totalorder %s49, %s50
    %p64 = scmp.eq.s32.totalorder %s16, 3
    %p65 = por %p63, %p64
    %p67 = scmp.ne.s32.totalorder %s50, %s66
    %p68 = scmp.eq.s32.totalorder %s16, 0
    %p69 = por %p67, %p68
    %s71 = sadd.s32 %s70, 1
    %p74 = scmp.eq.s32.totalorder %s10, 3
    %p75 = scmp.ne.s32.totalorder %s70, %s72
    %p76 = scmp.eq.s32.totalorder %s10, 0
    %p77 = por %p75, %p76
    %p78 = scmp.ne.s32.totalorder %s70, %s72
    %p79 = scmp.eq.s32.totalorder %s15, 3
    %p80 = por %p78, %p79
    %p81 = scmp.ne.s32.totalorder %s72, %s73
    %p82 = scmp.eq.s32.totalorder %s15, 0
    %p83 = por %p81, %p82
    %p84 = scmp.ne.s32.totalorder %s72, %s73
    %p85 = scmp.eq.s32.totalorder %s16, 3
    %p86 = por %p84, %p85
    %p88 = scmp.ne.s32.totalorder %s73, %s87
    %p89 = scmp.eq.s32.totalorder %s16, 0
    %p90 = por %p88, %p89
    %s92 = sadd.s32 %s91, 1
    %p95 = scmp.eq.s32.totalorder %s10, 3
    %p96 = scmp.ne.s32.totalorder %s91, %s93
    %p97 = scmp.eq.s32.totalorder %s10, 0
    %p98 = por %p96, %p97
    %p99 = scmp.ne.s32.totalorder %s91, %s93
    %p100 = scmp.eq.s32.totalorder %s15, 3
    %p101 = por %p99, %p100
    %p102 = scmp.ne.s32.totalorder %s93, %s94
    %p103 = scmp.eq.s32.totalorder %s15, 0
    %p104 = por %p102, %p103
    %p105 = scmp.ne.s32.totalorder %s93, %s94
    %p106 = scmp.eq.s32.totalorder %s16, 3
    %p107 = por %p105, %p106
    %p109 = scmp.ne.s32.totalorder %s94, %s108
    %p110 = scmp.eq.s32.totalorder %s16, 0
    %p111 = por %p109, %p110
    %s113 = sadd.s32 %s112, 1
    %p116 = scmp.eq.s32.totalorder %s10, 3
    %p117 = scmp.ne.s32.totalorder %s112, %s114
    %p118 = scmp.eq.s32.totalorder %s10, 0
    %p119 = por %p117, %p118
    %p120 = scmp.ne.s32.totalorder %s112, %s114
    %p121 = scmp.eq.s32.totalorder %s15, 3
    %p122 = por %p120, %p121
    %p123 = scmp.ne.s32.totalorder %s114, %s115
    %p124 = scmp.eq.s32.totalorder %s15, 0
    %p125 = por %p123, %p124
    %p126 = scmp.ne.s32.totalorder %s114, %s115
    %p127 = scmp.eq.s32.totalorder %s16, 3
    %p128 = por %p126, %p127
    %p130 = scmp.ne.s32.totalorder %s115, %s129
    %p131 = scmp.eq.s32.totalorder %s16, 0
    %p132 = por %p130, %p131
    %p133 = scmp.le.s32.totalorder 1, %s10
    %p134 = scmp.lt.s32.totalorder %s10, 5
    %p135 = pnand %p133, %p134
    %p136 = pneg %p135
    // Predicated region
    $region9: #{generator_forward.8} parent=5 // pred_check
      _
    $region10: #{generator_forward.8} parent=5 // pred_check_branch
      %138 = sbr.rel (%p135) target = $region12
    $region11: #{generator_forward.8} parent=5 // pred_region
      %s139 = ssub.s32 %s10, 1
      // Predicated region
      $region13: #{generator_forward.8} parent=11 // pred_check
        %p140 = pneg %p83
      $region14: #{generator_forward.8} parent=11 // pred_check_branch
        %142 = sbr.rel (%p140) target = $region16
      $region15: #{generator_forward.8} parent=11 // pred_region
        _
      $region16: #{generator_forward.8} parent=11 // pred_fallthru
        _
      // Predicated region
      $region17: #{generator_forward.8} parent=11 // pred_check
        %p143 = pneg %p104
      $region18: #{generator_forward.8} parent=11 // pred_check_branch
        %145 = sbr.rel (%p143) target = $region20
      $region19: #{generator_forward.8} parent=11 // pred_region
        _
      $region20: #{generator_forward.8} parent=11 // pred_fallthru
        _
    $region12: #{generator_forward.8} parent=5 // pred_fallthru
      _
    %p146 = scmp.lt.s32.totalorder %s10, 4
    // Predicated region
    $region21: #{generator_forward.8} parent=5 // pred_check
      %p147 = pneg %p146
    $region22: #{generator_forward.8} parent=5 // pred_check_branch
      %149 = sbr.rel (%p147) target = $region24
    $region23: #{generator_forward.8} parent=5 // pred_region
      // Predicated region
      $region25: #{generator_forward.8} parent=23 // pred_check
        %p150 = pneg %p30
      $region26: #{generator_forward.8} parent=23 // pred_check_branch
        %152 = sbr.rel (%p150) target = $region28
      $region27: #{generator_forward.8} parent=23 // pred_region
        %p153 = scmp.lt.s32.totalorder %s10, 3
        %s154 = scalar_select %p153, %s10, 3
        %s155 = smul.addr %s154, 64
        %s156 = smul.addr %s155, 4
        %s157 = scalar_lea.vmem %s0, %s156
      $region28: #{generator_forward.8} parent=23 // pred_fallthru
        _
      // Predicated region
      $region29: #{generator_forward.8} parent=23 // pred_check
        %p158 = pneg %p56
      $region30: #{generator_forward.8} parent=23 // pred_check_branch
        %160 = sbr.rel (%p158) target = $region32
      $region31: #{generator_forward.8} parent=23 // pred_region
        %p161 = scmp.lt.s32.totalorder %s10, 3
        %s162 = scalar_select %p161, %s10, 3
        %s163 = smul.addr %s162, 16
        %s164 = smul.addr %s163, 4
        %s165 = scalar_lea.vmem %s1, %s164
      $region32: #{generator_forward.8} parent=23 // pred_fallthru
        _
    $region24: #{generator_forward.8} parent=5 // pred_fallthru
      _
    %p166 = scmp.le.s32.totalorder 1, %s10
    %p167 = scmp.lt.s32.totalorder %s10, 5
    %p168 = pnand %p166, %p167
    %p169 = pneg %p168
    // Predicated region
    $region33: #{generator_forward.8} parent=5 // pred_check
      _
    $region34: #{generator_forward.8} parent=5 // pred_check_branch
      %171 = sbr.rel (%p168) target = $region36
    $region35: #{generator_forward.8} parent=5 // pred_region
      %s172 = ssub.s32 %s10, 1
      %p173 = scmp.lt.s32.totalorder %s15, 3
      %s174 = scalar_select %p173, %s15, 3
      %s175 = smul.addr %s174, 64
      %s176 = smul.addr %s175, 4
      %s177 = scalar_lea.vmem %s0, %s176
      %p178 = pneg %p36
      %p179 = pneg %p33
      %p180 = scmp.lt.s32.totalorder %s15, 3
      %s181 = scalar_select %p180, %s15, 3
      %s182 = smul.addr %s181, 16
      %s183 = smul.addr %s182, 4
      %s184 = scalar_lea.vmem %s1, %s183
      %p185 = pneg %p62
      %p186 = pneg %p59
      %p187 = pneg %p83
      %p188 = pneg %p80
      %p189 = pneg %p104
      %p190 = pneg %p101
      %p191 = pneg %p125
      %p192 = pneg %p122
      %p193 = scmp.lt.s32.totalorder %s15, 3
      %s194 = scalar_select %p193, %s15, 3
      %s195 = smul.addr %s194, 64
      %s196 = smul.addr %s195, 4
      %s197 = scalar_lea.vmem %s0, %s196
      %p198 = scmp.lt.s32.totalorder %s15, 3
      %s199 = scalar_select %p198, %s15, 3
      %s200 = smul.addr %s199, 16
      %s201 = smul.addr %s200, 4
      %s202 = scalar_lea.vmem %s1, %s201
      %p204 = scmp.eq.s32.totalorder %s15, 0
      // Predicated region
      $region37: #{generator_forward.8} parent=35 // pred_check
        %p205 = pneg %p204
      $region38: #{generator_forward.8} parent=35 // pred_check_branch
        %207 = sbr.rel (%p205) target = $region40
      $region39: #{generator_forward.8} parent=35 // pred_region
        %208 = vst [vmem:[#allocation2] sm:$0x1] 0.0
        %209 = vst [vmem:[#allocation3] sm:$0x1] 0.0
      $region40: #{generator_forward.8} parent=35 // pred_fallthru
        _
      %v210 = vld [vmem:[%s197] sm:$0xf]
      %v211 = vld [vmem:[%s197 + $0x4] sm:$0xf]
      %v212 = vld [vmem:[%s197 + $0x8] sm:$0xf]
      %v213 = vld [vmem:[%s197 + $0xc] sm:$0xf]
      %v214 = vld [vmem:[%s197 + $0x10] sm:$0xf]
      %v215 = vld [vmem:[%s197 + $0x14] sm:$0xf]
      %v216 = vld [vmem:[%s197 + $0x18] sm:$0xf]
      %v217 = vld [vmem:[%s197 + $0x1c] sm:$0xf]
      %v218 = vld [vmem:[%s197 + $0x20] sm:$0xf]
      %v219 = vld [vmem:[%s197 + $0x24] sm:$0xf]
      %v220 = vld [vmem:[%s197 + $0x28] sm:$0xf]
      %v221 = vld [vmem:[%s197 + $0x2c] sm:$0xf]
      %v222 = vld [vmem:[%s197 + $0x30] sm:$0xf]
      %v223 = vld [vmem:[%s197 + $0x34] sm:$0xf]
      %v224 = vld [vmem:[%s197 + $0x38] sm:$0xf]
      %v225 = vld [vmem:[%s197 + $0x3c] sm:$0xf]
      %v226 = vld [vmem:[%s197 + $0x40] sm:$0xf]
      %v227 = vld [vmem:[%s197 + $0x44] sm:$0xf]
      %v228 = vld [vmem:[%s197 + $0x48] sm:$0xf]
      %v229 = vld [vmem:[%s197 + $0x4c] sm:$0xf]
      %v230 = vld [vmem:[%s197 + $0x50] sm:$0xf]
      %v231 = vld [vmem:[%s197 + $0x54] sm:$0xf]
      %v232 = vld [vmem:[%s197 + $0x58] sm:$0xf]
      %v233 = vld [vmem:[%s197 + $0x5c] sm:$0xf]
      %v234 = vld [vmem:[%s197 + $0x60] sm:$0xf]
      %v235 = vld [vmem:[%s197 + $0x64] sm:$0xf]
      %v236 = vld [vmem:[%s197 + $0x68] sm:$0xf]
      %v237 = vld [vmem:[%s197 + $0x6c] sm:$0xf]
      %v238 = vld [vmem:[%s197 + $0x70] sm:$0xf]
      %v239 = vld [vmem:[%s197 + $0x74] sm:$0xf]
      %v240 = vld [vmem:[%s197 + $0x78] sm:$0xf]
      %v241 = vld [vmem:[%s197 + $0x7c] sm:$0xf]
      %v242 = vld [vmem:[%s197 + $0x80] sm:$0xf]
      %v243 = vld [vmem:[%s197 + $0x84] sm:$0xf]
      %v244 = vld [vmem:[%s197 + $0x88] sm:$0xf]
      %v245 = vld [vmem:[%s197 + $0x8c] sm:$0xf]
      %v246 = vld [vmem:[%s197 + $0x90] sm:$0xf]
      %v247 = vld [vmem:[%s197 + $0x94] sm:$0xf]
      %v248 = vld [vmem:[%s197 + $0x98] sm:$0xf]
      %v249 = vld [vmem:[%s197 + $0x9c] sm:$0xf]
      %v250 = vld [vmem:[%s197 + $0xa0] sm:$0xf]
      %v251 = vld [vmem:[%s197 + $0xa4] sm:$0xf]
      %v252 = vld [vmem:[%s197 + $0xa8] sm:$0xf]
      %v253 = vld [vmem:[%s197 + $0xac] sm:$0xf]
      %v254 = vld [vmem:[%s197 + $0xb0] sm:$0xf]
      %v255 = vld [vmem:[%s197 + $0xb4] sm:$0xf]
      %v256 = vld [vmem:[%s197 + $0xb8] sm:$0xf]
      %v257 = vld [vmem:[%s197 + $0xbc] sm:$0xf]
      %v258 = vld [vmem:[%s197 + $0xc0] sm:$0xf]
      %v259 = vld [vmem:[%s197 + $0xc4] sm:$0xf]
      %v260 = vld [vmem:[%s197 + $0xc8] sm:$0xf]
      %v261 = vld [vmem:[%s197 + $0xcc] sm:$0xf]
      %v262 = vld [vmem:[%s197 + $0xd0] sm:$0xf]
      %v263 = vld [vmem:[%s197 + $0xd4] sm:$0xf]
      %v264 = vld [vmem:[%s197 + $0xd8] sm:$0xf]
      %v265 = vld [vmem:[%s197 + $0xdc] sm:$0xf]
      %v266 = vld [vmem:[%s197 + $0xe0] sm:$0xf]
      %v267 = vld [vmem:[%s197 + $0xe4] sm:$0xf]
      %v268 = vld [vmem:[%s197 + $0xe8] sm:$0xf]
      %v269 = vld [vmem:[%s197 + $0xec] sm:$0xf]
      %v270 = vld [vmem:[%s197 + $0xf0] sm:$0xf]
      %v271 = vld [vmem:[%s197 + $0xf4] sm:$0xf]
      %v272 = vld [vmem:[%s197 + $0xf8] sm:$0xf]
      %v273 = vld [vmem:[%s197 + $0xfc] sm:$0xf]
      %v274 = vld [vmem:[%s202] sm:$0xf]
      %v275 = vld [vmem:[%s202 + $0x4] sm:$0xf]
      %v276 = vld [vmem:[%s202 + $0x8] sm:$0xf]
      %v277 = vld [vmem:[%s202 + $0xc] sm:$0xf]
      %v278 = vld [vmem:[%s202 + $0x10] sm:$0xf]
      %v279 = vld [vmem:[%s202 + $0x14] sm:$0xf]
      %v280 = vld [vmem:[%s202 + $0x18] sm:$0xf]
      %v281 = vld [vmem:[%s202 + $0x1c] sm:$0xf]
      %v282 = vld [vmem:[%s202 + $0x20] sm:$0xf]
      %v283 = vld [vmem:[%s202 + $0x24] sm:$0xf]
      %v284 = vld [vmem:[%s202 + $0x28] sm:$0xf]
      %v285 = vld [vmem:[%s202 + $0x2c] sm:$0xf]
      %v286 = vld [vmem:[%s202 + $0x30] sm:$0xf]
      %v287 = vld [vmem:[%s202 + $0x34] sm:$0xf]
      %v288 = vld [vmem:[%s202 + $0x38] sm:$0xf]
      %v289 = vld [vmem:[%s202 + $0x3c] sm:$0xf]
      %v354 = vunpack.c.l.b16 %v210
      %v355 = vunpack.c.l.b16 %v211
      %v356 = vunpack.c.l.b16 %v212
      %v357 = vunpack.c.l.b16 %v213
      %v358 = vunpack.c.l.b16 %v214
      %v359 = vunpack.c.l.b16 %v215
      %v360 = vunpack.c.l.b16 %v216
      %v361 = vunpack.c.l.b16 %v217
      %v362 = vunpack.c.l.b16 %v218
      %v363 = vunpack.c.l.b16 %v219
      %v364 = vunpack.c.l.b16 %v220
      %v365 = vunpack.c.l.b16 %v221
      %v366 = vunpack.c.l.b16 %v222
      %v367 = vunpack.c.l.b16 %v223
      %v368 = vunpack.c.l.b16 %v224
      %v369 = vunpack.c.l.b16 %v225
      %v370 = vunpack.c.l.b16 %v226
      %v371 = vunpack.c.l.b16 %v227
      %v372 = vunpack.c.l.b16 %v228
      %v373 = vunpack.c.l.b16 %v229
      %v374 = vunpack.c.l.b16 %v230
      %v375 = vunpack.c.l.b16 %v231
      %v376 = vunpack.c.l.b16 %v232
      %v377 = vunpack.c.l.b16 %v233
      %v378 = vunpack.c.l.b16 %v234
      %v379 = vunpack.c.l.b16 %v235
      %v380 = vunpack.c.l.b16 %v236
      %v381 = vunpack.c.l.b16 %v237
      %v382 = vunpack.c.l.b16 %v238
      %v383 = vunpack.c.l.b16 %v239
      %v384 = vunpack.c.l.b16 %v240
      %v385 = vunpack.c.l.b16 %v241
      %v386 = vunpack.c.l.b16 %v242
      %v387 = vunpack.c.l.b16 %v243
      %v388 = vunpack.c.l.b16 %v244
      %v389 = vunpack.c.l.b16 %v245
      %v390 = vunpack.c.l.b16 %v246
      %v391 = vunpack.c.l.b16 %v247
      %v392 = vunpack.c.l.b16 %v248
      %v393 = vunpack.c.l.b16 %v249
      %v394 = vunpack.c.l.b16 %v250
      %v395 = vunpack.c.l.b16 %v251
      %v396 = vunpack.c.l.b16 %v252
      %v397 = vunpack.c.l.b16 %v253
      %v398 = vunpack.c.l.b16 %v254
      %v399 = vunpack.c.l.b16 %v255
      %v400 = vunpack.c.l.b16 %v256
      %v401 = vunpack.c.l.b16 %v257
      %v402 = vunpack.c.l.b16 %v258
      %v403 = vunpack.c.l.b16 %v259
      %v404 = vunpack.c.l.b16 %v260
      %v405 = vunpack.c.l.b16 %v261
      %v406 = vunpack.c.l.b16 %v262
      %v407 = vunpack.c.l.b16 %v263
      %v408 = vunpack.c.l.b16 %v264
      %v409 = vunpack.c.l.b16 %v265
      %v410 = vunpack.c.l.b16 %v266
      %v411 = vunpack.c.l.b16 %v267
      %v412 = vunpack.c.l.b16 %v268
      %v413 = vunpack.c.l.b16 %v269
      %v414 = vunpack.c.l.b16 %v270
      %v415 = vunpack.c.l.b16 %v271
      %v416 = vunpack.c.l.b16 %v272
      %v417 = vunpack.c.l.b16 %v273
      %v418 = vpack.c.b16 %v355, %v354
      %v419 = vpack.c.b16 %v357, %v356
      %v420 = vpack.c.b16 %v359, %v358
      %v421 = vpack.c.b16 %v361, %v360
      %v422 = vpack.c.b16 %v363, %v362
      %v423 = vpack.c.b16 %v365, %v364
      %v424 = vpack.c.b16 %v367, %v366
      %v425 = vpack.c.b16 %v369, %v368
      %v426 = vpack.c.b16 %v371, %v370
      %v427 = vpack.c.b16 %v373, %v372
      %v428 = vpack.c.b16 %v375, %v374
      %v429 = vpack.c.b16 %v377, %v376
      %v430 = vpack.c.b16 %v379, %v378
      %v431 = vpack.c.b16 %v381, %v380
      %v432 = vpack.c.b16 %v383, %v382
      %v433 = vpack.c.b16 %v385, %v384
      %v434 = vpack.c.b16 %v387, %v386
      %v435 = vpack.c.b16 %v389, %v388
      %v436 = vpack.c.b16 %v391, %v390
      %v437 = vpack.c.b16 %v393, %v392
      %v438 = vpack.c.b16 %v395, %v394
      %v439 = vpack.c.b16 %v397, %v396
      %v440 = vpack.c.b16 %v399, %v398
      %v441 = vpack.c.b16 %v401, %v400
      %v442 = vpack.c.b16 %v403, %v402
      %v443 = vpack.c.b16 %v405, %v404
      %v444 = vpack.c.b16 %v407, %v406
      %v445 = vpack.c.b16 %v409, %v408
      %v446 = vpack.c.b16 %v411, %v410
      %v447 = vpack.c.b16 %v413, %v412
      %v448 = vpack.c.b16 %v415, %v414
      %v449 = vpack.c.b16 %v417, %v416
      %v498 = vunpack.c.l.b16 %v274
      %v499 = vunpack.c.l.b16 %v275
      %v500 = vunpack.c.l.b16 %v276
      %v501 = vunpack.c.l.b16 %v277
      %v502 = vunpack.c.l.b16 %v278
      %v503 = vunpack.c.l.b16 %v279
      %v504 = vunpack.c.l.b16 %v280
      %v505 = vunpack.c.l.b16 %v281
      %v506 = vunpack.c.l.b16 %v282
      %v507 = vunpack.c.l.b16 %v283
      %v508 = vunpack.c.l.b16 %v284
      %v509 = vunpack.c.l.b16 %v285
      %v510 = vunpack.c.l.b16 %v286
      %v511 = vunpack.c.l.b16 %v287
      %v512 = vunpack.c.l.b16 %v288
      %v513 = vunpack.c.l.b16 %v289
      %v514 = vpack.c.b16 %v499, %v498
      %v515 = vpack.c.b16 %v501, %v500
      %v516 = vpack.c.b16 %v503, %v502
      %v517 = vpack.c.b16 %v505, %v504
      %v518 = vpack.c.b16 %v507, %v506
      %v519 = vpack.c.b16 %v509, %v508
      %v520 = vpack.c.b16 %v511, %v510
      %v521 = vpack.c.b16 %v513, %v512
      %530 = vmatprep.subr.bf16.mxu0 0
      %531 = vmatpush1.bf16.msra.mxu0 %v521
      %532 = vmatprep.subr.bf16.mxu0 0
      %533 = vmatpush1.bf16.msra.mxu0 %v520
      %534 = vmatprep.subr.bf16.mxu0 0
      %535 = vmatpush1.bf16.msra.mxu0 %v519
      %536 = vmatprep.subr.bf16.mxu0 0
      %537 = vmatpush1.bf16.msra.mxu0 %v518
      %538 = vmatprep.subr.bf16.mxu0 0
      %539 = vmatpush1.bf16.msra.mxu0 %v517
      %540 = vmatprep.subr.bf16.mxu0 0
      %541 = vmatpush1.bf16.msra.mxu0 %v516
      %542 = vmatprep.subr.bf16.mxu0 0
      %543 = vmatpush1.bf16.msra.mxu0 %v515
      %544 = vmatprep.subr.bf16.mxu0 0
      %545 = vmatpush1.bf16.msra.mxu0 %v514
      %546 = vmatprep.subr.bf16.mxu0 0
      %547 = vmatpush2.bf16.msra.mxu0 0
      %548 = vmatprep.subr.bf16.mxu0 0
      %549 = vmatpush2.bf16.msra.mxu0 0
      %550 = vmatprep.subr.bf16.mxu0 0
      %551 = vmatpush2.bf16.msra.mxu0 0
      %552 = vmatprep.subr.bf16.mxu0 0
      %553 = vmatpush2.bf16.msra.mxu0 0
      %554 = vmatprep.subr.bf16.mxu0 0
      %555 = vmatpush2.bf16.msra.mxu0 0
      %556 = vmatprep.subr.bf16.mxu0 0
      %557 = vmatpush2.bf16.msra.mxu0 0
      %558 = vmatprep.subr.bf16.mxu0 0
      %559 = vmatpush2.bf16.msra.mxu0 0
      %560 = vmatprep.subr.bf16.mxu0 0
      %561 = vmatpush2.bf16.msra.mxu0 0
      %562 = vmatprep.mubr.bf16.mxu0 0
      %563 = vmatmul.mubr.bf16.gmra.mxu0 %v418
      %v564 = vpop.f32.mrf.mxu0
      %v565 = vadd.f32 0.0, %v564
      %v566 = vpop.f32.mrf.mxu0
      %v567 = vpop.f32.mrf.mxu0
      %v568 = vadd.f32 0.0, %v567
      %v569 = vpop.f32.mrf.mxu0
      %570 = vmatprep.mubr.bf16.mxu0 0
      %571 = vmatmul.mubr.bf16.gmra.mxu0 %v419
      %v572 = vpop.f32.mrf.mxu0
      %v573 = vadd.f32 0.0, %v572
      %v574 = vpop.f32.mrf.mxu0
      %v575 = vpop.f32.mrf.mxu0
      %v576 = vadd.f32 0.0, %v575
      %v577 = vpop.f32.mrf.mxu0
      %578 = vmatprep.mubr.bf16.mxu0 0
      %579 = vmatmul.mubr.bf16.gmra.mxu0 %v420
      %v580 = vpop.f32.mrf.mxu0
      %v581 = vadd.f32 0.0, %v580
      %v582 = vpop.f32.mrf.mxu0
      %v583 = vpop.f32.mrf.mxu0
      %v584 = vadd.f32 0.0, %v583
      %v585 = vpop.f32.mrf.mxu0
      %586 = vmatprep.mubr.bf16.mxu0 0
      %587 = vmatmul.mubr.bf16.gmra.mxu0 %v421
      %v588 = vpop.f32.mrf.mxu0
      %v589 = vadd.f32 0.0, %v588
      %v590 = vpop.f32.mrf.mxu0
      %v591 = vpop.f32.mrf.mxu0
      %v592 = vadd.f32 0.0, %v591
      %v593 = vpop.f32.mrf.mxu0
      %594 = vmatprep.mubr.bf16.mxu0 0
      %595 = vmatmul.mubr.bf16.gmra.mxu0 %v422
      %v596 = vpop.f32.mrf.mxu0
      %v597 = vadd.f32 0.0, %v596
      %v598 = vpop.f32.mrf.mxu0
      %v599 = vpop.f32.mrf.mxu0
      %v600 = vadd.f32 0.0, %v599
      %v601 = vpop.f32.mrf.mxu0
      %602 = vmatprep.mubr.bf16.mxu0 0
      %603 = vmatmul.mubr.bf16.gmra.mxu0 %v423
      %v604 = vpop.f32.mrf.mxu0
      %v605 = vadd.f32 0.0, %v604
      %v606 = vpop.f32.mrf.mxu0
      %v607 = vpop.f32.mrf.mxu0
      %v608 = vadd.f32 0.0, %v607
      %v609 = vpop.f32.mrf.mxu0
      %610 = vmatprep.mubr.bf16.mxu0 0
      %611 = vmatmul.mubr.bf16.gmra.mxu0 %v424
      %v612 = vpop.f32.mrf.mxu0
      %v613 = vadd.f32 0.0, %v612
      %v614 = vpop.f32.mrf.mxu0
      %v615 = vpop.f32.mrf.mxu0
      %v616 = vadd.f32 0.0, %v615
      %v617 = vpop.f32.mrf.mxu0
      %618 = vmatprep.mubr.bf16.mxu0 0
      %619 = vmatmul.mubr.bf16.gmra.mxu0 %v425
      %v620 = vpop.f32.mrf.mxu0
      %v621 = vadd.f32 0.0, %v620
      %v622 = vpop.f32.mrf.mxu0
      %v623 = vpop.f32.mrf.mxu0
      %v624 = vadd.f32 0.0, %v623
      %v625 = vpop.f32.mrf.mxu0
      %626 = vmatprep.mubr.bf16.mxu0 0
      %627 = vmatmul.mubr.bf16.gmra.mxu0 %v426
      %v628 = vpop.f32.mrf.mxu0
      %v629 = vadd.f32 0.0, %v628
      %v630 = vpop.f32.mrf.mxu0
      %v631 = vpop.f32.mrf.mxu0
      %v632 = vadd.f32 0.0, %v631
      %v633 = vpop.f32.mrf.mxu0
      %634 = vmatprep.mubr.bf16.mxu0 0
      %635 = vmatmul.mubr.bf16.gmra.mxu0 %v427
      %v636 = vpop.f32.mrf.mxu0
      %v637 = vadd.f32 0.0, %v636
      %v638 = vpop.f32.mrf.mxu0
      %v639 = vpop.f32.mrf.mxu0
      %v640 = vadd.f32 0.0, %v639
      %v641 = vpop.f32.mrf.mxu0
      %642 = vmatprep.mubr.bf16.mxu0 0
      %643 = vmatmul.mubr.bf16.gmra.mxu0 %v428
      %v644 = vpop.f32.mrf.mxu0
      %v645 = vadd.f32 0.0, %v644
      %v646 = vpop.f32.mrf.mxu0
      %v647 = vpop.f32.mrf.mxu0
      %v648 = vadd.f32 0.0, %v647
      %v649 = vpop.f32.mrf.mxu0
      %650 = vmatprep.mubr.bf16.mxu0 0
      %651 = vmatmul.mubr.bf16.gmra.mxu0 %v429
      %v652 = vpop.f32.mrf.mxu0
      %v653 = vadd.f32 0.0, %v652
      %v654 = vpop.f32.mrf.mxu0
      %v655 = vpop.f32.mrf.mxu0
      %v656 = vadd.f32 0.0, %v655
      %v657 = vpop.f32.mrf.mxu0
      %658 = vmatprep.mubr.bf16.mxu0 0
      %659 = vmatmul.mubr.bf16.gmra.mxu0 %v430
      %v660 = vpop.f32.mrf.mxu0
      %v661 = vadd.f32 0.0, %v660
      %v662 = vpop.f32.mrf.mxu0
      %v663 = vpop.f32.mrf.mxu0
      %v664 = vadd.f32 0.0, %v663
      %v665 = vpop.f32.mrf.mxu0
      %666 = vmatprep.mubr.bf16.mxu0 0
      %667 = vmatmul.mubr.bf16.gmra.mxu0 %v431
      %v668 = vpop.f32.mrf.mxu0
      %v669 = vadd.f32 0.0, %v668
      %v670 = vpop.f32.mrf.mxu0
      %v671 = vpop.f32.mrf.mxu0
      %v672 = vadd.f32 0.0, %v671
      %v673 = vpop.f32.mrf.mxu0
      %674 = vmatprep.mubr.bf16.mxu0 0
      %675 = vmatmul.mubr.bf16.gmra.mxu0 %v432
      %v676 = vpop.f32.mrf.mxu0
      %v677 = vadd.f32 0.0, %v676
      %v678 = vpop.f32.mrf.mxu0
      %v679 = vpop.f32.mrf.mxu0
      %v680 = vadd.f32 0.0, %v679
      %v681 = vpop.f32.mrf.mxu0
      %682 = vmatprep.mubr.bf16.mxu0 0
      %683 = vmatmul.mubr.bf16.gmra.mxu0 %v433
      %v684 = vpop.f32.mrf.mxu0
      %v685 = vadd.f32 0.0, %v684
      %v686 = vpop.f32.mrf.mxu0
      %v687 = vpop.f32.mrf.mxu0
      %v688 = vadd.f32 0.0, %v687
      %v689 = vpop.f32.mrf.mxu0
      %690 = vmatprep.mubr.bf16.mxu0 0
      %691 = vmatmul.mubr.bf16.gmra.mxu0 %v434
      %v692 = vpop.f32.mrf.mxu0
      %v693 = vadd.f32 0.0, %v692
      %v694 = vpop.f32.mrf.mxu0
      %v695 = vpop.f32.mrf.mxu0
      %v696 = vadd.f32 0.0, %v695
      %v697 = vpop.f32.mrf.mxu0
      %698 = vmatprep.mubr.bf16.mxu0 0
      %699 = vmatmul.mubr.bf16.gmra.mxu0 %v435
      %v700 = vpop.f32.mrf.mxu0
      %v701 = vadd.f32 0.0, %v700
      %v702 = vpop.f32.mrf.mxu0
      %v703 = vpop.f32.mrf.mxu0
      %v704 = vadd.f32 0.0, %v703
      %v705 = vpop.f32.mrf.mxu0
      %706 = vmatprep.mubr.bf16.mxu0 0
      %707 = vmatmul.mubr.bf16.gmra.mxu0 %v436
      %v708 = vpop.f32.mrf.mxu0
      %v709 = vadd.f32 0.0, %v708
      %v710 = vpop.f32.mrf.mxu0
      %v711 = vpop.f32.mrf.mxu0
      %v712 = vadd.f32 0.0, %v711
      %v713 = vpop.f32.mrf.mxu0
      %714 = vmatprep.mubr.bf16.mxu0 0
      %715 = vmatmul.mubr.bf16.gmra.mxu0 %v437
      %v716 = vpop.f32.mrf.mxu0
      %v717 = vadd.f32 0.0, %v716
      %v718 = vpop.f32.mrf.mxu0
      %v719 = vpop.f32.mrf.mxu0
      %v720 = vadd.f32 0.0, %v719
      %v721 = vpop.f32.mrf.mxu0
      %722 = vmatprep.mubr.bf16.mxu0 0
      %723 = vmatmul.mubr.bf16.gmra.mxu0 %v438
      %v724 = vpop.f32.mrf.mxu0
      %v725 = vadd.f32 0.0, %v724
      %v726 = vpop.f32.mrf.mxu0
      %v727 = vpop.f32.mrf.mxu0
      %v728 = vadd.f32 0.0, %v727
      %v729 = vpop.f32.mrf.mxu0
      %730 = vmatprep.mubr.bf16.mxu0 0
      %731 = vmatmul.mubr.bf16.gmra.mxu0 %v439
      %v732 = vpop.f32.mrf.mxu0
      %v733 = vadd.f32 0.0, %v732
      %v734 = vpop.f32.mrf.mxu0
      %v735 = vpop.f32.mrf.mxu0
      %v736 = vadd.f32 0.0, %v735
      %v737 = vpop.f32.mrf.mxu0
      %738 = vmatprep.mubr.bf16.mxu0 0
      %739 = vmatmul.mubr.bf16.gmra.mxu0 %v440
      %v740 = vpop.f32.mrf.mxu0
      %v741 = vadd.f32 0.0, %v740
      %v742 = vpop.f32.mrf.mxu0
      %v743 = vpop.f32.mrf.mxu0
      %v744 = vadd.f32 0.0, %v743
      %v745 = vpop.f32.mrf.mxu0
      %746 = vmatprep.mubr.bf16.mxu0 0
      %747 = vmatmul.mubr.bf16.gmra.mxu0 %v441
      %v748 = vpop.f32.mrf.mxu0
      %v749 = vadd.f32 0.0, %v748
      %v750 = vpop.f32.mrf.mxu0
      %v751 = vpop.f32.mrf.mxu0
      %v752 = vadd.f32 0.0, %v751
      %v753 = vpop.f32.mrf.mxu0
      %754 = vmatprep.mubr.bf16.mxu0 0
      %755 = vmatmul.mubr.bf16.gmra.mxu0 %v442
      %v756 = vpop.f32.mrf.mxu0
      %v757 = vadd.f32 0.0, %v756
      %v758 = vpop.f32.mrf.mxu0
      %v759 = vpop.f32.mrf.mxu0
      %v760 = vadd.f32 0.0, %v759
      %v761 = vpop.f32.mrf.mxu0
      %762 = vmatprep.mubr.bf16.mxu0 0
      %763 = vmatmul.mubr.bf16.gmra.mxu0 %v443
      %v764 = vpop.f32.mrf.mxu0
      %v765 = vadd.f32 0.0, %v764
      %v766 = vpop.f32.mrf.mxu0
      %v767 = vpop.f32.mrf.mxu0
      %v768 = vadd.f32 0.0, %v767
      %v769 = vpop.f32.mrf.mxu0
      %770 = vmatprep.mubr.bf16.mxu0 0
      %771 = vmatmul.mubr.bf16.gmra.mxu0 %v444
      %v772 = vpop.f32.mrf.mxu0
      %v773 = vadd.f32 0.0, %v772
      %v774 = vpop.f32.mrf.mxu0
      %v775 = vpop.f32.mrf.mxu0
      %v776 = vadd.f32 0.0, %v775
      %v777 = vpop.f32.mrf.mxu0
      %778 = vmatprep.mubr.bf16.mxu0 0
      %779 = vmatmul.mubr.bf16.gmra.mxu0 %v445
      %v780 = vpop.f32.mrf.mxu0
      %v781 = vadd.f32 0.0, %v780
      %v782 = vpop.f32.mrf.mxu0
      %v783 = vpop.f32.mrf.mxu0
      %v784 = vadd.f32 0.0, %v783
      %v785 = vpop.f32.mrf.mxu0
      %786 = vmatprep.mubr.bf16.mxu0 0
      %787 = vmatmul.mubr.bf16.gmra.mxu0 %v446
      %v788 = vpop.f32.mrf.mxu0
      %v789 = vadd.f32 0.0, %v788
      %v790 = vpop.f32.mrf.mxu0
      %v791 = vpop.f32.mrf.mxu0
      %v792 = vadd.f32 0.0, %v791
      %v793 = vpop.f32.mrf.mxu0
      %794 = vmatprep.mubr.bf16.mxu0 0
      %795 = vmatmul.mubr.bf16.gmra.mxu0 %v447
      %v796 = vpop.f32.mrf.mxu0
      %v797 = vadd.f32 0.0, %v796
      %v798 = vpop.f32.mrf.mxu0
      %v799 = vpop.f32.mrf.mxu0
      %v800 = vadd.f32 0.0, %v799
      %v801 = vpop.f32.mrf.mxu0
      %802 = vmatprep.mubr.bf16.mxu0 0
      %803 = vmatmul.mubr.bf16.gmra.mxu0 %v448
      %v804 = vpop.f32.mrf.mxu0
      %v805 = vadd.f32 0.0, %v804
      %v806 = vpop.f32.mrf.mxu0
      %v807 = vpop.f32.mrf.mxu0
      %v808 = vadd.f32 0.0, %v807
      %v809 = vpop.f32.mrf.mxu0
      %810 = vmatprep.mubr.bf16.mxu0 0
      %811 = vmatmul.mubr.bf16.gmra.mxu0 %v449
      %v812 = vpop.f32.mrf.mxu0
      %v813 = vadd.f32 0.0, %v812
      %v814 = vpop.f32.mrf.mxu0
      %v815 = vpop.f32.mrf.mxu0
      %v816 = vadd.f32 0.0, %v815
      %v817 = vpop.f32.mrf.mxu0
      %818 = vdwg.mxu0
      %s819 = smul.u32 %s15, 512
      %s820 = scalar_lea.vmem %s4, %s819
      %821 = vst [vmem:[%s820] sm:$0xff] %v565
      %822 = vst [vmem:[%s820 + $0x8] sm:$0xff] %v568
      %823 = vst [vmem:[%s820 + $0x10] sm:$0xff] %v573
      %824 = vst [vmem:[%s820 + $0x18] sm:$0xff] %v576
      %825 = vst [vmem:[%s820 + $0x20] sm:$0xff] %v581
      %826 = vst [vmem:[%s820 + $0x28] sm:$0xff] %v584
      %827 = vst [vmem:[%s820 + $0x30] sm:$0xff] %v589
      %828 = vst [vmem:[%s820 + $0x38] sm:$0xff] %v592
      %829 = vst [vmem:[%s820 + $0x40] sm:$0xff] %v597
      %830 = vst [vmem:[%s820 + $0x48] sm:$0xff] %v600
      %831 = vst [vmem:[%s820 + $0x50] sm:$0xff] %v605
      %832 = vst [vmem:[%s820 + $0x58] sm:$0xff] %v608
      %833 = vst [vmem:[%s820 + $0x60] sm:$0xff] %v613
      %834 = vst [vmem:[%s820 + $0x68] sm:$0xff] %v616
      %835 = vst [vmem:[%s820 + $0x70] sm:$0xff] %v621
      %836 = vst [vmem:[%s820 + $0x78] sm:$0xff] %v624
      %837 = vst [vmem:[%s820 + $0x80] sm:$0xff] %v629
      %838 = vst [vmem:[%s820 + $0x88] sm:$0xff] %v632
      %839 = vst [vmem:[%s820 + $0x90] sm:$0xff] %v637
      %840 = vst [vmem:[%s820 + $0x98] sm:$0xff] %v640
      %841 = vst [vmem:[%s820 + $0xa0] sm:$0xff] %v645
      %842 = vst [vmem:[%s820 + $0xa8] sm:$0xff] %v648
      %843 = vst [vmem:[%s820 + $0xb0] sm:$0xff] %v653
      %844 = vst [vmem:[%s820 + $0xb8] sm:$0xff] %v656
      %845 = vst [vmem:[%s820 + $0xc0] sm:$0xff] %v661
      %846 = vst [vmem:[%s820 + $0xc8] sm:$0xff] %v664
      %847 = vst [vmem:[%s820 + $0xd0] sm:$0xff] %v669
      %848 = vst [vmem:[%s820 + $0xd8] sm:$0xff] %v672
      %849 = vst [vmem:[%s820 + $0xe0] sm:$0xff] %v677
      %850 = vst [vmem:[%s820 + $0xe8] sm:$0xff] %v680
      %851 = vst [vmem:[%s820 + $0xf0] sm:$0xff] %v685
      %852 = vst [vmem:[%s820 + $0xf8] sm:$0xff] %v688
      %853 = vst [vmem:[%s820 + $0x100] sm:$0xff] %v693
      %854 = vst [vmem:[%s820 + $0x108] sm:$0xff] %v696
      %855 = vst [vmem:[%s820 + $0x110] sm:$0xff] %v701
      %856 = vst [vmem:[%s820 + $0x118] sm:$0xff] %v704
      %857 = vst [vmem:[%s820 + $0x120] sm:$0xff] %v709
      %858 = vst [vmem:[%s820 + $0x128] sm:$0xff] %v712
      %859 = vst [vmem:[%s820 + $0x130] sm:$0xff] %v717
      %860 = vst [vmem:[%s820 + $0x138] sm:$0xff] %v720
      %861 = vst [vmem:[%s820 + $0x140] sm:$0xff] %v725
      %862 = vst [vmem:[%s820 + $0x148] sm:$0xff] %v728
      %863 = vst [vmem:[%s820 + $0x150] sm:$0xff] %v733
      %864 = vst [vmem:[%s820 + $0x158] sm:$0xff] %v736
      %865 = vst [vmem:[%s820 + $0x160] sm:$0xff] %v741
      %866 = vst [vmem:[%s820 + $0x168] sm:$0xff] %v744
      %867 = vst [vmem:[%s820 + $0x170] sm:$0xff] %v749
      %868 = vst [vmem:[%s820 + $0x178] sm:$0xff] %v752
      %869 = vst [vmem:[%s820 + $0x180] sm:$0xff] %v757
      %870 = vst [vmem:[%s820 + $0x188] sm:$0xff] %v760
      %871 = vst [vmem:[%s820 + $0x190] sm:$0xff] %v765
      %872 = vst [vmem:[%s820 + $0x198] sm:$0xff] %v768
      %873 = vst [vmem:[%s820 + $0x1a0] sm:$0xff] %v773
      %874 = vst [vmem:[%s820 + $0x1a8] sm:$0xff] %v776
      %875 = vst [vmem:[%s820 + $0x1b0] sm:$0xff] %v781
      %876 = vst [vmem:[%s820 + $0x1b8] sm:$0xff] %v784
      %877 = vst [vmem:[%s820 + $0x1c0] sm:$0xff] %v789
      %878 = vst [vmem:[%s820 + $0x1c8] sm:$0xff] %v792
      %879 = vst [vmem:[%s820 + $0x1d0] sm:$0xff] %v797
      %880 = vst [vmem:[%s820 + $0x1d8] sm:$0xff] %v800
      %881 = vst [vmem:[%s820 + $0x1e0] sm:$0xff] %v805
      %882 = vst [vmem:[%s820 + $0x1e8] sm:$0xff] %v808
      %883 = vst [vmem:[%s820 + $0x1f0] sm:$0xff] %v813
      %884 = vst [vmem:[%s820 + $0x1f8] sm:$0xff] %v816
      %v885 = vld [vmem:[#allocation2] sm:$0x1]
      %v886 = vadd.f32 %v565, %v568
      %v887 = vadd.f32 %v886, %v573
      %v888 = vadd.f32 %v887, %v576
      %v889 = vadd.f32 %v888, %v581
      %v890 = vadd.f32 %v889, %v584
      %v891 = vadd.f32 %v890, %v589
      %v892 = vadd.f32 %v891, %v592
      %v893 = vadd.f32 %v892, %v597
      %v894 = vadd.f32 %v893, %v600
      %v895 = vadd.f32 %v894, %v605
      %v896 = vadd.f32 %v895, %v608
      %v897 = vadd.f32 %v896, %v613
      %v898 = vadd.f32 %v897, %v616
      %v899 = vadd.f32 %v898, %v621
      %v900 = vadd.f32 %v899, %v624
      %v901 = vadd.f32 %v900, %v629
      %v902 = vadd.f32 %v901, %v632
      %v903 = vadd.f32 %v902, %v637
      %v904 = vadd.f32 %v903, %v640
      %v905 = vadd.f32 %v904, %v645
      %v906 = vadd.f32 %v905, %v648
      %v907 = vadd.f32 %v906, %v653
      %v908 = vadd.f32 %v907, %v656
      %v909 = vadd.f32 %v908, %v661
      %v910 = vadd.f32 %v909, %v664
      %v911 = vadd.f32 %v910, %v669
      %v912 = vadd.f32 %v911, %v672
      %v913 = vadd.f32 %v912, %v677
      %v914 = vadd.f32 %v913, %v680
      %v915 = vadd.f32 %v914, %v685
      %v916 = vadd.f32 %v915, %v688
      %v917 = vadd.f32 %v916, %v693
      %v918 = vadd.f32 %v917, %v696
      %v919 = vadd.f32 %v918, %v701
      %v920 = vadd.f32 %v919, %v704
      %v921 = vadd.f32 %v920, %v709
      %v922 = vadd.f32 %v921, %v712
      %v923 = vadd.f32 %v922, %v717
      %v924 = vadd.f32 %v923, %v720
      %v925 = vadd.f32 %v924, %v725
      %v926 = vadd.f32 %v925, %v728
      %v927 = vadd.f32 %v926, %v733
      %v928 = vadd.f32 %v927, %v736
      %v929 = vadd.f32 %v928, %v741
      %v930 = vadd.f32 %v929, %v744
      %v931 = vadd.f32 %v930, %v749
      %v932 = vadd.f32 %v931, %v752
      %v933 = vadd.f32 %v932, %v757
      %v934 = vadd.f32 %v933, %v760
      %v935 = vadd.f32 %v934, %v765
      %v936 = vadd.f32 %v935, %v768
      %v937 = vadd.f32 %v936, %v773
      %v938 = vadd.f32 %v937, %v776
      %v939 = vadd.f32 %v938, %v781
      %v940 = vadd.f32 %v939, %v784
      %v941 = vadd.f32 %v940, %v789
      %v942 = vadd.f32 %v941, %v792
      %v943 = vadd.f32 %v942, %v797
      %v944 = vadd.f32 %v943, %v800
      %v945 = vadd.f32 %v944, %v805
      %v946 = vadd.f32 %v945, %v808
      %v947 = vadd.f32 %v946, %v813
      %v948 = vadd.f32 %v947, %v816
      %v949 = vrot.slane %v948, 4
      %v950 = vadd.f32 %v948, %v949
      %v951 = vrot.slane %v950, 2
      %v952 = vadd.f32 %v950, %v951
      %v953 = vrot.slane %v952, 1
      %v954 = vadd.f32 %v952, %v953
      %v955 = vadd.f32 %v885, %v954
      %956 = vst [vmem:[#allocation2] sm:$0x1] %v955
      %v957 = vld [vmem:[#allocation3] sm:$0x1]
      %v958 = vmul.f32 %v565, %v565
      %v959 = vmul.f32 %v568, %v568
      %v960 = vmul.f32 %v573, %v573
      %v961 = vmul.f32 %v576, %v576
      %v962 = vmul.f32 %v581, %v581
      %v963 = vmul.f32 %v584, %v584
      %v964 = vmul.f32 %v589, %v589
      %v965 = vmul.f32 %v592, %v592
      %v966 = vmul.f32 %v597, %v597
      %v967 = vmul.f32 %v600, %v600
      %v968 = vmul.f32 %v605, %v605
      %v969 = vmul.f32 %v608, %v608
      %v970 = vmul.f32 %v613, %v613
      %v971 = vmul.f32 %v616, %v616
      %v972 = vmul.f32 %v621, %v621
      %v973 = vmul.f32 %v624, %v624
      %v974 = vmul.f32 %v629, %v629
      %v975 = vmul.f32 %v632, %v632
      %v976 = vmul.f32 %v637, %v637
      %v977 = vmul.f32 %v640, %v640
      %v978 = vmul.f32 %v645, %v645
      %v979 = vmul.f32 %v648, %v648
      %v980 = vmul.f32 %v653, %v653
      %v981 = vmul.f32 %v656, %v656
      %v982 = vmul.f32 %v661, %v661
      %v983 = vmul.f32 %v664, %v664
      %v984 = vmul.f32 %v669, %v669
      %v985 = vmul.f32 %v672, %v672
      %v986 = vmul.f32 %v677, %v677
      %v987 = vmul.f32 %v680, %v680
      %v988 = vmul.f32 %v685, %v685
      %v989 = vmul.f32 %v688, %v688
      %v990 = vmul.f32 %v693, %v693
      %v991 = vmul.f32 %v696, %v696
      %v992 = vmul.f32 %v701, %v701
      %v993 = vmul.f32 %v704, %v704
      %v994 = vmul.f32 %v709, %v709
      %v995 = vmul.f32 %v712, %v712
      %v996 = vmul.f32 %v717, %v717
      %v997 = vmul.f32 %v720, %v720
      %v998 = vmul.f32 %v725, %v725
      %v999 = vmul.f32 %v728, %v728
      %v1000 = vmul.f32 %v733, %v733
      %v1001 = vmul.f32 %v736, %v736
      %v1002 = vmul.f32 %v741, %v741
      %v1003 = vmul.f32 %v744, %v744
      %v1004 = vmul.f32 %v749, %v749
      %v1005 = vmul.f32 %v752, %v752
      %v1006 = vmul.f32 %v757, %v757
      %v1007 = vmul.f32 %v760, %v760
      %v1008 = vmul.f32 %v765, %v765
      %v1009 = vmul.f32 %v768, %v768
      %v1010 = vmul.f32 %v773, %v773
      %v1011 = vmul.f32 %v776, %v776
      %v1012 = vmul.f32 %v781, %v781
      %v1013 = vmul.f32 %v784, %v784
      %v1014 = vmul.f32 %v789, %v789
      %v1015 = vmul.f32 %v792, %v792
      %v1016 = vmul.f32 %v797, %v797
      %v1017 = vmul.f32 %v800, %v800
      %v1018 = vmul.f32 %v805, %v805
      %v1019 = vmul.f32 %v808, %v808
      %v1020 = vmul.f32 %v813, %v813
      %v1021 = vmul.f32 %v816, %v816
      %v1022 = vadd.f32 %v958, %v959
      %v1023 = vadd.f32 %v1022, %v960
      %v1024 = vadd.f32 %v1023, %v961
      %v1025 = vadd.f32 %v1024, %v962
      %v1026 = vadd.f32 %v1025, %v963
      %v1027 = vadd.f32 %v1026, %v964
      %v1028 = vadd.f32 %v1027, %v965
      %v1029 = vadd.f32 %v1028, %v966
      %v1030 = vadd.f32 %v1029, %v967
      %v1031 = vadd.f32 %v1030, %v968
      %v1032 = vadd.f32 %v1031, %v969
      %v1033 = vadd.f32 %v1032, %v970
      %v1034 = vadd.f32 %v1033, %v971
      %v1035 = vadd.f32 %v1034, %v972
      %v1036 = vadd.f32 %v1035, %v973
      %v1037 = vadd.f32 %v1036, %v974
      %v1038 = vadd.f32 %v1037, %v975
      %v1039 = vadd.f32 %v1038, %v976
      %v1040 = vadd.f32 %v1039, %v977
      %v1041 = vadd.f32 %v1040, %v978
      %v1042 = vadd.f32 %v1041, %v979
      %v1043 = vadd.f32 %v1042, %v980
      %v1044 = vadd.f32 %v1043, %v981
      %v1045 = vadd.f32 %v1044, %v982
      %v1046 = vadd.f32 %v1045, %v983
      %v1047 = vadd.f32 %v1046, %v984
      %v1048 = vadd.f32 %v1047, %v985
      %v1049 = vadd.f32 %v1048, %v986
      %v1050 = vadd.f32 %v1049, %v987
      %v1051 = vadd.f32 %v1050, %v988
      %v1052 = vadd.f32 %v1051, %v989
      %v1053 = vadd.f32 %v1052, %v990
      %v1054 = vadd.f32 %v1053, %v991
      %v1055 = vadd.f32 %v1054, %v992
      %v1056 = vadd.f32 %v1055, %v993
      %v1057 = vadd.f32 %v1056, %v994
      %v1058 = vadd.f32 %v1057, %v995
      %v1059 = vadd.f32 %v1058, %v996
      %v1060 = vadd.f32 %v1059, %v997
      %v1061 = vadd.f32 %v1060, %v998
      %v1062 = vadd.f32 %v1061, %v999
      %v1063 = vadd.f32 %v1062, %v1000
      %v1064 = vadd.f32 %v1063, %v1001
      %v1065 = vadd.f32 %v1064, %v1002
      %v1066 = vadd.f32 %v1065, %v1003
      %v1067 = vadd.f32 %v1066, %v1004
      %v1068 = vadd.f32 %v1067, %v1005
      %v1069 = vadd.f32 %v1068, %v1006
      %v1070 = vadd.f32 %v1069, %v1007
      %v1071 = vadd.f32 %v1070, %v1008
      %v1072 = vadd.f32 %v1071, %v1009
      %v1073 = vadd.f32 %v1072, %v1010
      %v1074 = vadd.f32 %v1073, %v1011
      %v1075 = vadd.f32 %v1074, %v1012
      %v1076 = vadd.f32 %v1075, %v1013
      %v1077 = vadd.f32 %v1076, %v1014
      %v1078 = vadd.f32 %v1077, %v1015
      %v1079 = vadd.f32 %v1078, %v1016
      %v1080 = vadd.f32 %v1079, %v1017
      %v1081 = vadd.f32 %v1080, %v1018
      %v1082 = vadd.f32 %v1081, %v1019
      %v1083 = vadd.f32 %v1082, %v1020
      %v1084 = vadd.f32 %v1083, %v1021
      %v1085 = vrot.slane %v1084, 4
      %v1086 = vadd.f32 %v1084, %v1085
      %v1087 = vrot.slane %v1086, 2
      %v1088 = vadd.f32 %v1086, %v1087
      %v1089 = vrot.slane %v1088, 1
      %v1090 = vadd.f32 %v1088, %v1089
      %v1091 = vadd.f32 %v957, %v1090
      %1092 = vst [vmem:[#allocation3] sm:$0x1] %v1091
      %p1093 = scmp.eq.s32.totalorder %s15, 3
      // Predicated region
      $region41: #{generator_forward.8} parent=35 // pred_check
        %p1094 = pneg %p1093
      $region42: #{generator_forward.8} parent=35 // pred_check_branch
        %1096 = sbr.rel (%p1094) target = $region44
      $region43: #{generator_forward.8} parent=35 // pred_region
        %v1097 = vld [vmem:[#allocation2] sm:$0x1]
        %v1098 = vrcp.pop 2048.0
        %v1099 = vmul.f32 %v1097, %v1098
        %v1100 = vld [vmem:[#allocation3] sm:$0x1]
        %v1101 = vmul.f32 %v1100, %v1098
        %v1102 = vmul.f32 %v1099, %v1099
        %v1103 = vsub.f32 %v1101, %v1102
        %v1104 = vld [vmem:[%s2] sm:$0x1]
        %v1105 = vadd.f32 %v1103, 1e-05
        %v1106 = vrsqrt.pop %v1105
        %v1107 = vmul.f32 %v1104, %v1106
        %v1108 = vld [vmem:[%s3] sm:$0x1]
        %v1109 = vmul.f32 %v1099, %v1107
        %v1110 = vsub.f32 %v1108, %v1109
        %v1111 = vld [vmem:[%s4] sm:$0xff]
        %v1112 = vld [vmem:[%s4 + $0x8] sm:$0xff]
        %v1113 = vld [vmem:[%s4 + $0x10] sm:$0xff]
        %v1114 = vld [vmem:[%s4 + $0x18] sm:$0xff]
        %v1115 = vld [vmem:[%s4 + $0x20] sm:$0xff]
        %v1116 = vld [vmem:[%s4 + $0x28] sm:$0xff]
        %v1117 = vld [vmem:[%s4 + $0x30] sm:$0xff]
        %v1118 = vld [vmem:[%s4 + $0x38] sm:$0xff]
        %v1119 = vld [vmem:[%s4 + $0x40] sm:$0xff]
        %v1120 = vld [vmem:[%s4 + $0x48] sm:$0xff]
        %v1121 = vld [vmem:[%s4 + $0x50] sm:$0xff]
        %v1122 = vld [vmem:[%s4 + $0x58] sm:$0xff]
        %v1123 = vld [vmem:[%s4 + $0x60] sm:$0xff]
        %v1124 = vld [vmem:[%s4 + $0x68] sm:$0xff]
        %v1125 = vld [vmem:[%s4 + $0x70] sm:$0xff]
        %v1126 = vld [vmem:[%s4 + $0x78] sm:$0xff]
        %v1127 = vld [vmem:[%s4 + $0x80] sm:$0xff]
        %v1128 = vld [vmem:[%s4 + $0x88] sm:$0xff]
        %v1129 = vld [vmem:[%s4 + $0x90] sm:$0xff]
        %v1130 = vld [vmem:[%s4 + $0x98] sm:$0xff]
        %v1131 = vld [vmem:[%s4 + $0xa0] sm:$0xff]
        %v1132 = vld [vmem:[%s4 + $0xa8] sm:$0xff]
        %v1133 = vld [vmem:[%s4 + $0xb0] sm:$0xff]
        %v1134 = vld [vmem:[%s4 + $0xb8] sm:$0xff]
        %v1135 = vld [vmem:[%s4 + $0xc0] sm:$0xff]
        %v1136 = vld [vmem:[%s4 + $0xc8] sm:$0xff]
        %v1137 = vld [vmem:[%s4 + $0xd0] sm:$0xff]
        %v1138 = vld [vmem:[%s4 + $0xd8] sm:$0xff]
        %v1139 = vld [vmem:[%s4 + $0xe0] sm:$0xff]
        %v1140 = vld [vmem:[%s4 + $0xe8] sm:$0xff]
        %v1141 = vld [vmem:[%s4 + $0xf0] sm:$0xff]
        %v1142 = vld [vmem:[%s4 + $0xf8] sm:$0xff]
        %v1143 = vld [vmem:[%s4 + $0x100] sm:$0xff]
        %v1144 = vld [vmem:[%s4 + $0x108] sm:$0xff]
        %v1145 = vld [vmem:[%s4 + $0x110] sm:$0xff]
        %v1146 = vld [vmem:[%s4 + $0x118] sm:$0xff]
        %v1147 = vld [vmem:[%s4 + $0x120] sm:$0xff]
        %v1148 = vld [vmem:[%s4 + $0x128] sm:$0xff]
        %v1149 = vld [vmem:[%s4 + $0x130] sm:$0xff]
        %v1150 = vld [vmem:[%s4 + $0x138] sm:$0xff]
        %v1151 = vld [vmem:[%s4 + $0x140] sm:$0xff]
        %v1152 = vld [vmem:[%s4 + $0x148] sm:$0xff]
        %v1153 = vld [vmem:[%s4 + $0x150] sm:$0xff]
        %v1154 = vld [vmem:[%s4 + $0x158] sm:$0xff]
        %v1155 = vld [vmem:[%s4 + $0x160] sm:$0xff]
        %v1156 = vld [vmem:[%s4 + $0x168] sm:$0xff]
        %v1157 = vld [vmem:[%s4 + $0x170] sm:$0xff]
        %v1158 = vld [vmem:[%s4 + $0x178] sm:$0xff]
        %v1159 = vld [vmem:[%s4 + $0x180] sm:$0xff]
        %v1160 = vld [vmem:[%s4 + $0x188] sm:$0xff]
        %v1161 = vld [vmem:[%s4 + $0x190] sm:$0xff]
        %v1162 = vld [vmem:[%s4 + $0x198] sm:$0xff]
        %v1163 = vld [vmem:[%s4 + $0x1a0] sm:$0xff]
        %v1164 = vld [vmem:[%s4 + $0x1a8] sm:$0xff]
        %v1165 = vld [vmem:[%s4 + $0x1b0] sm:$0xff]
        %v1166 = vld [vmem:[%s4 + $0x1b8] sm:$0xff]
        %v1167 = vld [vmem:[%s4 + $0x1c0] sm:$0xff]
        %v1168 = vld [vmem:[%s4 + $0x1c8] sm:$0xff]
        %v1169 = vld [vmem:[%s4 + $0x1d0] sm:$0xff]
        %v1170 = vld [vmem:[%s4 + $0x1d8] sm:$0xff]
        %v1171 = vld [vmem:[%s4 + $0x1e0] sm:$0xff]
        %v1172 = vld [vmem:[%s4 + $0x1e8] sm:$0xff]
        %v1173 = vld [vmem:[%s4 + $0x1f0] sm:$0xff]
        %v1174 = vld [vmem:[%s4 + $0x1f8] sm:$0xff]
        %v1175 = vld [vmem:[%s4 + $0x200] sm:$0xff]
        %v1176 = vld [vmem:[%s4 + $0x208] sm:$0xff]
        %v1177 = vld [vmem:[%s4 + $0x210] sm:$0xff]
        %v1178 = vld [vmem:[%s4 + $0x218] sm:$0xff]
        %v1179 = vld [vmem:[%s4 + $0x220] sm:$0xff]
        %v1180 = vld [vmem:[%s4 + $0x228] sm:$0xff]
        %v1181 = vld [vmem:[%s4 + $0x230] sm:$0xff]
        %v1182 = vld [vmem:[%s4 + $0x238] sm:$0xff]
        %v1183 = vld [vmem:[%s4 + $0x240] sm:$0xff]
        %v1184 = vld [vmem:[%s4 + $0x248] sm:$0xff]
        %v1185 = vld [vmem:[%s4 + $0x250] sm:$0xff]
        %v1186 = vld [vmem:[%s4 + $0x258] sm:$0xff]
        %v1187 = vld [vmem:[%s4 + $0x260] sm:$0xff]
        %v1188 = vld [vmem:[%s4 + $0x268] sm:$0xff]
        %v1189 = vld [vmem:[%s4 + $0x270] sm:$0xff]
        %v1190 = vld [vmem:[%s4 + $0x278] sm:$0xff]
        %v1191 = vld [vmem:[%s4 + $0x280] sm:$0xff]
        %v1192 = vld [vmem:[%s4 + $0x288] sm:$0xff]
        %v1193 = vld [vmem:[%s4 + $0x290] sm:$0xff]
        %v1194 = vld [vmem:[%s4 + $0x298] sm:$0xff]
        %v1195 = vld [vmem:[%s4 + $0x2a0] sm:$0xff]
        %v1196 = vld [vmem:[%s4 + $0x2a8] sm:$0xff]
        %v1197 = vld [vmem:[%s4 + $0x2b0] sm:$0xff]
        %v1198 = vld [vmem:[%s4 + $0x2b8] sm:$0xff]
        %v1199 = vld [vmem:[%s4 + $0x2c0] sm:$0xff]
        %v1200 = vld [vmem:[%s4 + $0x2c8] sm:$0xff]
        %v1201 = vld [vmem:[%s4 + $0x2d0] sm:$0xff]
        %v1202 = vld [vmem:[%s4 + $0x2d8] sm:$0xff]
        %v1203 = vld [vmem:[%s4 + $0x2e0] sm:$0xff]
        %v1204 = vld [vmem:[%s4 + $0x2e8] sm:$0xff]
        %v1205 = vld [vmem:[%s4 + $0x2f0] sm:$0xff]
        %v1206 = vld [vmem:[%s4 + $0x2f8] sm:$0xff]
        %v1207 = vld [vmem:[%s4 + $0x300] sm:$0xff]
        %v1208 = vld [vmem:[%s4 + $0x308] sm:$0xff]
        %v1209 = vld [vmem:[%s4 + $0x310] sm:$0xff]
        %v1210 = vld [vmem:[%s4 + $0x318] sm:$0xff]
        %v1211 = vld [vmem:[%s4 + $0x320] sm:$0xff]
        %v1212 = vld [vmem:[%s4 + $0x328] sm:$0xff]
        %v1213 = vld [vmem:[%s4 + $0x330] sm:$0xff]
        %v1214 = vld [vmem:[%s4 + $0x338] sm:$0xff]
        %v1215 = vld [vmem:[%s4 + $0x340] sm:$0xff]
        %v1216 = vld [vmem:[%s4 + $0x348] sm:$0xff]
        %v1217 = vld [vmem:[%s4 + $0x350] sm:$0xff]
        %v1218 = vld [vmem:[%s4 + $0x358] sm:$0xff]
        %v1219 = vld [vmem:[%s4 + $0x360] sm:$0xff]
        %v1220 = vld [vmem:[%s4 + $0x368] sm:$0xff]
        %v1221 = vld [vmem:[%s4 + $0x370] sm:$0xff]
        %v1222 = vld [vmem:[%s4 + $0x378] sm:$0xff]
        %v1223 = vld [vmem:[%s4 + $0x380] sm:$0xff]
        %v1224 = vld [vmem:[%s4 + $0x388] sm:$0xff]
        %v1225 = vld [vmem:[%s4 + $0x390] sm:$0xff]
        %v1226 = vld [vmem:[%s4 + $0x398] sm:$0xff]
        %v1227 = vld [vmem:[%s4 + $0x3a0] sm:$0xff]
        %v1228 = vld [vmem:[%s4 + $0x3a8] sm:$0xff]
        %v1229 = vld [vmem:[%s4 + $0x3b0] sm:$0xff]
        %v1230 = vld [vmem:[%s4 + $0x3b8] sm:$0xff]
        %v1231 = vld [vmem:[%s4 + $0x3c0] sm:$0xff]
        %v1232 = vld [vmem:[%s4 + $0x3c8] sm:$0xff]
        %v1233 = vld [vmem:[%s4 + $0x3d0] sm:$0xff]
        %v1234 = vld [vmem:[%s4 + $0x3d8] sm:$0xff]
        %v1235 = vld [vmem:[%s4 + $0x3e0] sm:$0xff]
        %v1236 = vld [vmem:[%s4 + $0x3e8] sm:$0xff]
        %v1237 = vld [vmem:[%s4 + $0x3f0] sm:$0xff]
        %v1238 = vld [vmem:[%s4 + $0x3f8] sm:$0xff]
        %v1239 = vld [vmem:[%s4 + $0x400] sm:$0xff]
        %v1240 = vld [vmem:[%s4 + $0x408] sm:$0xff]
        %v1241 = vld [vmem:[%s4 + $0x410] sm:$0xff]
        %v1242 = vld [vmem:[%s4 + $0x418] sm:$0xff]
        %v1243 = vld [vmem:[%s4 + $0x420] sm:$0xff]
        %v1244 = vld [vmem:[%s4 + $0x428] sm:$0xff]
        %v1245 = vld [vmem:[%s4 + $0x430] sm:$0xff]
        %v1246 = vld [vmem:[%s4 + $0x438] sm:$0xff]
        %v1247 = vld [vmem:[%s4 + $0x440] sm:$0xff]
        %v1248 = vld [vmem:[%s4 + $0x448] sm:$0xff]
        %v1249 = vld [vmem:[%s4 + $0x450] sm:$0xff]
        %v1250 = vld [vmem:[%s4 + $0x458] sm:$0xff]
        %v1251 = vld [vmem:[%s4 + $0x460] sm:$0xff]
        %v1252 = vld [vmem:[%s4 + $0x468] sm:$0xff]
        %v1253 = vld [vmem:[%s4 + $0x470] sm:$0xff]
        %v1254 = vld [vmem:[%s4 + $0x478] sm:$0xff]
        %v1255 = vld [vmem:[%s4 + $0x480] sm:$0xff]
        %v1256 = vld [vmem:[%s4 + $0x488] sm:$0xff]
        %v1257 = vld [vmem:[%s4 + $0x490] sm:$0xff]
        %v1258 = vld [vmem:[%s4 + $0x498] sm:$0xff]
        %v1259 = vld [vmem:[%s4 + $0x4a0] sm:$0xff]
        %v1260 = vld [vmem:[%s4 + $0x4a8] sm:$0xff]
        %v1261 = vld [vmem:[%s4 + $0x4b0] sm:$0xff]
        %v1262 = vld [vmem:[%s4 + $0x4b8] sm:$0xff]
        %v1263 = vld [vmem:[%s4 + $0x4c0] sm:$0xff]
        %v1264 = vld [vmem:[%s4 + $0x4c8] sm:$0xff]
        %v1265 = vld [vmem:[%s4 + $0x4d0] sm:$0xff]
        %v1266 = vld [vmem:[%s4 + $0x4d8] sm:$0xff]
        %v1267 = vld [vmem:[%s4 + $0x4e0] sm:$0xff]
        %v1268 = vld [vmem:[%s4 + $0x4e8] sm:$0xff]
        %v1269 = vld [vmem:[%s4 + $0x4f0] sm:$0xff]
        %v1270 = vld [vmem:[%s4 + $0x4f8] sm:$0xff]
        %v1271 = vld [vmem:[%s4 + $0x500] sm:$0xff]
        %v1272 = vld [vmem:[%s4 + $0x508] sm:$0xff]
        %v1273 = vld [vmem:[%s4 + $0x510] sm:$0xff]
        %v1274 = vld [vmem:[%s4 + $0x518] sm:$0xff]
        %v1275 = vld [vmem:[%s4 + $0x520] sm:$0xff]
        %v1276 = vld [vmem:[%s4 + $0x528] sm:$0xff]
        %v1277 = vld [vmem:[%s4 + $0x530] sm:$0xff]
        %v1278 = vld [vmem:[%s4 + $0x538] sm:$0xff]
        %v1279 = vld [vmem:[%s4 + $0x540] sm:$0xff]
        %v1280 = vld [vmem:[%s4 + $0x548] sm:$0xff]
        %v1281 = vld [vmem:[%s4 + $0x550] sm:$0xff]
        %v1282 = vld [vmem:[%s4 + $0x558] sm:$0xff]
        %v1283 = vld [vmem:[%s4 + $0x560] sm:$0xff]
        %v1284 = vld [vmem:[%s4 + $0x568] sm:$0xff]
        %v1285 = vld [vmem:[%s4 + $0x570] sm:$0xff]
        %v1286 = vld [vmem:[%s4 + $0x578] sm:$0xff]
        %v1287 = vld [vmem:[%s4 + $0x580] sm:$0xff]
        %v1288 = vld [vmem:[%s4 + $0x588] sm:$0xff]
        %v1289 = vld [vmem:[%s4 + $0x590] sm:$0xff]
        %v1290 = vld [vmem:[%s4 + $0x598] sm:$0xff]
        %v1291 = vld [vmem:[%s4 + $0x5a0] sm:$0xff]
        %v1292 = vld [vmem:[%s4 + $0x5a8] sm:$0xff]
        %v1293 = vld [vmem:[%s4 + $0x5b0] sm:$0xff]
        %v1294 = vld [vmem:[%s4 + $0x5b8] sm:$0xff]
        %v1295 = vld [vmem:[%s4 + $0x5c0] sm:$0xff]
        %v1296 = vld [vmem:[%s4 + $0x5c8] sm:$0xff]
        %v1297 = vld [vmem:[%s4 + $0x5d0] sm:$0xff]
        %v1298 = vld [vmem:[%s4 + $0x5d8] sm:$0xff]
        %v1299 = vld [vmem:[%s4 + $0x5e0] sm:$0xff]
        %v1300 = vld [vmem:[%s4 + $0x5e8] sm:$0xff]
        %v1301 = vld [vmem:[%s4 + $0x5f0] sm:$0xff]
        %v1302 = vld [vmem:[%s4 + $0x5f8] sm:$0xff]
        %v1303 = vld [vmem:[%s4 + $0x600] sm:$0xff]
        %v1304 = vld [vmem:[%s4 + $0x608] sm:$0xff]
        %v1305 = vld [vmem:[%s4 + $0x610] sm:$0xff]
        %v1306 = vld [vmem:[%s4 + $0x618] sm:$0xff]
        %v1307 = vld [vmem:[%s4 + $0x620] sm:$0xff]
        %v1308 = vld [vmem:[%s4 + $0x628] sm:$0xff]
        %v1309 = vld [vmem:[%s4 + $0x630] sm:$0xff]
        %v1310 = vld [vmem:[%s4 + $0x638] sm:$0xff]
        %v1311 = vld [vmem:[%s4 + $0x640] sm:$0xff]
        %v1312 = vld [vmem:[%s4 + $0x648] sm:$0xff]
        %v1313 = vld [vmem:[%s4 + $0x650] sm:$0xff]
        %v1314 = vld [vmem:[%s4 + $0x658] sm:$0xff]
        %v1315 = vld [vmem:[%s4 + $0x660] sm:$0xff]
        %v1316 = vld [vmem:[%s4 + $0x668] sm:$0xff]
        %v1317 = vld [vmem:[%s4 + $0x670] sm:$0xff]
        %v1318 = vld [vmem:[%s4 + $0x678] sm:$0xff]
        %v1319 = vld [vmem:[%s4 + $0x680] sm:$0xff]
        %v1320 = vld [vmem:[%s4 + $0x688] sm:$0xff]
        %v1321 = vld [vmem:[%s4 + $0x690] sm:$0xff]
        %v1322 = vld [vmem:[%s4 + $0x698] sm:$0xff]
        %v1323 = vld [vmem:[%s4 + $0x6a0] sm:$0xff]
        %v1324 = vld [vmem:[%s4 + $0x6a8] sm:$0xff]
        %v1325 = vld [vmem:[%s4 + $0x6b0] sm:$0xff]
        %v1326 = vld [vmem:[%s4 + $0x6b8] sm:$0xff]
        %v1327 = vld [vmem:[%s4 + $0x6c0] sm:$0xff]
        %v1328 = vld [vmem:[%s4 + $0x6c8] sm:$0xff]
        %v1329 = vld [vmem:[%s4 + $0x6d0] sm:$0xff]
        %v1330 = vld [vmem:[%s4 + $0x6d8] sm:$0xff]
        %v1331 = vld [vmem:[%s4 + $0x6e0] sm:$0xff]
        %v1332 = vld [vmem:[%s4 + $0x6e8] sm:$0xff]
        %v1333 = vld [vmem:[%s4 + $0x6f0] sm:$0xff]
        %v1334 = vld [vmem:[%s4 + $0x6f8] sm:$0xff]
        %v1335 = vld [vmem:[%s4 + $0x700] sm:$0xff]
        %v1336 = vld [vmem:[%s4 + $0x708] sm:$0xff]
        %v1337 = vld [vmem:[%s4 + $0x710] sm:$0xff]
        %v1338 = vld [vmem:[%s4 + $0x718] sm:$0xff]
        %v1339 = vld [vmem:[%s4 + $0x720] sm:$0xff]
        %v1340 = vld [vmem:[%s4 + $0x728] sm:$0xff]
        %v1341 = vld [vmem:[%s4 + $0x730] sm:$0xff]
        %v1342 = vld [vmem:[%s4 + $0x738] sm:$0xff]
        %v1343 = vld [vmem:[%s4 + $0x740] sm:$0xff]
        %v1344 = vld [vmem:[%s4 + $0x748] sm:$0xff]
        %v1345 = vld [vmem:[%s4 + $0x750] sm:$0xff]
        %v1346 = vld [vmem:[%s4 + $0x758] sm:$0xff]
        %v1347 = vld [vmem:[%s4 + $0x760] sm:$0xff]
        %v1348 = vld [vmem:[%s4 + $0x768] sm:$0xff]
        %v1349 = vld [vmem:[%s4 + $0x770] sm:$0xff]
        %v1350 = vld [vmem:[%s4 + $0x778] sm:$0xff]
        %v1351 = vld [vmem:[%s4 + $0x780] sm:$0xff]
        %v1352 = vld [vmem:[%s4 + $0x788] sm:$0xff]
        %v1353 = vld [vmem:[%s4 + $0x790] sm:$0xff]
        %v1354 = vld [vmem:[%s4 + $0x798] sm:$0xff]
        %v1355 = vld [vmem:[%s4 + $0x7a0] sm:$0xff]
        %v1356 = vld [vmem:[%s4 + $0x7a8] sm:$0xff]
        %v1357 = vld [vmem:[%s4 + $0x7b0] sm:$0xff]
        %v1358 = vld [vmem:[%s4 + $0x7b8] sm:$0xff]
        %v1359 = vld [vmem:[%s4 + $0x7c0] sm:$0xff]
        %v1360 = vld [vmem:[%s4 + $0x7c8] sm:$0xff]
        %v1361 = vld [vmem:[%s4 + $0x7d0] sm:$0xff]
        %v1362 = vld [vmem:[%s4 + $0x7d8] sm:$0xff]
        %v1363 = vld [vmem:[%s4 + $0x7e0] sm:$0xff]
        %v1364 = vld [vmem:[%s4 + $0x7e8] sm:$0xff]
        %v1365 = vld [vmem:[%s4 + $0x7f0] sm:$0xff]
        %v1366 = vld [vmem:[%s4 + $0x7f8] sm:$0xff]
        %v1368 = vlaneseq
        %v1369 = vshrl.u32 %v1368, 7
        %v1370 = vsub.s32 0, %v1369
        %v1371 = vrot.slane %v1107, %v1370
        %v1373 = vmul.f32 %v1111, %v1371
        %v1374 = vmul.f32 %v1112, %v1371
        %v1375 = vmul.f32 %v1113, %v1371
        %v1376 = vmul.f32 %v1114, %v1371
        %v1377 = vmul.f32 %v1115, %v1371
        %v1378 = vmul.f32 %v1116, %v1371
        %v1379 = vmul.f32 %v1117, %v1371
        %v1380 = vmul.f32 %v1118, %v1371
        %v1381 = vmul.f32 %v1119, %v1371
        %v1382 = vmul.f32 %v1120, %v1371
        %v1383 = vmul.f32 %v1121, %v1371
        %v1384 = vmul.f32 %v1122, %v1371
        %v1385 = vmul.f32 %v1123, %v1371
        %v1386 = vmul.f32 %v1124, %v1371
        %v1387 = vmul.f32 %v1125, %v1371
        %v1388 = vmul.f32 %v1126, %v1371
        %v1389 = vmul.f32 %v1127, %v1371
        %v1390 = vmul.f32 %v1128, %v1371
        %v1391 = vmul.f32 %v1129, %v1371
        %v1392 = vmul.f32 %v1130, %v1371
        %v1393 = vmul.f32 %v1131, %v1371
        %v1394 = vmul.f32 %v1132, %v1371
        %v1395 = vmul.f32 %v1133, %v1371
        %v1396 = vmul.f32 %v1134, %v1371
        %v1397 = vmul.f32 %v1135, %v1371
        %v1398 = vmul.f32 %v1136, %v1371
        %v1399 = vmul.f32 %v1137, %v1371
        %v1400 = vmul.f32 %v1138, %v1371
        %v1401 = vmul.f32 %v1139, %v1371
        %v1402 = vmul.f32 %v1140, %v1371
        %v1403 = vmul.f32 %v1141, %v1371
        %v1404 = vmul.f32 %v1142, %v1371
        %v1405 = vmul.f32 %v1143, %v1371
        %v1406 = vmul.f32 %v1144, %v1371
        %v1407 = vmul.f32 %v1145, %v1371
        %v1408 = vmul.f32 %v1146, %v1371
        %v1409 = vmul.f32 %v1147, %v1371
        %v1410 = vmul.f32 %v1148, %v1371
        %v1411 = vmul.f32 %v1149, %v1371
        %v1412 = vmul.f32 %v1150, %v1371
        %v1413 = vmul.f32 %v1151, %v1371
        %v1414 = vmul.f32 %v1152, %v1371
        %v1415 = vmul.f32 %v1153, %v1371
        %v1416 = vmul.f32 %v1154, %v1371
        %v1417 = vmul.f32 %v1155, %v1371
        %v1418 = vmul.f32 %v1156, %v1371
        %v1419 = vmul.f32 %v1157, %v1371
        %v1420 = vmul.f32 %v1158, %v1371
        %v1421 = vmul.f32 %v1159, %v1371
        %v1422 = vmul.f32 %v1160, %v1371
        %v1423 = vmul.f32 %v1161, %v1371
        %v1424 = vmul.f32 %v1162, %v1371
        %v1425 = vmul.f32 %v1163, %v1371
        %v1426 = vmul.f32 %v1164, %v1371
        %v1427 = vmul.f32 %v1165, %v1371
        %v1428 = vmul.f32 %v1166, %v1371
        %v1429 = vmul.f32 %v1167, %v1371
        %v1430 = vmul.f32 %v1168, %v1371
        %v1431 = vmul.f32 %v1169, %v1371
        %v1432 = vmul.f32 %v1170, %v1371
        %v1433 = vmul.f32 %v1171, %v1371
        %v1434 = vmul.f32 %v1172, %v1371
        %v1435 = vmul.f32 %v1173, %v1371
        %v1436 = vmul.f32 %v1174, %v1371
        %v1437 = vmul.f32 %v1175, %v1371
        %v1438 = vmul.f32 %v1176, %v1371
        %v1439 = vmul.f32 %v1177, %v1371
        %v1440 = vmul.f32 %v1178, %v1371
        %v1441 = vmul.f32 %v1179, %v1371
        %v1442 = vmul.f32 %v1180, %v1371
        %v1443 = vmul.f32 %v1181, %v1371
        %v1444 = vmul.f32 %v1182, %v1371
        %v1445 = vmul.f32 %v1183, %v1371
        %v1446 = vmul.f32 %v1184, %v1371
        %v1447 = vmul.f32 %v1185, %v1371
        %v1448 = vmul.f32 %v1186, %v1371
        %v1449 = vmul.f32 %v1187, %v1371
        %v1450 = vmul.f32 %v1188, %v1371
        %v1451 = vmul.f32 %v1189, %v1371
        %v1452 = vmul.f32 %v1190, %v1371
        %v1453 = vmul.f32 %v1191, %v1371
        %v1454 = vmul.f32 %v1192, %v1371
        %v1455 = vmul.f32 %v1193, %v1371
        %v1456 = vmul.f32 %v1194, %v1371
        %v1457 = vmul.f32 %v1195, %v1371
        %v1458 = vmul.f32 %v1196, %v1371
        %v1459 = vmul.f32 %v1197, %v1371
        %v1460 = vmul.f32 %v1198, %v1371
        %v1461 = vmul.f32 %v1199, %v1371
        %v1462 = vmul.f32 %v1200, %v1371
        %v1463 = vmul.f32 %v1201, %v1371
        %v1464 = vmul.f32 %v1202, %v1371
        %v1465 = vmul.f32 %v1203, %v1371
        %v1466 = vmul.f32 %v1204, %v1371
        %v1467 = vmul.f32 %v1205, %v1371
        %v1468 = vmul.f32 %v1206, %v1371
        %v1469 = vmul.f32 %v1207, %v1371
        %v1470 = vmul.f32 %v1208, %v1371
        %v1471 = vmul.f32 %v1209, %v1371
        %v1472 = vmul.f32 %v1210, %v1371
        %v1473 = vmul.f32 %v1211, %v1371
        %v1474 = vmul.f32 %v1212, %v1371
        %v1475 = vmul.f32 %v1213, %v1371
        %v1476 = vmul.f32 %v1214, %v1371
        %v1477 = vmul.f32 %v1215, %v1371
        %v1478 = vmul.f32 %v1216, %v1371
        %v1479 = vmul.f32 %v1217, %v1371
        %v1480 = vmul.f32 %v1218, %v1371
        %v1481 = vmul.f32 %v1219, %v1371
        %v1482 = vmul.f32 %v1220, %v1371
        %v1483 = vmul.f32 %v1221, %v1371
        %v1484 = vmul.f32 %v1222, %v1371
        %v1485 = vmul.f32 %v1223, %v1371
        %v1486 = vmul.f32 %v1224, %v1371
        %v1487 = vmul.f32 %v1225, %v1371
        %v1488 = vmul.f32 %v1226, %v1371
        %v1489 = vmul.f32 %v1227, %v1371
        %v1490 = vmul.f32 %v1228, %v1371
        %v1491 = vmul.f32 %v1229, %v1371
        %v1492 = vmul.f32 %v1230, %v1371
        %v1493 = vmul.f32 %v1231, %v1371
        %v1494 = vmul.f32 %v1232, %v1371
        %v1495 = vmul.f32 %v1233, %v1371
        %v1496 = vmul.f32 %v1234, %v1371
        %v1497 = vmul.f32 %v1235, %v1371
        %v1498 = vmul.f32 %v1236, %v1371
        %v1499 = vmul.f32 %v1237, %v1371
        %v1500 = vmul.f32 %v1238, %v1371
        %v1501 = vmul.f32 %v1239, %v1371
        %v1502 = vmul.f32 %v1240, %v1371
        %v1503 = vmul.f32 %v1241, %v1371
        %v1504 = vmul.f32 %v1242, %v1371
        %v1505 = vmul.f32 %v1243, %v1371
        %v1506 = vmul.f32 %v1244, %v1371
        %v1507 = vmul.f32 %v1245, %v1371
        %v1508 = vmul.f32 %v1246, %v1371
        %v1509 = vmul.f32 %v1247, %v1371
        %v1510 = vmul.f32 %v1248, %v1371
        %v1511 = vmul.f32 %v1249, %v1371
        %v1512 = vmul.f32 %v1250, %v1371
        %v1513 = vmul.f32 %v1251, %v1371
        %v1514 = vmul.f32 %v1252, %v1371
        %v1515 = vmul.f32 %v1253, %v1371
        %v1516 = vmul.f32 %v1254, %v1371
        %v1517 = vmul.f32 %v1255, %v1371
        %v1518 = vmul.f32 %v1256, %v1371
        %v1519 = vmul.f32 %v1257, %v1371
        %v1520 = vmul.f32 %v1258, %v1371
        %v1521 = vmul.f32 %v1259, %v1371
        %v1522 = vmul.f32 %v1260, %v1371
        %v1523 = vmul.f32 %v1261, %v1371
        %v1524 = vmul.f32 %v1262, %v1371
        %v1525 = vmul.f32 %v1263, %v1371
        %v1526 = vmul.f32 %v1264, %v1371
        %v1527 = vmul.f32 %v1265, %v1371
        %v1528 = vmul.f32 %v1266, %v1371
        %v1529 = vmul.f32 %v1267, %v1371
        %v1530 = vmul.f32 %v1268, %v1371
        %v1531 = vmul.f32 %v1269, %v1371
        %v1532 = vmul.f32 %v1270, %v1371
        %v1533 = vmul.f32 %v1271, %v1371
        %v1534 = vmul.f32 %v1272, %v1371
        %v1535 = vmul.f32 %v1273, %v1371
        %v1536 = vmul.f32 %v1274, %v1371
        %v1537 = vmul.f32 %v1275, %v1371
        %v1538 = vmul.f32 %v1276, %v1371
        %v1539 = vmul.f32 %v1277, %v1371
        %v1540 = vmul.f32 %v1278, %v1371
        %v1541 = vmul.f32 %v1279, %v1371
        %v1542 = vmul.f32 %v1280, %v1371
        %v1543 = vmul.f32 %v1281, %v1371
        %v1544 = vmul.f32 %v1282, %v1371
        %v1545 = vmul.f32 %v1283, %v1371
        %v1546 = vmul.f32 %v1284, %v1371
        %v1547 = vmul.f32 %v1285, %v1371
        %v1548 = vmul.f32 %v1286, %v1371
        %v1549 = vmul.f32 %v1287, %v1371
        %v1550 = vmul.f32 %v1288, %v1371
        %v1551 = vmul.f32 %v1289, %v1371
        %v1552 = vmul.f32 %v1290, %v1371
        %v1553 = vmul.f32 %v1291, %v1371
        %v1554 = vmul.f32 %v1292, %v1371
        %v1555 = vmul.f32 %v1293, %v1371
        %v1556 = vmul.f32 %v1294, %v1371
        %v1557 = vmul.f32 %v1295, %v1371
        %v1558 = vmul.f32 %v1296, %v1371
        %v1559 = vmul.f32 %v1297, %v1371
        %v1560 = vmul.f32 %v1298, %v1371
        %v1561 = vmul.f32 %v1299, %v1371
        %v1562 = vmul.f32 %v1300, %v1371
        %v1563 = vmul.f32 %v1301, %v1371
        %v1564 = vmul.f32 %v1302, %v1371
        %v1565 = vmul.f32 %v1303, %v1371
        %v1566 = vmul.f32 %v1304, %v1371
        %v1567 = vmul.f32 %v1305, %v1371
        %v1568 = vmul.f32 %v1306, %v1371
        %v1569 = vmul.f32 %v1307, %v1371
        %v1570 = vmul.f32 %v1308, %v1371
        %v1571 = vmul.f32 %v1309, %v1371
        %v1572 = vmul.f32 %v1310, %v1371
        %v1573 = vmul.f32 %v1311, %v1371
        %v1574 = vmul.f32 %v1312, %v1371
        %v1575 = vmul.f32 %v1313, %v1371
        %v1576 = vmul.f32 %v1314, %v1371
        %v1577 = vmul.f32 %v1315, %v1371
        %v1578 = vmul.f32 %v1316, %v1371
        %v1579 = vmul.f32 %v1317, %v1371
        %v1580 = vmul.f32 %v1318, %v1371
        %v1581 = vmul.f32 %v1319, %v1371
        %v1582 = vmul.f32 %v1320, %v1371
        %v1583 = vmul.f32 %v1321, %v1371
        %v1584 = vmul.f32 %v1322, %v1371
        %v1585 = vmul.f32 %v1323, %v1371
        %v1586 = vmul.f32 %v1324, %v1371
        %v1587 = vmul.f32 %v1325, %v1371
        %v1588 = vmul.f32 %v1326, %v1371
        %v1589 = vmul.f32 %v1327, %v1371
        %v1590 = vmul.f32 %v1328, %v1371
        %v1591 = vmul.f32 %v1329, %v1371
        %v1592 = vmul.f32 %v1330, %v1371
        %v1593 = vmul.f32 %v1331, %v1371
        %v1594 = vmul.f32 %v1332, %v1371
        %v1595 = vmul.f32 %v1333, %v1371
        %v1596 = vmul.f32 %v1334, %v1371
        %v1597 = vmul.f32 %v1335, %v1371
        %v1598 = vmul.f32 %v1336, %v1371
        %v1599 = vmul.f32 %v1337, %v1371
        %v1600 = vmul.f32 %v1338, %v1371
        %v1601 = vmul.f32 %v1339, %v1371
        %v1602 = vmul.f32 %v1340, %v1371
        %v1603 = vmul.f32 %v1341, %v1371
        %v1604 = vmul.f32 %v1342, %v1371
        %v1605 = vmul.f32 %v1343, %v1371
        %v1606 = vmul.f32 %v1344, %v1371
        %v1607 = vmul.f32 %v1345, %v1371
        %v1608 = vmul.f32 %v1346, %v1371
        %v1609 = vmul.f32 %v1347, %v1371
        %v1610 = vmul.f32 %v1348, %v1371
        %v1611 = vmul.f32 %v1349, %v1371
        %v1612 = vmul.f32 %v1350, %v1371
        %v1613 = vmul.f32 %v1351, %v1371
        %v1614 = vmul.f32 %v1352, %v1371
        %v1615 = vmul.f32 %v1353, %v1371
        %v1616 = vmul.f32 %v1354, %v1371
        %v1617 = vmul.f32 %v1355, %v1371
        %v1618 = vmul.f32 %v1356, %v1371
        %v1619 = vmul.f32 %v1357, %v1371
        %v1620 = vmul.f32 %v1358, %v1371
        %v1621 = vmul.f32 %v1359, %v1371
        %v1622 = vmul.f32 %v1360, %v1371
        %v1623 = vmul.f32 %v1361, %v1371
        %v1624 = vmul.f32 %v1362, %v1371
        %v1625 = vmul.f32 %v1363, %v1371
        %v1626 = vmul.f32 %v1364, %v1371
        %v1627 = vmul.f32 %v1365, %v1371
        %v1628 = vmul.f32 %v1366, %v1371
        %v1630 = vlaneseq
        %v1631 = vshrl.u32 %v1630, 7
        %v1632 = vsub.s32 0, %v1631
        %v1633 = vrot.slane %v1110, %v1632
        %v1635 = vadd.f32 %v1373, %v1633
        %v1636 = vadd.f32 %v1374, %v1633
        %v1637 = vadd.f32 %v1375, %v1633
        %v1638 = vadd.f32 %v1376, %v1633
        %v1639 = vadd.f32 %v1377, %v1633
        %v1640 = vadd.f32 %v1378, %v1633
        %v1641 = vadd.f32 %v1379, %v1633
        %v1642 = vadd.f32 %v1380, %v1633
        %v1643 = vadd.f32 %v1381, %v1633
        %v1644 = vadd.f32 %v1382, %v1633
        %v1645 = vadd.f32 %v1383, %v1633
        %v1646 = vadd.f32 %v1384, %v1633
        %v1647 = vadd.f32 %v1385, %v1633
        %v1648 = vadd.f32 %v1386, %v1633
        %v1649 = vadd.f32 %v1387, %v1633
        %v1650 = vadd.f32 %v1388, %v1633
        %v1651 = vadd.f32 %v1389, %v1633
        %v1652 = vadd.f32 %v1390, %v1633
        %v1653 = vadd.f32 %v1391, %v1633
        %v1654 = vadd.f32 %v1392, %v1633
        %v1655 = vadd.f32 %v1393, %v1633
        %v1656 = vadd.f32 %v1394, %v1633
        %v1657 = vadd.f32 %v1395, %v1633
        %v1658 = vadd.f32 %v1396, %v1633
        %v1659 = vadd.f32 %v1397, %v1633
        %v1660 = vadd.f32 %v1398, %v1633
        %v1661 = vadd.f32 %v1399, %v1633
        %v1662 = vadd.f32 %v1400, %v1633
        %v1663 = vadd.f32 %v1401, %v1633
        %v1664 = vadd.f32 %v1402, %v1633
        %v1665 = vadd.f32 %v1403, %v1633
        %v1666 = vadd.f32 %v1404, %v1633
        %v1667 = vadd.f32 %v1405, %v1633
        %v1668 = vadd.f32 %v1406, %v1633
        %v1669 = vadd.f32 %v1407, %v1633
        %v1670 = vadd.f32 %v1408, %v1633
        %v1671 = vadd.f32 %v1409, %v1633
        %v1672 = vadd.f32 %v1410, %v1633
        %v1673 = vadd.f32 %v1411, %v1633
        %v1674 = vadd.f32 %v1412, %v1633
        %v1675 = vadd.f32 %v1413, %v1633
        %v1676 = vadd.f32 %v1414, %v1633
        %v1677 = vadd.f32 %v1415, %v1633
        %v1678 = vadd.f32 %v1416, %v1633
        %v1679 = vadd.f32 %v1417, %v1633
        %v1680 = vadd.f32 %v1418, %v1633
        %v1681 = vadd.f32 %v1419, %v1633
        %v1682 = vadd.f32 %v1420, %v1633
        %v1683 = vadd.f32 %v1421, %v1633
        %v1684 = vadd.f32 %v1422, %v1633
        %v1685 = vadd.f32 %v1423, %v1633
        %v1686 = vadd.f32 %v1424, %v1633
        %v1687 = vadd.f32 %v1425, %v1633
        %v1688 = vadd.f32 %v1426, %v1633
        %v1689 = vadd.f32 %v1427, %v1633
        %v1690 = vadd.f32 %v1428, %v1633
        %v1691 = vadd.f32 %v1429, %v1633
        %v1692 = vadd.f32 %v1430, %v1633
        %v1693 = vadd.f32 %v1431, %v1633
        %v1694 = vadd.f32 %v1432, %v1633
        %v1695 = vadd.f32 %v1433, %v1633
        %v1696 = vadd.f32 %v1434, %v1633
        %v1697 = vadd.f32 %v1435, %v1633
        %v1698 = vadd.f32 %v1436, %v1633
        %v1699 = vadd.f32 %v1437, %v1633
        %v1700 = vadd.f32 %v1438, %v1633
        %v1701 = vadd.f32 %v1439, %v1633
        %v1702 = vadd.f32 %v1440, %v1633
        %v1703 = vadd.f32 %v1441, %v1633
        %v1704 = vadd.f32 %v1442, %v1633
        %v1705 = vadd.f32 %v1443, %v1633
        %v1706 = vadd.f32 %v1444, %v1633
        %v1707 = vadd.f32 %v1445, %v1633
        %v1708 = vadd.f32 %v1446, %v1633
        %v1709 = vadd.f32 %v1447, %v1633
        %v1710 = vadd.f32 %v1448, %v1633
        %v1711 = vadd.f32 %v1449, %v1633
        %v1712 = vadd.f32 %v1450, %v1633
        %v1713 = vadd.f32 %v1451, %v1633
        %v1714 = vadd.f32 %v1452, %v1633
        %v1715 = vadd.f32 %v1453, %v1633
        %v1716 = vadd.f32 %v1454, %v1633
        %v1717 = vadd.f32 %v1455, %v1633
        %v1718 = vadd.f32 %v1456, %v1633
        %v1719 = vadd.f32 %v1457, %v1633
        %v1720 = vadd.f32 %v1458, %v1633
        %v1721 = vadd.f32 %v1459, %v1633
        %v1722 = vadd.f32 %v1460, %v1633
        %v1723 = vadd.f32 %v1461, %v1633
        %v1724 = vadd.f32 %v1462, %v1633
        %v1725 = vadd.f32 %v1463, %v1633
        %v1726 = vadd.f32 %v1464, %v1633
        %v1727 = vadd.f32 %v1465, %v1633
        %v1728 = vadd.f32 %v1466, %v1633
        %v1729 = vadd.f32 %v1467, %v1633
        %v1730 = vadd.f32 %v1468, %v1633
        %v1731 = vadd.f32 %v1469, %v1633
        %v1732 = vadd.f32 %v1470, %v1633
        %v1733 = vadd.f32 %v1471, %v1633
        %v1734 = vadd.f32 %v1472, %v1633
        %v1735 = vadd.f32 %v1473, %v1633
        %v1736 = vadd.f32 %v1474, %v1633
        %v1737 = vadd.f32 %v1475, %v1633
        %v1738 = vadd.f32 %v1476, %v1633
        %v1739 = vadd.f32 %v1477, %v1633
        %v1740 = vadd.f32 %v1478, %v1633
        %v1741 = vadd.f32 %v1479, %v1633
        %v1742 = vadd.f32 %v1480, %v1633
        %v1743 = vadd.f32 %v1481, %v1633
        %v1744 = vadd.f32 %v1482, %v1633
        %v1745 = vadd.f32 %v1483, %v1633
        %v1746 = vadd.f32 %v1484, %v1633
        %v1747 = vadd.f32 %v1485, %v1633
        %v1748 = vadd.f32 %v1486, %v1633
        %v1749 = vadd.f32 %v1487, %v1633
        %v1750 = vadd.f32 %v1488, %v1633
        %v1751 = vadd.f32 %v1489, %v1633
        %v1752 = vadd.f32 %v1490, %v1633
        %v1753 = vadd.f32 %v1491, %v1633
        %v1754 = vadd.f32 %v1492, %v1633
        %v1755 = vadd.f32 %v1493, %v1633
        %v1756 = vadd.f32 %v1494, %v1633
        %v1757 = vadd.f32 %v1495, %v1633
        %v1758 = vadd.f32 %v1496, %v1633
        %v1759 = vadd.f32 %v1497, %v1633
        %v1760 = vadd.f32 %v1498, %v1633
        %v1761 = vadd.f32 %v1499, %v1633
        %v1762 = vadd.f32 %v1500, %v1633
        %v1763 = vadd.f32 %v1501, %v1633
        %v1764 = vadd.f32 %v1502, %v1633
        %v1765 = vadd.f32 %v1503, %v1633
        %v1766 = vadd.f32 %v1504, %v1633
        %v1767 = vadd.f32 %v1505, %v1633
        %v1768 = vadd.f32 %v1506, %v1633
        %v1769 = vadd.f32 %v1507, %v1633
        %v1770 = vadd.f32 %v1508, %v1633
        %v1771 = vadd.f32 %v1509, %v1633
        %v1772 = vadd.f32 %v1510, %v1633
        %v1773 = vadd.f32 %v1511, %v1633
        %v1774 = vadd.f32 %v1512, %v1633
        %v1775 = vadd.f32 %v1513, %v1633
        %v1776 = vadd.f32 %v1514, %v1633
        %v1777 = vadd.f32 %v1515, %v1633
        %v1778 = vadd.f32 %v1516, %v1633
        %v1779 = vadd.f32 %v1517, %v1633
        %v1780 = vadd.f32 %v1518, %v1633
        %v1781 = vadd.f32 %v1519, %v1633
        %v1782 = vadd.f32 %v1520, %v1633
        %v1783 = vadd.f32 %v1521, %v1633
        %v1784 = vadd.f32 %v1522, %v1633
        %v1785 = vadd.f32 %v1523, %v1633
        %v1786 = vadd.f32 %v1524, %v1633
        %v1787 = vadd.f32 %v1525, %v1633
        %v1788 = vadd.f32 %v1526, %v1633
        %v1789 = vadd.f32 %v1527, %v1633
        %v1790 = vadd.f32 %v1528, %v1633
        %v1791 = vadd.f32 %v1529, %v1633
        %v1792 = vadd.f32 %v1530, %v1633
        %v1793 = vadd.f32 %v1531, %v1633
        %v1794 = vadd.f32 %v1532, %v1633
        %v1795 = vadd.f32 %v1533, %v1633
        %v1796 = vadd.f32 %v1534, %v1633
        %v1797 = vadd.f32 %v1535, %v1633
        %v1798 = vadd.f32 %v1536, %v1633
        %v1799 = vadd.f32 %v1537, %v1633
        %v1800 = vadd.f32 %v1538, %v1633
        %v1801 = vadd.f32 %v1539, %v1633
        %v1802 = vadd.f32 %v1540, %v1633
        %v1803 = vadd.f32 %v1541, %v1633
        %v1804 = vadd.f32 %v1542, %v1633
        %v1805 = vadd.f32 %v1543, %v1633
        %v1806 = vadd.f32 %v1544, %v1633
        %v1807 = vadd.f32 %v1545, %v1633
        %v1808 = vadd.f32 %v1546, %v1633
        %v1809 = vadd.f32 %v1547, %v1633
        %v1810 = vadd.f32 %v1548, %v1633
        %v1811 = vadd.f32 %v1549, %v1633
        %v1812 = vadd.f32 %v1550, %v1633
        %v1813 = vadd.f32 %v1551, %v1633
        %v1814 = vadd.f32 %v1552, %v1633
        %v1815 = vadd.f32 %v1553, %v1633
        %v1816 = vadd.f32 %v1554, %v1633
        %v1817 = vadd.f32 %v1555, %v1633
        %v1818 = vadd.f32 %v1556, %v1633
        %v1819 = vadd.f32 %v1557, %v1633
        %v1820 = vadd.f32 %v1558, %v1633
        %v1821 = vadd.f32 %v1559, %v1633
        %v1822 = vadd.f32 %v1560, %v1633
        %v1823 = vadd.f32 %v1561, %v1633
        %v1824 = vadd.f32 %v1562, %v1633
        %v1825 = vadd.f32 %v1563, %v1633
        %v1826 = vadd.f32 %v1564, %v1633
        %v1827 = vadd.f32 %v1565, %v1633
        %v1828 = vadd.f32 %v1566, %v1633
        %v1829 = vadd.f32 %v1567, %v1633
        %v1830 = vadd.f32 %v1568, %v1633
        %v1831 = vadd.f32 %v1569, %v1633
        %v1832 = vadd.f32 %v1570, %v1633
        %v1833 = vadd.f32 %v1571, %v1633
        %v1834 = vadd.f32 %v1572, %v1633
        %v1835 = vadd.f32 %v1573, %v1633
        %v1836 = vadd.f32 %v1574, %v1633
        %v1837 = vadd.f32 %v1575, %v1633
        %v1838 = vadd.f32 %v1576, %v1633
        %v1839 = vadd.f32 %v1577, %v1633
        %v1840 = vadd.f32 %v1578, %v1633
        %v1841 = vadd.f32 %v1579, %v1633
        %v1842 = vadd.f32 %v1580, %v1633
        %v1843 = vadd.f32 %v1581, %v1633
        %v1844 = vadd.f32 %v1582, %v1633
        %v1845 = vadd.f32 %v1583, %v1633
        %v1846 = vadd.f32 %v1584, %v1633
        %v1847 = vadd.f32 %v1585, %v1633
        %v1848 = vadd.f32 %v1586, %v1633
        %v1849 = vadd.f32 %v1587, %v1633
        %v1850 = vadd.f32 %v1588, %v1633
        %v1851 = vadd.f32 %v1589, %v1633
        %v1852 = vadd.f32 %v1590, %v1633
        %v1853 = vadd.f32 %v1591, %v1633
        %v1854 = vadd.f32 %v1592, %v1633
        %v1855 = vadd.f32 %v1593, %v1633
        %v1856 = vadd.f32 %v1594, %v1633
        %v1857 = vadd.f32 %v1595, %v1633
        %v1858 = vadd.f32 %v1596, %v1633
        %v1859 = vadd.f32 %v1597, %v1633
        %v1860 = vadd.f32 %v1598, %v1633
        %v1861 = vadd.f32 %v1599, %v1633
        %v1862 = vadd.f32 %v1600, %v1633
        %v1863 = vadd.f32 %v1601, %v1633
        %v1864 = vadd.f32 %v1602, %v1633
        %v1865 = vadd.f32 %v1603, %v1633
        %v1866 = vadd.f32 %v1604, %v1633
        %v1867 = vadd.f32 %v1605, %v1633
        %v1868 = vadd.f32 %v1606, %v1633
        %v1869 = vadd.f32 %v1607, %v1633
        %v1870 = vadd.f32 %v1608, %v1633
        %v1871 = vadd.f32 %v1609, %v1633
        %v1872 = vadd.f32 %v1610, %v1633
        %v1873 = vadd.f32 %v1611, %v1633
        %v1874 = vadd.f32 %v1612, %v1633
        %v1875 = vadd.f32 %v1613, %v1633
        %v1876 = vadd.f32 %v1614, %v1633
        %v1877 = vadd.f32 %v1615, %v1633
        %v1878 = vadd.f32 %v1616, %v1633
        %v1879 = vadd.f32 %v1617, %v1633
        %v1880 = vadd.f32 %v1618, %v1633
        %v1881 = vadd.f32 %v1619, %v1633
        %v1882 = vadd.f32 %v1620, %v1633
        %v1883 = vadd.f32 %v1621, %v1633
        %v1884 = vadd.f32 %v1622, %v1633
        %v1885 = vadd.f32 %v1623, %v1633
        %v1886 = vadd.f32 %v1624, %v1633
        %v1887 = vadd.f32 %v1625, %v1633
        %v1888 = vadd.f32 %v1626, %v1633
        %v1889 = vadd.f32 %v1627, %v1633
        %v1890 = vadd.f32 %v1628, %v1633
        %v1891 = vmax.f32 %v1635, 0.0
        %v1892 = vmax.f32 %v1636, 0.0
        %v1893 = vmax.f32 %v1637, 0.0
        %v1894 = vmax.f32 %v1638, 0.0
        %v1895 = vmax.f32 %v1639, 0.0
        %v1896 = vmax.f32 %v1640, 0.0
        %v1897 = vmax.f32 %v1641, 0.0
        %v1898 = vmax.f32 %v1642, 0.0
        %v1899 = vmax.f32 %v1643, 0.0
        %v1900 = vmax.f32 %v1644, 0.0
        %v1901 = vmax.f32 %v1645, 0.0
        %v1902 = vmax.f32 %v1646, 0.0
        %v1903 = vmax.f32 %v1647, 0.0
        %v1904 = vmax.f32 %v1648, 0.0
        %v1905 = vmax.f32 %v1649, 0.0
        %v1906 = vmax.f32 %v1650, 0.0
        %v1907 = vmax.f32 %v1651, 0.0
        %v1908 = vmax.f32 %v1652, 0.0
        %v1909 = vmax.f32 %v1653, 0.0
        %v1910 = vmax.f32 %v1654, 0.0
        %v1911 = vmax.f32 %v1655, 0.0
        %v1912 = vmax.f32 %v1656, 0.0
        %v1913 = vmax.f32 %v1657, 0.0
        %v1914 = vmax.f32 %v1658, 0.0
        %v1915 = vmax.f32 %v1659, 0.0
        %v1916 = vmax.f32 %v1660, 0.0
        %v1917 = vmax.f32 %v1661, 0.0
        %v1918 = vmax.f32 %v1662, 0.0
        %v1919 = vmax.f32 %v1663, 0.0
        %v1920 = vmax.f32 %v1664, 0.0
        %v1921 = vmax.f32 %v1665, 0.0
        %v1922 = vmax.f32 %v1666, 0.0
        %v1923 = vmax.f32 %v1667, 0.0
        %v1924 = vmax.f32 %v1668, 0.0
        %v1925 = vmax.f32 %v1669, 0.0
        %v1926 = vmax.f32 %v1670, 0.0
        %v1927 = vmax.f32 %v1671, 0.0
        %v1928 = vmax.f32 %v1672, 0.0
        %v1929 = vmax.f32 %v1673, 0.0
        %v1930 = vmax.f32 %v1674, 0.0
        %v1931 = vmax.f32 %v1675, 0.0
        %v1932 = vmax.f32 %v1676, 0.0
        %v1933 = vmax.f32 %v1677, 0.0
        %v1934 = vmax.f32 %v1678, 0.0
        %v1935 = vmax.f32 %v1679, 0.0
        %v1936 = vmax.f32 %v1680, 0.0
        %v1937 = vmax.f32 %v1681, 0.0
        %v1938 = vmax.f32 %v1682, 0.0
        %v1939 = vmax.f32 %v1683, 0.0
        %v1940 = vmax.f32 %v1684, 0.0
        %v1941 = vmax.f32 %v1685, 0.0
        %v1942 = vmax.f32 %v1686, 0.0
        %v1943 = vmax.f32 %v1687, 0.0
        %v1944 = vmax.f32 %v1688, 0.0
        %v1945 = vmax.f32 %v1689, 0.0
        %v1946 = vmax.f32 %v1690, 0.0
        %v1947 = vmax.f32 %v1691, 0.0
        %v1948 = vmax.f32 %v1692, 0.0
        %v1949 = vmax.f32 %v1693, 0.0
        %v1950 = vmax.f32 %v1694, 0.0
        %v1951 = vmax.f32 %v1695, 0.0
        %v1952 = vmax.f32 %v1696, 0.0
        %v1953 = vmax.f32 %v1697, 0.0
        %v1954 = vmax.f32 %v1698, 0.0
        %v1955 = vmax.f32 %v1699, 0.0
        %v1956 = vmax.f32 %v1700, 0.0
        %v1957 = vmax.f32 %v1701, 0.0
        %v1958 = vmax.f32 %v1702, 0.0
        %v1959 = vmax.f32 %v1703, 0.0
        %v1960 = vmax.f32 %v1704, 0.0
        %v1961 = vmax.f32 %v1705, 0.0
        %v1962 = vmax.f32 %v1706, 0.0
        %v1963 = vmax.f32 %v1707, 0.0
        %v1964 = vmax.f32 %v1708, 0.0
        %v1965 = vmax.f32 %v1709, 0.0
        %v1966 = vmax.f32 %v1710, 0.0
        %v1967 = vmax.f32 %v1711, 0.0
        %v1968 = vmax.f32 %v1712, 0.0
        %v1969 = vmax.f32 %v1713, 0.0
        %v1970 = vmax.f32 %v1714, 0.0
        %v1971 = vmax.f32 %v1715, 0.0
        %v1972 = vmax.f32 %v1716, 0.0
        %v1973 = vmax.f32 %v1717, 0.0
        %v1974 = vmax.f32 %v1718, 0.0
        %v1975 = vmax.f32 %v1719, 0.0
        %v1976 = vmax.f32 %v1720, 0.0
        %v1977 = vmax.f32 %v1721, 0.0
        %v1978 = vmax.f32 %v1722, 0.0
        %v1979 = vmax.f32 %v1723, 0.0
        %v1980 = vmax.f32 %v1724, 0.0
        %v1981 = vmax.f32 %v1725, 0.0
        %v1982 = vmax.f32 %v1726, 0.0
        %v1983 = vmax.f32 %v1727, 0.0
        %v1984 = vmax.f32 %v1728, 0.0
        %v1985 = vmax.f32 %v1729, 0.0
        %v1986 = vmax.f32 %v1730, 0.0
        %v1987 = vmax.f32 %v1731, 0.0
        %v1988 = vmax.f32 %v1732, 0.0
        %v1989 = vmax.f32 %v1733, 0.0
        %v1990 = vmax.f32 %v1734, 0.0
        %v1991 = vmax.f32 %v1735, 0.0
        %v1992 = vmax.f32 %v1736, 0.0
        %v1993 = vmax.f32 %v1737, 0.0
        %v1994 = vmax.f32 %v1738, 0.0
        %v1995 = vmax.f32 %v1739, 0.0
        %v1996 = vmax.f32 %v1740, 0.0
        %v1997 = vmax.f32 %v1741, 0.0
        %v1998 = vmax.f32 %v1742, 0.0
        %v1999 = vmax.f32 %v1743, 0.0
        %v2000 = vmax.f32 %v1744, 0.0
        %v2001 = vmax.f32 %v1745, 0.0
        %v2002 = vmax.f32 %v1746, 0.0
        %v2003 = vmax.f32 %v1747, 0.0
        %v2004 = vmax.f32 %v1748, 0.0
        %v2005 = vmax.f32 %v1749, 0.0
        %v2006 = vmax.f32 %v1750, 0.0
        %v2007 = vmax.f32 %v1751, 0.0
        %v2008 = vmax.f32 %v1752, 0.0
        %v2009 = vmax.f32 %v1753, 0.0
        %v2010 = vmax.f32 %v1754, 0.0
        %v2011 = vmax.f32 %v1755, 0.0
        %v2012 = vmax.f32 %v1756, 0.0
        %v2013 = vmax.f32 %v1757, 0.0
        %v2014 = vmax.f32 %v1758, 0.0
        %v2015 = vmax.f32 %v1759, 0.0
        %v2016 = vmax.f32 %v1760, 0.0
        %v2017 = vmax.f32 %v1761, 0.0
        %v2018 = vmax.f32 %v1762, 0.0
        %v2019 = vmax.f32 %v1763, 0.0
        %v2020 = vmax.f32 %v1764, 0.0
        %v2021 = vmax.f32 %v1765, 0.0
        %v2022 = vmax.f32 %v1766, 0.0
        %v2023 = vmax.f32 %v1767, 0.0
        %v2024 = vmax.f32 %v1768, 0.0
        %v2025 = vmax.f32 %v1769, 0.0
        %v2026 = vmax.f32 %v1770, 0.0
        %v2027 = vmax.f32 %v1771, 0.0
        %v2028 = vmax.f32 %v1772, 0.0
        %v2029 = vmax.f32 %v1773, 0.0
        %v2030 = vmax.f32 %v1774, 0.0
        %v2031 = vmax.f32 %v1775, 0.0
        %v2032 = vmax.f32 %v1776, 0.0
        %v2033 = vmax.f32 %v1777, 0.0
        %v2034 = vmax.f32 %v1778, 0.0
        %v2035 = vmax.f32 %v1779, 0.0
        %v2036 = vmax.f32 %v1780, 0.0
        %v2037 = vmax.f32 %v1781, 0.0
        %v2038 = vmax.f32 %v1782, 0.0
        %v2039 = vmax.f32 %v1783, 0.0
        %v2040 = vmax.f32 %v1784, 0.0
        %v2041 = vmax.f32 %v1785, 0.0
        %v2042 = vmax.f32 %v1786, 0.0
        %v2043 = vmax.f32 %v1787, 0.0
        %v2044 = vmax.f32 %v1788, 0.0
        %v2045 = vmax.f32 %v1789, 0.0
        %v2046 = vmax.f32 %v1790, 0.0
        %v2047 = vmax.f32 %v1791, 0.0
        %v2048 = vmax.f32 %v1792, 0.0
        %v2049 = vmax.f32 %v1793, 0.0
        %v2050 = vmax.f32 %v1794, 0.0
        %v2051 = vmax.f32 %v1795, 0.0
        %v2052 = vmax.f32 %v1796, 0.0
        %v2053 = vmax.f32 %v1797, 0.0
        %v2054 = vmax.f32 %v1798, 0.0
        %v2055 = vmax.f32 %v1799, 0.0
        %v2056 = vmax.f32 %v1800, 0.0
        %v2057 = vmax.f32 %v1801, 0.0
        %v2058 = vmax.f32 %v1802, 0.0
        %v2059 = vmax.f32 %v1803, 0.0
        %v2060 = vmax.f32 %v1804, 0.0
        %v2061 = vmax.f32 %v1805, 0.0
        %v2062 = vmax.f32 %v1806, 0.0
        %v2063 = vmax.f32 %v1807, 0.0
        %v2064 = vmax.f32 %v1808, 0.0
        %v2065 = vmax.f32 %v1809, 0.0
        %v2066 = vmax.f32 %v1810, 0.0
        %v2067 = vmax.f32 %v1811, 0.0
        %v2068 = vmax.f32 %v1812, 0.0
        %v2069 = vmax.f32 %v1813, 0.0
        %v2070 = vmax.f32 %v1814, 0.0
        %v2071 = vmax.f32 %v1815, 0.0
        %v2072 = vmax.f32 %v1816, 0.0
        %v2073 = vmax.f32 %v1817, 0.0
        %v2074 = vmax.f32 %v1818, 0.0
        %v2075 = vmax.f32 %v1819, 0.0
        %v2076 = vmax.f32 %v1820, 0.0
        %v2077 = vmax.f32 %v1821, 0.0
        %v2078 = vmax.f32 %v1822, 0.0
        %v2079 = vmax.f32 %v1823, 0.0
        %v2080 = vmax.f32 %v1824, 0.0
        %v2081 = vmax.f32 %v1825, 0.0
        %v2082 = vmax.f32 %v1826, 0.0
        %v2083 = vmax.f32 %v1827, 0.0
        %v2084 = vmax.f32 %v1828, 0.0
        %v2085 = vmax.f32 %v1829, 0.0
        %v2086 = vmax.f32 %v1830, 0.0
        %v2087 = vmax.f32 %v1831, 0.0
        %v2088 = vmax.f32 %v1832, 0.0
        %v2089 = vmax.f32 %v1833, 0.0
        %v2090 = vmax.f32 %v1834, 0.0
        %v2091 = vmax.f32 %v1835, 0.0
        %v2092 = vmax.f32 %v1836, 0.0
        %v2093 = vmax.f32 %v1837, 0.0
        %v2094 = vmax.f32 %v1838, 0.0
        %v2095 = vmax.f32 %v1839, 0.0
        %v2096 = vmax.f32 %v1840, 0.0
        %v2097 = vmax.f32 %v1841, 0.0
        %v2098 = vmax.f32 %v1842, 0.0
        %v2099 = vmax.f32 %v1843, 0.0
        %v2100 = vmax.f32 %v1844, 0.0
        %v2101 = vmax.f32 %v1845, 0.0
        %v2102 = vmax.f32 %v1846, 0.0
        %v2103 = vmax.f32 %v1847, 0.0
        %v2104 = vmax.f32 %v1848, 0.0
        %v2105 = vmax.f32 %v1849, 0.0
        %v2106 = vmax.f32 %v1850, 0.0
        %v2107 = vmax.f32 %v1851, 0.0
        %v2108 = vmax.f32 %v1852, 0.0
        %v2109 = vmax.f32 %v1853, 0.0
        %v2110 = vmax.f32 %v1854, 0.0
        %v2111 = vmax.f32 %v1855, 0.0
        %v2112 = vmax.f32 %v1856, 0.0
        %v2113 = vmax.f32 %v1857, 0.0
        %v2114 = vmax.f32 %v1858, 0.0
        %v2115 = vmax.f32 %v1859, 0.0
        %v2116 = vmax.f32 %v1860, 0.0
        %v2117 = vmax.f32 %v1861, 0.0
        %v2118 = vmax.f32 %v1862, 0.0
        %v2119 = vmax.f32 %v1863, 0.0
        %v2120 = vmax.f32 %v1864, 0.0
        %v2121 = vmax.f32 %v1865, 0.0
        %v2122 = vmax.f32 %v1866, 0.0
        %v2123 = vmax.f32 %v1867, 0.0
        %v2124 = vmax.f32 %v1868, 0.0
        %v2125 = vmax.f32 %v1869, 0.0
        %v2126 = vmax.f32 %v1870, 0.0
        %v2127 = vmax.f32 %v1871, 0.0
        %v2128 = vmax.f32 %v1872, 0.0
        %v2129 = vmax.f32 %v1873, 0.0
        %v2130 = vmax.f32 %v1874, 0.0
        %v2131 = vmax.f32 %v1875, 0.0
        %v2132 = vmax.f32 %v1876, 0.0
        %v2133 = vmax.f32 %v1877, 0.0
        %v2134 = vmax.f32 %v1878, 0.0
        %v2135 = vmax.f32 %v1879, 0.0
        %v2136 = vmax.f32 %v1880, 0.0
        %v2137 = vmax.f32 %v1881, 0.0
        %v2138 = vmax.f32 %v1882, 0.0
        %v2139 = vmax.f32 %v1883, 0.0
        %v2140 = vmax.f32 %v1884, 0.0
        %v2141 = vmax.f32 %v1885, 0.0
        %v2142 = vmax.f32 %v1886, 0.0
        %v2143 = vmax.f32 %v1887, 0.0
        %v2144 = vmax.f32 %v1888, 0.0
        %v2145 = vmax.f32 %v1889, 0.0
        %v2146 = vmax.f32 %v1890, 0.0
        %2147 = vst [vmem:[%s4] sm:$0xff] %v1891
        %2148 = vst [vmem:[%s4 + $0x8] sm:$0xff] %v1892
        %2149 = vst [vmem:[%s4 + $0x10] sm:$0xff] %v1893
        %2150 = vst [vmem:[%s4 + $0x18] sm:$0xff] %v1894
        %2151 = vst [vmem:[%s4 + $0x20] sm:$0xff] %v1895
        %2152 = vst [vmem:[%s4 + $0x28] sm:$0xff] %v1896
        %2153 = vst [vmem:[%s4 + $0x30] sm:$0xff] %v1897
        %2154 = vst [vmem:[%s4 + $0x38] sm:$0xff] %v1898
        %2155 = vst [vmem:[%s4 + $0x40] sm:$0xff] %v1899
        %2156 = vst [vmem:[%s4 + $0x48] sm:$0xff] %v1900
        %2157 = vst [vmem:[%s4 + $0x50] sm:$0xff] %v1901
        %2158 = vst [vmem:[%s4 + $0x58] sm:$0xff] %v1902
        %2159 = vst [vmem:[%s4 + $0x60] sm:$0xff] %v1903
        %2160 = vst [vmem:[%s4 + $0x68] sm:$0xff] %v1904
        %2161 = vst [vmem:[%s4 + $0x70] sm:$0xff] %v1905
        %2162 = vst [vmem:[%s4 + $0x78] sm:$0xff] %v1906
        %2163 = vst [vmem:[%s4 + $0x80] sm:$0xff] %v1907
        %2164 = vst [vmem:[%s4 + $0x88] sm:$0xff] %v1908
        %2165 = vst [vmem:[%s4 + $0x90] sm:$0xff] %v1909
        %2166 = vst [vmem:[%s4 + $0x98] sm:$0xff] %v1910
        %2167 = vst [vmem:[%s4 + $0xa0] sm:$0xff] %v1911
        %2168 = vst [vmem:[%s4 + $0xa8] sm:$0xff] %v1912
        %2169 = vst [vmem:[%s4 + $0xb0] sm:$0xff] %v1913
        %2170 = vst [vmem:[%s4 + $0xb8] sm:$0xff] %v1914
        %2171 = vst [vmem:[%s4 + $0xc0] sm:$0xff] %v1915
        %2172 = vst [vmem:[%s4 + $0xc8] sm:$0xff] %v1916
        %2173 = vst [vmem:[%s4 + $0xd0] sm:$0xff] %v1917
        %2174 = vst [vmem:[%s4 + $0xd8] sm:$0xff] %v1918
        %2175 = vst [vmem:[%s4 + $0xe0] sm:$0xff] %v1919
        %2176 = vst [vmem:[%s4 + $0xe8] sm:$0xff] %v1920
        %2177 = vst [vmem:[%s4 + $0xf0] sm:$0xff] %v1921
        %2178 = vst [vmem:[%s4 + $0xf8] sm:$0xff] %v1922
        %2179 = vst [vmem:[%s4 + $0x100] sm:$0xff] %v1923
        %2180 = vst [vmem:[%s4 + $0x108] sm:$0xff] %v1924
        %2181 = vst [vmem:[%s4 + $0x110] sm:$0xff] %v1925
        %2182 = vst [vmem:[%s4 + $0x118] sm:$0xff] %v1926
        %2183 = vst [vmem:[%s4 + $0x120] sm:$0xff] %v1927
        %2184 = vst [vmem:[%s4 + $0x128] sm:$0xff] %v1928
        %2185 = vst [vmem:[%s4 + $0x130] sm:$0xff] %v1929
        %2186 = vst [vmem:[%s4 + $0x138] sm:$0xff] %v1930
        %2187 = vst [vmem:[%s4 + $0x140] sm:$0xff] %v1931
        %2188 = vst [vmem:[%s4 + $0x148] sm:$0xff] %v1932
        %2189 = vst [vmem:[%s4 + $0x150] sm:$0xff] %v1933
        %2190 = vst [vmem:[%s4 + $0x158] sm:$0xff] %v1934
        %2191 = vst [vmem:[%s4 + $0x160] sm:$0xff] %v1935
        %2192 = vst [vmem:[%s4 + $0x168] sm:$0xff] %v1936
        %2193 = vst [vmem:[%s4 + $0x170] sm:$0xff] %v1937
        %2194 = vst [vmem:[%s4 + $0x178] sm:$0xff] %v1938
        %2195 = vst [vmem:[%s4 + $0x180] sm:$0xff] %v1939
        %2196 = vst [vmem:[%s4 + $0x188] sm:$0xff] %v1940
        %2197 = vst [vmem:[%s4 + $0x190] sm:$0xff] %v1941
        %2198 = vst [vmem:[%s4 + $0x198] sm:$0xff] %v1942
        %2199 = vst [vmem:[%s4 + $0x1a0] sm:$0xff] %v1943
        %2200 = vst [vmem:[%s4 + $0x1a8] sm:$0xff] %v1944
        %2201 = vst [vmem:[%s4 + $0x1b0] sm:$0xff] %v1945
        %2202 = vst [vmem:[%s4 + $0x1b8] sm:$0xff] %v1946
        %2203 = vst [vmem:[%s4 + $0x1c0] sm:$0xff] %v1947
        %2204 = vst [vmem:[%s4 + $0x1c8] sm:$0xff] %v1948
        %2205 = vst [vmem:[%s4 + $0x1d0] sm:$0xff] %v1949
        %2206 = vst [vmem:[%s4 + $0x1d8] sm:$0xff] %v1950
        %2207 = vst [vmem:[%s4 + $0x1e0] sm:$0xff] %v1951
        %2208 = vst [vmem:[%s4 + $0x1e8] sm:$0xff] %v1952
        %2209 = vst [vmem:[%s4 + $0x1f0] sm:$0xff] %v1953
        %2210 = vst [vmem:[%s4 + $0x1f8] sm:$0xff] %v1954
        %2211 = vst [vmem:[%s4 + $0x200] sm:$0xff] %v1955
        %2212 = vst [vmem:[%s4 + $0x208] sm:$0xff] %v1956
        %2213 = vst [vmem:[%s4 + $0x210] sm:$0xff] %v1957
        %2214 = vst [vmem:[%s4 + $0x218] sm:$0xff] %v1958
        %2215 = vst [vmem:[%s4 + $0x220] sm:$0xff] %v1959
        %2216 = vst [vmem:[%s4 + $0x228] sm:$0xff] %v1960
        %2217 = vst [vmem:[%s4 + $0x230] sm:$0xff] %v1961
        %2218 = vst [vmem:[%s4 + $0x238] sm:$0xff] %v1962
        %2219 = vst [vmem:[%s4 + $0x240] sm:$0xff] %v1963
        %2220 = vst [vmem:[%s4 + $0x248] sm:$0xff] %v1964
        %2221 = vst [vmem:[%s4 + $0x250] sm:$0xff] %v1965
        %2222 = vst [vmem:[%s4 + $0x258] sm:$0xff] %v1966
        %2223 = vst [vmem:[%s4 + $0x260] sm:$0xff] %v1967
        %2224 = vst [vmem:[%s4 + $0x268] sm:$0xff] %v1968
        %2225 = vst [vmem:[%s4 + $0x270] sm:$0xff] %v1969
        %2226 = vst [vmem:[%s4 + $0x278] sm:$0xff] %v1970
        %2227 = vst [vmem:[%s4 + $0x280] sm:$0xff] %v1971
        %2228 = vst [vmem:[%s4 + $0x288] sm:$0xff] %v1972
        %2229 = vst [vmem:[%s4 + $0x290] sm:$0xff] %v1973
        %2230 = vst [vmem:[%s4 + $0x298] sm:$0xff] %v1974
        %2231 = vst [vmem:[%s4 + $0x2a0] sm:$0xff] %v1975
        %2232 = vst [vmem:[%s4 + $0x2a8] sm:$0xff] %v1976
        %2233 = vst [vmem:[%s4 + $0x2b0] sm:$0xff] %v1977
        %2234 = vst [vmem:[%s4 + $0x2b8] sm:$0xff] %v1978
        %2235 = vst [vmem:[%s4 + $0x2c0] sm:$0xff] %v1979
        %2236 = vst [vmem:[%s4 + $0x2c8] sm:$0xff] %v1980
        %2237 = vst [vmem:[%s4 + $0x2d0] sm:$0xff] %v1981
        %2238 = vst [vmem:[%s4 + $0x2d8] sm:$0xff] %v1982
        %2239 = vst [vmem:[%s4 + $0x2e0] sm:$0xff] %v1983
        %2240 = vst [vmem:[%s4 + $0x2e8] sm:$0xff] %v1984
        %2241 = vst [vmem:[%s4 + $0x2f0] sm:$0xff] %v1985
        %2242 = vst [vmem:[%s4 + $0x2f8] sm:$0xff] %v1986
        %2243 = vst [vmem:[%s4 + $0x300] sm:$0xff] %v1987
        %2244 = vst [vmem:[%s4 + $0x308] sm:$0xff] %v1988
        %2245 = vst [vmem:[%s4 + $0x310] sm:$0xff] %v1989
        %2246 = vst [vmem:[%s4 + $0x318] sm:$0xff] %v1990
        %2247 = vst [vmem:[%s4 + $0x320] sm:$0xff] %v1991
        %2248 = vst [vmem:[%s4 + $0x328] sm:$0xff] %v1992
        %2249 = vst [vmem:[%s4 + $0x330] sm:$0xff] %v1993
        %2250 = vst [vmem:[%s4 + $0x338] sm:$0xff] %v1994
        %2251 = vst [vmem:[%s4 + $0x340] sm:$0xff] %v1995
        %2252 = vst [vmem:[%s4 + $0x348] sm:$0xff] %v1996
        %2253 = vst [vmem:[%s4 + $0x350] sm:$0xff] %v1997
        %2254 = vst [vmem:[%s4 + $0x358] sm:$0xff] %v1998
        %2255 = vst [vmem:[%s4 + $0x360] sm:$0xff] %v1999
        %2256 = vst [vmem:[%s4 + $0x368] sm:$0xff] %v2000
        %2257 = vst [vmem:[%s4 + $0x370] sm:$0xff] %v2001
        %2258 = vst [vmem:[%s4 + $0x378] sm:$0xff] %v2002
        %2259 = vst [vmem:[%s4 + $0x380] sm:$0xff] %v2003
        %2260 = vst [vmem:[%s4 + $0x388] sm:$0xff] %v2004
        %2261 = vst [vmem:[%s4 + $0x390] sm:$0xff] %v2005
        %2262 = vst [vmem:[%s4 + $0x398] sm:$0xff] %v2006
        %2263 = vst [vmem:[%s4 + $0x3a0] sm:$0xff] %v2007
        %2264 = vst [vmem:[%s4 + $0x3a8] sm:$0xff] %v2008
        %2265 = vst [vmem:[%s4 + $0x3b0] sm:$0xff] %v2009
        %2266 = vst [vmem:[%s4 + $0x3b8] sm:$0xff] %v2010
        %2267 = vst [vmem:[%s4 + $0x3c0] sm:$0xff] %v2011
        %2268 = vst [vmem:[%s4 + $0x3c8] sm:$0xff] %v2012
        %2269 = vst [vmem:[%s4 + $0x3d0] sm:$0xff] %v2013
        %2270 = vst [vmem:[%s4 + $0x3d8] sm:$0xff] %v2014
        %2271 = vst [vmem:[%s4 + $0x3e0] sm:$0xff] %v2015
        %2272 = vst [vmem:[%s4 + $0x3e8] sm:$0xff] %v2016
        %2273 = vst [vmem:[%s4 + $0x3f0] sm:$0xff] %v2017
        %2274 = vst [vmem:[%s4 + $0x3f8] sm:$0xff] %v2018
        %2275 = vst [vmem:[%s4 + $0x400] sm:$0xff] %v2019
        %2276 = vst [vmem:[%s4 + $0x408] sm:$0xff] %v2020
        %2277 = vst [vmem:[%s4 + $0x410] sm:$0xff] %v2021
        %2278 = vst [vmem:[%s4 + $0x418] sm:$0xff] %v2022
        %2279 = vst [vmem:[%s4 + $0x420] sm:$0xff] %v2023
        %2280 = vst [vmem:[%s4 + $0x428] sm:$0xff] %v2024
        %2281 = vst [vmem:[%s4 + $0x430] sm:$0xff] %v2025
        %2282 = vst [vmem:[%s4 + $0x438] sm:$0xff] %v2026
        %2283 = vst [vmem:[%s4 + $0x440] sm:$0xff] %v2027
        %2284 = vst [vmem:[%s4 + $0x448] sm:$0xff] %v2028
        %2285 = vst [vmem:[%s4 + $0x450] sm:$0xff] %v2029
        %2286 = vst [vmem:[%s4 + $0x458] sm:$0xff] %v2030
        %2287 = vst [vmem:[%s4 + $0x460] sm:$0xff] %v2031
        %2288 = vst [vmem:[%s4 + $0x468] sm:$0xff] %v2032
        %2289 = vst [vmem:[%s4 + $0x470] sm:$0xff] %v2033
        %2290 = vst [vmem:[%s4 + $0x478] sm:$0xff] %v2034
        %2291 = vst [vmem:[%s4 + $0x480] sm:$0xff] %v2035
        %2292 = vst [vmem:[%s4 + $0x488] sm:$0xff] %v2036
        %2293 = vst [vmem:[%s4 + $0x490] sm:$0xff] %v2037
        %2294 = vst [vmem:[%s4 + $0x498] sm:$0xff] %v2038
        %2295 = vst [vmem:[%s4 + $0x4a0] sm:$0xff] %v2039
        %2296 = vst [vmem:[%s4 + $0x4a8] sm:$0xff] %v2040
        %2297 = vst [vmem:[%s4 + $0x4b0] sm:$0xff] %v2041
        %2298 = vst [vmem:[%s4 + $0x4b8] sm:$0xff] %v2042
        %2299 = vst [vmem:[%s4 + $0x4c0] sm:$0xff] %v2043
        %2300 = vst [vmem:[%s4 + $0x4c8] sm:$0xff] %v2044
        %2301 = vst [vmem:[%s4 + $0x4d0] sm:$0xff] %v2045
        %2302 = vst [vmem:[%s4 + $0x4d8] sm:$0xff] %v2046
        %2303 = vst [vmem:[%s4 + $0x4e0] sm:$0xff] %v2047
        %2304 = vst [vmem:[%s4 + $0x4e8] sm:$0xff] %v2048
        %2305 = vst [vmem:[%s4 + $0x4f0] sm:$0xff] %v2049
        %2306 = vst [vmem:[%s4 + $0x4f8] sm:$0xff] %v2050
        %2307 = vst [vmem:[%s4 + $0x500] sm:$0xff] %v2051
        %2308 = vst [vmem:[%s4 + $0x508] sm:$0xff] %v2052
        %2309 = vst [vmem:[%s4 + $0x510] sm:$0xff] %v2053
        %2310 = vst [vmem:[%s4 + $0x518] sm:$0xff] %v2054
        %2311 = vst [vmem:[%s4 + $0x520] sm:$0xff] %v2055
        %2312 = vst [vmem:[%s4 + $0x528] sm:$0xff] %v2056
        %2313 = vst [vmem:[%s4 + $0x530] sm:$0xff] %v2057
        %2314 = vst [vmem:[%s4 + $0x538] sm:$0xff] %v2058
        %2315 = vst [vmem:[%s4 + $0x540] sm:$0xff] %v2059
        %2316 = vst [vmem:[%s4 + $0x548] sm:$0xff] %v2060
        %2317 = vst [vmem:[%s4 + $0x550] sm:$0xff] %v2061
        %2318 = vst [vmem:[%s4 + $0x558] sm:$0xff] %v2062
        %2319 = vst [vmem:[%s4 + $0x560] sm:$0xff] %v2063
        %2320 = vst [vmem:[%s4 + $0x568] sm:$0xff] %v2064
        %2321 = vst [vmem:[%s4 + $0x570] sm:$0xff] %v2065
        %2322 = vst [vmem:[%s4 + $0x578] sm:$0xff] %v2066
        %2323 = vst [vmem:[%s4 + $0x580] sm:$0xff] %v2067
        %2324 = vst [vmem:[%s4 + $0x588] sm:$0xff] %v2068
        %2325 = vst [vmem:[%s4 + $0x590] sm:$0xff] %v2069
        %2326 = vst [vmem:[%s4 + $0x598] sm:$0xff] %v2070
        %2327 = vst [vmem:[%s4 + $0x5a0] sm:$0xff] %v2071
        %2328 = vst [vmem:[%s4 + $0x5a8] sm:$0xff] %v2072
        %2329 = vst [vmem:[%s4 + $0x5b0] sm:$0xff] %v2073
        %2330 = vst [vmem:[%s4 + $0x5b8] sm:$0xff] %v2074
        %2331 = vst [vmem:[%s4 + $0x5c0] sm:$0xff] %v2075
        %2332 = vst [vmem:[%s4 + $0x5c8] sm:$0xff] %v2076
        %2333 = vst [vmem:[%s4 + $0x5d0] sm:$0xff] %v2077
        %2334 = vst [vmem:[%s4 + $0x5d8] sm:$0xff] %v2078
        %2335 = vst [vmem:[%s4 + $0x5e0] sm:$0xff] %v2079
        %2336 = vst [vmem:[%s4 + $0x5e8] sm:$0xff] %v2080
        %2337 = vst [vmem:[%s4 + $0x5f0] sm:$0xff] %v2081
        %2338 = vst [vmem:[%s4 + $0x5f8] sm:$0xff] %v2082
        %2339 = vst [vmem:[%s4 + $0x600] sm:$0xff] %v2083
        %2340 = vst [vmem:[%s4 + $0x608] sm:$0xff] %v2084
        %2341 = vst [vmem:[%s4 + $0x610] sm:$0xff] %v2085
        %2342 = vst [vmem:[%s4 + $0x618] sm:$0xff] %v2086
        %2343 = vst [vmem:[%s4 + $0x620] sm:$0xff] %v2087
        %2344 = vst [vmem:[%s4 + $0x628] sm:$0xff] %v2088
        %2345 = vst [vmem:[%s4 + $0x630] sm:$0xff] %v2089
        %2346 = vst [vmem:[%s4 + $0x638] sm:$0xff] %v2090
        %2347 = vst [vmem:[%s4 + $0x640] sm:$0xff] %v2091
        %2348 = vst [vmem:[%s4 + $0x648] sm:$0xff] %v2092
        %2349 = vst [vmem:[%s4 + $0x650] sm:$0xff] %v2093
        %2350 = vst [vmem:[%s4 + $0x658] sm:$0xff] %v2094
        %2351 = vst [vmem:[%s4 + $0x660] sm:$0xff] %v2095
        %2352 = vst [vmem:[%s4 + $0x668] sm:$0xff] %v2096
        %2353 = vst [vmem:[%s4 + $0x670] sm:$0xff] %v2097
        %2354 = vst [vmem:[%s4 + $0x678] sm:$0xff] %v2098
        %2355 = vst [vmem:[%s4 + $0x680] sm:$0xff] %v2099
        %2356 = vst [vmem:[%s4 + $0x688] sm:$0xff] %v2100
        %2357 = vst [vmem:[%s4 + $0x690] sm:$0xff] %v2101
        %2358 = vst [vmem:[%s4 + $0x698] sm:$0xff] %v2102
        %2359 = vst [vmem:[%s4 + $0x6a0] sm:$0xff] %v2103
        %2360 = vst [vmem:[%s4 + $0x6a8] sm:$0xff] %v2104
        %2361 = vst [vmem:[%s4 + $0x6b0] sm:$0xff] %v2105
        %2362 = vst [vmem:[%s4 + $0x6b8] sm:$0xff] %v2106
        %2363 = vst [vmem:[%s4 + $0x6c0] sm:$0xff] %v2107
        %2364 = vst [vmem:[%s4 + $0x6c8] sm:$0xff] %v2108
        %2365 = vst [vmem:[%s4 + $0x6d0] sm:$0xff] %v2109
        %2366 = vst [vmem:[%s4 + $0x6d8] sm:$0xff] %v2110
        %2367 = vst [vmem:[%s4 + $0x6e0] sm:$0xff] %v2111
        %2368 = vst [vmem:[%s4 + $0x6e8] sm:$0xff] %v2112
        %2369 = vst [vmem:[%s4 + $0x6f0] sm:$0xff] %v2113
        %2370 = vst [vmem:[%s4 + $0x6f8] sm:$0xff] %v2114
        %2371 = vst [vmem:[%s4 + $0x700] sm:$0xff] %v2115
        %2372 = vst [vmem:[%s4 + $0x708] sm:$0xff] %v2116
        %2373 = vst [vmem:[%s4 + $0x710] sm:$0xff] %v2117
        %2374 = vst [vmem:[%s4 + $0x718] sm:$0xff] %v2118
        %2375 = vst [vmem:[%s4 + $0x720] sm:$0xff] %v2119
        %2376 = vst [vmem:[%s4 + $0x728] sm:$0xff] %v2120
        %2377 = vst [vmem:[%s4 + $0x730] sm:$0xff] %v2121
        %2378 = vst [vmem:[%s4 + $0x738] sm:$0xff] %v2122
        %2379 = vst [vmem:[%s4 + $0x740] sm:$0xff] %v2123
        %2380 = vst [vmem:[%s4 + $0x748] sm:$0xff] %v2124
        %2381 = vst [vmem:[%s4 + $0x750] sm:$0xff] %v2125
        %2382 = vst [vmem:[%s4 + $0x758] sm:$0xff] %v2126
        %2383 = vst [vmem:[%s4 + $0x760] sm:$0xff] %v2127
        %2384 = vst [vmem:[%s4 + $0x768] sm:$0xff] %v2128
        %2385 = vst [vmem:[%s4 + $0x770] sm:$0xff] %v2129
        %2386 = vst [vmem:[%s4 + $0x778] sm:$0xff] %v2130
        %2387 = vst [vmem:[%s4 + $0x780] sm:$0xff] %v2131
        %2388 = vst [vmem:[%s4 + $0x788] sm:$0xff] %v2132
        %2389 = vst [vmem:[%s4 + $0x790] sm:$0xff] %v2133
        %2390 = vst [vmem:[%s4 + $0x798] sm:$0xff] %v2134
        %2391 = vst [vmem:[%s4 + $0x7a0] sm:$0xff] %v2135
        %2392 = vst [vmem:[%s4 + $0x7a8] sm:$0xff] %v2136
        %2393 = vst [vmem:[%s4 + $0x7b0] sm:$0xff] %v2137
        %2394 = vst [vmem:[%s4 + $0x7b8] sm:$0xff] %v2138
        %2395 = vst [vmem:[%s4 + $0x7c0] sm:$0xff] %v2139
        %2396 = vst [vmem:[%s4 + $0x7c8] sm:$0xff] %v2140
        %2397 = vst [vmem:[%s4 + $0x7d0] sm:$0xff] %v2141
        %2398 = vst [vmem:[%s4 + $0x7d8] sm:$0xff] %v2142
        %2399 = vst [vmem:[%s4 + $0x7e0] sm:$0xff] %v2143
        %2400 = vst [vmem:[%s4 + $0x7e8] sm:$0xff] %v2144
        %2401 = vst [vmem:[%s4 + $0x7f0] sm:$0xff] %v2145
        %2402 = vst [vmem:[%s4 + $0x7f8] sm:$0xff] %v2146
      $region44: #{generator_forward.8} parent=35 // pred_fallthru
        _
      // Predicated region
      $region45: #{generator_forward.8} parent=35 // pred_check
        %p2403 = pneg %p122
      $region46: #{generator_forward.8} parent=35 // pred_check_branch
        %2405 = sbr.rel (%p2403) target = $region48
      $region47: #{generator_forward.8} parent=35 // pred_region
        _
      $region48: #{generator_forward.8} parent=35 // pred_fallthru
        _
      // Predicated region
      $region49: #{generator_forward.8} parent=35 // pred_check
        %p2406 = pneg %p122
      $region50: #{generator_forward.8} parent=35 // pred_check_branch
        %2408 = sbr.rel (%p2406) target = $region52
      $region51: #{generator_forward.8} parent=35 // pred_region
        _
      $region52: #{generator_forward.8} parent=35 // pred_fallthru
        _
    $region36: #{generator_forward.8} parent=5 // pred_fallthru
      _
    %p2409 = scmp.le.s32.totalorder 2, %s10
    // Predicated region
    $region53: #{generator_forward.8} parent=5 // pred_check
      %p2410 = pneg %p2409
    $region54: #{generator_forward.8} parent=5 // pred_check_branch
      %2412 = sbr.rel (%p2410) target = $region56
    $region55: #{generator_forward.8} parent=5 // pred_region
      %s2413 = ssub.s32 %s10, 2
    $region56: #{generator_forward.8} parent=5 // pred_fallthru
      _
  $region6: #{generator_forward.8} parent=0 // loop_footer
    %s14 = sadd.s32 1, %s10
  $region7: #{generator_forward.8} parent=0 // loop_footer_branch
    %9 = sbr.rel target = $region3
  $region8: #{generator_forward.8} parent=0 // loop_exit
    _

// kernel: generator_forward.9
$region0: #{generator_forward.9}
  #allocation0 [shape = 'u32[]', space=smem, size = 0x4, offset = 0x4, fixed_abs, tag = 'smem constant byte address 0x4 - core index']
  #allocation1 [shape = 'u32[144,128]{1,0:T(1,128)}', space=vmem, size = 0x12000, scoped, tag = 'internal scratch']
  %s0 = inlined_call_operand.vmem [shape: bf16[4,2048,64], index: 0, kind: input, shape index: {}]
  %s1 = inlined_call_operand.vmem [shape: bf16[4,64,128], index: 1, kind: input, shape index: {}]
  %s2 = inlined_call_operand.vmem [shape: f32[1,128], index: 2, kind: input, shape index: {}]
  %s3 = inlined_call_operand.vmem [shape: f32[4,2048,128], index: 3, kind: output, shape index: {}]
  %s4 = sld [smem:[#allocation0]]
  $region45: #{generator_forward.9} parent=0
    _
  %s6 = ssub.s32 1, %s4
  %s7 = scalar_select 0, %s6, %s4
  loop: start=0, step=1, limit=10
  $region2: #{generator_forward.9} parent=0 // loop_pre_header
    _
  $region3: #{generator_forward.9} parent=0 // loop_header
    %s9 = sphi 0, %s13
    %p10 = scmp.ge.s32.totalorder %s9, 10
    %s16 = sphi 0, %s28
    %s17 = sphi 0, %s24
    %s18 = sphi 0, %s16
    %s19 = sphi 0, %s17
    %s20 = sphi 0, %s18
    %s21 = sphi 0, %s19
    %s33 = sphi 0, %s35
    %s36 = sphi 0, %s33
    %s37 = sphi 0, %s36
    %s53 = sphi 0, %s37
    %s59 = sphi 0, %s61
    %s62 = sphi 0, %s59
    %s63 = sphi 0, %s62
    %s79 = sphi 0, %s63
    %s83 = sphi 0, %s83
    %s85 = sphi 0, %s83
    %s86 = sphi 0, %s85
    %s100 = sphi 0, %s86
    %s108 = sphi 0, %s110
    %s111 = sphi 0, %s108
    %s112 = sphi 0, %s111
    %s128 = sphi 0, %s112
  $region4: #{generator_forward.9} parent=0 // loop_header_branch
    %12 = sbr.rel (%p10) target = $region8
  $region5: #{generator_forward.9} parent=0 // loop_body
    %s14 = ssub.s32 %s9, 1
    %s15 = ssub.s32 %s9, 2
    %s22 = sadd.s32 1, %s17
    %p23 = scmp.ge.s32.totalorder %s22, 2
    %s24 = scalar_select %p23, 0, %s22
    %s25 = sadd.s32 1, %s16
    %s26 = scalar_select %p23, %s25, %s16
    %p27 = scmp.ge.s32.totalorder %s26, 4
    %s28 = scalar_select %p27, 0, %s26
    %s29 = ssub.s32 %s16, %s28
    %s30 = ssub.s32 %s17, %s24
    %s31 = sor.u32 %s29, %s30
    %p32 = scmp.eq.s32.totalorder %s31, 0
    %s34 = sadd.s32 %s33, 1
    %s35 = scalar_select %p32, %s33, %s34
    %p38 = pneg %p32
    %p39 = scmp.eq.s32.totalorder %s9, 7
    %p40 = por %p38, %p39
    %p41 = scmp.ne.s32.totalorder %s33, %s36
    %p42 = scmp.eq.s32.totalorder %s9, 0
    %p43 = por %p41, %p42
    %p44 = scmp.ne.s32.totalorder %s33, %s36
    %p45 = scmp.eq.s32.totalorder %s14, 7
    %p46 = por %p44, %p45
    %p47 = scmp.ne.s32.totalorder %s36, %s37
    %p48 = scmp.eq.s32.totalorder %s14, 0
    %p49 = por %p47, %p48
    %p50 = scmp.ne.s32.totalorder %s36, %s37
    %p51 = scmp.eq.s32.totalorder %s15, 7
    %p52 = por %p50, %p51
    %p54 = scmp.ne.s32.totalorder %s37, %s53
    %p55 = scmp.eq.s32.totalorder %s15, 0
    %p56 = por %p54, %p55
    %s57 = ssub.s32 %s16, %s28
    %p58 = scmp.eq.s32.totalorder %s57, 0
    %s60 = sadd.s32 %s59, 1
    %s61 = scalar_select %p58, %s59, %s60
    %p64 = pneg %p58
    %p65 = scmp.eq.s32.totalorder %s9, 7
    %p66 = por %p64, %p65
    %p67 = scmp.ne.s32.totalorder %s59, %s62
    %p68 = scmp.eq.s32.totalorder %s9, 0
    %p69 = por %p67, %p68
    %p70 = scmp.ne.s32.totalorder %s59, %s62
    %p71 = scmp.eq.s32.totalorder %s14, 7
    %p72 = por %p70, %p71
    %p73 = scmp.ne.s32.totalorder %s62, %s63
    %p74 = scmp.eq.s32.totalorder %s14, 0
    %p75 = por %p73, %p74
    %p76 = scmp.ne.s32.totalorder %s62, %s63
    %p77 = scmp.eq.s32.totalorder %s15, 7
    %p78 = por %p76, %p77
    %p80 = scmp.ne.s32.totalorder %s63, %s79
    %p81 = scmp.eq.s32.totalorder %s15, 0
    %p82 = por %p80, %p81
    %s84 = sadd.s32 %s83, 1
    %p87 = scmp.eq.s32.totalorder %s9, 7
    %p88 = scmp.ne.s32.totalorder %s83, %s85
    %p89 = scmp.eq.s32.totalorder %s9, 0
    %p90 = por %p88, %p89
    %p91 = scmp.ne.s32.totalorder %s83, %s85
    %p92 = scmp.eq.s32.totalorder %s14, 7
    %p93 = por %p91, %p92
    %p94 = scmp.ne.s32.totalorder %s85, %s86
    %p95 = scmp.eq.s32.totalorder %s14, 0
    %p96 = por %p94, %p95
    %p97 = scmp.ne.s32.totalorder %s85, %s86
    %p98 = scmp.eq.s32.totalorder %s15, 7
    %p99 = por %p97, %p98
    %p101 = scmp.ne.s32.totalorder %s86, %s100
    %p102 = scmp.eq.s32.totalorder %s15, 0
    %p103 = por %p101, %p102
    %s104 = ssub.s32 %s16, %s28
    %s105 = ssub.s32 %s17, %s24
    %s106 = sor.u32 %s104, %s105
    %p107 = scmp.eq.s32.totalorder %s106, 0
    %s109 = sadd.s32 %s108, 1
    %s110 = scalar_select %p107, %s108, %s109
    %p113 = pneg %p107
    %p114 = scmp.eq.s32.totalorder %s9, 7
    %p115 = por %p113, %p114
    %p116 = scmp.ne.s32.totalorder %s108, %s111
    %p117 = scmp.eq.s32.totalorder %s9, 0
    %p118 = por %p116, %p117
    %p119 = scmp.ne.s32.totalorder %s108, %s111
    %p120 = scmp.eq.s32.totalorder %s14, 7
    %p121 = por %p119, %p120
    %p122 = scmp.ne.s32.totalorder %s111, %s112
    %p123 = scmp.eq.s32.totalorder %s14, 0
    %p124 = por %p122, %p123
    %p125 = scmp.ne.s32.totalorder %s111, %s112
    %p126 = scmp.eq.s32.totalorder %s15, 7
    %p127 = por %p125, %p126
    %p129 = scmp.ne.s32.totalorder %s112, %s128
    %p130 = scmp.eq.s32.totalorder %s15, 0
    %p131 = por %p129, %p130
    %p132 = scmp.le.s32.totalorder 1, %s9
    %p133 = scmp.lt.s32.totalorder %s9, 9
    %p134 = pnand %p132, %p133
    %p135 = pneg %p134
    // Predicated region
    $region9: #{generator_forward.9} parent=5 // pred_check
      _
    $region10: #{generator_forward.9} parent=5 // pred_check_branch
      %137 = sbr.rel (%p134) target = $region12
    $region11: #{generator_forward.9} parent=5 // pred_region
      %s138 = ssub.s32 %s9, 1
      // Predicated region
      $region13: #{generator_forward.9} parent=11 // pred_check
        %p139 = pneg %p96
      $region14: #{generator_forward.9} parent=11 // pred_check_branch
        %141 = sbr.rel (%p139) target = $region16
      $region15: #{generator_forward.9} parent=11 // pred_region
        _
      $region16: #{generator_forward.9} parent=11 // pred_fallthru
        _
    $region12: #{generator_forward.9} parent=5 // pred_fallthru
      _
    %p142 = scmp.lt.s32.totalorder %s9, 8
    // Predicated region
    $region17: #{generator_forward.9} parent=5 // pred_check
      %p143 = pneg %p142
    $region18: #{generator_forward.9} parent=5 // pred_check_branch
      %145 = sbr.rel (%p143) target = $region20
    $region19: #{generator_forward.9} parent=5 // pred_region
      // Predicated region
      $region21: #{generator_forward.9} parent=19 // pred_check
        %p146 = pneg %p43
      $region22: #{generator_forward.9} parent=19 // pred_check_branch
        %148 = sbr.rel (%p146) target = $region24
      $region23: #{generator_forward.9} parent=19 // pred_region
        %s149 = smul.u32 128, %s17
        %p150 = scmp.lt.s32.totalorder %s16, 3
        %s151 = scalar_select %p150, %s16, 3
        %p152 = scmp.lt.s32.totalorder %s149, 255
        %s153 = scalar_select %p152, %s149, 255
        %s154 = smul.addr %s151, 256
        %s155 = sadd.s32 %s153, %s154
        %s156 = smul.addr %s155, 4
        %s157 = scalar_lea.vmem %s0, %s156
        %s158 = smul.u32 128, %s17
      $region24: #{generator_forward.9} parent=19 // pred_fallthru
        _
      // Predicated region
      $region25: #{generator_forward.9} parent=19 // pred_check
        %p159 = pneg %p69
      $region26: #{generator_forward.9} parent=19 // pred_check_branch
        %161 = sbr.rel (%p159) target = $region28
      $region27: #{generator_forward.9} parent=19 // pred_region
        %p162 = scmp.lt.s32.totalorder %s16, 3
        %s163 = scalar_select %p162, %s16, 3
        %s164 = smul.addr %s163, 8
        %s165 = smul.addr %s164, 4
        %s166 = scalar_lea.vmem %s1, %s165
      $region28: #{generator_forward.9} parent=19 // pred_fallthru
        _
    $region20: #{generator_forward.9} parent=5 // pred_fallthru
      _
    %p167 = scmp.le.s32.totalorder 1, %s9
    %p168 = scmp.lt.s32.totalorder %s9, 9
    %p169 = pnand %p167, %p168
    %p170 = pneg %p169
    // Predicated region
    $region29: #{generator_forward.9} parent=5 // pred_check
      _
    $region30: #{generator_forward.9} parent=5 // pred_check_branch
      %172 = sbr.rel (%p169) target = $region32
    $region31: #{generator_forward.9} parent=5 // pred_region
      %s173 = ssub.s32 %s9, 1
      %s174 = smul.u32 128, %s19
      %p175 = scmp.lt.s32.totalorder %s18, 3
      %s176 = scalar_select %p175, %s18, 3
      %p177 = scmp.lt.s32.totalorder %s174, 255
      %s178 = scalar_select %p177, %s174, 255
      %s179 = smul.addr %s176, 256
      %s180 = sadd.s32 %s178, %s179
      %s181 = smul.addr %s180, 4
      %s182 = scalar_lea.vmem %s0, %s181
      %p183 = pneg %p49
      %p184 = pneg %p46
      %p185 = scmp.lt.s32.totalorder %s18, 3
      %s186 = scalar_select %p185, %s18, 3
      %s187 = smul.addr %s186, 8
      %s188 = smul.addr %s187, 4
      %s189 = scalar_lea.vmem %s1, %s188
      %p190 = pneg %p75
      %p191 = pneg %p72
      %p192 = pneg %p96
      %p193 = pneg %p93
      %p194 = pneg %p124
      %p195 = pneg %p121
      %s196 = smul.u32 128, %s19
      %p197 = scmp.lt.s32.totalorder %s18, 3
      %s198 = scalar_select %p197, %s18, 3
      %p199 = scmp.lt.s32.totalorder %s196, 255
      %s200 = scalar_select %p199, %s196, 255
      %s201 = smul.addr %s198, 256
      %s202 = sadd.s32 %s200, %s201
      %s203 = smul.addr %s202, 8
      %s204 = scalar_lea.vmem %s3, %s203
      %s205 = smul.u32 128, %s19
      %p206 = scmp.lt.s32.totalorder %s18, 3
      %s207 = scalar_select %p206, %s18, 3
      %p208 = scmp.lt.s32.totalorder %s205, 255
      %s209 = scalar_select %p208, %s205, 255
      %s210 = smul.addr %s207, 256
      %s211 = sadd.s32 %s209, %s210
      %s212 = smul.addr %s211, 4
      %s213 = scalar_lea.vmem %s0, %s212
      %s214 = smul.u32 128, %s19
      %p215 = scmp.lt.s32.totalorder %s18, 3
      %s216 = scalar_select %p215, %s18, 3
      %s217 = smul.addr %s216, 8
      %s218 = smul.addr %s217, 4
      %s219 = scalar_lea.vmem %s1, %s218
      %s220 = smul.u32 128, %s19
      %p221 = scmp.lt.s32.totalorder %s18, 3
      %s222 = scalar_select %p221, %s18, 3
      %p223 = scmp.lt.s32.totalorder %s220, 255
      %s224 = scalar_select %p223, %s220, 255
      %s225 = smul.addr %s222, 256
      %s226 = sadd.s32 %s224, %s225
      %s227 = smul.addr %s226, 8
      %s228 = scalar_lea.vmem %s3, %s227
      %s229 = smul.u32 128, %s19
      %v231 = vld [vmem:[%s213] sm:$0xf]
      %v232 = vld [vmem:[%s213 + $0x4] sm:$0xf]
      %v233 = vld [vmem:[%s213 + $0x8] sm:$0xf]
      %v234 = vld [vmem:[%s213 + $0xc] sm:$0xf]
      %v235 = vld [vmem:[%s213 + $0x10] sm:$0xf]
      %v236 = vld [vmem:[%s213 + $0x14] sm:$0xf]
      %v237 = vld [vmem:[%s213 + $0x18] sm:$0xf]
      %v238 = vld [vmem:[%s213 + $0x1c] sm:$0xf]
      %v239 = vld [vmem:[%s213 + $0x20] sm:$0xf]
      %v240 = vld [vmem:[%s213 + $0x24] sm:$0xf]
      %v241 = vld [vmem:[%s213 + $0x28] sm:$0xf]
      %v242 = vld [vmem:[%s213 + $0x2c] sm:$0xf]
      %v243 = vld [vmem:[%s213 + $0x30] sm:$0xf]
      %v244 = vld [vmem:[%s213 + $0x34] sm:$0xf]
      %v245 = vld [vmem:[%s213 + $0x38] sm:$0xf]
      %v246 = vld [vmem:[%s213 + $0x3c] sm:$0xf]
      %v247 = vld [vmem:[%s213 + $0x40] sm:$0xf]
      %v248 = vld [vmem:[%s213 + $0x44] sm:$0xf]
      %v249 = vld [vmem:[%s213 + $0x48] sm:$0xf]
      %v250 = vld [vmem:[%s213 + $0x4c] sm:$0xf]
      %v251 = vld [vmem:[%s213 + $0x50] sm:$0xf]
      %v252 = vld [vmem:[%s213 + $0x54] sm:$0xf]
      %v253 = vld [vmem:[%s213 + $0x58] sm:$0xf]
      %v254 = vld [vmem:[%s213 + $0x5c] sm:$0xf]
      %v255 = vld [vmem:[%s213 + $0x60] sm:$0xf]
      %v256 = vld [vmem:[%s213 + $0x64] sm:$0xf]
      %v257 = vld [vmem:[%s213 + $0x68] sm:$0xf]
      %v258 = vld [vmem:[%s213 + $0x6c] sm:$0xf]
      %v259 = vld [vmem:[%s213 + $0x70] sm:$0xf]
      %v260 = vld [vmem:[%s213 + $0x74] sm:$0xf]
      %v261 = vld [vmem:[%s213 + $0x78] sm:$0xf]
      %v262 = vld [vmem:[%s213 + $0x7c] sm:$0xf]
      %v263 = vld [vmem:[%s213 + $0x80] sm:$0xf]
      %v264 = vld [vmem:[%s213 + $0x84] sm:$0xf]
      %v265 = vld [vmem:[%s213 + $0x88] sm:$0xf]
      %v266 = vld [vmem:[%s213 + $0x8c] sm:$0xf]
      %v267 = vld [vmem:[%s213 + $0x90] sm:$0xf]
      %v268 = vld [vmem:[%s213 + $0x94] sm:$0xf]
      %v269 = vld [vmem:[%s213 + $0x98] sm:$0xf]
      %v270 = vld [vmem:[%s213 + $0x9c] sm:$0xf]
      %v271 = vld [vmem:[%s213 + $0xa0] sm:$0xf]
      %v272 = vld [vmem:[%s213 + $0xa4] sm:$0xf]
      %v273 = vld [vmem:[%s213 + $0xa8] sm:$0xf]
      %v274 = vld [vmem:[%s213 + $0xac] sm:$0xf]
      %v275 = vld [vmem:[%s213 + $0xb0] sm:$0xf]
      %v276 = vld [vmem:[%s213 + $0xb4] sm:$0xf]
      %v277 = vld [vmem:[%s213 + $0xb8] sm:$0xf]
      %v278 = vld [vmem:[%s213 + $0xbc] sm:$0xf]
      %v279 = vld [vmem:[%s213 + $0xc0] sm:$0xf]
      %v280 = vld [vmem:[%s213 + $0xc4] sm:$0xf]
      %v281 = vld [vmem:[%s213 + $0xc8] sm:$0xf]
      %v282 = vld [vmem:[%s213 + $0xcc] sm:$0xf]
      %v283 = vld [vmem:[%s213 + $0xd0] sm:$0xf]
      %v284 = vld [vmem:[%s213 + $0xd4] sm:$0xf]
      %v285 = vld [vmem:[%s213 + $0xd8] sm:$0xf]
      %v286 = vld [vmem:[%s213 + $0xdc] sm:$0xf]
      %v287 = vld [vmem:[%s213 + $0xe0] sm:$0xf]
      %v288 = vld [vmem:[%s213 + $0xe4] sm:$0xf]
      %v289 = vld [vmem:[%s213 + $0xe8] sm:$0xf]
      %v290 = vld [vmem:[%s213 + $0xec] sm:$0xf]
      %v291 = vld [vmem:[%s213 + $0xf0] sm:$0xf]
      %v292 = vld [vmem:[%s213 + $0xf4] sm:$0xf]
      %v293 = vld [vmem:[%s213 + $0xf8] sm:$0xf]
      %v294 = vld [vmem:[%s213 + $0xfc] sm:$0xf]
      %v295 = vld [vmem:[%s213 + $0x100] sm:$0xf]
      %v296 = vld [vmem:[%s213 + $0x104] sm:$0xf]
      %v297 = vld [vmem:[%s213 + $0x108] sm:$0xf]
      %v298 = vld [vmem:[%s213 + $0x10c] sm:$0xf]
      %v299 = vld [vmem:[%s213 + $0x110] sm:$0xf]
      %v300 = vld [vmem:[%s213 + $0x114] sm:$0xf]
      %v301 = vld [vmem:[%s213 + $0x118] sm:$0xf]
      %v302 = vld [vmem:[%s213 + $0x11c] sm:$0xf]
      %v303 = vld [vmem:[%s213 + $0x120] sm:$0xf]
      %v304 = vld [vmem:[%s213 + $0x124] sm:$0xf]
      %v305 = vld [vmem:[%s213 + $0x128] sm:$0xf]
      %v306 = vld [vmem:[%s213 + $0x12c] sm:$0xf]
      %v307 = vld [vmem:[%s213 + $0x130] sm:$0xf]
      %v308 = vld [vmem:[%s213 + $0x134] sm:$0xf]
      %v309 = vld [vmem:[%s213 + $0x138] sm:$0xf]
      %v310 = vld [vmem:[%s213 + $0x13c] sm:$0xf]
      %v311 = vld [vmem:[%s213 + $0x140] sm:$0xf]
      %v312 = vld [vmem:[%s213 + $0x144] sm:$0xf]
      %v313 = vld [vmem:[%s213 + $0x148] sm:$0xf]
      %v314 = vld [vmem:[%s213 + $0x14c] sm:$0xf]
      %v315 = vld [vmem:[%s213 + $0x150] sm:$0xf]
      %v316 = vld [vmem:[%s213 + $0x154] sm:$0xf]
      %v317 = vld [vmem:[%s213 + $0x158] sm:$0xf]
      %v318 = vld [vmem:[%s213 + $0x15c] sm:$0xf]
      %v319 = vld [vmem:[%s213 + $0x160] sm:$0xf]
      %v320 = vld [vmem:[%s213 + $0x164] sm:$0xf]
      %v321 = vld [vmem:[%s213 + $0x168] sm:$0xf]
      %v322 = vld [vmem:[%s213 + $0x16c] sm:$0xf]
      %v323 = vld [vmem:[%s213 + $0x170] sm:$0xf]
      %v324 = vld [vmem:[%s213 + $0x174] sm:$0xf]
      %v325 = vld [vmem:[%s213 + $0x178] sm:$0xf]
      %v326 = vld [vmem:[%s213 + $0x17c] sm:$0xf]
      %v327 = vld [vmem:[%s213 + $0x180] sm:$0xf]
      %v328 = vld [vmem:[%s213 + $0x184] sm:$0xf]
      %v329 = vld [vmem:[%s213 + $0x188] sm:$0xf]
      %v330 = vld [vmem:[%s213 + $0x18c] sm:$0xf]
      %v331 = vld [vmem:[%s213 + $0x190] sm:$0xf]
      %v332 = vld [vmem:[%s213 + $0x194] sm:$0xf]
      %v333 = vld [vmem:[%s213 + $0x198] sm:$0xf]
      %v334 = vld [vmem:[%s213 + $0x19c] sm:$0xf]
      %v335 = vld [vmem:[%s213 + $0x1a0] sm:$0xf]
      %v336 = vld [vmem:[%s213 + $0x1a4] sm:$0xf]
      %v337 = vld [vmem:[%s213 + $0x1a8] sm:$0xf]
      %v338 = vld [vmem:[%s213 + $0x1ac] sm:$0xf]
      %v339 = vld [vmem:[%s213 + $0x1b0] sm:$0xf]
      %v340 = vld [vmem:[%s213 + $0x1b4] sm:$0xf]
      %v341 = vld [vmem:[%s213 + $0x1b8] sm:$0xf]
      %v342 = vld [vmem:[%s213 + $0x1bc] sm:$0xf]
      %v343 = vld [vmem:[%s213 + $0x1c0] sm:$0xf]
      %v344 = vld [vmem:[%s213 + $0x1c4] sm:$0xf]
      %v345 = vld [vmem:[%s213 + $0x1c8] sm:$0xf]
      %v346 = vld [vmem:[%s213 + $0x1cc] sm:$0xf]
      %v347 = vld [vmem:[%s213 + $0x1d0] sm:$0xf]
      %v348 = vld [vmem:[%s213 + $0x1d4] sm:$0xf]
      %v349 = vld [vmem:[%s213 + $0x1d8] sm:$0xf]
      %v350 = vld [vmem:[%s213 + $0x1dc] sm:$0xf]
      %v351 = vld [vmem:[%s213 + $0x1e0] sm:$0xf]
      %v352 = vld [vmem:[%s213 + $0x1e4] sm:$0xf]
      %v353 = vld [vmem:[%s213 + $0x1e8] sm:$0xf]
      %v354 = vld [vmem:[%s213 + $0x1ec] sm:$0xf]
      %v355 = vld [vmem:[%s213 + $0x1f0] sm:$0xf]
      %v356 = vld [vmem:[%s213 + $0x1f4] sm:$0xf]
      %v357 = vld [vmem:[%s213 + $0x1f8] sm:$0xf]
      %v358 = vld [vmem:[%s213 + $0x1fc] sm:$0xf]
      %v359 = vld [vmem:[%s219] sm:$0xf]
      %v360 = vld [vmem:[%s219 + $0x4] sm:$0xf]
      %v361 = vld [vmem:[%s219 + $0x8] sm:$0xf]
      %v362 = vld [vmem:[%s219 + $0xc] sm:$0xf]
      %v363 = vld [vmem:[%s219 + $0x10] sm:$0xf]
      %v364 = vld [vmem:[%s219 + $0x14] sm:$0xf]
      %v365 = vld [vmem:[%s219 + $0x18] sm:$0xf]
      %v366 = vld [vmem:[%s219 + $0x1c] sm:$0xf]
      %v367 = vld [vmem:[%s2] sm:$0x1]
      %v369 = vlaneseq
      %v370 = vshrl.u32 %v369, 7
      %v371 = vsub.s32 0, %v370
      %v372 = vrot.slane %v367, %v371
      %v502 = vunpack.c.l.b16 %v231
      %v503 = vunpack.c.l.b16 %v232
      %v504 = vunpack.c.l.b16 %v233
      %v505 = vunpack.c.l.b16 %v234
      %v506 = vunpack.c.l.b16 %v235
      %v507 = vunpack.c.l.b16 %v236
      %v508 = vunpack.c.l.b16 %v237
      %v509 = vunpack.c.l.b16 %v238
      %v510 = vunpack.c.l.b16 %v239
      %v511 = vunpack.c.l.b16 %v240
      %v512 = vunpack.c.l.b16 %v241
      %v513 = vunpack.c.l.b16 %v242
      %v514 = vunpack.c.l.b16 %v243
      %v515 = vunpack.c.l.b16 %v244
      %v516 = vunpack.c.l.b16 %v245
      %v517 = vunpack.c.l.b16 %v246
      %v518 = vunpack.c.l.b16 %v247
      %v519 = vunpack.c.l.b16 %v248
      %v520 = vunpack.c.l.b16 %v249
      %v521 = vunpack.c.l.b16 %v250
      %v522 = vunpack.c.l.b16 %v251
      %v523 = vunpack.c.l.b16 %v252
      %v524 = vunpack.c.l.b16 %v253
      %v525 = vunpack.c.l.b16 %v254
      %v526 = vunpack.c.l.b16 %v255
      %v527 = vunpack.c.l.b16 %v256
      %v528 = vunpack.c.l.b16 %v257
      %v529 = vunpack.c.l.b16 %v258
      %v530 = vunpack.c.l.b16 %v259
      %v531 = vunpack.c.l.b16 %v260
      %v532 = vunpack.c.l.b16 %v261
      %v533 = vunpack.c.l.b16 %v262
      %v534 = vunpack.c.l.b16 %v263
      %v535 = vunpack.c.l.b16 %v264
      %v536 = vunpack.c.l.b16 %v265
      %v537 = vunpack.c.l.b16 %v266
      %v538 = vunpack.c.l.b16 %v267
      %v539 = vunpack.c.l.b16 %v268
      %v540 = vunpack.c.l.b16 %v269
      %v541 = vunpack.c.l.b16 %v270
      %v542 = vunpack.c.l.b16 %v271
      %v543 = vunpack.c.l.b16 %v272
      %v544 = vunpack.c.l.b16 %v273
      %v545 = vunpack.c.l.b16 %v274
      %v546 = vunpack.c.l.b16 %v275
      %v547 = vunpack.c.l.b16 %v276
      %v548 = vunpack.c.l.b16 %v277
      %v549 = vunpack.c.l.b16 %v278
      %v550 = vunpack.c.l.b16 %v279
      %v551 = vunpack.c.l.b16 %v280
      %v552 = vunpack.c.l.b16 %v281
      %v553 = vunpack.c.l.b16 %v282
      %v554 = vunpack.c.l.b16 %v283
      %v555 = vunpack.c.l.b16 %v284
      %v556 = vunpack.c.l.b16 %v285
      %v557 = vunpack.c.l.b16 %v286
      %v558 = vunpack.c.l.b16 %v287
      %v559 = vunpack.c.l.b16 %v288
      %v560 = vunpack.c.l.b16 %v289
      %v561 = vunpack.c.l.b16 %v290
      %v562 = vunpack.c.l.b16 %v291
      %v563 = vunpack.c.l.b16 %v292
      %v564 = vunpack.c.l.b16 %v293
      %v565 = vunpack.c.l.b16 %v294
      %v566 = vunpack.c.l.b16 %v295
      %v567 = vunpack.c.l.b16 %v296
      %v568 = vunpack.c.l.b16 %v297
      %v569 = vunpack.c.l.b16 %v298
      %v570 = vunpack.c.l.b16 %v299
      %v571 = vunpack.c.l.b16 %v300
      %v572 = vunpack.c.l.b16 %v301
      %v573 = vunpack.c.l.b16 %v302
      %v574 = vunpack.c.l.b16 %v303
      %v575 = vunpack.c.l.b16 %v304
      %v576 = vunpack.c.l.b16 %v305
      %v577 = vunpack.c.l.b16 %v306
      %v578 = vunpack.c.l.b16 %v307
      %v579 = vunpack.c.l.b16 %v308
      %v580 = vunpack.c.l.b16 %v309
      %v581 = vunpack.c.l.b16 %v310
      %v582 = vunpack.c.l.b16 %v311
      %v583 = vunpack.c.l.b16 %v312
      %v584 = vunpack.c.l.b16 %v313
      %v585 = vunpack.c.l.b16 %v314
      %v586 = vunpack.c.l.b16 %v315
      %v587 = vunpack.c.l.b16 %v316
      %v588 = vunpack.c.l.b16 %v317
      %v589 = vunpack.c.l.b16 %v318
      %v590 = vunpack.c.l.b16 %v319
      %v591 = vunpack.c.l.b16 %v320
      %v592 = vunpack.c.l.b16 %v321
      %v593 = vunpack.c.l.b16 %v322
      %v594 = vunpack.c.l.b16 %v323
      %v595 = vunpack.c.l.b16 %v324
      %v596 = vunpack.c.l.b16 %v325
      %v597 = vunpack.c.l.b16 %v326
      %v598 = vunpack.c.l.b16 %v327
      %v599 = vunpack.c.l.b16 %v328
      %v600 = vunpack.c.l.b16 %v329
      %v601 = vunpack.c.l.b16 %v330
      %v602 = vunpack.c.l.b16 %v331
      %v603 = vunpack.c.l.b16 %v332
      %v604 = vunpack.c.l.b16 %v333
      %v605 = vunpack.c.l.b16 %v334
      %v606 = vunpack.c.l.b16 %v335
      %v607 = vunpack.c.l.b16 %v336
      %v608 = vunpack.c.l.b16 %v337
      %v609 = vunpack.c.l.b16 %v338
      %v610 = vunpack.c.l.b16 %v339
      %v611 = vunpack.c.l.b16 %v340
      %v612 = vunpack.c.l.b16 %v341
      %v613 = vunpack.c.l.b16 %v342
      %v614 = vunpack.c.l.b16 %v343
      %v615 = vunpack.c.l.b16 %v344
      %v616 = vunpack.c.l.b16 %v345
      %v617 = vunpack.c.l.b16 %v346
      %v618 = vunpack.c.l.b16 %v347
      %v619 = vunpack.c.l.b16 %v348
      %v620 = vunpack.c.l.b16 %v349
      %v621 = vunpack.c.l.b16 %v350
      %v622 = vunpack.c.l.b16 %v351
      %v623 = vunpack.c.l.b16 %v352
      %v624 = vunpack.c.l.b16 %v353
      %v625 = vunpack.c.l.b16 %v354
      %v626 = vunpack.c.l.b16 %v355
      %v627 = vunpack.c.l.b16 %v356
      %v628 = vunpack.c.l.b16 %v357
      %v629 = vunpack.c.l.b16 %v358
      %v630 = vpack.c.b16 %v503, %v502
      %v631 = vpack.c.b16 %v505, %v504
      %v632 = vpack.c.b16 %v507, %v506
      %v633 = vpack.c.b16 %v509, %v508
      %v634 = vpack.c.b16 %v511, %v510
      %v635 = vpack.c.b16 %v513, %v512
      %v636 = vpack.c.b16 %v515, %v514
      %v637 = vpack.c.b16 %v517, %v516
      %v638 = vpack.c.b16 %v519, %v518
      %v639 = vpack.c.b16 %v521, %v520
      %v640 = vpack.c.b16 %v523, %v522
      %v641 = vpack.c.b16 %v525, %v524
      %v642 = vpack.c.b16 %v527, %v526
      %v643 = vpack.c.b16 %v529, %v528
      %v644 = vpack.c.b16 %v531, %v530
      %v645 = vpack.c.b16 %v533, %v532
      %v646 = vpack.c.b16 %v535, %v534
      %v647 = vpack.c.b16 %v537, %v536
      %v648 = vpack.c.b16 %v539, %v538
      %v649 = vpack.c.b16 %v541, %v540
      %v650 = vpack.c.b16 %v543, %v542
      %v651 = vpack.c.b16 %v545, %v544
      %v652 = vpack.c.b16 %v547, %v546
      %v653 = vpack.c.b16 %v549, %v548
      %v654 = vpack.c.b16 %v551, %v550
      %v655 = vpack.c.b16 %v553, %v552
      %v656 = vpack.c.b16 %v555, %v554
      %v657 = vpack.c.b16 %v557, %v556
      %v658 = vpack.c.b16 %v559, %v558
      %v659 = vpack.c.b16 %v561, %v560
      %v660 = vpack.c.b16 %v563, %v562
      %v661 = vpack.c.b16 %v565, %v564
      %v662 = vpack.c.b16 %v567, %v566
      %v663 = vpack.c.b16 %v569, %v568
      %v664 = vpack.c.b16 %v571, %v570
      %v665 = vpack.c.b16 %v573, %v572
      %v666 = vpack.c.b16 %v575, %v574
      %v667 = vpack.c.b16 %v577, %v576
      %v668 = vpack.c.b16 %v579, %v578
      %v669 = vpack.c.b16 %v581, %v580
      %v670 = vpack.c.b16 %v583, %v582
      %v671 = vpack.c.b16 %v585, %v584
      %v672 = vpack.c.b16 %v587, %v586
      %v673 = vpack.c.b16 %v589, %v588
      %v674 = vpack.c.b16 %v591, %v590
      %v675 = vpack.c.b16 %v593, %v592
      %v676 = vpack.c.b16 %v595, %v594
      %v677 = vpack.c.b16 %v597, %v596
      %v678 = vpack.c.b16 %v599, %v598
      %v679 = vpack.c.b16 %v601, %v600
      %v680 = vpack.c.b16 %v603, %v602
      %v681 = vpack.c.b16 %v605, %v604
      %v682 = vpack.c.b16 %v607, %v606
      %v683 = vpack.c.b16 %v609, %v608
      %v684 = vpack.c.b16 %v611, %v610
      %v685 = vpack.c.b16 %v613, %v612
      %v686 = vpack.c.b16 %v615, %v614
      %v687 = vpack.c.b16 %v617, %v616
      %v688 = vpack.c.b16 %v619, %v618
      %v689 = vpack.c.b16 %v621, %v620
      %v690 = vpack.c.b16 %v623, %v622
      %v691 = vpack.c.b16 %v625, %v624
      %v692 = vpack.c.b16 %v627, %v626
      %v693 = vpack.c.b16 %v629, %v628
      %v702 = vunpack.c.l.b16 %v359
      %v703 = vunpack.c.l.b16 %v360
      %v704 = vunpack.c.l.b16 %v361
      %v705 = vunpack.c.l.b16 %v362
      %v706 = vunpack.c.l.b16 %v363
      %v707 = vunpack.c.l.b16 %v364
      %v708 = vunpack.c.l.b16 %v365
      %v709 = vunpack.c.l.b16 %v366
      %v710 = vpack.c.b16 %v703, %v702
      %v711 = vpack.c.b16 %v705, %v704
      %v712 = vpack.c.b16 %v707, %v706
      %v713 = vpack.c.b16 %v709, %v708
      %vm718 = vcmask 523264
      %v720 = vsel %vm718, %v630, 0
      %v723 = vsel %vm718, %v631, 0
      %v726 = vsel %vm718, %v632, 0
      %v729 = vsel %vm718, %v633, 0
      %v732 = vsel %vm718, %v634, 0
      %v735 = vsel %vm718, %v635, 0
      %v738 = vsel %vm718, %v636, 0
      %v741 = vsel %vm718, %v637, 0
      %v744 = vsel %vm718, %v638, 0
      %v747 = vsel %vm718, %v639, 0
      %v750 = vsel %vm718, %v640, 0
      %v753 = vsel %vm718, %v641, 0
      %v756 = vsel %vm718, %v642, 0
      %v759 = vsel %vm718, %v643, 0
      %v762 = vsel %vm718, %v644, 0
      %v765 = vsel %vm718, %v645, 0
      %v768 = vsel %vm718, %v646, 0
      %v771 = vsel %vm718, %v647, 0
      %v774 = vsel %vm718, %v648, 0
      %v777 = vsel %vm718, %v649, 0
      %v780 = vsel %vm718, %v650, 0
      %v783 = vsel %vm718, %v651, 0
      %v786 = vsel %vm718, %v652, 0
      %v789 = vsel %vm718, %v653, 0
      %v792 = vsel %vm718, %v654, 0
      %v795 = vsel %vm718, %v655, 0
      %v798 = vsel %vm718, %v656, 0
      %v801 = vsel %vm718, %v657, 0
      %v804 = vsel %vm718, %v658, 0
      %v807 = vsel %vm718, %v659, 0
      %v810 = vsel %vm718, %v660, 0
      %v813 = vsel %vm718, %v661, 0
      %v816 = vsel %vm718, %v662, 0
      %v819 = vsel %vm718, %v663, 0
      %v822 = vsel %vm718, %v664, 0
      %v825 = vsel %vm718, %v665, 0
      %v828 = vsel %vm718, %v666, 0
      %v831 = vsel %vm718, %v667, 0
      %v834 = vsel %vm718, %v668, 0
      %v837 = vsel %vm718, %v669, 0
      %v840 = vsel %vm718, %v670, 0
      %v843 = vsel %vm718, %v671, 0
      %v846 = vsel %vm718, %v672, 0
      %v849 = vsel %vm718, %v673, 0
      %v852 = vsel %vm718, %v674, 0
      %v855 = vsel %vm718, %v675, 0
      %v858 = vsel %vm718, %v676, 0
      %v861 = vsel %vm718, %v677, 0
      %v864 = vsel %vm718, %v678, 0
      %v867 = vsel %vm718, %v679, 0
      %v870 = vsel %vm718, %v680, 0
      %v873 = vsel %vm718, %v681, 0
      %v876 = vsel %vm718, %v682, 0
      %v879 = vsel %vm718, %v683, 0
      %v882 = vsel %vm718, %v684, 0
      %v885 = vsel %vm718, %v685, 0
      %v888 = vsel %vm718, %v686, 0
      %v891 = vsel %vm718, %v687, 0
      %v894 = vsel %vm718, %v688, 0
      %v897 = vsel %vm718, %v689, 0
      %v900 = vsel %vm718, %v690, 0
      %v903 = vsel %vm718, %v691, 0
      %v906 = vsel %vm718, %v692, 0
      %v909 = vsel %vm718, %v693, 0
      %911 = vmatprep.subr.bf16.mxu0 0
      %912 = vmatpush1.bf16.msra.mxu0 0
      %913 = vmatprep.subr.bf16.mxu0 0
      %914 = vmatpush1.bf16.msra.mxu0 0
      %915 = vmatprep.subr.bf16.mxu0 0
      %916 = vmatpush1.bf16.msra.mxu0 0
      %917 = vmatprep.subr.bf16.mxu0 0
      %918 = vmatpush1.bf16.msra.mxu0 0
      %919 = vmatprep.subr.bf16.mxu0 0
      %920 = vmatpush1.bf16.msra.mxu0 %v713
      %921 = vmatprep.subr.bf16.mxu0 0
      %922 = vmatpush1.bf16.msra.mxu0 %v712
      %923 = vmatprep.subr.bf16.mxu0 0
      %924 = vmatpush1.bf16.msra.mxu0 %v711
      %925 = vmatprep.subr.bf16.mxu0 0
      %926 = vmatpush1.bf16.msra.mxu0 %v710
      %927 = vmatprep.subr.bf16.mxu0 0
      %928 = vmatpush2.bf16.msra.mxu0 0
      %929 = vmatprep.subr.bf16.mxu0 0
      %930 = vmatpush2.bf16.msra.mxu0 0
      %931 = vmatprep.subr.bf16.mxu0 0
      %932 = vmatpush2.bf16.msra.mxu0 0
      %933 = vmatprep.subr.bf16.mxu0 0
      %934 = vmatpush2.bf16.msra.mxu0 0
      %935 = vmatprep.subr.bf16.mxu0 0
      %936 = vmatpush2.bf16.msra.mxu0 0
      %937 = vmatprep.subr.bf16.mxu0 0
      %938 = vmatpush2.bf16.msra.mxu0 0
      %939 = vmatprep.subr.bf16.mxu0 0
      %940 = vmatpush2.bf16.msra.mxu0 0
      %941 = vmatprep.subr.bf16.mxu0 0
      %942 = vmatpush2.bf16.msra.mxu0 0
      %943 = vmatprep.mubr.bf16.mxu0 0
      %944 = vmatmul.mubr.bf16.gmra.mxu0 %v720
      %v945 = vpop.f32.mrf.mxu0
      %v946 = vadd.f32 %v372, %v945
      %v947 = vpop.f32.mrf.mxu0
      %v948 = vpop.f32.mrf.mxu0
      %v949 = vadd.f32 %v372, %v948
      %v950 = vpop.f32.mrf.mxu0
      %951 = vmatprep.mubr.bf16.mxu0 0
      %952 = vmatmul.mubr.bf16.gmra.mxu0 %v723
      %v953 = vpop.f32.mrf.mxu0
      %v954 = vadd.f32 %v372, %v953
      %v955 = vpop.f32.mrf.mxu0
      %v956 = vpop.f32.mrf.mxu0
      %v957 = vadd.f32 %v372, %v956
      %v958 = vpop.f32.mrf.mxu0
      %959 = vmatprep.mubr.bf16.mxu0 0
      %960 = vmatmul.mubr.bf16.gmra.mxu0 %v726
      %v961 = vpop.f32.mrf.mxu0
      %v962 = vadd.f32 %v372, %v961
      %v963 = vpop.f32.mrf.mxu0
      %v964 = vpop.f32.mrf.mxu0
      %v965 = vadd.f32 %v372, %v964
      %v966 = vpop.f32.mrf.mxu0
      %967 = vmatprep.mubr.bf16.mxu0 0
      %968 = vmatmul.mubr.bf16.gmra.mxu0 %v729
      %v969 = vpop.f32.mrf.mxu0
      %v970 = vadd.f32 %v372, %v969
      %v971 = vpop.f32.mrf.mxu0
      %v972 = vpop.f32.mrf.mxu0
      %v973 = vadd.f32 %v372, %v972
      %v974 = vpop.f32.mrf.mxu0
      %975 = vmatprep.mubr.bf16.mxu0 0
      %976 = vmatmul.mubr.bf16.gmra.mxu0 %v732
      %v977 = vpop.f32.mrf.mxu0
      %v978 = vadd.f32 %v372, %v977
      %v979 = vpop.f32.mrf.mxu0
      %v980 = vpop.f32.mrf.mxu0
      %v981 = vadd.f32 %v372, %v980
      %v982 = vpop.f32.mrf.mxu0
      %983 = vmatprep.mubr.bf16.mxu0 0
      %984 = vmatmul.mubr.bf16.gmra.mxu0 %v735
      %v985 = vpop.f32.mrf.mxu0
      %v986 = vadd.f32 %v372, %v985
      %v987 = vpop.f32.mrf.mxu0
      %v988 = vpop.f32.mrf.mxu0
      %v989 = vadd.f32 %v372, %v988
      %v990 = vpop.f32.mrf.mxu0
      %991 = vmatprep.mubr.bf16.mxu0 0
      %992 = vmatmul.mubr.bf16.gmra.mxu0 %v738
      %v993 = vpop.f32.mrf.mxu0
      %v994 = vadd.f32 %v372, %v993
      %v995 = vpop.f32.mrf.mxu0
      %v996 = vpop.f32.mrf.mxu0
      %v997 = vadd.f32 %v372, %v996
      %v998 = vpop.f32.mrf.mxu0
      %999 = vmatprep.mubr.bf16.mxu0 0
      %1000 = vmatmul.mubr.bf16.gmra.mxu0 %v741
      %v1001 = vpop.f32.mrf.mxu0
      %v1002 = vadd.f32 %v372, %v1001
      %v1003 = vpop.f32.mrf.mxu0
      %v1004 = vpop.f32.mrf.mxu0
      %v1005 = vadd.f32 %v372, %v1004
      %v1006 = vpop.f32.mrf.mxu0
      %1007 = vmatprep.mubr.bf16.mxu0 0
      %1008 = vmatmul.mubr.bf16.gmra.mxu0 %v744
      %v1009 = vpop.f32.mrf.mxu0
      %v1010 = vadd.f32 %v372, %v1009
      %v1011 = vpop.f32.mrf.mxu0
      %v1012 = vpop.f32.mrf.mxu0
      %v1013 = vadd.f32 %v372, %v1012
      %v1014 = vpop.f32.mrf.mxu0
      %1015 = vmatprep.mubr.bf16.mxu0 0
      %1016 = vmatmul.mubr.bf16.gmra.mxu0 %v747
      %v1017 = vpop.f32.mrf.mxu0
      %v1018 = vadd.f32 %v372, %v1017
      %v1019 = vpop.f32.mrf.mxu0
      %v1020 = vpop.f32.mrf.mxu0
      %v1021 = vadd.f32 %v372, %v1020
      %v1022 = vpop.f32.mrf.mxu0
      %1023 = vmatprep.mubr.bf16.mxu0 0
      %1024 = vmatmul.mubr.bf16.gmra.mxu0 %v750
      %v1025 = vpop.f32.mrf.mxu0
      %v1026 = vadd.f32 %v372, %v1025
      %v1027 = vpop.f32.mrf.mxu0
      %v1028 = vpop.f32.mrf.mxu0
      %v1029 = vadd.f32 %v372, %v1028
      %v1030 = vpop.f32.mrf.mxu0
      %1031 = vmatprep.mubr.bf16.mxu0 0
      %1032 = vmatmul.mubr.bf16.gmra.mxu0 %v753
      %v1033 = vpop.f32.mrf.mxu0
      %v1034 = vadd.f32 %v372, %v1033
      %v1035 = vpop.f32.mrf.mxu0
      %v1036 = vpop.f32.mrf.mxu0
      %v1037 = vadd.f32 %v372, %v1036
      %v1038 = vpop.f32.mrf.mxu0
      %1039 = vmatprep.mubr.bf16.mxu0 0
      %1040 = vmatmul.mubr.bf16.gmra.mxu0 %v756
      %v1041 = vpop.f32.mrf.mxu0
      %v1042 = vadd.f32 %v372, %v1041
      %v1043 = vpop.f32.mrf.mxu0
      %v1044 = vpop.f32.mrf.mxu0
      %v1045 = vadd.f32 %v372, %v1044
      %v1046 = vpop.f32.mrf.mxu0
      %1047 = vmatprep.mubr.bf16.mxu0 0
      %1048 = vmatmul.mubr.bf16.gmra.mxu0 %v759
      %v1049 = vpop.f32.mrf.mxu0
      %v1050 = vadd.f32 %v372, %v1049
      %v1051 = vpop.f32.mrf.mxu0
      %v1052 = vpop.f32.mrf.mxu0
      %v1053 = vadd.f32 %v372, %v1052
      %v1054 = vpop.f32.mrf.mxu0
      %1055 = vmatprep.mubr.bf16.mxu0 0
      %1056 = vmatmul.mubr.bf16.gmra.mxu0 %v762
      %v1057 = vpop.f32.mrf.mxu0
      %v1058 = vadd.f32 %v372, %v1057
      %v1059 = vpop.f32.mrf.mxu0
      %v1060 = vpop.f32.mrf.mxu0
      %v1061 = vadd.f32 %v372, %v1060
      %v1062 = vpop.f32.mrf.mxu0
      %1063 = vmatprep.mubr.bf16.mxu0 0
      %1064 = vmatmul.mubr.bf16.gmra.mxu0 %v765
      %v1065 = vpop.f32.mrf.mxu0
      %v1066 = vadd.f32 %v372, %v1065
      %v1067 = vpop.f32.mrf.mxu0
      %v1068 = vpop.f32.mrf.mxu0
      %v1069 = vadd.f32 %v372, %v1068
      %v1070 = vpop.f32.mrf.mxu0
      %1071 = vmatprep.mubr.bf16.mxu0 0
      %1072 = vmatmul.mubr.bf16.gmra.mxu0 %v768
      %v1073 = vpop.f32.mrf.mxu0
      %v1074 = vadd.f32 %v372, %v1073
      %v1075 = vpop.f32.mrf.mxu0
      %v1076 = vpop.f32.mrf.mxu0
      %v1077 = vadd.f32 %v372, %v1076
      %v1078 = vpop.f32.mrf.mxu0
      %1079 = vmatprep.mubr.bf16.mxu0 0
      %1080 = vmatmul.mubr.bf16.gmra.mxu0 %v771
      %v1081 = vpop.f32.mrf.mxu0
      %v1082 = vadd.f32 %v372, %v1081
      %v1083 = vpop.f32.mrf.mxu0
      %v1084 = vpop.f32.mrf.mxu0
      %v1085 = vadd.f32 %v372, %v1084
      %v1086 = vpop.f32.mrf.mxu0
      %1087 = vmatprep.mubr.bf16.mxu0 0
      %1088 = vmatmul.mubr.bf16.gmra.mxu0 %v774
      %v1089 = vpop.f32.mrf.mxu0
      %v1090 = vadd.f32 %v372, %v1089
      %v1091 = vpop.f32.mrf.mxu0
      %v1092 = vpop.f32.mrf.mxu0
      %v1093 = vadd.f32 %v372, %v1092
      %v1094 = vpop.f32.mrf.mxu0
      %1095 = vmatprep.mubr.bf16.mxu0 0
      %1096 = vmatmul.mubr.bf16.gmra.mxu0 %v777
      %v1097 = vpop.f32.mrf.mxu0
      %v1098 = vadd.f32 %v372, %v1097
      %v1099 = vpop.f32.mrf.mxu0
      %v1100 = vpop.f32.mrf.mxu0
      %v1101 = vadd.f32 %v372, %v1100
      %v1102 = vpop.f32.mrf.mxu0
      %1103 = vmatprep.mubr.bf16.mxu0 0
      %1104 = vmatmul.mubr.bf16.gmra.mxu0 %v780
      %v1105 = vpop.f32.mrf.mxu0
      %v1106 = vadd.f32 %v372, %v1105
      %v1107 = vpop.f32.mrf.mxu0
      %v1108 = vpop.f32.mrf.mxu0
      %v1109 = vadd.f32 %v372, %v1108
      %v1110 = vpop.f32.mrf.mxu0
      %1111 = vmatprep.mubr.bf16.mxu0 0
      %1112 = vmatmul.mubr.bf16.gmra.mxu0 %v783
      %v1113 = vpop.f32.mrf.mxu0
      %v1114 = vadd.f32 %v372, %v1113
      %v1115 = vpop.f32.mrf.mxu0
      %v1116 = vpop.f32.mrf.mxu0
      %v1117 = vadd.f32 %v372, %v1116
      %v1118 = vpop.f32.mrf.mxu0
      %1119 = vmatprep.mubr.bf16.mxu0 0
      %1120 = vmatmul.mubr.bf16.gmra.mxu0 %v786
      %v1121 = vpop.f32.mrf.mxu0
      %v1122 = vadd.f32 %v372, %v1121
      %v1123 = vpop.f32.mrf.mxu0
      %v1124 = vpop.f32.mrf.mxu0
      %v1125 = vadd.f32 %v372, %v1124
      %v1126 = vpop.f32.mrf.mxu0
      %1127 = vmatprep.mubr.bf16.mxu0 0
      %1128 = vmatmul.mubr.bf16.gmra.mxu0 %v789
      %v1129 = vpop.f32.mrf.mxu0
      %v1130 = vadd.f32 %v372, %v1129
      %v1131 = vpop.f32.mrf.mxu0
      %v1132 = vpop.f32.mrf.mxu0
      %v1133 = vadd.f32 %v372, %v1132
      %v1134 = vpop.f32.mrf.mxu0
      %1135 = vmatprep.mubr.bf16.mxu0 0
      %1136 = vmatmul.mubr.bf16.gmra.mxu0 %v792
      %v1137 = vpop.f32.mrf.mxu0
      %v1138 = vadd.f32 %v372, %v1137
      %v1139 = vpop.f32.mrf.mxu0
      %v1140 = vpop.f32.mrf.mxu0
      %v1141 = vadd.f32 %v372, %v1140
      %v1142 = vpop.f32.mrf.mxu0
      %1143 = vmatprep.mubr.bf16.mxu0 0
      %1144 = vmatmul.mubr.bf16.gmra.mxu0 %v795
      %v1145 = vpop.f32.mrf.mxu0
      %v1146 = vadd.f32 %v372, %v1145
      %v1147 = vpop.f32.mrf.mxu0
      %v1148 = vpop.f32.mrf.mxu0
      %v1149 = vadd.f32 %v372, %v1148
      %v1150 = vpop.f32.mrf.mxu0
      %1151 = vmatprep.mubr.bf16.mxu0 0
      %1152 = vmatmul.mubr.bf16.gmra.mxu0 %v798
      %v1153 = vpop.f32.mrf.mxu0
      %v1154 = vadd.f32 %v372, %v1153
      %v1155 = vpop.f32.mrf.mxu0
      %v1156 = vpop.f32.mrf.mxu0
      %v1157 = vadd.f32 %v372, %v1156
      %v1158 = vpop.f32.mrf.mxu0
      %1159 = vmatprep.mubr.bf16.mxu0 0
      %1160 = vmatmul.mubr.bf16.gmra.mxu0 %v801
      %v1161 = vpop.f32.mrf.mxu0
      %v1162 = vadd.f32 %v372, %v1161
      %v1163 = vpop.f32.mrf.mxu0
      %v1164 = vpop.f32.mrf.mxu0
      %v1165 = vadd.f32 %v372, %v1164
      %v1166 = vpop.f32.mrf.mxu0
      %1167 = vmatprep.mubr.bf16.mxu0 0
      %1168 = vmatmul.mubr.bf16.gmra.mxu0 %v804
      %v1169 = vpop.f32.mrf.mxu0
      %v1170 = vadd.f32 %v372, %v1169
      %v1171 = vpop.f32.mrf.mxu0
      %v1172 = vpop.f32.mrf.mxu0
      %v1173 = vadd.f32 %v372, %v1172
      %v1174 = vpop.f32.mrf.mxu0
      %1175 = vmatprep.mubr.bf16.mxu0 0
      %1176 = vmatmul.mubr.bf16.gmra.mxu0 %v807
      %v1177 = vpop.f32.mrf.mxu0
      %v1178 = vadd.f32 %v372, %v1177
      %v1179 = vpop.f32.mrf.mxu0
      %v1180 = vpop.f32.mrf.mxu0
      %v1181 = vadd.f32 %v372, %v1180
      %v1182 = vpop.f32.mrf.mxu0
      %1183 = vmatprep.mubr.bf16.mxu0 0
      %1184 = vmatmul.mubr.bf16.gmra.mxu0 %v810
      %v1185 = vpop.f32.mrf.mxu0
      %v1186 = vadd.f32 %v372, %v1185
      %v1187 = vpop.f32.mrf.mxu0
      %v1188 = vpop.f32.mrf.mxu0
      %v1189 = vadd.f32 %v372, %v1188
      %v1190 = vpop.f32.mrf.mxu0
      %1191 = vmatprep.mubr.bf16.mxu0 0
      %1192 = vmatmul.mubr.bf16.gmra.mxu0 %v813
      %v1193 = vpop.f32.mrf.mxu0
      %v1194 = vadd.f32 %v372, %v1193
      %v1195 = vpop.f32.mrf.mxu0
      %v1196 = vpop.f32.mrf.mxu0
      %v1197 = vadd.f32 %v372, %v1196
      %v1198 = vpop.f32.mrf.mxu0
      %1199 = vmatprep.mubr.bf16.mxu0 0
      %1200 = vmatmul.mubr.bf16.gmra.mxu0 %v816
      %v1201 = vpop.f32.mrf.mxu0
      %v1202 = vadd.f32 %v372, %v1201
      %v1203 = vpop.f32.mrf.mxu0
      %v1204 = vpop.f32.mrf.mxu0
      %v1205 = vadd.f32 %v372, %v1204
      %v1206 = vpop.f32.mrf.mxu0
      %1207 = vmatprep.mubr.bf16.mxu0 0
      %1208 = vmatmul.mubr.bf16.gmra.mxu0 %v819
      %v1209 = vpop.f32.mrf.mxu0
      %v1210 = vadd.f32 %v372, %v1209
      %v1211 = vpop.f32.mrf.mxu0
      %v1212 = vpop.f32.mrf.mxu0
      %v1213 = vadd.f32 %v372, %v1212
      %v1214 = vpop.f32.mrf.mxu0
      %1215 = vmatprep.mubr.bf16.mxu0 0
      %1216 = vmatmul.mubr.bf16.gmra.mxu0 %v822
      %v1217 = vpop.f32.mrf.mxu0
      %v1218 = vadd.f32 %v372, %v1217
      %v1219 = vpop.f32.mrf.mxu0
      %v1220 = vpop.f32.mrf.mxu0
      %v1221 = vadd.f32 %v372, %v1220
      %v1222 = vpop.f32.mrf.mxu0
      %1223 = vmatprep.mubr.bf16.mxu0 0
      %1224 = vmatmul.mubr.bf16.gmra.mxu0 %v825
      %v1225 = vpop.f32.mrf.mxu0
      %v1226 = vadd.f32 %v372, %v1225
      %v1227 = vpop.f32.mrf.mxu0
      %v1228 = vpop.f32.mrf.mxu0
      %v1229 = vadd.f32 %v372, %v1228
      %v1230 = vpop.f32.mrf.mxu0
      %1231 = vmatprep.mubr.bf16.mxu0 0
      %1232 = vmatmul.mubr.bf16.gmra.mxu0 %v828
      %v1233 = vpop.f32.mrf.mxu0
      %v1234 = vadd.f32 %v372, %v1233
      %v1235 = vpop.f32.mrf.mxu0
      %v1236 = vpop.f32.mrf.mxu0
      %v1237 = vadd.f32 %v372, %v1236
      %v1238 = vpop.f32.mrf.mxu0
      %1239 = vmatprep.mubr.bf16.mxu0 0
      %1240 = vmatmul.mubr.bf16.gmra.mxu0 %v831
      %v1241 = vpop.f32.mrf.mxu0
      %v1242 = vadd.f32 %v372, %v1241
      %v1243 = vpop.f32.mrf.mxu0
      %v1244 = vpop.f32.mrf.mxu0
      %v1245 = vadd.f32 %v372, %v1244
      %v1246 = vpop.f32.mrf.mxu0
      %1247 = vmatprep.mubr.bf16.mxu0 0
      %1248 = vmatmul.mubr.bf16.gmra.mxu0 %v834
      %v1249 = vpop.f32.mrf.mxu0
      %v1250 = vadd.f32 %v372, %v1249
      %v1251 = vpop.f32.mrf.mxu0
      %v1252 = vpop.f32.mrf.mxu0
      %v1253 = vadd.f32 %v372, %v1252
      %v1254 = vpop.f32.mrf.mxu0
      %1255 = vmatprep.mubr.bf16.mxu0 0
      %1256 = vmatmul.mubr.bf16.gmra.mxu0 %v837
      %v1257 = vpop.f32.mrf.mxu0
      %v1258 = vadd.f32 %v372, %v1257
      %v1259 = vpop.f32.mrf.mxu0
      %v1260 = vpop.f32.mrf.mxu0
      %v1261 = vadd.f32 %v372, %v1260
      %v1262 = vpop.f32.mrf.mxu0
      %1263 = vmatprep.mubr.bf16.mxu0 0
      %1264 = vmatmul.mubr.bf16.gmra.mxu0 %v840
      %v1265 = vpop.f32.mrf.mxu0
      %v1266 = vadd.f32 %v372, %v1265
      %v1267 = vpop.f32.mrf.mxu0
      %v1268 = vpop.f32.mrf.mxu0
      %v1269 = vadd.f32 %v372, %v1268
      %v1270 = vpop.f32.mrf.mxu0
      %1271 = vmatprep.mubr.bf16.mxu0 0
      %1272 = vmatmul.mubr.bf16.gmra.mxu0 %v843
      %v1273 = vpop.f32.mrf.mxu0
      %v1274 = vadd.f32 %v372, %v1273
      %v1275 = vpop.f32.mrf.mxu0
      %v1276 = vpop.f32.mrf.mxu0
      %v1277 = vadd.f32 %v372, %v1276
      %v1278 = vpop.f32.mrf.mxu0
      %1279 = vmatprep.mubr.bf16.mxu0 0
      %1280 = vmatmul.mubr.bf16.gmra.mxu0 %v846
      %v1281 = vpop.f32.mrf.mxu0
      %v1282 = vadd.f32 %v372, %v1281
      %v1283 = vpop.f32.mrf.mxu0
      %v1284 = vpop.f32.mrf.mxu0
      %v1285 = vadd.f32 %v372, %v1284
      %v1286 = vpop.f32.mrf.mxu0
      %1287 = vmatprep.mubr.bf16.mxu0 0
      %1288 = vmatmul.mubr.bf16.gmra.mxu0 %v849
      %v1289 = vpop.f32.mrf.mxu0
      %v1290 = vadd.f32 %v372, %v1289
      %v1291 = vpop.f32.mrf.mxu0
      %v1292 = vpop.f32.mrf.mxu0
      %v1293 = vadd.f32 %v372, %v1292
      %v1294 = vpop.f32.mrf.mxu0
      %1295 = vmatprep.mubr.bf16.mxu0 0
      %1296 = vmatmul.mubr.bf16.gmra.mxu0 %v852
      %v1297 = vpop.f32.mrf.mxu0
      %v1298 = vadd.f32 %v372, %v1297
      %v1299 = vpop.f32.mrf.mxu0
      %v1300 = vpop.f32.mrf.mxu0
      %v1301 = vadd.f32 %v372, %v1300
      %v1302 = vpop.f32.mrf.mxu0
      %1303 = vmatprep.mubr.bf16.mxu0 0
      %1304 = vmatmul.mubr.bf16.gmra.mxu0 %v855
      %v1305 = vpop.f32.mrf.mxu0
      %v1306 = vadd.f32 %v372, %v1305
      %v1307 = vpop.f32.mrf.mxu0
      %v1308 = vpop.f32.mrf.mxu0
      %v1309 = vadd.f32 %v372, %v1308
      %v1310 = vpop.f32.mrf.mxu0
      %1311 = vmatprep.mubr.bf16.mxu0 0
      %1312 = vmatmul.mubr.bf16.gmra.mxu0 %v858
      %v1313 = vpop.f32.mrf.mxu0
      %v1314 = vadd.f32 %v372, %v1313
      %v1315 = vpop.f32.mrf.mxu0
      %v1316 = vpop.f32.mrf.mxu0
      %v1317 = vadd.f32 %v372, %v1316
      %v1318 = vpop.f32.mrf.mxu0
      %1319 = vmatprep.mubr.bf16.mxu0 0
      %1320 = vmatmul.mubr.bf16.gmra.mxu0 %v861
      %v1321 = vpop.f32.mrf.mxu0
      %v1322 = vadd.f32 %v372, %v1321
      %v1323 = vpop.f32.mrf.mxu0
      %v1324 = vpop.f32.mrf.mxu0
      %v1325 = vadd.f32 %v372, %v1324
      %v1326 = vpop.f32.mrf.mxu0
      %1327 = vmatprep.mubr.bf16.mxu0 0
      %1328 = vmatmul.mubr.bf16.gmra.mxu0 %v864
      %v1329 = vpop.f32.mrf.mxu0
      %v1330 = vadd.f32 %v372, %v1329
      %v1331 = vpop.f32.mrf.mxu0
      %v1332 = vpop.f32.mrf.mxu0
      %v1333 = vadd.f32 %v372, %v1332
      %v1334 = vpop.f32.mrf.mxu0
      %1335 = vmatprep.mubr.bf16.mxu0 0
      %1336 = vmatmul.mubr.bf16.gmra.mxu0 %v867
      %v1337 = vpop.f32.mrf.mxu0
      %v1338 = vadd.f32 %v372, %v1337
      %v1339 = vpop.f32.mrf.mxu0
      %v1340 = vpop.f32.mrf.mxu0
      %v1341 = vadd.f32 %v372, %v1340
      %v1342 = vpop.f32.mrf.mxu0
      %1343 = vmatprep.mubr.bf16.mxu0 0
      %1344 = vmatmul.mubr.bf16.gmra.mxu0 %v870
      %v1345 = vpop.f32.mrf.mxu0
      %v1346 = vadd.f32 %v372, %v1345
      %v1347 = vpop.f32.mrf.mxu0
      %v1348 = vpop.f32.mrf.mxu0
      %v1349 = vadd.f32 %v372, %v1348
      %v1350 = vpop.f32.mrf.mxu0
      %1351 = vmatprep.mubr.bf16.mxu0 0
      %1352 = vmatmul.mubr.bf16.gmra.mxu0 %v873
      %v1353 = vpop.f32.mrf.mxu0
      %v1354 = vadd.f32 %v372, %v1353
      %v1355 = vpop.f32.mrf.mxu0
      %v1356 = vpop.f32.mrf.mxu0
      %v1357 = vadd.f32 %v372, %v1356
      %v1358 = vpop.f32.mrf.mxu0
      %1359 = vmatprep.mubr.bf16.mxu0 0
      %1360 = vmatmul.mubr.bf16.gmra.mxu0 %v876
      %v1361 = vpop.f32.mrf.mxu0
      %v1362 = vadd.f32 %v372, %v1361
      %v1363 = vpop.f32.mrf.mxu0
      %v1364 = vpop.f32.mrf.mxu0
      %v1365 = vadd.f32 %v372, %v1364
      %v1366 = vpop.f32.mrf.mxu0
      %1367 = vmatprep.mubr.bf16.mxu0 0
      %1368 = vmatmul.mubr.bf16.gmra.mxu0 %v879
      %v1369 = vpop.f32.mrf.mxu0
      %v1370 = vadd.f32 %v372, %v1369
      %v1371 = vpop.f32.mrf.mxu0
      %v1372 = vpop.f32.mrf.mxu0
      %v1373 = vadd.f32 %v372, %v1372
      %v1374 = vpop.f32.mrf.mxu0
      %1375 = vmatprep.mubr.bf16.mxu0 0
      %1376 = vmatmul.mubr.bf16.gmra.mxu0 %v882
      %v1377 = vpop.f32.mrf.mxu0
      %v1378 = vadd.f32 %v372, %v1377
      %v1379 = vpop.f32.mrf.mxu0
      %v1380 = vpop.f32.mrf.mxu0
      %v1381 = vadd.f32 %v372, %v1380
      %v1382 = vpop.f32.mrf.mxu0
      %1383 = vmatprep.mubr.bf16.mxu0 0
      %1384 = vmatmul.mubr.bf16.gmra.mxu0 %v885
      %v1385 = vpop.f32.mrf.mxu0
      %v1386 = vadd.f32 %v372, %v1385
      %v1387 = vpop.f32.mrf.mxu0
      %v1388 = vpop.f32.mrf.mxu0
      %v1389 = vadd.f32 %v372, %v1388
      %v1390 = vpop.f32.mrf.mxu0
      %1391 = vmatprep.mubr.bf16.mxu0 0
      %1392 = vmatmul.mubr.bf16.gmra.mxu0 %v888
      %v1393 = vpop.f32.mrf.mxu0
      %v1394 = vadd.f32 %v372, %v1393
      %v1395 = vpop.f32.mrf.mxu0
      %v1396 = vpop.f32.mrf.mxu0
      %v1397 = vadd.f32 %v372, %v1396
      %v1398 = vpop.f32.mrf.mxu0
      %1399 = vmatprep.mubr.bf16.mxu0 0
      %1400 = vmatmul.mubr.bf16.gmra.mxu0 %v891
      %v1401 = vpop.f32.mrf.mxu0
      %v1402 = vadd.f32 %v372, %v1401
      %v1403 = vpop.f32.mrf.mxu0
      %v1404 = vpop.f32.mrf.mxu0
      %v1405 = vadd.f32 %v372, %v1404
      %v1406 = vpop.f32.mrf.mxu0
      %1407 = vmatprep.mubr.bf16.mxu0 0
      %1408 = vmatmul.mubr.bf16.gmra.mxu0 %v894
      %v1409 = vpop.f32.mrf.mxu0
      %v1410 = vadd.f32 %v372, %v1409
      %v1411 = vpop.f32.mrf.mxu0
      %v1412 = vpop.f32.mrf.mxu0
      %v1413 = vadd.f32 %v372, %v1412
      %v1414 = vpop.f32.mrf.mxu0
      %1415 = vmatprep.mubr.bf16.mxu0 0
      %1416 = vmatmul.mubr.bf16.gmra.mxu0 %v897
      %v1417 = vpop.f32.mrf.mxu0
      %v1418 = vadd.f32 %v372, %v1417
      %v1419 = vpop.f32.mrf.mxu0
      %v1420 = vpop.f32.mrf.mxu0
      %v1421 = vadd.f32 %v372, %v1420
      %v1422 = vpop.f32.mrf.mxu0
      %1423 = vmatprep.mubr.bf16.mxu0 0
      %1424 = vmatmul.mubr.bf16.gmra.mxu0 %v900
      %v1425 = vpop.f32.mrf.mxu0
      %v1426 = vadd.f32 %v372, %v1425
      %v1427 = vpop.f32.mrf.mxu0
      %v1428 = vpop.f32.mrf.mxu0
      %v1429 = vadd.f32 %v372, %v1428
      %v1430 = vpop.f32.mrf.mxu0
      %1431 = vmatprep.mubr.bf16.mxu0 0
      %1432 = vmatmul.mubr.bf16.gmra.mxu0 %v903
      %v1433 = vpop.f32.mrf.mxu0
      %v1434 = vadd.f32 %v372, %v1433
      %v1435 = vpop.f32.mrf.mxu0
      %v1436 = vpop.f32.mrf.mxu0
      %v1437 = vadd.f32 %v372, %v1436
      %v1438 = vpop.f32.mrf.mxu0
      %1439 = vmatprep.mubr.bf16.mxu0 0
      %1440 = vmatmul.mubr.bf16.gmra.mxu0 %v906
      %v1441 = vpop.f32.mrf.mxu0
      %v1442 = vadd.f32 %v372, %v1441
      %v1443 = vpop.f32.mrf.mxu0
      %v1444 = vpop.f32.mrf.mxu0
      %v1445 = vadd.f32 %v372, %v1444
      %v1446 = vpop.f32.mrf.mxu0
      %1447 = vmatprep.mubr.bf16.mxu0 0
      %1448 = vmatmul.mubr.bf16.gmra.mxu0 %v909
      %v1449 = vpop.f32.mrf.mxu0
      %v1450 = vadd.f32 %v372, %v1449
      %v1451 = vpop.f32.mrf.mxu0
      %v1452 = vpop.f32.mrf.mxu0
      %v1453 = vadd.f32 %v372, %v1452
      %v1454 = vpop.f32.mrf.mxu0
      %1455 = vdwg.mxu0
      %v1456 = vtanh.pop %v946
      %v1457 = vtanh.pop %v949
      %v1458 = vtanh.pop %v954
      %v1459 = vtanh.pop %v957
      %v1460 = vtanh.pop %v962
      %v1461 = vtanh.pop %v965
      %v1462 = vtanh.pop %v970
      %v1463 = vtanh.pop %v973
      %v1464 = vtanh.pop %v978
      %v1465 = vtanh.pop %v981
      %v1466 = vtanh.pop %v986
      %v1467 = vtanh.pop %v989
      %v1468 = vtanh.pop %v994
      %v1469 = vtanh.pop %v997
      %v1470 = vtanh.pop %v1002
      %v1471 = vtanh.pop %v1005
      %v1472 = vtanh.pop %v1010
      %v1473 = vtanh.pop %v1013
      %v1474 = vtanh.pop %v1018
      %v1475 = vtanh.pop %v1021
      %v1476 = vtanh.pop %v1026
      %v1477 = vtanh.pop %v1029
      %v1478 = vtanh.pop %v1034
      %v1479 = vtanh.pop %v1037
      %v1480 = vtanh.pop %v1042
      %v1481 = vtanh.pop %v1045
      %v1482 = vtanh.pop %v1050
      %v1483 = vtanh.pop %v1053
      %v1484 = vtanh.pop %v1058
      %v1485 = vtanh.pop %v1061
      %v1486 = vtanh.pop %v1066
      %v1487 = vtanh.pop %v1069
      %v1488 = vtanh.pop %v1074
      %v1489 = vtanh.pop %v1077
      %v1490 = vtanh.pop %v1082
      %v1491 = vtanh.pop %v1085
      %v1492 = vtanh.pop %v1090
      %v1493 = vtanh.pop %v1093
      %v1494 = vtanh.pop %v1098
      %v1495 = vtanh.pop %v1101
      %v1496 = vtanh.pop %v1106
      %v1497 = vtanh.pop %v1109
      %v1498 = vtanh.pop %v1114
      %v1499 = vtanh.pop %v1117
      %v1500 = vtanh.pop %v1122
      %v1501 = vtanh.pop %v1125
      %v1502 = vtanh.pop %v1130
      %v1503 = vtanh.pop %v1133
      %v1504 = vtanh.pop %v1138
      %v1505 = vtanh.pop %v1141
      %v1506 = vtanh.pop %v1146
      %v1507 = vtanh.pop %v1149
      %v1508 = vtanh.pop %v1154
      %v1509 = vtanh.pop %v1157
      %v1510 = vtanh.pop %v1162
      %v1511 = vtanh.pop %v1165
      %v1512 = vtanh.pop %v1170
      %v1513 = vtanh.pop %v1173
      %v1514 = vtanh.pop %v1178
      %v1515 = vtanh.pop %v1181
      %v1516 = vtanh.pop %v1186
      %v1517 = vtanh.pop %v1189
      %v1518 = vtanh.pop %v1194
      %v1519 = vtanh.pop %v1197
      %v1520 = vtanh.pop %v1202
      %v1521 = vtanh.pop %v1205
      %v1522 = vtanh.pop %v1210
      %v1523 = vtanh.pop %v1213
      %v1524 = vtanh.pop %v1218
      %v1525 = vtanh.pop %v1221
      %v1526 = vtanh.pop %v1226
      %v1527 = vtanh.pop %v1229
      %v1528 = vtanh.pop %v1234
      %v1529 = vtanh.pop %v1237
      %v1530 = vtanh.pop %v1242
      %v1531 = vtanh.pop %v1245
      %v1532 = vtanh.pop %v1250
      %v1533 = vtanh.pop %v1253
      %v1534 = vtanh.pop %v1258
      %v1535 = vtanh.pop %v1261
      %v1536 = vtanh.pop %v1266
      %v1537 = vtanh.pop %v1269
      %v1538 = vtanh.pop %v1274
      %v1539 = vtanh.pop %v1277
      %v1540 = vtanh.pop %v1282
      %v1541 = vtanh.pop %v1285
      %v1542 = vtanh.pop %v1290
      %v1543 = vtanh.pop %v1293
      %v1544 = vtanh.pop %v1298
      %v1545 = vtanh.pop %v1301
      %v1546 = vtanh.pop %v1306
      %v1547 = vtanh.pop %v1309
      %v1548 = vtanh.pop %v1314
      %v1549 = vtanh.pop %v1317
      %v1550 = vtanh.pop %v1322
      %v1551 = vtanh.pop %v1325
      %v1552 = vtanh.pop %v1330
      %v1553 = vtanh.pop %v1333
      %v1554 = vtanh.pop %v1338
      %v1555 = vtanh.pop %v1341
      %v1556 = vtanh.pop %v1346
      %v1557 = vtanh.pop %v1349
      %v1558 = vtanh.pop %v1354
      %v1559 = vtanh.pop %v1357
      %v1560 = vtanh.pop %v1362
      %v1561 = vtanh.pop %v1365
      %v1562 = vtanh.pop %v1370
      %v1563 = vtanh.pop %v1373
      %v1564 = vtanh.pop %v1378
      %v1565 = vtanh.pop %v1381
      %v1566 = vtanh.pop %v1386
      %v1567 = vtanh.pop %v1389
      %v1568 = vtanh.pop %v1394
      %v1569 = vtanh.pop %v1397
      %v1570 = vtanh.pop %v1402
      %v1571 = vtanh.pop %v1405
      %v1572 = vtanh.pop %v1410
      %v1573 = vtanh.pop %v1413
      %v1574 = vtanh.pop %v1418
      %v1575 = vtanh.pop %v1421
      %v1576 = vtanh.pop %v1426
      %v1577 = vtanh.pop %v1429
      %v1578 = vtanh.pop %v1434
      %v1579 = vtanh.pop %v1437
      %v1580 = vtanh.pop %v1442
      %v1581 = vtanh.pop %v1445
      %v1582 = vtanh.pop %v1450
      %v1583 = vtanh.pop %v1453
      %1584 = vst [vmem:[%s228] sm:$0xff] %v1456
      %1585 = vst [vmem:[%s228 + $0x8] sm:$0xff] %v1457
      %1586 = vst [vmem:[%s228 + $0x10] sm:$0xff] %v1458
      %1587 = vst [vmem:[%s228 + $0x18] sm:$0xff] %v1459
      %1588 = vst [vmem:[%s228 + $0x20] sm:$0xff] %v1460
      %1589 = vst [vmem:[%s228 + $0x28] sm:$0xff] %v1461
      %1590 = vst [vmem:[%s228 + $0x30] sm:$0xff] %v1462
      %1591 = vst [vmem:[%s228 + $0x38] sm:$0xff] %v1463
      %1592 = vst [vmem:[%s228 + $0x40] sm:$0xff] %v1464
      %1593 = vst [vmem:[%s228 + $0x48] sm:$0xff] %v1465
      %1594 = vst [vmem:[%s228 + $0x50] sm:$0xff] %v1466
      %1595 = vst [vmem:[%s228 + $0x58] sm:$0xff] %v1467
      %1596 = vst [vmem:[%s228 + $0x60] sm:$0xff] %v1468
      %1597 = vst [vmem:[%s228 + $0x68] sm:$0xff] %v1469
      %1598 = vst [vmem:[%s228 + $0x70] sm:$0xff] %v1470
      %1599 = vst [vmem:[%s228 + $0x78] sm:$0xff] %v1471
      %1600 = vst [vmem:[%s228 + $0x80] sm:$0xff] %v1472
      %1601 = vst [vmem:[%s228 + $0x88] sm:$0xff] %v1473
      %1602 = vst [vmem:[%s228 + $0x90] sm:$0xff] %v1474
      %1603 = vst [vmem:[%s228 + $0x98] sm:$0xff] %v1475
      %1604 = vst [vmem:[%s228 + $0xa0] sm:$0xff] %v1476
      %1605 = vst [vmem:[%s228 + $0xa8] sm:$0xff] %v1477
      %1606 = vst [vmem:[%s228 + $0xb0] sm:$0xff] %v1478
      %1607 = vst [vmem:[%s228 + $0xb8] sm:$0xff] %v1479
      %1608 = vst [vmem:[%s228 + $0xc0] sm:$0xff] %v1480
      %1609 = vst [vmem:[%s228 + $0xc8] sm:$0xff] %v1481
      %1610 = vst [vmem:[%s228 + $0xd0] sm:$0xff] %v1482
      %1611 = vst [vmem:[%s228 + $0xd8] sm:$0xff] %v1483
      %1612 = vst [vmem:[%s228 + $0xe0] sm:$0xff] %v1484
      %1613 = vst [vmem:[%s228 + $0xe8] sm:$0xff] %v1485
      %1614 = vst [vmem:[%s228 + $0xf0] sm:$0xff] %v1486
      %1615 = vst [vmem:[%s228 + $0xf8] sm:$0xff] %v1487
      %1616 = vst [vmem:[%s228 + $0x100] sm:$0xff] %v1488
      %1617 = vst [vmem:[%s228 + $0x108] sm:$0xff] %v1489
      %1618 = vst [vmem:[%s228 + $0x110] sm:$0xff] %v1490
      %1619 = vst [vmem:[%s228 + $0x118] sm:$0xff] %v1491
      %1620 = vst [vmem:[%s228 + $0x120] sm:$0xff] %v1492
      %1621 = vst [vmem:[%s228 + $0x128] sm:$0xff] %v1493
      %1622 = vst [vmem:[%s228 + $0x130] sm:$0xff] %v1494
      %1623 = vst [vmem:[%s228 + $0x138] sm:$0xff] %v1495
      %1624 = vst [vmem:[%s228 + $0x140] sm:$0xff] %v1496
      %1625 = vst [vmem:[%s228 + $0x148] sm:$0xff] %v1497
      %1626 = vst [vmem:[%s228 + $0x150] sm:$0xff] %v1498
      %1627 = vst [vmem:[%s228 + $0x158] sm:$0xff] %v1499
      %1628 = vst [vmem:[%s228 + $0x160] sm:$0xff] %v1500
      %1629 = vst [vmem:[%s228 + $0x168] sm:$0xff] %v1501
      %1630 = vst [vmem:[%s228 + $0x170] sm:$0xff] %v1502
      %1631 = vst [vmem:[%s228 + $0x178] sm:$0xff] %v1503
      %1632 = vst [vmem:[%s228 + $0x180] sm:$0xff] %v1504
      %1633 = vst [vmem:[%s228 + $0x188] sm:$0xff] %v1505
      %1634 = vst [vmem:[%s228 + $0x190] sm:$0xff] %v1506
      %1635 = vst [vmem:[%s228 + $0x198] sm:$0xff] %v1507
      %1636 = vst [vmem:[%s228 + $0x1a0] sm:$0xff] %v1508
      %1637 = vst [vmem:[%s228 + $0x1a8] sm:$0xff] %v1509
      %1638 = vst [vmem:[%s228 + $0x1b0] sm:$0xff] %v1510
      %1639 = vst [vmem:[%s228 + $0x1b8] sm:$0xff] %v1511
      %1640 = vst [vmem:[%s228 + $0x1c0] sm:$0xff] %v1512
      %1641 = vst [vmem:[%s228 + $0x1c8] sm:$0xff] %v1513
      %1642 = vst [vmem:[%s228 + $0x1d0] sm:$0xff] %v1514
      %1643 = vst [vmem:[%s228 + $0x1d8] sm:$0xff] %v1515
      %1644 = vst [vmem:[%s228 + $0x1e0] sm:$0xff] %v1516
      %1645 = vst [vmem:[%s228 + $0x1e8] sm:$0xff] %v1517
      %1646 = vst [vmem:[%s228 + $0x1f0] sm:$0xff] %v1518
      %1647 = vst [vmem:[%s228 + $0x1f8] sm:$0xff] %v1519
      %1648 = vst [vmem:[%s228 + $0x200] sm:$0xff] %v1520
      %1649 = vst [vmem:[%s228 + $0x208] sm:$0xff] %v1521
      %1650 = vst [vmem:[%s228 + $0x210] sm:$0xff] %v1522
      %1651 = vst [vmem:[%s228 + $0x218] sm:$0xff] %v1523
      %1652 = vst [vmem:[%s228 + $0x220] sm:$0xff] %v1524
      %1653 = vst [vmem:[%s228 + $0x228] sm:$0xff] %v1525
      %1654 = vst [vmem:[%s228 + $0x230] sm:$0xff] %v1526
      %1655 = vst [vmem:[%s228 + $0x238] sm:$0xff] %v1527
      %1656 = vst [vmem:[%s228 + $0x240] sm:$0xff] %v1528
      %1657 = vst [vmem:[%s228 + $0x248] sm:$0xff] %v1529
      %1658 = vst [vmem:[%s228 + $0x250] sm:$0xff] %v1530
      %1659 = vst [vmem:[%s228 + $0x258] sm:$0xff] %v1531
      %1660 = vst [vmem:[%s228 + $0x260] sm:$0xff] %v1532
      %1661 = vst [vmem:[%s228 + $0x268] sm:$0xff] %v1533
      %1662 = vst [vmem:[%s228 + $0x270] sm:$0xff] %v1534
      %1663 = vst [vmem:[%s228 + $0x278] sm:$0xff] %v1535
      %1664 = vst [vmem:[%s228 + $0x280] sm:$0xff] %v1536
      %1665 = vst [vmem:[%s228 + $0x288] sm:$0xff] %v1537
      %1666 = vst [vmem:[%s228 + $0x290] sm:$0xff] %v1538
      %1667 = vst [vmem:[%s228 + $0x298] sm:$0xff] %v1539
      %1668 = vst [vmem:[%s228 + $0x2a0] sm:$0xff] %v1540
      %1669 = vst [vmem:[%s228 + $0x2a8] sm:$0xff] %v1541
      %1670 = vst [vmem:[%s228 + $0x2b0] sm:$0xff] %v1542
      %1671 = vst [vmem:[%s228 + $0x2b8] sm:$0xff] %v1543
      %1672 = vst [vmem:[%s228 + $0x2c0] sm:$0xff] %v1544
      %1673 = vst [vmem:[%s228 + $0x2c8] sm:$0xff] %v1545
      %1674 = vst [vmem:[%s228 + $0x2d0] sm:$0xff] %v1546
      %1675 = vst [vmem:[%s228 + $0x2d8] sm:$0xff] %v1547
      %1676 = vst [vmem:[%s228 + $0x2e0] sm:$0xff] %v1548
      %1677 = vst [vmem:[%s228 + $0x2e8] sm:$0xff] %v1549
      %1678 = vst [vmem:[%s228 + $0x2f0] sm:$0xff] %v1550
      %1679 = vst [vmem:[%s228 + $0x2f8] sm:$0xff] %v1551
      %1680 = vst [vmem:[%s228 + $0x300] sm:$0xff] %v1552
      %1681 = vst [vmem:[%s228 + $0x308] sm:$0xff] %v1553
      %1682 = vst [vmem:[%s228 + $0x310] sm:$0xff] %v1554
      %1683 = vst [vmem:[%s228 + $0x318] sm:$0xff] %v1555
      %1684 = vst [vmem:[%s228 + $0x320] sm:$0xff] %v1556
      %1685 = vst [vmem:[%s228 + $0x328] sm:$0xff] %v1557
      %1686 = vst [vmem:[%s228 + $0x330] sm:$0xff] %v1558
      %1687 = vst [vmem:[%s228 + $0x338] sm:$0xff] %v1559
      %1688 = vst [vmem:[%s228 + $0x340] sm:$0xff] %v1560
      %1689 = vst [vmem:[%s228 + $0x348] sm:$0xff] %v1561
      %1690 = vst [vmem:[%s228 + $0x350] sm:$0xff] %v1562
      %1691 = vst [vmem:[%s228 + $0x358] sm:$0xff] %v1563
      %1692 = vst [vmem:[%s228 + $0x360] sm:$0xff] %v1564
      %1693 = vst [vmem:[%s228 + $0x368] sm:$0xff] %v1565
      %1694 = vst [vmem:[%s228 + $0x370] sm:$0xff] %v1566
      %1695 = vst [vmem:[%s228 + $0x378] sm:$0xff] %v1567
      %1696 = vst [vmem:[%s228 + $0x380] sm:$0xff] %v1568
      %1697 = vst [vmem:[%s228 + $0x388] sm:$0xff] %v1569
      %1698 = vst [vmem:[%s228 + $0x390] sm:$0xff] %v1570
      %1699 = vst [vmem:[%s228 + $0x398] sm:$0xff] %v1571
      %1700 = vst [vmem:[%s228 + $0x3a0] sm:$0xff] %v1572
      %1701 = vst [vmem:[%s228 + $0x3a8] sm:$0xff] %v1573
      %1702 = vst [vmem:[%s228 + $0x3b0] sm:$0xff] %v1574
      %1703 = vst [vmem:[%s228 + $0x3b8] sm:$0xff] %v1575
      %1704 = vst [vmem:[%s228 + $0x3c0] sm:$0xff] %v1576
      %1705 = vst [vmem:[%s228 + $0x3c8] sm:$0xff] %v1577
      %1706 = vst [vmem:[%s228 + $0x3d0] sm:$0xff] %v1578
      %1707 = vst [vmem:[%s228 + $0x3d8] sm:$0xff] %v1579
      %1708 = vst [vmem:[%s228 + $0x3e0] sm:$0xff] %v1580
      %1709 = vst [vmem:[%s228 + $0x3e8] sm:$0xff] %v1581
      %1710 = vst [vmem:[%s228 + $0x3f0] sm:$0xff] %v1582
      %1711 = vst [vmem:[%s228 + $0x3f8] sm:$0xff] %v1583
      %s1712 = smul.u32 128, %s19
      %p1713 = scmp.lt.s32.totalorder %s18, 3
      %s1714 = scalar_select %p1713, %s18, 3
      %p1715 = scmp.lt.s32.totalorder %s1712, 255
      %s1716 = scalar_select %p1715, %s1712, 255
      %s1717 = smul.addr %s1714, 256
      %s1718 = sadd.s32 %s1716, %s1717
      %s1719 = smul.addr %s1718, 8
      %s1720 = scalar_lea.vmem %s3, %s1719
      // Predicated region
      $region33: #{generator_forward.9} parent=31 // pred_check
        %p1721 = pneg %p121
      $region34: #{generator_forward.9} parent=31 // pred_check_branch
        %1723 = sbr.rel (%p1721) target = $region36
      $region35: #{generator_forward.9} parent=31 // pred_region
        %s1724 = smul.u32 128, %s19
      $region36: #{generator_forward.9} parent=31 // pred_fallthru
        _
    $region32: #{generator_forward.9} parent=5 // pred_fallthru
      _
    %p1725 = scmp.le.s32.totalorder 2, %s9
    // Predicated region
    $region37: #{generator_forward.9} parent=5 // pred_check
      %p1726 = pneg %p1725
    $region38: #{generator_forward.9} parent=5 // pred_check_branch
      %1728 = sbr.rel (%p1726) target = $region40
    $region39: #{generator_forward.9} parent=5 // pred_region
      %s1729 = ssub.s32 %s9, 2
      // Predicated region
      $region41: #{generator_forward.9} parent=39 // pred_check
        %p1730 = pneg %p127
      $region42: #{generator_forward.9} parent=39 // pred_check_branch
        %1732 = sbr.rel (%p1730) target = $region44
      $region43: #{generator_forward.9} parent=39 // pred_region
        %s1733 = smul.u32 128, %s21
        %p1734 = scmp.lt.s32.totalorder %s20, 3
        %s1735 = scalar_select %p1734, %s20, 3
        %p1736 = scmp.lt.s32.totalorder %s1733, 255
        %s1737 = scalar_select %p1736, %s1733, 255
        %s1738 = smul.addr %s1735, 256
        %s1739 = sadd.s32 %s1737, %s1738
        %s1740 = smul.addr %s1739, 8
        %s1741 = scalar_lea.vmem %s3, %s1740
      $region44: #{generator_forward.9} parent=39 // pred_fallthru
        _
    $region40: #{generator_forward.9} parent=5 // pred_fallthru
      _
  $region6: #{generator_forward.9} parent=0 // loop_footer
    %s13 = sadd.s32 1, %s9
  $region7: #{generator_forward.9} parent=0 // loop_footer_branch
    %8 = sbr.rel target = $region3
  $region8: #{generator_forward.9} parent=0 // loop_exit
    _

</llo_original>
